<compile_context>
chip_gen: v6e
topology: v6e:2x2x1
jax: 0.10.0
libtpu: 0.0.40
codegen_flags: <defaults>
</compile_context>

<pallas_src>
import functools

import jax
import jax.numpy as jnp
from jax.experimental import pallas as pl
from jax.experimental.pallas import tpu as pltpu

EPS = 1e-6


# --------------------------- in-kernel math helpers ---------------------------

def _layer_norm(x, a, b, eps=EPS):
    # x: (S, D) f32; a, b: (1, D) f32.  PyTorch semantics: unbiased std, /(std+eps).
    d = x.shape[-1]
    mean = jnp.mean(x, axis=-1, keepdims=True)
    var = jnp.sum((x - mean) ** 2, axis=-1, keepdims=True) / (d - 1)
    std = jnp.sqrt(var)
    return a * (x - mean) / (std + eps) + b


def _softmax_last(x, approx_recip):
    # f32 softmax over the last axis.
    x = x - jnp.max(x, axis=-1, keepdims=True)
    e = jnp.exp(x)
    denom = jnp.sum(e, axis=-1, keepdims=True)
    if approx_recip:
        return e * pl.reciprocal(denom, approx=True)   # EUP slot, ~free
    return e / denom


def _mha(q_in, kv_in, wq, bq, wk, bk, wv, bv, wo, bo, *, n_heads, approx_recip):
    # q_in: (Sq, D) f32, kv_in: (Skv, D) f32.  Matmul operands cast to the
    # weight dtype (bf16 on the fast path); accumulation stays f32 on the MXU.
    sq, d = q_in.shape
    dk = d // n_heads
    cdt = wq.dtype
    scale = 1.0 / jnp.sqrt(jnp.float32(dk))

    qc = q_in.astype(cdt)
    kvc = kv_in.astype(cdt)
    q = jnp.dot(qc, wq, preferred_element_type=jnp.float32) + bq
    k = jnp.dot(kvc, wk, preferred_element_type=jnp.float32) + bk
    v = jnp.dot(kvc, wv, preferred_element_type=jnp.float32) + bv

    # Per-head attention with the output projection folded into a running f32
    # accumulator: no concat of head outputs along the lane axis, only one
    # (Sq, D) accumulator stays live.
    acc = jnp.zeros((sq, wo.shape[1]), jnp.float32)
    for h in range(n_heads):
        lo, hi = h * dk, (h + 1) * dk
        qh = q[:, lo:hi].astype(cdt)
        kh = k[:, lo:hi].astype(cdt)
        vh = v[:, lo:hi].astype(cdt)
        s = jnp.dot(qh, kh.T, preferred_element_type=jnp.float32) * scale
        p = _softmax_last(s, approx_recip)
        oh = jnp.dot(p.astype(cdt), vh, preferred_element_type=jnp.float32)
        acc = acc + jnp.dot(oh.astype(cdt), wo[lo:hi, :],
                            preferred_element_type=jnp.float32)
    return acc + bo


# --------------------------------- the kernel ---------------------------------

def decoder_layer_kernel(
    xq_ref, xf_ref, m_ref,
    sa_wq, sa_bq, sa_wk, sa_bk, sa_wv, sa_bv, sa_wo, sa_bo,
    ca_wq, ca_bq, ca_wk, ca_bk, ca_wv, ca_bv, ca_wo, ca_bo,
    ff_w1, ff_b1, ff_w2, ff_b2,
    ln0_a, ln0_b, ln1_a, ln1_b, ln2_a, ln2_b,
    o_ref, *, n_heads, approx_recip, single_tile,
):
    # Blocks are squeezed to 2-D: xq (Ts, D) = this grid step's query rows /
    # residual stream, xf (S, D) = full target sequence (self-attn K/V),
    # m (Sm, D) = encoder memory.
    xq = xq_ref[...].astype(jnp.float32)
    mem = m_ref[...].astype(jnp.float32)

    # sublayer[0]: x = x + dropout(self_attn(norm(x), norm(x), norm(x)))
    hq = _layer_norm(xq, ln0_a[...], ln0_b[...])
    if single_tile:
        hk = hq                                   # tile == full sequence
    else:
        xf = xf_ref[...].astype(jnp.float32)
        hk = _layer_norm(xf, ln0_a[...], ln0_b[...])
    xq = xq + _mha(hq, hk,
                   sa_wq[...], sa_bq[...], sa_wk[...], sa_bk[...],
                   sa_wv[...], sa_bv[...], sa_wo[...], sa_bo[...],
                   n_heads=n_heads, approx_recip=approx_recip)

    # sublayer[1]: x = x + dropout(src_attn(norm(x), m, m))
    hq = _layer_norm(xq, ln1_a[...], ln1_b[...])
    xq = xq + _mha(hq, mem,
                   ca_wq[...], ca_bq[...], ca_wk[...], ca_bk[...],
                   ca_wv[...], ca_bv[...], ca_wo[...], ca_bo[...],
                   n_heads=n_heads, approx_recip=approx_recip)

    # sublayer[2]: x = x + dropout(W2 @ relu(W1 @ norm(x) + b1) + b2)
    h = _layer_norm(xq, ln2_a[...], ln2_b[...])
    w1 = ff_w1[...]
    w2 = ff_w2[...]
    cdt = w1.dtype
    hid = jnp.maximum(
        jnp.dot(h.astype(cdt), w1, preferred_element_type=jnp.float32) + ff_b1[...],
        0.0)
    xq = xq + jnp.dot(hid.astype(cdt), w2,
                      preferred_element_type=jnp.float32) + ff_b2[...]

    o_ref[...] = xq.astype(o_ref.dtype)


# ----------------------------------- wrapper -----------------------------------

_MATMUL_WEIGHT_KEYS = frozenset({
    "sa_wq", "sa_wk", "sa_wv", "sa_wo",
    "ca_wq", "ca_wk", "ca_wv", "ca_wo",
    "ff_w1", "ff_w2",
})

_WEIGHT_ORDER = (
    "sa_wq", "sa_bq", "sa_wk", "sa_bk", "sa_wv", "sa_bv", "sa_wo", "sa_bo",
    "ca_wq", "ca_bq", "ca_wk", "ca_bk", "ca_wv", "ca_bv", "ca_wo", "ca_bo",
    "ff_w1", "ff_b1", "ff_w2", "ff_b2",
    "ln0_a", "ln0_b", "ln1_a", "ln1_b", "ln2_a", "ln2_b",
)


def decoder_layer(x, m, params, *, n_heads, compute_dtype=jnp.bfloat16,
                  block_s=None):
    """Pre-norm decoder layer forward.  x: (B,S,D), m: (B,Sm,D) -> (B,S,D)."""
    B, S, D = x.shape
    _, Sm, _ = m.shape

    # Sequence tiling for queries / residual stream / FFN; self-attn K/V read
    # the full target sequence block (row-independent pre-norm makes this exact).
    if block_s is None:
        block_s = min(S, 128)
    if S % block_s != 0:
        block_s = S
    n_s_tiles = S // block_s
    single_tile = n_s_tiles == 1

    weights = [
        params[k].astype(compute_dtype) if k in _MATMUL_WEIGHT_KEYS
        else params[k].astype(jnp.float32)
        for k in _WEIGHT_ORDER
    ]
    approx_recip = compute_dtype != jnp.float32

    kernel = functools.partial(decoder_layer_kernel, n_heads=n_heads,
                               approx_recip=approx_recip,
                               single_tile=single_tile)

    def build(single_buffer_weights):
        def wspec(arr):
            kw = {}
            if single_buffer_weights:
                # Weight block index never changes across the grid: single-
                # buffer it so VMEM isn't wasted on a second pipeline copy.
                kw["pipeline_mode"] = pl.Buffered(1)
            return pl.BlockSpec(arr.shape, lambda b, si: (0, 0), **kw)

        in_specs = [
            pl.BlockSpec((None, block_s, D), lambda b, si: (b, si, 0)),  # x (q rows)
            pl.BlockSpec((None, S, D), lambda b, si: (b, 0, 0)),         # x (self-attn K/V)
            pl.BlockSpec((None, Sm, D), lambda b, si: (b, 0, 0)),        # m
        ] + [wspec(w) for w in weights]

        return pl.pallas_call(
            kernel,
            out_shape=jax.ShapeDtypeStruct((B, S, D), x.dtype),
            grid=(B, n_s_tiles),
            in_specs=in_specs,
            out_specs=pl.BlockSpec((None, block_s, D), lambda b, si: (b, si, 0)),
            compiler_params=pltpu.CompilerParams(
                dimension_semantics=("parallel", "parallel"),
                vmem_limit_bytes=64 * 1024 * 1024),
        )

    try:
        return build(single_buffer_weights=True)(x, x, m, *weights)
    except Exception:
        # Some jax versions reject pl.Buffered(1) on pallas_call BlockSpecs;
        # fall back to default double-buffered weights (identical results).
        return build(single_buffer_weights=False)(x, x, m, *weights)


# ------------------------------ pure-JAX reference ------------------------------

def _ref_forward(x, m, p, n_heads):
    def ln(v, a, b):
        d = v.shape[-1]
        mean = jnp.mean(v, -1, keepdims=True)
        std = jnp.sqrt(jnp.sum((v - mean) ** 2, -1, keepdims=True) / (d - 1))
        return a * (v - mean) / (std + EPS) + b

    def mha(q_in, kv_in, pre):
        B, Sq, D = q_in.shape
        Skv = kv_in.shape[1]
        dk = D // n_heads
        q = (q_in @ p[pre + "wq"] + p[pre + "bq"]).reshape(B, Sq, n_heads, dk).transpose(0, 2, 1, 3)
        k = (kv_in @ p[pre + "wk"] + p[pre + "bk"]).reshape(B, Skv, n_heads, dk).transpose(0, 2, 1, 3)
        v = (kv_in @ p[pre + "wv"] + p[pre + "bv"]).reshape(B, Skv, n_heads, dk).transpose(0, 2, 1, 3)
        s = jnp.einsum("bhqd,bhkd->bhqk", q, k) / jnp.sqrt(jnp.float32(dk))
        w = jax.nn.softmax(s, axis=-1)
        o = jnp.einsum("bhqk,bhkd->bhqd", w, v).transpose(0, 2, 1, 3).reshape(B, Sq, D)
        return o @ p[pre + "wo"] + p[pre + "bo"]

    x = x + mha(ln(x, p["ln0_a"], p["ln0_b"]), ln(x, p["ln0_a"], p["ln0_b"]), "sa_")
    x = x + mha(ln(x, p["ln1_a"], p["ln1_b"]), m, "ca_")
    h = ln(x, p["ln2_a"], p["ln2_b"])
    x = x + jnp.maximum(h @ p["ff_w1"] + p["ff_b1"], 0.0) @ p["ff_w2"] + p["ff_b2"]
    return x


# ------------------------------------- main -------------------------------------

if __name__ == "__main__":
    # Small shapes; D and F are multiples of 128 so vregs / stores are lane-dense.
    B, S, Sm, D, H, F = 2, 8, 16, 128, 4, 512

    key = jax.random.PRNGKey(0)
    keys = jax.random.split(key, 32)
    ki = iter(keys)

    def w(shape, scale):
        return jax.random.normal(next(ki), shape, jnp.float32) * scale

    params = {}
    for pre in ("sa_", "ca_"):
        for name in ("wq", "wk", "wv", "wo"):
            params[pre + name] = w((D, D), 1.0 / jnp.sqrt(D))
        for name in ("bq", "bk", "bv", "bo"):
            params[pre + name] = w((1, D), 0.02)
    params["ff_w1"] = w((D, F), 1.0 / jnp.sqrt(D))
    params["ff_b1"] = w((1, F), 0.02)
    params["ff_w2"] = w((F, D), 1.0 / jnp.sqrt(F))
    params["ff_b2"] = w((1, D), 0.02)
    for i in range(3):
        params[f"ln{i}_a"] = jnp.ones((1, D), jnp.float32)
        params[f"ln{i}_b"] = jnp.zeros((1, D), jnp.float32)

    x = jax.random.normal(next(ki), (B, S, D), jnp.float32)
    m = jax.random.normal(next(ki), (B, Sm, D), jnp.float32)

    ref = _ref_forward(x, m, params, H)

    # Strict check: pure-f32 path (exact eval-mode semantics of the module).
    out_f32 = jax.block_until_ready(
        decoder_layer(x, m, params, n_heads=H, compute_dtype=jnp.float32))
    if not jnp.allclose(out_f32, ref, atol=1e-4, rtol=1e-4):
        raise AssertionError("f32 Pallas kernel output does not match JAX reference")

    # Fast path: bf16 matmul operands (f32 accumulation) + approx softmax recip.
    out_bf16 = jax.block_until_ready(
        decoder_layer(x, m, params, n_heads=H, compute_dtype=jnp.bfloat16))
    if not jnp.allclose(out_bf16, ref, atol=1e-1, rtol=5e-2):
        raise AssertionError("bf16 Pallas kernel deviates too far from reference")

    print("KERNEL_OK")
</pallas_src>

<mosaic_0001>
module attributes {stable_mosaic.version = 11 : i64} {
  func.func @decoder_layer_kernel(%arg0: i32, %arg1: i32, %arg2: memref<1x8x128xf32, #tpu.memory_space<vmem>>, %arg3: memref<1x8x128xf32, #tpu.memory_space<vmem>>, %arg4: memref<1x16x128xf32, #tpu.memory_space<vmem>>, %arg5: memref<128x128xf32, #tpu.memory_space<vmem>>, %arg6: memref<1x128xf32, #tpu.memory_space<vmem>>, %arg7: memref<128x128xf32, #tpu.memory_space<vmem>>, %arg8: memref<1x128xf32, #tpu.memory_space<vmem>>, %arg9: memref<128x128xf32, #tpu.memory_space<vmem>>, %arg10: memref<1x128xf32, #tpu.memory_space<vmem>>, %arg11: memref<128x128xf32, #tpu.memory_space<vmem>>, %arg12: memref<1x128xf32, #tpu.memory_space<vmem>>, %arg13: memref<128x128xf32, #tpu.memory_space<vmem>>, %arg14: memref<1x128xf32, #tpu.memory_space<vmem>>, %arg15: memref<128x128xf32, #tpu.memory_space<vmem>>, %arg16: memref<1x128xf32, #tpu.memory_space<vmem>>, %arg17: memref<128x128xf32, #tpu.memory_space<vmem>>, %arg18: memref<1x128xf32, #tpu.memory_space<vmem>>, %arg19: memref<128x128xf32, #tpu.memory_space<vmem>>, %arg20: memref<1x128xf32, #tpu.memory_space<vmem>>, %arg21: memref<128x512xf32, #tpu.memory_space<vmem>>, %arg22: memref<1x512xf32, #tpu.memory_space<vmem>>, %arg23: memref<512x128xf32, #tpu.memory_space<vmem>>, %arg24: memref<1x128xf32, #tpu.memory_space<vmem>>, %arg25: memref<1x128xf32, #tpu.memory_space<vmem>>, %arg26: memref<1x128xf32, #tpu.memory_space<vmem>>, %arg27: memref<1x128xf32, #tpu.memory_space<vmem>>, %arg28: memref<1x128xf32, #tpu.memory_space<vmem>>, %arg29: memref<1x128xf32, #tpu.memory_space<vmem>>, %arg30: memref<1x128xf32, #tpu.memory_space<vmem>>, %arg31: memref<1x8x128xf32, #tpu.memory_space<vmem>>) attributes {dimension_semantics = [#tpu.dimension_semantics<parallel>, #tpu.dimension_semantics<parallel>], iteration_bounds = array<i64: 2, 1>, scalar_prefetch = 0 : i64, scratch_operands = 0 : i64, tpu.core_type = #tpu.core_type<tc>, window_params = [{transform_indices = @transform_0, window_bounds = array<i64: 1, 8, 128>}, {transform_indices = @transform_1, window_bounds = array<i64: 1, 8, 128>}, {transform_indices = @transform_2, window_bounds = array<i64: 1, 16, 128>}, {pipeline_mode = #tpu.pipeline_mode<synchronous>, transform_indices = @transform_3, window_bounds = array<i64: 128, 128>}, {pipeline_mode = #tpu.pipeline_mode<synchronous>, transform_indices = @transform_4, window_bounds = array<i64: 1, 128>}, {pipeline_mode = #tpu.pipeline_mode<synchronous>, transform_indices = @transform_5, window_bounds = array<i64: 128, 128>}, {pipeline_mode = #tpu.pipeline_mode<synchronous>, transform_indices = @transform_6, window_bounds = array<i64: 1, 128>}, {pipeline_mode = #tpu.pipeline_mode<synchronous>, transform_indices = @transform_7, window_bounds = array<i64: 128, 128>}, {pipeline_mode = #tpu.pipeline_mode<synchronous>, transform_indices = @transform_8, window_bounds = array<i64: 1, 128>}, {pipeline_mode = #tpu.pipeline_mode<synchronous>, transform_indices = @transform_9, window_bounds = array<i64: 128, 128>}, {pipeline_mode = #tpu.pipeline_mode<synchronous>, transform_indices = @transform_10, window_bounds = array<i64: 1, 128>}, {pipeline_mode = #tpu.pipeline_mode<synchronous>, transform_indices = @transform_11, window_bounds = array<i64: 128, 128>}, {pipeline_mode = #tpu.pipeline_mode<synchronous>, transform_indices = @transform_12, window_bounds = array<i64: 1, 128>}, {pipeline_mode = #tpu.pipeline_mode<synchronous>, transform_indices = @transform_13, window_bounds = array<i64: 128, 128>}, {pipeline_mode = #tpu.pipeline_mode<synchronous>, transform_indices = @transform_14, window_bounds = array<i64: 1, 128>}, {pipeline_mode = #tpu.pipeline_mode<synchronous>, transform_indices = @transform_15, window_bounds = array<i64: 128, 128>}, {pipeline_mode = #tpu.pipeline_mode<synchronous>, transform_indices = @transform_16, window_bounds = array<i64: 1, 128>}, {pipeline_mode = #tpu.pipeline_mode<synchronous>, transform_indices = @transform_17, window_bounds = array<i64: 128, 128>}, {pipeline_mode = #tpu.pipeline_mode<synchronous>, transform_indices = @transform_18, window_bounds = array<i64: 1, 128>}, {pipeline_mode = #tpu.pipeline_mode<synchronous>, transform_indices = @transform_19, window_bounds = array<i64: 128, 512>}, {pipeline_mode = #tpu.pipeline_mode<synchronous>, transform_indices = @transform_20, window_bounds = array<i64: 1, 512>}, {pipeline_mode = #tpu.pipeline_mode<synchronous>, transform_indices = @transform_21, window_bounds = array<i64: 512, 128>}, {pipeline_mode = #tpu.pipeline_mode<synchronous>, transform_indices = @transform_22, window_bounds = array<i64: 1, 128>}, {pipeline_mode = #tpu.pipeline_mode<synchronous>, transform_indices = @transform_23, window_bounds = array<i64: 1, 128>}, {pipeline_mode = #tpu.pipeline_mode<synchronous>, transform_indices = @transform_24, window_bounds = array<i64: 1, 128>}, {pipeline_mode = #tpu.pipeline_mode<synchronous>, transform_indices = @transform_25, window_bounds = array<i64: 1, 128>}, {pipeline_mode = #tpu.pipeline_mode<synchronous>, transform_indices = @transform_26, window_bounds = array<i64: 1, 128>}, {pipeline_mode = #tpu.pipeline_mode<synchronous>, transform_indices = @transform_27, window_bounds = array<i64: 1, 128>}, {pipeline_mode = #tpu.pipeline_mode<synchronous>, transform_indices = @transform_28, window_bounds = array<i64: 1, 128>}, {transform_indices = @transform_29, window_bounds = array<i64: 1, 8, 128>}]} {
    %c0 = arith.constant 0 : index
    %c0_0 = arith.constant 0 : index
    %c0_1 = arith.constant 0 : index
    %0 = vector.load %arg2[%c0, %c0_0, %c0_1] : memref<1x8x128xf32, #tpu.memory_space<vmem>>, vector<1x8x128xf32>
    %1 = vector.shape_cast %0 : vector<1x8x128xf32> to vector<8x128xf32>
    %c0_2 = arith.constant 0 : index
    %c0_3 = arith.constant 0 : index
    %c0_4 = arith.constant 0 : index
    %2 = vector.load %arg4[%c0_2, %c0_3, %c0_4] : memref<1x16x128xf32, #tpu.memory_space<vmem>>, vector<1x16x128xf32>
    %3 = vector.shape_cast %2 : vector<1x16x128xf32> to vector<16x128xf32>
    %c0_5 = arith.constant 0 : index
    %c0_6 = arith.constant 0 : index
    %4 = vector.load %arg25[%c0_5, %c0_6] : memref<1x128xf32, #tpu.memory_space<vmem>>, vector<1x128xf32>
    %c0_7 = arith.constant 0 : index
    %c0_8 = arith.constant 0 : index
    %5 = vector.load %arg26[%c0_7, %c0_8] : memref<1x128xf32, #tpu.memory_space<vmem>>, vector<1x128xf32>
    %cst = arith.constant dense<0.000000e+00> : vector<8xf32>
    %6 = vector.multi_reduction <add>, %1, %cst [1] : vector<8x128xf32> to vector<8xf32>
    %7 = vector.shape_cast %6 : vector<8xf32> to vector<8x1xf32>
    %cst_9 = arith.constant 1.280000e+02 : f32
    %8 = vector.broadcast %cst_9 : f32 to vector<8x1xf32>
    %9 = arith.divf %7, %8 : vector<8x1xf32>
    %10 = vector.broadcast %9 : vector<8x1xf32> to vector<8x128xf32>
    %11 = arith.subf %1, %10 : vector<8x128xf32>
    %12 = arith.mulf %11, %11 : vector<8x128xf32>
    %cst_10 = arith.constant dense<0.000000e+00> : vector<8xf32>
    %13 = vector.multi_reduction <add>, %12, %cst_10 [1] : vector<8x128xf32> to vector<8xf32>
    %14 = vector.shape_cast %13 : vector<8xf32> to vector<8x1xf32>
    %cst_11 = arith.constant 1.270000e+02 : f32
    %15 = vector.broadcast %cst_11 : f32 to vector<8x1xf32>
    %16 = arith.divf %14, %15 : vector<8x1xf32>
    %17 = math.sqrt %16 : vector<8x1xf32>
    %18 = vector.broadcast %9 : vector<8x1xf32> to vector<8x128xf32>
    %19 = arith.subf %1, %18 : vector<8x128xf32>
    %20 = vector.broadcast %4 : vector<1x128xf32> to vector<8x128xf32>
    %21 = arith.mulf %20, %19 : vector<8x128xf32>
    %cst_12 = arith.constant 9.99999997E-7 : f32
    %22 = vector.broadcast %cst_12 : f32 to vector<8x1xf32>
    %23 = arith.addf %17, %22 : vector<8x1xf32>
    %24 = vector.broadcast %23 : vector<8x1xf32> to vector<8x128xf32>
    %25 = arith.divf %21, %24 : vector<8x128xf32>
    %26 = vector.broadcast %5 : vector<1x128xf32> to vector<8x128xf32>
    %27 = arith.addf %25, %26 : vector<8x128xf32>
    %c0_13 = arith.constant 0 : index
    %c0_14 = arith.constant 0 : index
    %28 = vector.load %arg5[%c0_13, %c0_14] : memref<128x128xf32, #tpu.memory_space<vmem>>, vector<128x128xf32>
    %c0_15 = arith.constant 0 : index
    %c0_16 = arith.constant 0 : index
    %29 = vector.load %arg6[%c0_15, %c0_16] : memref<1x128xf32, #tpu.memory_space<vmem>>, vector<1x128xf32>
    %c0_17 = arith.constant 0 : index
    %c0_18 = arith.constant 0 : index
    %30 = vector.load %arg7[%c0_17, %c0_18] : memref<128x128xf32, #tpu.memory_space<vmem>>, vector<128x128xf32>
    %c0_19 = arith.constant 0 : index
    %c0_20 = arith.constant 0 : index
    %31 = vector.load %arg8[%c0_19, %c0_20] : memref<1x128xf32, #tpu.memory_space<vmem>>, vector<1x128xf32>
    %c0_21 = arith.constant 0 : index
    %c0_22 = arith.constant 0 : index
    %32 = vector.load %arg9[%c0_21, %c0_22] : memref<128x128xf32, #tpu.memory_space<vmem>>, vector<128x128xf32>
    %c0_23 = arith.constant 0 : index
    %c0_24 = arith.constant 0 : index
    %33 = vector.load %arg10[%c0_23, %c0_24] : memref<1x128xf32, #tpu.memory_space<vmem>>, vector<1x128xf32>
    %c0_25 = arith.constant 0 : index
    %c0_26 = arith.constant 0 : index
    %34 = vector.load %arg11[%c0_25, %c0_26] : memref<128x128xf32, #tpu.memory_space<vmem>>, vector<128x128xf32>
    %c0_27 = arith.constant 0 : index
    %c0_28 = arith.constant 0 : index
    %35 = vector.load %arg12[%c0_27, %c0_28] : memref<1x128xf32, #tpu.memory_space<vmem>>, vector<1x128xf32>
    %cst_29 = arith.constant 3.200000e+01 : f32
    %36 = math.sqrt %cst_29 : f32
    %cst_30 = arith.constant 1.000000e+00 : f32
    %37 = arith.divf %cst_30, %36 : f32
    %cst_31 = arith.constant dense<0.000000e+00> : vector<8x128xf32>
    %38 = tpu.matmul %27, %28, %cst_31 {dimension_numbers = #tpu.dot_dimension_numbers<[1], [0], [0], [1], [0, 0, 1, 1], [], []>} : vector<8x128xf32>, vector<128x128xf32>, vector<8x128xf32> -> vector<8x128xf32>
    %39 = vector.broadcast %29 : vector<1x128xf32> to vector<8x128xf32>
    %40 = arith.addf %38, %39 : vector<8x128xf32>
    %cst_32 = arith.constant dense<0.000000e+00> : vector<8x128xf32>
    %41 = tpu.matmul %27, %30, %cst_32 {dimension_numbers = #tpu.dot_dimension_numbers<[1], [0], [0], [1], [0, 0, 1, 1], [], []>} : vector<8x128xf32>, vector<128x128xf32>, vector<8x128xf32> -> vector<8x128xf32>
    %42 = vector.broadcast %31 : vector<1x128xf32> to vector<8x128xf32>
    %43 = arith.addf %41, %42 : vector<8x128xf32>
    %cst_33 = arith.constant dense<0.000000e+00> : vector<8x128xf32>
    %44 = tpu.matmul %27, %32, %cst_33 {dimension_numbers = #tpu.dot_dimension_numbers<[1], [0], [0], [1], [0, 0, 1, 1], [], []>} : vector<8x128xf32>, vector<128x128xf32>, vector<8x128xf32> -> vector<8x128xf32>
    %45 = vector.broadcast %33 : vector<1x128xf32> to vector<8x128xf32>
    %46 = arith.addf %44, %45 : vector<8x128xf32>
    %cst_34 = arith.constant 0.000000e+00 : f32
    %47 = vector.broadcast %cst_34 : f32 to vector<8x128xf32>
    %48 = vector.extract_strided_slice %40 {offsets = [0, 0], sizes = [8, 32], strides = [1, 1]} : vector<8x128xf32> to vector<8x32xf32>
    %49 = vector.extract_strided_slice %43 {offsets = [0, 0], sizes = [8, 32], strides = [1, 1]} : vector<8x128xf32> to vector<8x32xf32>
    %50 = vector.extract_strided_slice %46 {offsets = [0, 0], sizes = [8, 32], strides = [1, 1]} : vector<8x128xf32> to vector<8x32xf32>
    %51 = tpu.transpose %49, [1, 0] : vector<8x32xf32> -> vector<32x8xf32>
    %cst_35 = arith.constant dense<0.000000e+00> : vector<8x8xf32>
    %52 = tpu.matmul %48, %51, %cst_35 {dimension_numbers = #tpu.dot_dimension_numbers<[1], [0], [0], [1], [0, 0, 1, 1], [], []>} : vector<8x32xf32>, vector<32x8xf32>, vector<8x8xf32> -> vector<8x8xf32>
    %53 = vector.broadcast %37 : f32 to vector<8x8xf32>
    %54 = arith.mulf %52, %53 : vector<8x8xf32>
    %cst_36 = arith.constant dense<0xFF800000> : vector<8xf32>
    %55 = vector.multi_reduction <maximumf>, %54, %cst_36 [1] : vector<8x8xf32> to vector<8xf32>
    %56 = vector.shape_cast %55 : vector<8xf32> to vector<8x1xf32>
    %57 = vector.broadcast %56 : vector<8x1xf32> to vector<8x8xf32>
    %58 = arith.subf %54, %57 : vector<8x8xf32>
    %59 = math.exp %58 : vector<8x8xf32>
    %cst_37 = arith.constant dense<0.000000e+00> : vector<8xf32>
    %60 = vector.multi_reduction <add>, %59, %cst_37 [1] : vector<8x8xf32> to vector<8xf32>
    %61 = vector.shape_cast %60 : vector<8xf32> to vector<8x1xf32>
    %62 = vector.broadcast %61 : vector<8x1xf32> to vector<8x8xf32>
    %63 = arith.divf %59, %62 : vector<8x8xf32>
    %cst_38 = arith.constant dense<0.000000e+00> : vector<8x32xf32>
    %64 = tpu.matmul %63, %50, %cst_38 {dimension_numbers = #tpu.dot_dimension_numbers<[1], [0], [0], [1], [0, 0, 1, 1], [], []>} : vector<8x8xf32>, vector<8x32xf32>, vector<8x32xf32> -> vector<8x32xf32>
    %65 = vector.extract_strided_slice %34 {offsets = [0, 0], sizes = [32, 128], strides = [1, 1]} : vector<128x128xf32> to vector<32x128xf32>
    %cst_39 = arith.constant dense<0.000000e+00> : vector<8x128xf32>
    %66 = tpu.matmul %64, %65, %cst_39 {dimension_numbers = #tpu.dot_dimension_numbers<[1], [0], [0], [1], [0, 0, 1, 1], [], []>} : vector<8x32xf32>, vector<32x128xf32>, vector<8x128xf32> -> vector<8x128xf32>
    %67 = arith.addf %47, %66 : vector<8x128xf32>
    %68 = vector.extract_strided_slice %40 {offsets = [0, 32], sizes = [8, 32], strides = [1, 1]} : vector<8x128xf32> to vector<8x32xf32>
    %69 = vector.extract_strided_slice %43 {offsets = [0, 32], sizes = [8, 32], strides = [1, 1]} : vector<8x128xf32> to vector<8x32xf32>
    %70 = vector.extract_strided_slice %46 {offsets = [0, 32], sizes = [8, 32], strides = [1, 1]} : vector<8x128xf32> to vector<8x32xf32>
    %71 = tpu.transpose %69, [1, 0] : vector<8x32xf32> -> vector<32x8xf32>
    %cst_40 = arith.constant dense<0.000000e+00> : vector<8x8xf32>
    %72 = tpu.matmul %68, %71, %cst_40 {dimension_numbers = #tpu.dot_dimension_numbers<[1], [0], [0], [1], [0, 0, 1, 1], [], []>} : vector<8x32xf32>, vector<32x8xf32>, vector<8x8xf32> -> vector<8x8xf32>
    %73 = vector.broadcast %37 : f32 to vector<8x8xf32>
    %74 = arith.mulf %72, %73 : vector<8x8xf32>
    %cst_41 = arith.constant dense<0xFF800000> : vector<8xf32>
    %75 = vector.multi_reduction <maximumf>, %74, %cst_41 [1] : vector<8x8xf32> to vector<8xf32>
    %76 = vector.shape_cast %75 : vector<8xf32> to vector<8x1xf32>
    %77 = vector.broadcast %76 : vector<8x1xf32> to vector<8x8xf32>
    %78 = arith.subf %74, %77 : vector<8x8xf32>
    %79 = math.exp %78 : vector<8x8xf32>
    %cst_42 = arith.constant dense<0.000000e+00> : vector<8xf32>
    %80 = vector.multi_reduction <add>, %79, %cst_42 [1] : vector<8x8xf32> to vector<8xf32>
    %81 = vector.shape_cast %80 : vector<8xf32> to vector<8x1xf32>
    %82 = vector.broadcast %81 : vector<8x1xf32> to vector<8x8xf32>
    %83 = arith.divf %79, %82 : vector<8x8xf32>
    %cst_43 = arith.constant dense<0.000000e+00> : vector<8x32xf32>
    %84 = tpu.matmul %83, %70, %cst_43 {dimension_numbers = #tpu.dot_dimension_numbers<[1], [0], [0], [1], [0, 0, 1, 1], [], []>} : vector<8x8xf32>, vector<8x32xf32>, vector<8x32xf32> -> vector<8x32xf32>
    %85 = vector.extract_strided_slice %34 {offsets = [32, 0], sizes = [32, 128], strides = [1, 1]} : vector<128x128xf32> to vector<32x128xf32>
    %cst_44 = arith.constant dense<0.000000e+00> : vector<8x128xf32>
    %86 = tpu.matmul %84, %85, %cst_44 {dimension_numbers = #tpu.dot_dimension_numbers<[1], [0], [0], [1], [0, 0, 1, 1], [], []>} : vector<8x32xf32>, vector<32x128xf32>, vector<8x128xf32> -> vector<8x128xf32>
    %87 = arith.addf %67, %86 : vector<8x128xf32>
    %88 = vector.extract_strided_slice %40 {offsets = [0, 64], sizes = [8, 32], strides = [1, 1]} : vector<8x128xf32> to vector<8x32xf32>
    %89 = vector.extract_strided_slice %43 {offsets = [0, 64], sizes = [8, 32], strides = [1, 1]} : vector<8x128xf32> to vector<8x32xf32>
    %90 = vector.extract_strided_slice %46 {offsets = [0, 64], sizes = [8, 32], strides = [1, 1]} : vector<8x128xf32> to vector<8x32xf32>
    %91 = tpu.transpose %89, [1, 0] : vector<8x32xf32> -> vector<32x8xf32>
    %cst_45 = arith.constant dense<0.000000e+00> : vector<8x8xf32>
    %92 = tpu.matmul %88, %91, %cst_45 {dimension_numbers = #tpu.dot_dimension_numbers<[1], [0], [0], [1], [0, 0, 1, 1], [], []>} : vector<8x32xf32>, vector<32x8xf32>, vector<8x8xf32> -> vector<8x8xf32>
    %93 = vector.broadcast %37 : f32 to vector<8x8xf32>
    %94 = arith.mulf %92, %93 : vector<8x8xf32>
    %cst_46 = arith.constant dense<0xFF800000> : vector<8xf32>
    %95 = vector.multi_reduction <maximumf>, %94, %cst_46 [1] : vector<8x8xf32> to vector<8xf32>
    %96 = vector.shape_cast %95 : vector<8xf32> to vector<8x1xf32>
    %97 = vector.broadcast %96 : vector<8x1xf32> to vector<8x8xf32>
    %98 = arith.subf %94, %97 : vector<8x8xf32>
    %99 = math.exp %98 : vector<8x8xf32>
    %cst_47 = arith.constant dense<0.000000e+00> : vector<8xf32>
    %100 = vector.multi_reduction <add>, %99, %cst_47 [1] : vector<8x8xf32> to vector<8xf32>
    %101 = vector.shape_cast %100 : vector<8xf32> to vector<8x1xf32>
    %102 = vector.broadcast %101 : vector<8x1xf32> to vector<8x8xf32>
    %103 = arith.divf %99, %102 : vector<8x8xf32>
    %cst_48 = arith.constant dense<0.000000e+00> : vector<8x32xf32>
    %104 = tpu.matmul %103, %90, %cst_48 {dimension_numbers = #tpu.dot_dimension_numbers<[1], [0], [0], [1], [0, 0, 1, 1], [], []>} : vector<8x8xf32>, vector<8x32xf32>, vector<8x32xf32> -> vector<8x32xf32>
    %105 = vector.extract_strided_slice %34 {offsets = [64, 0], sizes = [32, 128], strides = [1, 1]} : vector<128x128xf32> to vector<32x128xf32>
    %cst_49 = arith.constant dense<0.000000e+00> : vector<8x128xf32>
    %106 = tpu.matmul %104, %105, %cst_49 {dimension_numbers = #tpu.dot_dimension_numbers<[1], [0], [0], [1], [0, 0, 1, 1], [], []>} : vector<8x32xf32>, vector<32x128xf32>, vector<8x128xf32> -> vector<8x128xf32>
    %107 = arith.addf %87, %106 : vector<8x128xf32>
    %108 = vector.extract_strided_slice %40 {offsets = [0, 96], sizes = [8, 32], strides = [1, 1]} : vector<8x128xf32> to vector<8x32xf32>
    %109 = vector.extract_strided_slice %43 {offsets = [0, 96], sizes = [8, 32], strides = [1, 1]} : vector<8x128xf32> to vector<8x32xf32>
    %110 = vector.extract_strided_slice %46 {offsets = [0, 96], sizes = [8, 32], strides = [1, 1]} : vector<8x128xf32> to vector<8x32xf32>
    %111 = tpu.transpose %109, [1, 0] : vector<8x32xf32> -> vector<32x8xf32>
    %cst_50 = arith.constant dense<0.000000e+00> : vector<8x8xf32>
    %112 = tpu.matmul %108, %111, %cst_50 {dimension_numbers = #tpu.dot_dimension_numbers<[1], [0], [0], [1], [0, 0, 1, 1], [], []>} : vector<8x32xf32>, vector<32x8xf32>, vector<8x8xf32> -> vector<8x8xf32>
    %113 = vector.broadcast %37 : f32 to vector<8x8xf32>
    %114 = arith.mulf %112, %113 : vector<8x8xf32>
    %cst_51 = arith.constant dense<0xFF800000> : vector<8xf32>
    %115 = vector.multi_reduction <maximumf>, %114, %cst_51 [1] : vector<8x8xf32> to vector<8xf32>
    %116 = vector.shape_cast %115 : vector<8xf32> to vector<8x1xf32>
    %117 = vector.broadcast %116 : vector<8x1xf32> to vector<8x8xf32>
    %118 = arith.subf %114, %117 : vector<8x8xf32>
    %119 = math.exp %118 : vector<8x8xf32>
    %cst_52 = arith.constant dense<0.000000e+00> : vector<8xf32>
    %120 = vector.multi_reduction <add>, %119, %cst_52 [1] : vector<8x8xf32> to vector<8xf32>
    %121 = vector.shape_cast %120 : vector<8xf32> to vector<8x1xf32>
    %122 = vector.broadcast %121 : vector<8x1xf32> to vector<8x8xf32>
    %123 = arith.divf %119, %122 : vector<8x8xf32>
    %cst_53 = arith.constant dense<0.000000e+00> : vector<8x32xf32>
    %124 = tpu.matmul %123, %110, %cst_53 {dimension_numbers = #tpu.dot_dimension_numbers<[1], [0], [0], [1], [0, 0, 1, 1], [], []>} : vector<8x8xf32>, vector<8x32xf32>, vector<8x32xf32> -> vector<8x32xf32>
    %125 = vector.extract_strided_slice %34 {offsets = [96, 0], sizes = [32, 128], strides = [1, 1]} : vector<128x128xf32> to vector<32x128xf32>
    %cst_54 = arith.constant dense<0.000000e+00> : vector<8x128xf32>
    %126 = tpu.matmul %124, %125, %cst_54 {dimension_numbers = #tpu.dot_dimension_numbers<[1], [0], [0], [1], [0, 0, 1, 1], [], []>} : vector<8x32xf32>, vector<32x128xf32>, vector<8x128xf32> -> vector<8x128xf32>
    %127 = arith.addf %107, %126 : vector<8x128xf32>
    %128 = vector.broadcast %35 : vector<1x128xf32> to vector<8x128xf32>
    %129 = arith.addf %127, %128 : vector<8x128xf32>
    %130 = arith.addf %1, %129 : vector<8x128xf32>
    %c0_55 = arith.constant 0 : index
    %c0_56 = arith.constant 0 : index
    %131 = vector.load %arg27[%c0_55, %c0_56] : memref<1x128xf32, #tpu.memory_space<vmem>>, vector<1x128xf32>
    %c0_57 = arith.constant 0 : index
    %c0_58 = arith.constant 0 : index
    %132 = vector.load %arg28[%c0_57, %c0_58] : memref<1x128xf32, #tpu.memory_space<vmem>>, vector<1x128xf32>
    %cst_59 = arith.constant dense<0.000000e+00> : vector<8xf32>
    %133 = vector.multi_reduction <add>, %130, %cst_59 [1] : vector<8x128xf32> to vector<8xf32>
    %134 = vector.shape_cast %133 : vector<8xf32> to vector<8x1xf32>
    %cst_60 = arith.constant 1.280000e+02 : f32
    %135 = vector.broadcast %cst_60 : f32 to vector<8x1xf32>
    %136 = arith.divf %134, %135 : vector<8x1xf32>
    %137 = vector.broadcast %136 : vector<8x1xf32> to vector<8x128xf32>
    %138 = arith.subf %130, %137 : vector<8x128xf32>
    %139 = arith.mulf %138, %138 : vector<8x128xf32>
    %cst_61 = arith.constant dense<0.000000e+00> : vector<8xf32>
    %140 = vector.multi_reduction <add>, %139, %cst_61 [1] : vector<8x128xf32> to vector<8xf32>
    %141 = vector.shape_cast %140 : vector<8xf32> to vector<8x1xf32>
    %cst_62 = arith.constant 1.270000e+02 : f32
    %142 = vector.broadcast %cst_62 : f32 to vector<8x1xf32>
    %143 = arith.divf %141, %142 : vector<8x1xf32>
    %144 = math.sqrt %143 : vector<8x1xf32>
    %145 = vector.broadcast %136 : vector<8x1xf32> to vector<8x128xf32>
    %146 = arith.subf %130, %145 : vector<8x128xf32>
    %147 = vector.broadcast %131 : vector<1x128xf32> to vector<8x128xf32>
    %148 = arith.mulf %147, %146 : vector<8x128xf32>
    %cst_63 = arith.constant 9.99999997E-7 : f32
    %149 = vector.broadcast %cst_63 : f32 to vector<8x1xf32>
    %150 = arith.addf %144, %149 : vector<8x1xf32>
    %151 = vector.broadcast %150 : vector<8x1xf32> to vector<8x128xf32>
    %152 = arith.divf %148, %151 : vector<8x128xf32>
    %153 = vector.broadcast %132 : vector<1x128xf32> to vector<8x128xf32>
    %154 = arith.addf %152, %153 : vector<8x128xf32>
    %c0_64 = arith.constant 0 : index
    %c0_65 = arith.constant 0 : index
    %155 = vector.load %arg13[%c0_64, %c0_65] : memref<128x128xf32, #tpu.memory_space<vmem>>, vector<128x128xf32>
    %c0_66 = arith.constant 0 : index
    %c0_67 = arith.constant 0 : index
    %156 = vector.load %arg14[%c0_66, %c0_67] : memref<1x128xf32, #tpu.memory_space<vmem>>, vector<1x128xf32>
    %c0_68 = arith.constant 0 : index
    %c0_69 = arith.constant 0 : index
    %157 = vector.load %arg15[%c0_68, %c0_69] : memref<128x128xf32, #tpu.memory_space<vmem>>, vector<128x128xf32>
    %c0_70 = arith.constant 0 : index
    %c0_71 = arith.constant 0 : index
    %158 = vector.load %arg16[%c0_70, %c0_71] : memref<1x128xf32, #tpu.memory_space<vmem>>, vector<1x128xf32>
    %c0_72 = arith.constant 0 : index
    %c0_73 = arith.constant 0 : index
    %159 = vector.load %arg17[%c0_72, %c0_73] : memref<128x128xf32, #tpu.memory_space<vmem>>, vector<128x128xf32>
    %c0_74 = arith.constant 0 : index
    %c0_75 = arith.constant 0 : index
    %160 = vector.load %arg18[%c0_74, %c0_75] : memref<1x128xf32, #tpu.memory_space<vmem>>, vector<1x128xf32>
    %c0_76 = arith.constant 0 : index
    %c0_77 = arith.constant 0 : index
    %161 = vector.load %arg19[%c0_76, %c0_77] : memref<128x128xf32, #tpu.memory_space<vmem>>, vector<128x128xf32>
    %c0_78 = arith.constant 0 : index
    %c0_79 = arith.constant 0 : index
    %162 = vector.load %arg20[%c0_78, %c0_79] : memref<1x128xf32, #tpu.memory_space<vmem>>, vector<1x128xf32>
    %cst_80 = arith.constant 3.200000e+01 : f32
    %163 = math.sqrt %cst_80 : f32
    %cst_81 = arith.constant 1.000000e+00 : f32
    %164 = arith.divf %cst_81, %163 : f32
    %cst_82 = arith.constant dense<0.000000e+00> : vector<8x128xf32>
    %165 = tpu.matmul %154, %155, %cst_82 {dimension_numbers = #tpu.dot_dimension_numbers<[1], [0], [0], [1], [0, 0, 1, 1], [], []>} : vector<8x128xf32>, vector<128x128xf32>, vector<8x128xf32> -> vector<8x128xf32>
    %166 = vector.broadcast %156 : vector<1x128xf32> to vector<8x128xf32>
    %167 = arith.addf %165, %166 : vector<8x128xf32>
    %cst_83 = arith.constant dense<0.000000e+00> : vector<16x128xf32>
    %168 = tpu.matmul %3, %157, %cst_83 {dimension_numbers = #tpu.dot_dimension_numbers<[1], [0], [0], [1], [0, 0, 1, 1], [], []>} : vector<16x128xf32>, vector<128x128xf32>, vector<16x128xf32> -> vector<16x128xf32>
    %169 = vector.broadcast %158 : vector<1x128xf32> to vector<16x128xf32>
    %170 = arith.addf %168, %169 : vector<16x128xf32>
    %cst_84 = arith.constant dense<0.000000e+00> : vector<16x128xf32>
    %171 = tpu.matmul %3, %159, %cst_84 {dimension_numbers = #tpu.dot_dimension_numbers<[1], [0], [0], [1], [0, 0, 1, 1], [], []>} : vector<16x128xf32>, vector<128x128xf32>, vector<16x128xf32> -> vector<16x128xf32>
    %172 = vector.broadcast %160 : vector<1x128xf32> to vector<16x128xf32>
    %173 = arith.addf %171, %172 : vector<16x128xf32>
    %cst_85 = arith.constant 0.000000e+00 : f32
    %174 = vector.broadcast %cst_85 : f32 to vector<8x128xf32>
    %175 = vector.extract_strided_slice %167 {offsets = [0, 0], sizes = [8, 32], strides = [1, 1]} : vector<8x128xf32> to vector<8x32xf32>
    %176 = vector.extract_strided_slice %170 {offsets = [0, 0], sizes = [16, 32], strides = [1, 1]} : vector<16x128xf32> to vector<16x32xf32>
    %177 = vector.extract_strided_slice %173 {offsets = [0, 0], sizes = [16, 32], strides = [1, 1]} : vector<16x128xf32> to vector<16x32xf32>
    %178 = tpu.transpose %176, [1, 0] : vector<16x32xf32> -> vector<32x16xf32>
    %cst_86 = arith.constant dense<0.000000e+00> : vector<8x16xf32>
    %179 = tpu.matmul %175, %178, %cst_86 {dimension_numbers = #tpu.dot_dimension_numbers<[1], [0], [0], [1], [0, 0, 1, 1], [], []>} : vector<8x32xf32>, vector<32x16xf32>, vector<8x16xf32> -> vector<8x16xf32>
    %180 = vector.broadcast %164 : f32 to vector<8x16xf32>
    %181 = arith.mulf %179, %180 : vector<8x16xf32>
    %cst_87 = arith.constant dense<0xFF800000> : vector<8xf32>
    %182 = vector.multi_reduction <maximumf>, %181, %cst_87 [1] : vector<8x16xf32> to vector<8xf32>
    %183 = vector.shape_cast %182 : vector<8xf32> to vector<8x1xf32>
    %184 = vector.broadcast %183 : vector<8x1xf32> to vector<8x16xf32>
    %185 = arith.subf %181, %184 : vector<8x16xf32>
    %186 = math.exp %185 : vector<8x16xf32>
    %cst_88 = arith.constant dense<0.000000e+00> : vector<8xf32>
    %187 = vector.multi_reduction <add>, %186, %cst_88 [1] : vector<8x16xf32> to vector<8xf32>
    %188 = vector.shape_cast %187 : vector<8xf32> to vector<8x1xf32>
    %189 = vector.broadcast %188 : vector<8x1xf32> to vector<8x16xf32>
    %190 = arith.divf %186, %189 : vector<8x16xf32>
    %cst_89 = arith.constant dense<0.000000e+00> : vector<8x32xf32>
    %191 = tpu.matmul %190, %177, %cst_89 {dimension_numbers = #tpu.dot_dimension_numbers<[1], [0], [0], [1], [0, 0, 1, 1], [], []>} : vector<8x16xf32>, vector<16x32xf32>, vector<8x32xf32> -> vector<8x32xf32>
    %192 = vector.extract_strided_slice %161 {offsets = [0, 0], sizes = [32, 128], strides = [1, 1]} : vector<128x128xf32> to vector<32x128xf32>
    %cst_90 = arith.constant dense<0.000000e+00> : vector<8x128xf32>
    %193 = tpu.matmul %191, %192, %cst_90 {dimension_numbers = #tpu.dot_dimension_numbers<[1], [0], [0], [1], [0, 0, 1, 1], [], []>} : vector<8x32xf32>, vector<32x128xf32>, vector<8x128xf32> -> vector<8x128xf32>
    %194 = arith.addf %174, %193 : vector<8x128xf32>
    %195 = vector.extract_strided_slice %167 {offsets = [0, 32], sizes = [8, 32], strides = [1, 1]} : vector<8x128xf32> to vector<8x32xf32>
    %196 = vector.extract_strided_slice %170 {offsets = [0, 32], sizes = [16, 32], strides = [1, 1]} : vector<16x128xf32> to vector<16x32xf32>
    %197 = vector.extract_strided_slice %173 {offsets = [0, 32], sizes = [16, 32], strides = [1, 1]} : vector<16x128xf32> to vector<16x32xf32>
    %198 = tpu.transpose %196, [1, 0] : vector<16x32xf32> -> vector<32x16xf32>
    %cst_91 = arith.constant dense<0.000000e+00> : vector<8x16xf32>
    %199 = tpu.matmul %195, %198, %cst_91 {dimension_numbers = #tpu.dot_dimension_numbers<[1], [0], [0], [1], [0, 0, 1, 1], [], []>} : vector<8x32xf32>, vector<32x16xf32>, vector<8x16xf32> -> vector<8x16xf32>
    %200 = vector.broadcast %164 : f32 to vector<8x16xf32>
    %201 = arith.mulf %199, %200 : vector<8x16xf32>
    %cst_92 = arith.constant dense<0xFF800000> : vector<8xf32>
    %202 = vector.multi_reduction <maximumf>, %201, %cst_92 [1] : vector<8x16xf32> to vector<8xf32>
    %203 = vector.shape_cast %202 : vector<8xf32> to vector<8x1xf32>
    %204 = vector.broadcast %203 : vector<8x1xf32> to vector<8x16xf32>
    %205 = arith.subf %201, %204 : vector<8x16xf32>
    %206 = math.exp %205 : vector<8x16xf32>
    %cst_93 = arith.constant dense<0.000000e+00> : vector<8xf32>
    %207 = vector.multi_reduction <add>, %206, %cst_93 [1] : vector<8x16xf32> to vector<8xf32>
    %208 = vector.shape_cast %207 : vector<8xf32> to vector<8x1xf32>
    %209 = vector.broadcast %208 : vector<8x1xf32> to vector<8x16xf32>
    %210 = arith.divf %206, %209 : vector<8x16xf32>
    %cst_94 = arith.constant dense<0.000000e+00> : vector<8x32xf32>
    %211 = tpu.matmul %210, %197, %cst_94 {dimension_numbers = #tpu.dot_dimension_numbers<[1], [0], [0], [1], [0, 0, 1, 1], [], []>} : vector<8x16xf32>, vector<16x32xf32>, vector<8x32xf32> -> vector<8x32xf32>
    %212 = vector.extract_strided_slice %161 {offsets = [32, 0], sizes = [32, 128], strides = [1, 1]} : vector<128x128xf32> to vector<32x128xf32>
    %cst_95 = arith.constant dense<0.000000e+00> : vector<8x128xf32>
    %213 = tpu.matmul %211, %212, %cst_95 {dimension_numbers = #tpu.dot_dimension_numbers<[1], [0], [0], [1], [0, 0, 1, 1], [], []>} : vector<8x32xf32>, vector<32x128xf32>, vector<8x128xf32> -> vector<8x128xf32>
    %214 = arith.addf %194, %213 : vector<8x128xf32>
    %215 = vector.extract_strided_slice %167 {offsets = [0, 64], sizes = [8, 32], strides = [1, 1]} : vector<8x128xf32> to vector<8x32xf32>
    %216 = vector.extract_strided_slice %170 {offsets = [0, 64], sizes = [16, 32], strides = [1, 1]} : vector<16x128xf32> to vector<16x32xf32>
    %217 = vector.extract_strided_slice %173 {offsets = [0, 64], sizes = [16, 32], strides = [1, 1]} : vector<16x128xf32> to vector<16x32xf32>
    %218 = tpu.transpose %216, [1, 0] : vector<16x32xf32> -> vector<32x16xf32>
    %cst_96 = arith.constant dense<0.000000e+00> : vector<8x16xf32>
    %219 = tpu.matmul %215, %218, %cst_96 {dimension_numbers = #tpu.dot_dimension_numbers<[1], [0], [0], [1], [0, 0, 1, 1], [], []>} : vector<8x32xf32>, vector<32x16xf32>, vector<8x16xf32> -> vector<8x16xf32>
    %220 = vector.broadcast %164 : f32 to vector<8x16xf32>
    %221 = arith.mulf %219, %220 : vector<8x16xf32>
    %cst_97 = arith.constant dense<0xFF800000> : vector<8xf32>
    %222 = vector.multi_reduction <maximumf>, %221, %cst_97 [1] : vector<8x16xf32> to vector<8xf32>
    %223 = vector.shape_cast %222 : vector<8xf32> to vector<8x1xf32>
    %224 = vector.broadcast %223 : vector<8x1xf32> to vector<8x16xf32>
    %225 = arith.subf %221, %224 : vector<8x16xf32>
    %226 = math.exp %225 : vector<8x16xf32>
    %cst_98 = arith.constant dense<0.000000e+00> : vector<8xf32>
    %227 = vector.multi_reduction <add>, %226, %cst_98 [1] : vector<8x16xf32> to vector<8xf32>
    %228 = vector.shape_cast %227 : vector<8xf32> to vector<8x1xf32>
    %229 = vector.broadcast %228 : vector<8x1xf32> to vector<8x16xf32>
    %230 = arith.divf %226, %229 : vector<8x16xf32>
    %cst_99 = arith.constant dense<0.000000e+00> : vector<8x32xf32>
    %231 = tpu.matmul %230, %217, %cst_99 {dimension_numbers = #tpu.dot_dimension_numbers<[1], [0], [0], [1], [0, 0, 1, 1], [], []>} : vector<8x16xf32>, vector<16x32xf32>, vector<8x32xf32> -> vector<8x32xf32>
    %232 = vector.extract_strided_slice %161 {offsets = [64, 0], sizes = [32, 128], strides = [1, 1]} : vector<128x128xf32> to vector<32x128xf32>
    %cst_100 = arith.constant dense<0.000000e+00> : vector<8x128xf32>
    %233 = tpu.matmul %231, %232, %cst_100 {dimension_numbers = #tpu.dot_dimension_numbers<[1], [0], [0], [1], [0, 0, 1, 1], [], []>} : vector<8x32xf32>, vector<32x128xf32>, vector<8x128xf32> -> vector<8x128xf32>
    %234 = arith.addf %214, %233 : vector<8x128xf32>
    %235 = vector.extract_strided_slice %167 {offsets = [0, 96], sizes = [8, 32], strides = [1, 1]} : vector<8x128xf32> to vector<8x32xf32>
    %236 = vector.extract_strided_slice %170 {offsets = [0, 96], sizes = [16, 32], strides = [1, 1]} : vector<16x128xf32> to vector<16x32xf32>
    %237 = vector.extract_strided_slice %173 {offsets = [0, 96], sizes = [16, 32], strides = [1, 1]} : vector<16x128xf32> to vector<16x32xf32>
    %238 = tpu.transpose %236, [1, 0] : vector<16x32xf32> -> vector<32x16xf32>
    %cst_101 = arith.constant dense<0.000000e+00> : vector<8x16xf32>
    %239 = tpu.matmul %235, %238, %cst_101 {dimension_numbers = #tpu.dot_dimension_numbers<[1], [0], [0], [1], [0, 0, 1, 1], [], []>} : vector<8x32xf32>, vector<32x16xf32>, vector<8x16xf32> -> vector<8x16xf32>
    %240 = vector.broadcast %164 : f32 to vector<8x16xf32>
    %241 = arith.mulf %239, %240 : vector<8x16xf32>
    %cst_102 = arith.constant dense<0xFF800000> : vector<8xf32>
    %242 = vector.multi_reduction <maximumf>, %241, %cst_102 [1] : vector<8x16xf32> to vector<8xf32>
    %243 = vector.shape_cast %242 : vector<8xf32> to vector<8x1xf32>
    %244 = vector.broadcast %243 : vector<8x1xf32> to vector<8x16xf32>
    %245 = arith.subf %241, %244 : vector<8x16xf32>
    %246 = math.exp %245 : vector<8x16xf32>
    %cst_103 = arith.constant dense<0.000000e+00> : vector<8xf32>
    %247 = vector.multi_reduction <add>, %246, %cst_103 [1] : vector<8x16xf32> to vector<8xf32>
    %248 = vector.shape_cast %247 : vector<8xf32> to vector<8x1xf32>
    %249 = vector.broadcast %248 : vector<8x1xf32> to vector<8x16xf32>
    %250 = arith.divf %246, %249 : vector<8x16xf32>
    %cst_104 = arith.constant dense<0.000000e+00> : vector<8x32xf32>
    %251 = tpu.matmul %250, %237, %cst_104 {dimension_numbers = #tpu.dot_dimension_numbers<[1], [0], [0], [1], [0, 0, 1, 1], [], []>} : vector<8x16xf32>, vector<16x32xf32>, vector<8x32xf32> -> vector<8x32xf32>
    %252 = vector.extract_strided_slice %161 {offsets = [96, 0], sizes = [32, 128], strides = [1, 1]} : vector<128x128xf32> to vector<32x128xf32>
    %cst_105 = arith.constant dense<0.000000e+00> : vector<8x128xf32>
    %253 = tpu.matmul %251, %252, %cst_105 {dimension_numbers = #tpu.dot_dimension_numbers<[1], [0], [0], [1], [0, 0, 1, 1], [], []>} : vector<8x32xf32>, vector<32x128xf32>, vector<8x128xf32> -> vector<8x128xf32>
    %254 = arith.addf %234, %253 : vector<8x128xf32>
    %255 = vector.broadcast %162 : vector<1x128xf32> to vector<8x128xf32>
    %256 = arith.addf %254, %255 : vector<8x128xf32>
    %257 = arith.addf %130, %256 : vector<8x128xf32>
    %c0_106 = arith.constant 0 : index
    %c0_107 = arith.constant 0 : index
    %258 = vector.load %arg29[%c0_106, %c0_107] : memref<1x128xf32, #tpu.memory_space<vmem>>, vector<1x128xf32>
    %c0_108 = arith.constant 0 : index
    %c0_109 = arith.constant 0 : index
    %259 = vector.load %arg30[%c0_108, %c0_109] : memref<1x128xf32, #tpu.memory_space<vmem>>, vector<1x128xf32>
    %cst_110 = arith.constant dense<0.000000e+00> : vector<8xf32>
    %260 = vector.multi_reduction <add>, %257, %cst_110 [1] : vector<8x128xf32> to vector<8xf32>
    %261 = vector.shape_cast %260 : vector<8xf32> to vector<8x1xf32>
    %cst_111 = arith.constant 1.280000e+02 : f32
    %262 = vector.broadcast %cst_111 : f32 to vector<8x1xf32>
    %263 = arith.divf %261, %262 : vector<8x1xf32>
    %264 = vector.broadcast %263 : vector<8x1xf32> to vector<8x128xf32>
    %265 = arith.subf %257, %264 : vector<8x128xf32>
    %266 = arith.mulf %265, %265 : vector<8x128xf32>
    %cst_112 = arith.constant dense<0.000000e+00> : vector<8xf32>
    %267 = vector.multi_reduction <add>, %266, %cst_112 [1] : vector<8x128xf32> to vector<8xf32>
    %268 = vector.shape_cast %267 : vector<8xf32> to vector<8x1xf32>
    %cst_113 = arith.constant 1.270000e+02 : f32
    %269 = vector.broadcast %cst_113 : f32 to vector<8x1xf32>
    %270 = arith.divf %268, %269 : vector<8x1xf32>
    %271 = math.sqrt %270 : vector<8x1xf32>
    %272 = vector.broadcast %263 : vector<8x1xf32> to vector<8x128xf32>
    %273 = arith.subf %257, %272 : vector<8x128xf32>
    %274 = vector.broadcast %258 : vector<1x128xf32> to vector<8x128xf32>
    %275 = arith.mulf %274, %273 : vector<8x128xf32>
    %cst_114 = arith.constant 9.99999997E-7 : f32
    %276 = vector.broadcast %cst_114 : f32 to vector<8x1xf32>
    %277 = arith.addf %271, %276 : vector<8x1xf32>
    %278 = vector.broadcast %277 : vector<8x1xf32> to vector<8x128xf32>
    %279 = arith.divf %275, %278 : vector<8x128xf32>
    %280 = vector.broadcast %259 : vector<1x128xf32> to vector<8x128xf32>
    %281 = arith.addf %279, %280 : vector<8x128xf32>
    %c0_115 = arith.constant 0 : index
    %c0_116 = arith.constant 0 : index
    %282 = vector.load %arg21[%c0_115, %c0_116] : memref<128x512xf32, #tpu.memory_space<vmem>>, vector<128x512xf32>
    %c0_117 = arith.constant 0 : index
    %c0_118 = arith.constant 0 : index
    %283 = vector.load %arg23[%c0_117, %c0_118] : memref<512x128xf32, #tpu.memory_space<vmem>>, vector<512x128xf32>
    %cst_119 = arith.constant dense<0.000000e+00> : vector<8x512xf32>
    %284 = tpu.matmul %281, %282, %cst_119 {dimension_numbers = #tpu.dot_dimension_numbers<[1], [0], [0], [1], [0, 0, 1, 1], [], []>} : vector<8x128xf32>, vector<128x512xf32>, vector<8x512xf32> -> vector<8x512xf32>
    %c0_120 = arith.constant 0 : index
    %c0_121 = arith.constant 0 : index
    %285 = vector.load %arg22[%c0_120, %c0_121] : memref<1x512xf32, #tpu.memory_space<vmem>>, vector<1x512xf32>
    %286 = vector.broadcast %285 : vector<1x512xf32> to vector<8x512xf32>
    %287 = arith.addf %284, %286 : vector<8x512xf32>
    %cst_122 = arith.constant 0.000000e+00 : f32
    %288 = vector.broadcast %cst_122 : f32 to vector<8x512xf32>
    %289 = arith.maximumf %287, %288 : vector<8x512xf32>
    %cst_123 = arith.constant dense<0.000000e+00> : vector<8x128xf32>
    %290 = tpu.matmul %289, %283, %cst_123 {dimension_numbers = #tpu.dot_dimension_numbers<[1], [0], [0], [1], [0, 0, 1, 1], [], []>} : vector<8x512xf32>, vector<512x128xf32>, vector<8x128xf32> -> vector<8x128xf32>
    %291 = arith.addf %257, %290 : vector<8x128xf32>
    %c0_124 = arith.constant 0 : index
    %c0_125 = arith.constant 0 : index
    %292 = vector.load %arg24[%c0_124, %c0_125] : memref<1x128xf32, #tpu.memory_space<vmem>>, vector<1x128xf32>
    %293 = vector.broadcast %292 : vector<1x128xf32> to vector<8x128xf32>
    %294 = arith.addf %291, %293 : vector<8x128xf32>
    %c0_126 = arith.constant 0 : index
    %c0_127 = arith.constant 0 : index
    %c0_128 = arith.constant 0 : index
    %295 = vector.load %arg31[%c0_126, %c0_127, %c0_128] : memref<1x8x128xf32, #tpu.memory_space<vmem>>, vector<1x8x128xf32>
    %296 = vector.shape_cast %295 : vector<1x8x128xf32> to vector<8x128xf32>
    %297 = vector.shape_cast %294 : vector<8x128xf32> to vector<1x8x128xf32>
    tpu.vector_store %arg31[%c0_126, %c0_127, %c0_128], %297 {strides = array<i32>} : memref<1x8x128xf32, #tpu.memory_space<vmem>>, vector<1x8x128xf32>,
    return
  }
  func.func @transform_0(%arg0: i32, %arg1: i32) -> (i32, i32, i32) {
    %c0_i32 = arith.constant 0 : i32
    %c0_i32_0 = arith.constant 0 : i32
    return %arg0, %arg1, %c0_i32 : i32, i32, i32
  }
  func.func @transform_1(%arg0: i32, %arg1: i32) -> (i32, i32, i32) {
    %c0_i32 = arith.constant 0 : i32
    %c0_i32_0 = arith.constant 0 : i32
    %c0_i32_1 = arith.constant 0 : i32
    return %arg0, %c0_i32, %c0_i32_0 : i32, i32, i32
  }
  func.func @transform_2(%arg0: i32, %arg1: i32) -> (i32, i32, i32) {
    %c0_i32 = arith.constant 0 : i32
    %c0_i32_0 = arith.constant 0 : i32
    %c0_i32_1 = arith.constant 0 : i32
    return %arg0, %c0_i32, %c0_i32_0 : i32, i32, i32
  }
  func.func @transform_3(%arg0: i32, %arg1: i32) -> (i32, i32) {
    %c0_i32 = arith.constant 0 : i32
    %c0_i32_0 = arith.constant 0 : i32
    %c0_i32_1 = arith.constant 0 : i32
    return %c0_i32, %c0_i32_0 : i32, i32
  }
  func.func @transform_4(%arg0: i32, %arg1: i32) -> (i32, i32) {
    %c0_i32 = arith.constant 0 : i32
    %c0_i32_0 = arith.constant 0 : i32
    %c0_i32_1 = arith.constant 0 : i32
    return %c0_i32, %c0_i32_0 : i32, i32
  }
  func.func @transform_5(%arg0: i32, %arg1: i32) -> (i32, i32) {
    %c0_i32 = arith.constant 0 : i32
    %c0_i32_0 = arith.constant 0 : i32
    %c0_i32_1 = arith.constant 0 : i32
    return %c0_i32, %c0_i32_0 : i32, i32
  }
  func.func @transform_6(%arg0: i32, %arg1: i32) -> (i32, i32) {
    %c0_i32 = arith.constant 0 : i32
    %c0_i32_0 = arith.constant 0 : i32
    %c0_i32_1 = arith.constant 0 : i32
    return %c0_i32, %c0_i32_0 : i32, i32
  }
  func.func @transform_7(%arg0: i32, %arg1: i32) -> (i32, i32) {
    %c0_i32 = arith.constant 0 : i32
    %c0_i32_0 = arith.constant 0 : i32
    %c0_i32_1 = arith.constant 0 : i32
    return %c0_i32, %c0_i32_0 : i32, i32
  }
  func.func @transform_8(%arg0: i32, %arg1: i32) -> (i32, i32) {
    %c0_i32 = arith.constant 0 : i32
    %c0_i32_0 = arith.constant 0 : i32
    %c0_i32_1 = arith.constant 0 : i32
    return %c0_i32, %c0_i32_0 : i32, i32
  }
  func.func @transform_9(%arg0: i32, %arg1: i32) -> (i32, i32) {
    %c0_i32 = arith.constant 0 : i32
    %c0_i32_0 = arith.constant 0 : i32
    %c0_i32_1 = arith.constant 0 : i32
    return %c0_i32, %c0_i32_0 : i32, i32
  }
  func.func @transform_10(%arg0: i32, %arg1: i32) -> (i32, i32) {
    %c0_i32 = arith.constant 0 : i32
    %c0_i32_0 = arith.constant 0 : i32
    %c0_i32_1 = arith.constant 0 : i32
    return %c0_i32, %c0_i32_0 : i32, i32
  }
  func.func @transform_11(%arg0: i32, %arg1: i32) -> (i32, i32) {
    %c0_i32 = arith.constant 0 : i32
    %c0_i32_0 = arith.constant 0 : i32
    %c0_i32_1 = arith.constant 0 : i32
    return %c0_i32, %c0_i32_0 : i32, i32
  }
  func.func @transform_12(%arg0: i32, %arg1: i32) -> (i32, i32) {
    %c0_i32 = arith.constant 0 : i32
    %c0_i32_0 = arith.constant 0 : i32
    %c0_i32_1 = arith.constant 0 : i32
    return %c0_i32, %c0_i32_0 : i32, i32
  }
  func.func @transform_13(%arg0: i32, %arg1: i32) -> (i32, i32) {
    %c0_i32 = arith.constant 0 : i32
    %c0_i32_0 = arith.constant 0 : i32
    %c0_i32_1 = arith.constant 0 : i32
    return %c0_i32, %c0_i32_0 : i32, i32
  }
  func.func @transform_14(%arg0: i32, %arg1: i32) -> (i32, i32) {
    %c0_i32 = arith.constant 0 : i32
    %c0_i32_0 = arith.constant 0 : i32
    %c0_i32_1 = arith.constant 0 : i32
    return %c0_i32, %c0_i32_0 : i32, i32
  }
  func.func @transform_15(%arg0: i32, %arg1: i32) -> (i32, i32) {
    %c0_i32 = arith.constant 0 : i32
    %c0_i32_0 = arith.constant 0 : i32
    %c0_i32_1 = arith.constant 0 : i32
    return %c0_i32, %c0_i32_0 : i32, i32
  }
  func.func @transform_16(%arg0: i32, %arg1: i32) -> (i32, i32) {
    %c0_i32 = arith.constant 0 : i32
    %c0_i32_0 = arith.constant 0 : i32
    %c0_i32_1 = arith.constant 0 : i32
    return %c0_i32, %c0_i32_0 : i32, i32
  }
  func.func @transform_17(%arg0: i32, %arg1: i32) -> (i32, i32) {
    %c0_i32 = arith.constant 0 : i32
    %c0_i32_0 = arith.constant 0 : i32
    %c0_i32_1 = arith.constant 0 : i32
    return %c0_i32, %c0_i32_0 : i32, i32
  }
  func.func @transform_18(%arg0: i32, %arg1: i32) -> (i32, i32) {
    %c0_i32 = arith.constant 0 : i32
    %c0_i32_0 = arith.constant 0 : i32
    %c0_i32_1 = arith.constant 0 : i32
    return %c0_i32, %c0_i32_0 : i32, i32
  }
  func.func @transform_19(%arg0: i32, %arg1: i32) -> (i32, i32) {
    %c0_i32 = arith.constant 0 : i32
    %c0_i32_0 = arith.constant 0 : i32
    %c0_i32_1 = arith.constant 0 : i32
    return %c0_i32, %c0_i32_0 : i32, i32
  }
  func.func @transform_20(%arg0: i32, %arg1: i32) -> (i32, i32) {
    %c0_i32 = arith.constant 0 : i32
    %c0_i32_0 = arith.constant 0 : i32
    %c0_i32_1 = arith.constant 0 : i32
    return %c0_i32, %c0_i32_0 : i32, i32
  }
  func.func @transform_21(%arg0: i32, %arg1: i32) -> (i32, i32) {
    %c0_i32 = arith.constant 0 : i32
    %c0_i32_0 = arith.constant 0 : i32
    %c0_i32_1 = arith.constant 0 : i32
    return %c0_i32, %c0_i32_0 : i32, i32
  }
  func.func @transform_22(%arg0: i32, %arg1: i32) -> (i32, i32) {
    %c0_i32 = arith.constant 0 : i32
    %c0_i32_0 = arith.constant 0 : i32
    %c0_i32_1 = arith.constant 0 : i32
    return %c0_i32, %c0_i32_0 : i32, i32
  }
  func.func @transform_23(%arg0: i32, %arg1: i32) -> (i32, i32) {
    %c0_i32 = arith.constant 0 : i32
    %c0_i32_0 = arith.constant 0 : i32
    %c0_i32_1 = arith.constant 0 : i32
    return %c0_i32, %c0_i32_0 : i32, i32
  }
  func.func @transform_24(%arg0: i32, %arg1: i32) -> (i32, i32) {
    %c0_i32 = arith.constant 0 : i32
    %c0_i32_0 = arith.constant 0 : i32
    %c0_i32_1 = arith.constant 0 : i32
    return %c0_i32, %c0_i32_0 : i32, i32
  }
  func.func @transform_25(%arg0: i32, %arg1: i32) -> (i32, i32) {
    %c0_i32 = arith.constant 0 : i32
    %c0_i32_0 = arith.constant 0 : i32
    %c0_i32_1 = arith.constant 0 : i32
    return %c0_i32, %c0_i32_0 : i32, i32
  }
  func.func @transform_26(%arg0: i32, %arg1: i32) -> (i32, i32) {
    %c0_i32 = arith.constant 0 : i32
    %c0_i32_0 = arith.constant 0 : i32
    %c0_i32_1 = arith.constant 0 : i32
    return %c0_i32, %c0_i32_0 : i32, i32
  }
  func.func @transform_27(%arg0: i32, %arg1: i32) -> (i32, i32) {
    %c0_i32 = arith.constant 0 : i32
    %c0_i32_0 = arith.constant 0 : i32
    %c0_i32_1 = arith.constant 0 : i32
    return %c0_i32, %c0_i32_0 : i32, i32
  }
  func.func @transform_28(%arg0: i32, %arg1: i32) -> (i32, i32) {
    %c0_i32 = arith.constant 0 : i32
    %c0_i32_0 = arith.constant 0 : i32
    %c0_i32_1 = arith.constant 0 : i32
    return %c0_i32, %c0_i32_0 : i32, i32
  }
  func.func @transform_29(%arg0: i32, %arg1: i32) -> (i32, i32, i32) {
    %c0_i32 = arith.constant 0 : i32
    %c0_i32_0 = arith.constant 0 : i32
    return %arg0, %arg1, %c0_i32 : i32, i32, i32
  }
}

module attributes {stable_mosaic.version = 11 : i64} {
  func.func @decoder_layer_kernel(%arg0: i32, %arg1: i32, %arg2: memref<1x8x128xf32, #tpu.memory_space<vmem>>, %arg3: memref<1x8x128xf32, #tpu.memory_space<vmem>>, %arg4: memref<1x16x128xf32, #tpu.memory_space<vmem>>, %arg5: memref<128x128xf32, #tpu.memory_space<vmem>>, %arg6: memref<1x128xf32, #tpu.memory_space<vmem>>, %arg7: memref<128x128xf32, #tpu.memory_space<vmem>>, %arg8: memref<1x128xf32, #tpu.memory_space<vmem>>, %arg9: memref<128x128xf32, #tpu.memory_space<vmem>>, %arg10: memref<1x128xf32, #tpu.memory_space<vmem>>, %arg11: memref<128x128xf32, #tpu.memory_space<vmem>>, %arg12: memref<1x128xf32, #tpu.memory_space<vmem>>, %arg13: memref<128x128xf32, #tpu.memory_space<vmem>>, %arg14: memref<1x128xf32, #tpu.memory_space<vmem>>, %arg15: memref<128x128xf32, #tpu.memory_space<vmem>>, %arg16: memref<1x128xf32, #tpu.memory_space<vmem>>, %arg17: memref<128x128xf32, #tpu.memory_space<vmem>>, %arg18: memref<1x128xf32, #tpu.memory_space<vmem>>, %arg19: memref<128x128xf32, #tpu.memory_space<vmem>>, %arg20: memref<1x128xf32, #tpu.memory_space<vmem>>, %arg21: memref<128x512xf32, #tpu.memory_space<vmem>>, %arg22: memref<1x512xf32, #tpu.memory_space<vmem>>, %arg23: memref<512x128xf32, #tpu.memory_space<vmem>>, %arg24: memref<1x128xf32, #tpu.memory_space<vmem>>, %arg25: memref<1x128xf32, #tpu.memory_space<vmem>>, %arg26: memref<1x128xf32, #tpu.memory_space<vmem>>, %arg27: memref<1x128xf32, #tpu.memory_space<vmem>>, %arg28: memref<1x128xf32, #tpu.memory_space<vmem>>, %arg29: memref<1x128xf32, #tpu.memory_space<vmem>>, %arg30: memref<1x128xf32, #tpu.memory_space<vmem>>, %arg31: memref<1x8x128xf32, #tpu.memory_space<vmem>>) attributes {dimension_semantics = [#tpu.dimension_semantics<parallel>, #tpu.dimension_semantics<parallel>], iteration_bounds = array<i64: 2, 1>, scalar_prefetch = 0 : i64, scratch_operands = 0 : i64, tpu.core_type = #tpu.core_type<tc>, window_params = [{transform_indices = @transform_0, window_bounds = array<i64: 1, 8, 128>}, {transform_indices = @transform_1, window_bounds = array<i64: 1, 8, 128>}, {transform_indices = @transform_2, window_bounds = array<i64: 1, 16, 128>}, {pipeline_mode = #tpu.pipeline_mode<synchronous>, transform_indices = @transform_3, window_bounds = array<i64: 128, 128>}, {pipeline_mode = #tpu.pipeline_mode<synchronous>, transform_indices = @transform_4, window_bounds = array<i64: 1, 128>}, {pipeline_mode = #tpu.pipeline_mode<synchronous>, transform_indices = @transform_5, window_bounds = array<i64: 128, 128>}, {pipeline_mode = #tpu.pipeline_mode<synchronous>, transform_indices = @transform_6, window_bounds = array<i64: 1, 128>}, {pipeline_mode = #tpu.pipeline_mode<synchronous>, transform_indices = @transform_7, window_bounds = array<i64: 128, 128>}, {pipeline_mode = #tpu.pipeline_mode<synchronous>, transform_indices = @transform_8, window_bounds = array<i64: 1, 128>}, {pipeline_mode = #tpu.pipeline_mode<synchronous>, transform_indices = @transform_9, window_bounds = array<i64: 128, 128>}, {pipeline_mode = #tpu.pipeline_mode<synchronous>, transform_indices = @transform_10, window_bounds = array<i64: 1, 128>}, {pipeline_mode = #tpu.pipeline_mode<synchronous>, transform_indices = @transform_11, window_bounds = array<i64: 128, 128>}, {pipeline_mode = #tpu.pipeline_mode<synchronous>, transform_indices = @transform_12, window_bounds = array<i64: 1, 128>}, {pipeline_mode = #tpu.pipeline_mode<synchronous>, transform_indices = @transform_13, window_bounds = array<i64: 128, 128>}, {pipeline_mode = #tpu.pipeline_mode<synchronous>, transform_indices = @transform_14, window_bounds = array<i64: 1, 128>}, {pipeline_mode = #tpu.pipeline_mode<synchronous>, transform_indices = @transform_15, window_bounds = array<i64: 128, 128>}, {pipeline_mode = #tpu.pipeline_mode<synchronous>, transform_indices = @transform_16, window_bounds = array<i64: 1, 128>}, {pipeline_mode = #tpu.pipeline_mode<synchronous>, transform_indices = @transform_17, window_bounds = array<i64: 128, 128>}, {pipeline_mode = #tpu.pipeline_mode<synchronous>, transform_indices = @transform_18, window_bounds = array<i64: 1, 128>}, {pipeline_mode = #tpu.pipeline_mode<synchronous>, transform_indices = @transform_19, window_bounds = array<i64: 128, 512>}, {pipeline_mode = #tpu.pipeline_mode<synchronous>, transform_indices = @transform_20, window_bounds = array<i64: 1, 512>}, {pipeline_mode = #tpu.pipeline_mode<synchronous>, transform_indices = @transform_21, window_bounds = array<i64: 512, 128>}, {pipeline_mode = #tpu.pipeline_mode<synchronous>, transform_indices = @transform_22, window_bounds = array<i64: 1, 128>}, {pipeline_mode = #tpu.pipeline_mode<synchronous>, transform_indices = @transform_23, window_bounds = array<i64: 1, 128>}, {pipeline_mode = #tpu.pipeline_mode<synchronous>, transform_indices = @transform_24, window_bounds = array<i64: 1, 128>}, {pipeline_mode = #tpu.pipeline_mode<synchronous>, transform_indices = @transform_25, window_bounds = array<i64: 1, 128>}, {pipeline_mode = #tpu.pipeline_mode<synchronous>, transform_indices = @transform_26, window_bounds = array<i64: 1, 128>}, {pipeline_mode = #tpu.pipeline_mode<synchronous>, transform_indices = @transform_27, window_bounds = array<i64: 1, 128>}, {pipeline_mode = #tpu.pipeline_mode<synchronous>, transform_indices = @transform_28, window_bounds = array<i64: 1, 128>}, {transform_indices = @transform_29, window_bounds = array<i64: 1, 8, 128>}]} {
    %c0 = arith.constant 0 : index
    %c0_0 = arith.constant 0 : index
    %c0_1 = arith.constant 0 : index
    %0 = vector.load %arg2[%c0, %c0_0, %c0_1] : memref<1x8x128xf32, #tpu.memory_space<vmem>>, vector<1x8x128xf32>
    %1 = vector.shape_cast %0 : vector<1x8x128xf32> to vector<8x128xf32>
    %c0_2 = arith.constant 0 : index
    %c0_3 = arith.constant 0 : index
    %c0_4 = arith.constant 0 : index
    %2 = vector.load %arg4[%c0_2, %c0_3, %c0_4] : memref<1x16x128xf32, #tpu.memory_space<vmem>>, vector<1x16x128xf32>
    %3 = vector.shape_cast %2 : vector<1x16x128xf32> to vector<16x128xf32>
    %c0_5 = arith.constant 0 : index
    %c0_6 = arith.constant 0 : index
    %4 = vector.load %arg25[%c0_5, %c0_6] : memref<1x128xf32, #tpu.memory_space<vmem>>, vector<1x128xf32>
    %c0_7 = arith.constant 0 : index
    %c0_8 = arith.constant 0 : index
    %5 = vector.load %arg26[%c0_7, %c0_8] : memref<1x128xf32, #tpu.memory_space<vmem>>, vector<1x128xf32>
    %cst = arith.constant dense<0.000000e+00> : vector<8xf32>
    %6 = vector.multi_reduction <add>, %1, %cst [1] : vector<8x128xf32> to vector<8xf32>
    %7 = vector.shape_cast %6 : vector<8xf32> to vector<8x1xf32>
    %cst_9 = arith.constant 1.280000e+02 : f32
    %8 = vector.broadcast %cst_9 : f32 to vector<8x1xf32>
    %9 = arith.divf %7, %8 : vector<8x1xf32>
    %10 = vector.broadcast %9 : vector<8x1xf32> to vector<8x128xf32>
    %11 = arith.subf %1, %10 : vector<8x128xf32>
    %12 = arith.mulf %11, %11 : vector<8x128xf32>
    %cst_10 = arith.constant dense<0.000000e+00> : vector<8xf32>
    %13 = vector.multi_reduction <add>, %12, %cst_10 [1] : vector<8x128xf32> to vector<8xf32>
    %14 = vector.shape_cast %13 : vector<8xf32> to vector<8x1xf32>
    %cst_11 = arith.constant 1.270000e+02 : f32
    %15 = vector.broadcast %cst_11 : f32 to vector<8x1xf32>
    %16 = arith.divf %14, %15 : vector<8x1xf32>
    %17 = math.sqrt %16 : vector<8x1xf32>
    %18 = vector.broadcast %9 : vector<8x1xf32> to vector<8x128xf32>
    %19 = arith.subf %1, %18 : vector<8x128xf32>
    %20 = vector.broadcast %4 : vector<1x128xf32> to vector<8x128xf32>
    %21 = arith.mulf %20, %19 : vector<8x128xf32>
    %cst_12 = arith.constant 9.99999997E-7 : f32
    %22 = vector.broadcast %cst_12 : f32 to vector<8x1xf32>
    %23 = arith.addf %17, %22 : vector<8x1xf32>
    %24 = vector.broadcast %23 : vector<8x1xf32> to vector<8x128xf32>
    %25 = arith.divf %21, %24 : vector<8x128xf32>
    %26 = vector.broadcast %5 : vector<1x128xf32> to vector<8x128xf32>
    %27 = arith.addf %25, %26 : vector<8x128xf32>
    %c0_13 = arith.constant 0 : index
    %c0_14 = arith.constant 0 : index
    %28 = vector.load %arg5[%c0_13, %c0_14] : memref<128x128xf32, #tpu.memory_space<vmem>>, vector<128x128xf32>
    %c0_15 = arith.constant 0 : index
    %c0_16 = arith.constant 0 : index
    %29 = vector.load %arg6[%c0_15, %c0_16] : memref<1x128xf32, #tpu.memory_space<vmem>>, vector<1x128xf32>
    %c0_17 = arith.constant 0 : index
    %c0_18 = arith.constant 0 : index
    %30 = vector.load %arg7[%c0_17, %c0_18] : memref<128x128xf32, #tpu.memory_space<vmem>>, vector<128x128xf32>
    %c0_19 = arith.constant 0 : index
    %c0_20 = arith.constant 0 : index
    %31 = vector.load %arg8[%c0_19, %c0_20] : memref<1x128xf32, #tpu.memory_space<vmem>>, vector<1x128xf32>
    %c0_21 = arith.constant 0 : index
    %c0_22 = arith.constant 0 : index
    %32 = vector.load %arg9[%c0_21, %c0_22] : memref<128x128xf32, #tpu.memory_space<vmem>>, vector<128x128xf32>
    %c0_23 = arith.constant 0 : index
    %c0_24 = arith.constant 0 : index
    %33 = vector.load %arg10[%c0_23, %c0_24] : memref<1x128xf32, #tpu.memory_space<vmem>>, vector<1x128xf32>
    %c0_25 = arith.constant 0 : index
    %c0_26 = arith.constant 0 : index
    %34 = vector.load %arg11[%c0_25, %c0_26] : memref<128x128xf32, #tpu.memory_space<vmem>>, vector<128x128xf32>
    %c0_27 = arith.constant 0 : index
    %c0_28 = arith.constant 0 : index
    %35 = vector.load %arg12[%c0_27, %c0_28] : memref<1x128xf32, #tpu.memory_space<vmem>>, vector<1x128xf32>
    %cst_29 = arith.constant 3.200000e+01 : f32
    %36 = math.sqrt %cst_29 : f32
    %cst_30 = arith.constant 1.000000e+00 : f32
    %37 = arith.divf %cst_30, %36 : f32
    %cst_31 = arith.constant dense<0.000000e+00> : vector<8x128xf32>
    %38 = tpu.matmul %27, %28, %cst_31 {dimension_numbers = #tpu.dot_dimension_numbers<[1], [0], [0], [1], [0, 0, 1, 1], [], []>} : vector<8x128xf32>, vector<128x128xf32>, vector<8x128xf32> -> vector<8x128xf32>
    %39 = vector.broadcast %29 : vector<1x128xf32> to vector<8x128xf32>
    %40 = arith.addf %38, %39 : vector<8x128xf32>
    %cst_32 = arith.constant dense<0.000000e+00> : vector<8x128xf32>
    %41 = tpu.matmul %27, %30, %cst_32 {dimension_numbers = #tpu.dot_dimension_numbers<[1], [0], [0], [1], [0, 0, 1, 1], [], []>} : vector<8x128xf32>, vector<128x128xf32>, vector<8x128xf32> -> vector<8x128xf32>
    %42 = vector.broadcast %31 : vector<1x128xf32> to vector<8x128xf32>
    %43 = arith.addf %41, %42 : vector<8x128xf32>
    %cst_33 = arith.constant dense<0.000000e+00> : vector<8x128xf32>
    %44 = tpu.matmul %27, %32, %cst_33 {dimension_numbers = #tpu.dot_dimension_numbers<[1], [0], [0], [1], [0, 0, 1, 1], [], []>} : vector<8x128xf32>, vector<128x128xf32>, vector<8x128xf32> -> vector<8x128xf32>
    %45 = vector.broadcast %33 : vector<1x128xf32> to vector<8x128xf32>
    %46 = arith.addf %44, %45 : vector<8x128xf32>
    %cst_34 = arith.constant 0.000000e+00 : f32
    %47 = vector.broadcast %cst_34 : f32 to vector<8x128xf32>
    %48 = vector.extract_strided_slice %40 {offsets = [0, 0], sizes = [8, 32], strides = [1, 1]} : vector<8x128xf32> to vector<8x32xf32>
    %49 = vector.extract_strided_slice %43 {offsets = [0, 0], sizes = [8, 32], strides = [1, 1]} : vector<8x128xf32> to vector<8x32xf32>
    %50 = vector.extract_strided_slice %46 {offsets = [0, 0], sizes = [8, 32], strides = [1, 1]} : vector<8x128xf32> to vector<8x32xf32>
    %51 = tpu.transpose %49, [1, 0] : vector<8x32xf32> -> vector<32x8xf32>
    %cst_35 = arith.constant dense<0.000000e+00> : vector<8x8xf32>
    %52 = tpu.matmul %48, %51, %cst_35 {dimension_numbers = #tpu.dot_dimension_numbers<[1], [0], [0], [1], [0, 0, 1, 1], [], []>} : vector<8x32xf32>, vector<32x8xf32>, vector<8x8xf32> -> vector<8x8xf32>
    %53 = vector.broadcast %37 : f32 to vector<8x8xf32>
    %54 = arith.mulf %52, %53 : vector<8x8xf32>
    %cst_36 = arith.constant dense<0xFF800000> : vector<8xf32>
    %55 = vector.multi_reduction <maximumf>, %54, %cst_36 [1] : vector<8x8xf32> to vector<8xf32>
    %56 = vector.shape_cast %55 : vector<8xf32> to vector<8x1xf32>
    %57 = vector.broadcast %56 : vector<8x1xf32> to vector<8x8xf32>
    %58 = arith.subf %54, %57 : vector<8x8xf32>
    %59 = math.exp %58 : vector<8x8xf32>
    %cst_37 = arith.constant dense<0.000000e+00> : vector<8xf32>
    %60 = vector.multi_reduction <add>, %59, %cst_37 [1] : vector<8x8xf32> to vector<8xf32>
    %61 = vector.shape_cast %60 : vector<8xf32> to vector<8x1xf32>
    %62 = vector.broadcast %61 : vector<8x1xf32> to vector<8x8xf32>
    %63 = arith.divf %59, %62 : vector<8x8xf32>
    %cst_38 = arith.constant dense<0.000000e+00> : vector<8x32xf32>
    %64 = tpu.matmul %63, %50, %cst_38 {dimension_numbers = #tpu.dot_dimension_numbers<[1], [0], [0], [1], [0, 0, 1, 1], [], []>} : vector<8x8xf32>, vector<8x32xf32>, vector<8x32xf32> -> vector<8x32xf32>
    %65 = vector.extract_strided_slice %34 {offsets = [0, 0], sizes = [32, 128], strides = [1, 1]} : vector<128x128xf32> to vector<32x128xf32>
    %cst_39 = arith.constant dense<0.000000e+00> : vector<8x128xf32>
    %66 = tpu.matmul %64, %65, %cst_39 {dimension_numbers = #tpu.dot_dimension_numbers<[1], [0], [0], [1], [0, 0, 1, 1], [], []>} : vector<8x32xf32>, vector<32x128xf32>, vector<8x128xf32> -> vector<8x128xf32>
    %67 = arith.addf %47, %66 : vector<8x128xf32>
    %68 = vector.extract_strided_slice %40 {offsets = [0, 32], sizes = [8, 32], strides = [1, 1]} : vector<8x128xf32> to vector<8x32xf32>
    %69 = vector.extract_strided_slice %43 {offsets = [0, 32], sizes = [8, 32], strides = [1, 1]} : vector<8x128xf32> to vector<8x32xf32>
    %70 = vector.extract_strided_slice %46 {offsets = [0, 32], sizes = [8, 32], strides = [1, 1]} : vector<8x128xf32> to vector<8x32xf32>
    %71 = tpu.transpose %69, [1, 0] : vector<8x32xf32> -> vector<32x8xf32>
    %cst_40 = arith.constant dense<0.000000e+00> : vector<8x8xf32>
    %72 = tpu.matmul %68, %71, %cst_40 {dimension_numbers = #tpu.dot_dimension_numbers<[1], [0], [0], [1], [0, 0, 1, 1], [], []>} : vector<8x32xf32>, vector<32x8xf32>, vector<8x8xf32> -> vector<8x8xf32>
    %73 = vector.broadcast %37 : f32 to vector<8x8xf32>
    %74 = arith.mulf %72, %73 : vector<8x8xf32>
    %cst_41 = arith.constant dense<0xFF800000> : vector<8xf32>
    %75 = vector.multi_reduction <maximumf>, %74, %cst_41 [1] : vector<8x8xf32> to vector<8xf32>
    %76 = vector.shape_cast %75 : vector<8xf32> to vector<8x1xf32>
    %77 = vector.broadcast %76 : vector<8x1xf32> to vector<8x8xf32>
    %78 = arith.subf %74, %77 : vector<8x8xf32>
    %79 = math.exp %78 : vector<8x8xf32>
    %cst_42 = arith.constant dense<0.000000e+00> : vector<8xf32>
    %80 = vector.multi_reduction <add>, %79, %cst_42 [1] : vector<8x8xf32> to vector<8xf32>
    %81 = vector.shape_cast %80 : vector<8xf32> to vector<8x1xf32>
    %82 = vector.broadcast %81 : vector<8x1xf32> to vector<8x8xf32>
    %83 = arith.divf %79, %82 : vector<8x8xf32>
    %cst_43 = arith.constant dense<0.000000e+00> : vector<8x32xf32>
    %84 = tpu.matmul %83, %70, %cst_43 {dimension_numbers = #tpu.dot_dimension_numbers<[1], [0], [0], [1], [0, 0, 1, 1], [], []>} : vector<8x8xf32>, vector<8x32xf32>, vector<8x32xf32> -> vector<8x32xf32>
    %85 = vector.extract_strided_slice %34 {offsets = [32, 0], sizes = [32, 128], strides = [1, 1]} : vector<128x128xf32> to vector<32x128xf32>
    %cst_44 = arith.constant dense<0.000000e+00> : vector<8x128xf32>
    %86 = tpu.matmul %84, %85, %cst_44 {dimension_numbers = #tpu.dot_dimension_numbers<[1], [0], [0], [1], [0, 0, 1, 1], [], []>} : vector<8x32xf32>, vector<32x128xf32>, vector<8x128xf32> -> vector<8x128xf32>
    %87 = arith.addf %67, %86 : vector<8x128xf32>
    %88 = vector.extract_strided_slice %40 {offsets = [0, 64], sizes = [8, 32], strides = [1, 1]} : vector<8x128xf32> to vector<8x32xf32>
    %89 = vector.extract_strided_slice %43 {offsets = [0, 64], sizes = [8, 32], strides = [1, 1]} : vector<8x128xf32> to vector<8x32xf32>
    %90 = vector.extract_strided_slice %46 {offsets = [0, 64], sizes = [8, 32], strides = [1, 1]} : vector<8x128xf32> to vector<8x32xf32>
    %91 = tpu.transpose %89, [1, 0] : vector<8x32xf32> -> vector<32x8xf32>
    %cst_45 = arith.constant dense<0.000000e+00> : vector<8x8xf32>
    %92 = tpu.matmul %88, %91, %cst_45 {dimension_numbers = #tpu.dot_dimension_numbers<[1], [0], [0], [1], [0, 0, 1, 1], [], []>} : vector<8x32xf32>, vector<32x8xf32>, vector<8x8xf32> -> vector<8x8xf32>
    %93 = vector.broadcast %37 : f32 to vector<8x8xf32>
    %94 = arith.mulf %92, %93 : vector<8x8xf32>
    %cst_46 = arith.constant dense<0xFF800000> : vector<8xf32>
    %95 = vector.multi_reduction <maximumf>, %94, %cst_46 [1] : vector<8x8xf32> to vector<8xf32>
    %96 = vector.shape_cast %95 : vector<8xf32> to vector<8x1xf32>
    %97 = vector.broadcast %96 : vector<8x1xf32> to vector<8x8xf32>
    %98 = arith.subf %94, %97 : vector<8x8xf32>
    %99 = math.exp %98 : vector<8x8xf32>
    %cst_47 = arith.constant dense<0.000000e+00> : vector<8xf32>
    %100 = vector.multi_reduction <add>, %99, %cst_47 [1] : vector<8x8xf32> to vector<8xf32>
    %101 = vector.shape_cast %100 : vector<8xf32> to vector<8x1xf32>
    %102 = vector.broadcast %101 : vector<8x1xf32> to vector<8x8xf32>
    %103 = arith.divf %99, %102 : vector<8x8xf32>
    %cst_48 = arith.constant dense<0.000000e+00> : vector<8x32xf32>
    %104 = tpu.matmul %103, %90, %cst_48 {dimension_numbers = #tpu.dot_dimension_numbers<[1], [0], [0], [1], [0, 0, 1, 1], [], []>} : vector<8x8xf32>, vector<8x32xf32>, vector<8x32xf32> -> vector<8x32xf32>
    %105 = vector.extract_strided_slice %34 {offsets = [64, 0], sizes = [32, 128], strides = [1, 1]} : vector<128x128xf32> to vector<32x128xf32>
    %cst_49 = arith.constant dense<0.000000e+00> : vector<8x128xf32>
    %106 = tpu.matmul %104, %105, %cst_49 {dimension_numbers = #tpu.dot_dimension_numbers<[1], [0], [0], [1], [0, 0, 1, 1], [], []>} : vector<8x32xf32>, vector<32x128xf32>, vector<8x128xf32> -> vector<8x128xf32>
    %107 = arith.addf %87, %106 : vector<8x128xf32>
    %108 = vector.extract_strided_slice %40 {offsets = [0, 96], sizes = [8, 32], strides = [1, 1]} : vector<8x128xf32> to vector<8x32xf32>
    %109 = vector.extract_strided_slice %43 {offsets = [0, 96], sizes = [8, 32], strides = [1, 1]} : vector<8x128xf32> to vector<8x32xf32>
    %110 = vector.extract_strided_slice %46 {offsets = [0, 96], sizes = [8, 32], strides = [1, 1]} : vector<8x128xf32> to vector<8x32xf32>
    %111 = tpu.transpose %109, [1, 0] : vector<8x32xf32> -> vector<32x8xf32>
    %cst_50 = arith.constant dense<0.000000e+00> : vector<8x8xf32>
    %112 = tpu.matmul %108, %111, %cst_50 {dimension_numbers = #tpu.dot_dimension_numbers<[1], [0], [0], [1], [0, 0, 1, 1], [], []>} : vector<8x32xf32>, vector<32x8xf32>, vector<8x8xf32> -> vector<8x8xf32>
    %113 = vector.broadcast %37 : f32 to vector<8x8xf32>
    %114 = arith.mulf %112, %113 : vector<8x8xf32>
    %cst_51 = arith.constant dense<0xFF800000> : vector<8xf32>
    %115 = vector.multi_reduction <maximumf>, %114, %cst_51 [1] : vector<8x8xf32> to vector<8xf32>
    %116 = vector.shape_cast %115 : vector<8xf32> to vector<8x1xf32>
    %117 = vector.broadcast %116 : vector<8x1xf32> to vector<8x8xf32>
    %118 = arith.subf %114, %117 : vector<8x8xf32>
    %119 = math.exp %118 : vector<8x8xf32>
    %cst_52 = arith.constant dense<0.000000e+00> : vector<8xf32>
    %120 = vector.multi_reduction <add>, %119, %cst_52 [1] : vector<8x8xf32> to vector<8xf32>
    %121 = vector.shape_cast %120 : vector<8xf32> to vector<8x1xf32>
    %122 = vector.broadcast %121 : vector<8x1xf32> to vector<8x8xf32>
    %123 = arith.divf %119, %122 : vector<8x8xf32>
    %cst_53 = arith.constant dense<0.000000e+00> : vector<8x32xf32>
    %124 = tpu.matmul %123, %110, %cst_53 {dimension_numbers = #tpu.dot_dimension_numbers<[1], [0], [0], [1], [0, 0, 1, 1], [], []>} : vector<8x8xf32>, vector<8x32xf32>, vector<8x32xf32> -> vector<8x32xf32>
    %125 = vector.extract_strided_slice %34 {offsets = [96, 0], sizes = [32, 128], strides = [1, 1]} : vector<128x128xf32> to vector<32x128xf32>
    %cst_54 = arith.constant dense<0.000000e+00> : vector<8x128xf32>
    %126 = tpu.matmul %124, %125, %cst_54 {dimension_numbers = #tpu.dot_dimension_numbers<[1], [0], [0], [1], [0, 0, 1, 1], [], []>} : vector<8x32xf32>, vector<32x128xf32>, vector<8x128xf32> -> vector<8x128xf32>
    %127 = arith.addf %107, %126 : vector<8x128xf32>
    %128 = vector.broadcast %35 : vector<1x128xf32> to vector<8x128xf32>
    %129 = arith.addf %127, %128 : vector<8x128xf32>
    %130 = arith.addf %1, %129 : vector<8x128xf32>
    %c0_55 = arith.constant 0 : index
    %c0_56 = arith.constant 0 : index
    %131 = vector.load %arg27[%c0_55, %c0_56] : memref<1x128xf32, #tpu.memory_space<vmem>>, vector<1x128xf32>
    %c0_57 = arith.constant 0 : index
    %c0_58 = arith.constant 0 : index
    %132 = vector.load %arg28[%c0_57, %c0_58] : memref<1x128xf32, #tpu.memory_space<vmem>>, vector<1x128xf32>
    %cst_59 = arith.constant dense<0.000000e+00> : vector<8xf32>
    %133 = vector.multi_reduction <add>, %130, %cst_59 [1] : vector<8x128xf32> to vector<8xf32>
    %134 = vector.shape_cast %133 : vector<8xf32> to vector<8x1xf32>
    %cst_60 = arith.constant 1.280000e+02 : f32
    %135 = vector.broadcast %cst_60 : f32 to vector<8x1xf32>
    %136 = arith.divf %134, %135 : vector<8x1xf32>
    %137 = vector.broadcast %136 : vector<8x1xf32> to vector<8x128xf32>
    %138 = arith.subf %130, %137 : vector<8x128xf32>
    %139 = arith.mulf %138, %138 : vector<8x128xf32>
    %cst_61 = arith.constant dense<0.000000e+00> : vector<8xf32>
    %140 = vector.multi_reduction <add>, %139, %cst_61 [1] : vector<8x128xf32> to vector<8xf32>
    %141 = vector.shape_cast %140 : vector<8xf32> to vector<8x1xf32>
    %cst_62 = arith.constant 1.270000e+02 : f32
    %142 = vector.broadcast %cst_62 : f32 to vector<8x1xf32>
    %143 = arith.divf %141, %142 : vector<8x1xf32>
    %144 = math.sqrt %143 : vector<8x1xf32>
    %145 = vector.broadcast %136 : vector<8x1xf32> to vector<8x128xf32>
    %146 = arith.subf %130, %145 : vector<8x128xf32>
    %147 = vector.broadcast %131 : vector<1x128xf32> to vector<8x128xf32>
    %148 = arith.mulf %147, %146 : vector<8x128xf32>
    %cst_63 = arith.constant 9.99999997E-7 : f32
    %149 = vector.broadcast %cst_63 : f32 to vector<8x1xf32>
    %150 = arith.addf %144, %149 : vector<8x1xf32>
    %151 = vector.broadcast %150 : vector<8x1xf32> to vector<8x128xf32>
    %152 = arith.divf %148, %151 : vector<8x128xf32>
    %153 = vector.broadcast %132 : vector<1x128xf32> to vector<8x128xf32>
    %154 = arith.addf %152, %153 : vector<8x128xf32>
    %c0_64 = arith.constant 0 : index
    %c0_65 = arith.constant 0 : index
    %155 = vector.load %arg13[%c0_64, %c0_65] : memref<128x128xf32, #tpu.memory_space<vmem>>, vector<128x128xf32>
    %c0_66 = arith.constant 0 : index
    %c0_67 = arith.constant 0 : index
    %156 = vector.load %arg14[%c0_66, %c0_67] : memref<1x128xf32, #tpu.memory_space<vmem>>, vector<1x128xf32>
    %c0_68 = arith.constant 0 : index
    %c0_69 = arith.constant 0 : index
    %157 = vector.load %arg15[%c0_68, %c0_69] : memref<128x128xf32, #tpu.memory_space<vmem>>, vector<128x128xf32>
    %c0_70 = arith.constant 0 : index
    %c0_71 = arith.constant 0 : index
    %158 = vector.load %arg16[%c0_70, %c0_71] : memref<1x128xf32, #tpu.memory_space<vmem>>, vector<1x128xf32>
    %c0_72 = arith.constant 0 : index
    %c0_73 = arith.constant 0 : index
    %159 = vector.load %arg17[%c0_72, %c0_73] : memref<128x128xf32, #tpu.memory_space<vmem>>, vector<128x128xf32>
    %c0_74 = arith.constant 0 : index
    %c0_75 = arith.constant 0 : index
    %160 = vector.load %arg18[%c0_74, %c0_75] : memref<1x128xf32, #tpu.memory_space<vmem>>, vector<1x128xf32>
    %c0_76 = arith.constant 0 : index
    %c0_77 = arith.constant 0 : index
    %161 = vector.load %arg19[%c0_76, %c0_77] : memref<128x128xf32, #tpu.memory_space<vmem>>, vector<128x128xf32>
    %c0_78 = arith.constant 0 : index
    %c0_79 = arith.constant 0 : index
    %162 = vector.load %arg20[%c0_78, %c0_79] : memref<1x128xf32, #tpu.memory_space<vmem>>, vector<1x128xf32>
    %cst_80 = arith.constant 3.200000e+01 : f32
    %163 = math.sqrt %cst_80 : f32
    %cst_81 = arith.constant 1.000000e+00 : f32
    %164 = arith.divf %cst_81, %163 : f32
    %cst_82 = arith.constant dense<0.000000e+00> : vector<8x128xf32>
    %165 = tpu.matmul %154, %155, %cst_82 {dimension_numbers = #tpu.dot_dimension_numbers<[1], [0], [0], [1], [0, 0, 1, 1], [], []>} : vector<8x128xf32>, vector<128x128xf32>, vector<8x128xf32> -> vector<8x128xf32>
    %166 = vector.broadcast %156 : vector<1x128xf32> to vector<8x128xf32>
    %167 = arith.addf %165, %166 : vector<8x128xf32>
    %cst_83 = arith.constant dense<0.000000e+00> : vector<16x128xf32>
    %168 = tpu.matmul %3, %157, %cst_83 {dimension_numbers = #tpu.dot_dimension_numbers<[1], [0], [0], [1], [0, 0, 1, 1], [], []>} : vector<16x128xf32>, vector<128x128xf32>, vector<16x128xf32> -> vector<16x128xf32>
    %169 = vector.broadcast %158 : vector<1x128xf32> to vector<16x128xf32>
    %170 = arith.addf %168, %169 : vector<16x128xf32>
    %cst_84 = arith.constant dense<0.000000e+00> : vector<16x128xf32>
    %171 = tpu.matmul %3, %159, %cst_84 {dimension_numbers = #tpu.dot_dimension_numbers<[1], [0], [0], [1], [0, 0, 1, 1], [], []>} : vector<16x128xf32>, vector<128x128xf32>, vector<16x128xf32> -> vector<16x128xf32>
    %172 = vector.broadcast %160 : vector<1x128xf32> to vector<16x128xf32>
    %173 = arith.addf %171, %172 : vector<16x128xf32>
    %cst_85 = arith.constant 0.000000e+00 : f32
    %174 = vector.broadcast %cst_85 : f32 to vector<8x128xf32>
    %175 = vector.extract_strided_slice %167 {offsets = [0, 0], sizes = [8, 32], strides = [1, 1]} : vector<8x128xf32> to vector<8x32xf32>
    %176 = vector.extract_strided_slice %170 {offsets = [0, 0], sizes = [16, 32], strides = [1, 1]} : vector<16x128xf32> to vector<16x32xf32>
    %177 = vector.extract_strided_slice %173 {offsets = [0, 0], sizes = [16, 32], strides = [1, 1]} : vector<16x128xf32> to vector<16x32xf32>
    %178 = tpu.transpose %176, [1, 0] : vector<16x32xf32> -> vector<32x16xf32>
    %cst_86 = arith.constant dense<0.000000e+00> : vector<8x16xf32>
    %179 = tpu.matmul %175, %178, %cst_86 {dimension_numbers = #tpu.dot_dimension_numbers<[1], [0], [0], [1], [0, 0, 1, 1], [], []>} : vector<8x32xf32>, vector<32x16xf32>, vector<8x16xf32> -> vector<8x16xf32>
    %180 = vector.broadcast %164 : f32 to vector<8x16xf32>
    %181 = arith.mulf %179, %180 : vector<8x16xf32>
    %cst_87 = arith.constant dense<0xFF800000> : vector<8xf32>
    %182 = vector.multi_reduction <maximumf>, %181, %cst_87 [1] : vector<8x16xf32> to vector<8xf32>
    %183 = vector.shape_cast %182 : vector<8xf32> to vector<8x1xf32>
    %184 = vector.broadcast %183 : vector<8x1xf32> to vector<8x16xf32>
    %185 = arith.subf %181, %184 : vector<8x16xf32>
    %186 = math.exp %185 : vector<8x16xf32>
    %cst_88 = arith.constant dense<0.000000e+00> : vector<8xf32>
    %187 = vector.multi_reduction <add>, %186, %cst_88 [1] : vector<8x16xf32> to vector<8xf32>
    %188 = vector.shape_cast %187 : vector<8xf32> to vector<8x1xf32>
    %189 = vector.broadcast %188 : vector<8x1xf32> to vector<8x16xf32>
    %190 = arith.divf %186, %189 : vector<8x16xf32>
    %cst_89 = arith.constant dense<0.000000e+00> : vector<8x32xf32>
    %191 = tpu.matmul %190, %177, %cst_89 {dimension_numbers = #tpu.dot_dimension_numbers<[1], [0], [0], [1], [0, 0, 1, 1], [], []>} : vector<8x16xf32>, vector<16x32xf32>, vector<8x32xf32> -> vector<8x32xf32>
    %192 = vector.extract_strided_slice %161 {offsets = [0, 0], sizes = [32, 128], strides = [1, 1]} : vector<128x128xf32> to vector<32x128xf32>
    %cst_90 = arith.constant dense<0.000000e+00> : vector<8x128xf32>
    %193 = tpu.matmul %191, %192, %cst_90 {dimension_numbers = #tpu.dot_dimension_numbers<[1], [0], [0], [1], [0, 0, 1, 1], [], []>} : vector<8x32xf32>, vector<32x128xf32>, vector<8x128xf32> -> vector<8x128xf32>
    %194 = arith.addf %174, %193 : vector<8x128xf32>
    %195 = vector.extract_strided_slice %167 {offsets = [0, 32], sizes = [8, 32], strides = [1, 1]} : vector<8x128xf32> to vector<8x32xf32>
    %196 = vector.extract_strided_slice %170 {offsets = [0, 32], sizes = [16, 32], strides = [1, 1]} : vector<16x128xf32> to vector<16x32xf32>
    %197 = vector.extract_strided_slice %173 {offsets = [0, 32], sizes = [16, 32], strides = [1, 1]} : vector<16x128xf32> to vector<16x32xf32>
    %198 = tpu.transpose %196, [1, 0] : vector<16x32xf32> -> vector<32x16xf32>
    %cst_91 = arith.constant dense<0.000000e+00> : vector<8x16xf32>
    %199 = tpu.matmul %195, %198, %cst_91 {dimension_numbers = #tpu.dot_dimension_numbers<[1], [0], [0], [1], [0, 0, 1, 1], [], []>} : vector<8x32xf32>, vector<32x16xf32>, vector<8x16xf32> -> vector<8x16xf32>
    %200 = vector.broadcast %164 : f32 to vector<8x16xf32>
    %201 = arith.mulf %199, %200 : vector<8x16xf32>
    %cst_92 = arith.constant dense<0xFF800000> : vector<8xf32>
    %202 = vector.multi_reduction <maximumf>, %201, %cst_92 [1] : vector<8x16xf32> to vector<8xf32>
    %203 = vector.shape_cast %202 : vector<8xf32> to vector<8x1xf32>
    %204 = vector.broadcast %203 : vector<8x1xf32> to vector<8x16xf32>
    %205 = arith.subf %201, %204 : vector<8x16xf32>
    %206 = math.exp %205 : vector<8x16xf32>
    %cst_93 = arith.constant dense<0.000000e+00> : vector<8xf32>
    %207 = vector.multi_reduction <add>, %206, %cst_93 [1] : vector<8x16xf32> to vector<8xf32>
    %208 = vector.shape_cast %207 : vector<8xf32> to vector<8x1xf32>
    %209 = vector.broadcast %208 : vector<8x1xf32> to vector<8x16xf32>
    %210 = arith.divf %206, %209 : vector<8x16xf32>
    %cst_94 = arith.constant dense<0.000000e+00> : vector<8x32xf32>
    %211 = tpu.matmul %210, %197, %cst_94 {dimension_numbers = #tpu.dot_dimension_numbers<[1], [0], [0], [1], [0, 0, 1, 1], [], []>} : vector<8x16xf32>, vector<16x32xf32>, vector<8x32xf32> -> vector<8x32xf32>
    %212 = vector.extract_strided_slice %161 {offsets = [32, 0], sizes = [32, 128], strides = [1, 1]} : vector<128x128xf32> to vector<32x128xf32>
    %cst_95 = arith.constant dense<0.000000e+00> : vector<8x128xf32>
    %213 = tpu.matmul %211, %212, %cst_95 {dimension_numbers = #tpu.dot_dimension_numbers<[1], [0], [0], [1], [0, 0, 1, 1], [], []>} : vector<8x32xf32>, vector<32x128xf32>, vector<8x128xf32> -> vector<8x128xf32>
    %214 = arith.addf %194, %213 : vector<8x128xf32>
    %215 = vector.extract_strided_slice %167 {offsets = [0, 64], sizes = [8, 32], strides = [1, 1]} : vector<8x128xf32> to vector<8x32xf32>
    %216 = vector.extract_strided_slice %170 {offsets = [0, 64], sizes = [16, 32], strides = [1, 1]} : vector<16x128xf32> to vector<16x32xf32>
    %217 = vector.extract_strided_slice %173 {offsets = [0, 64], sizes = [16, 32], strides = [1, 1]} : vector<16x128xf32> to vector<16x32xf32>
    %218 = tpu.transpose %216, [1, 0] : vector<16x32xf32> -> vector<32x16xf32>
    %cst_96 = arith.constant dense<0.000000e+00> : vector<8x16xf32>
    %219 = tpu.matmul %215, %218, %cst_96 {dimension_numbers = #tpu.dot_dimension_numbers<[1], [0], [0], [1], [0, 0, 1, 1], [], []>} : vector<8x32xf32>, vector<32x16xf32>, vector<8x16xf32> -> vector<8x16xf32>
    %220 = vector.broadcast %164 : f32 to vector<8x16xf32>
    %221 = arith.mulf %219, %220 : vector<8x16xf32>
    %cst_97 = arith.constant dense<0xFF800000> : vector<8xf32>
    %222 = vector.multi_reduction <maximumf>, %221, %cst_97 [1] : vector<8x16xf32> to vector<8xf32>
    %223 = vector.shape_cast %222 : vector<8xf32> to vector<8x1xf32>
    %224 = vector.broadcast %223 : vector<8x1xf32> to vector<8x16xf32>
    %225 = arith.subf %221, %224 : vector<8x16xf32>
    %226 = math.exp %225 : vector<8x16xf32>
    %cst_98 = arith.constant dense<0.000000e+00> : vector<8xf32>
    %227 = vector.multi_reduction <add>, %226, %cst_98 [1] : vector<8x16xf32> to vector<8xf32>
    %228 = vector.shape_cast %227 : vector<8xf32> to vector<8x1xf32>
    %229 = vector.broadcast %228 : vector<8x1xf32> to vector<8x16xf32>
    %230 = arith.divf %226, %229 : vector<8x16xf32>
    %cst_99 = arith.constant dense<0.000000e+00> : vector<8x32xf32>
    %231 = tpu.matmul %230, %217, %cst_99 {dimension_numbers = #tpu.dot_dimension_numbers<[1], [0], [0], [1], [0, 0, 1, 1], [], []>} : vector<8x16xf32>, vector<16x32xf32>, vector<8x32xf32> -> vector<8x32xf32>
    %232 = vector.extract_strided_slice %161 {offsets = [64, 0], sizes = [32, 128], strides = [1, 1]} : vector<128x128xf32> to vector<32x128xf32>
    %cst_100 = arith.constant dense<0.000000e+00> : vector<8x128xf32>
    %233 = tpu.matmul %231, %232, %cst_100 {dimension_numbers = #tpu.dot_dimension_numbers<[1], [0], [0], [1], [0, 0, 1, 1], [], []>} : vector<8x32xf32>, vector<32x128xf32>, vector<8x128xf32> -> vector<8x128xf32>
    %234 = arith.addf %214, %233 : vector<8x128xf32>
    %235 = vector.extract_strided_slice %167 {offsets = [0, 96], sizes = [8, 32], strides = [1, 1]} : vector<8x128xf32> to vector<8x32xf32>
    %236 = vector.extract_strided_slice %170 {offsets = [0, 96], sizes = [16, 32], strides = [1, 1]} : vector<16x128xf32> to vector<16x32xf32>
    %237 = vector.extract_strided_slice %173 {offsets = [0, 96], sizes = [16, 32], strides = [1, 1]} : vector<16x128xf32> to vector<16x32xf32>
    %238 = tpu.transpose %236, [1, 0] : vector<16x32xf32> -> vector<32x16xf32>
    %cst_101 = arith.constant dense<0.000000e+00> : vector<8x16xf32>
    %239 = tpu.matmul %235, %238, %cst_101 {dimension_numbers = #tpu.dot_dimension_numbers<[1], [0], [0], [1], [0, 0, 1, 1], [], []>} : vector<8x32xf32>, vector<32x16xf32>, vector<8x16xf32> -> vector<8x16xf32>
    %240 = vector.broadcast %164 : f32 to vector<8x16xf32>
    %241 = arith.mulf %239, %240 : vector<8x16xf32>
    %cst_102 = arith.constant dense<0xFF800000> : vector<8xf32>
    %242 = vector.multi_reduction <maximumf>, %241, %cst_102 [1] : vector<8x16xf32> to vector<8xf32>
    %243 = vector.shape_cast %242 : vector<8xf32> to vector<8x1xf32>
    %244 = vector.broadcast %243 : vector<8x1xf32> to vector<8x16xf32>
    %245 = arith.subf %241, %244 : vector<8x16xf32>
    %246 = math.exp %245 : vector<8x16xf32>
    %cst_103 = arith.constant dense<0.000000e+00> : vector<8xf32>
    %247 = vector.multi_reduction <add>, %246, %cst_103 [1] : vector<8x16xf32> to vector<8xf32>
    %248 = vector.shape_cast %247 : vector<8xf32> to vector<8x1xf32>
    %249 = vector.broadcast %248 : vector<8x1xf32> to vector<8x16xf32>
    %250 = arith.divf %246, %249 : vector<8x16xf32>
    %cst_104 = arith.constant dense<0.000000e+00> : vector<8x32xf32>
    %251 = tpu.matmul %250, %237, %cst_104 {dimension_numbers = #tpu.dot_dimension_numbers<[1], [0], [0], [1], [0, 0, 1, 1], [], []>} : vector<8x16xf32>, vector<16x32xf32>, vector<8x32xf32> -> vector<8x32xf32>
    %252 = vector.extract_strided_slice %161 {offsets = [96, 0], sizes = [32, 128], strides = [1, 1]} : vector<128x128xf32> to vector<32x128xf32>
    %cst_105 = arith.constant dense<0.000000e+00> : vector<8x128xf32>
    %253 = tpu.matmul %251, %252, %cst_105 {dimension_numbers = #tpu.dot_dimension_numbers<[1], [0], [0], [1], [0, 0, 1, 1], [], []>} : vector<8x32xf32>, vector<32x128xf32>, vector<8x128xf32> -> vector<8x128xf32>
    %254 = arith.addf %234, %253 : vector<8x128xf32>
    %255 = vector.broadcast %162 : vector<1x128xf32> to vector<8x128xf32>
    %256 = arith.addf %254, %255 : vector<8x128xf32>
    %257 = arith.addf %130, %256 : vector<8x128xf32>
    %c0_106 = arith.constant 0 : index
    %c0_107 = arith.constant 0 : index
    %258 = vector.load %arg29[%c0_106, %c0_107] : memref<1x128xf32, #tpu.memory_space<vmem>>, vector<1x128xf32>
    %c0_108 = arith.constant 0 : index
    %c0_109 = arith.constant 0 : index
    %259 = vector.load %arg30[%c0_108, %c0_109] : memref<1x128xf32, #tpu.memory_space<vmem>>, vector<1x128xf32>
    %cst_110 = arith.constant dense<0.000000e+00> : vector<8xf32>
    %260 = vector.multi_reduction <add>, %257, %cst_110 [1] : vector<8x128xf32> to vector<8xf32>
    %261 = vector.shape_cast %260 : vector<8xf32> to vector<8x1xf32>
    %cst_111 = arith.constant 1.280000e+02 : f32
    %262 = vector.broadcast %cst_111 : f32 to vector<8x1xf32>
    %263 = arith.divf %261, %262 : vector<8x1xf32>
    %264 = vector.broadcast %263 : vector<8x1xf32> to vector<8x128xf32>
    %265 = arith.subf %257, %264 : vector<8x128xf32>
    %266 = arith.mulf %265, %265 : vector<8x128xf32>
    %cst_112 = arith.constant dense<0.000000e+00> : vector<8xf32>
    %267 = vector.multi_reduction <add>, %266, %cst_112 [1] : vector<8x128xf32> to vector<8xf32>
    %268 = vector.shape_cast %267 : vector<8xf32> to vector<8x1xf32>
    %cst_113 = arith.constant 1.270000e+02 : f32
    %269 = vector.broadcast %cst_113 : f32 to vector<8x1xf32>
    %270 = arith.divf %268, %269 : vector<8x1xf32>
    %271 = math.sqrt %270 : vector<8x1xf32>
    %272 = vector.broadcast %263 : vector<8x1xf32> to vector<8x128xf32>
    %273 = arith.subf %257, %272 : vector<8x128xf32>
    %274 = vector.broadcast %258 : vector<1x128xf32> to vector<8x128xf32>
    %275 = arith.mulf %274, %273 : vector<8x128xf32>
    %cst_114 = arith.constant 9.99999997E-7 : f32
    %276 = vector.broadcast %cst_114 : f32 to vector<8x1xf32>
    %277 = arith.addf %271, %276 : vector<8x1xf32>
    %278 = vector.broadcast %277 : vector<8x1xf32> to vector<8x128xf32>
    %279 = arith.divf %275, %278 : vector<8x128xf32>
    %280 = vector.broadcast %259 : vector<1x128xf32> to vector<8x128xf32>
    %281 = arith.addf %279, %280 : vector<8x128xf32>
    %c0_115 = arith.constant 0 : index
    %c0_116 = arith.constant 0 : index
    %282 = vector.load %arg21[%c0_115, %c0_116] : memref<128x512xf32, #tpu.memory_space<vmem>>, vector<128x512xf32>
    %c0_117 = arith.constant 0 : index
    %c0_118 = arith.constant 0 : index
    %283 = vector.load %arg23[%c0_117, %c0_118] : memref<512x128xf32, #tpu.memory_space<vmem>>, vector<512x128xf32>
    %cst_119 = arith.constant dense<0.000000e+00> : vector<8x512xf32>
    %284 = tpu.matmul %281, %282, %cst_119 {dimension_numbers = #tpu.dot_dimension_numbers<[1], [0], [0], [1], [0, 0, 1, 1], [], []>} : vector<8x128xf32>, vector<128x512xf32>, vector<8x512xf32> -> vector<8x512xf32>
    %c0_120 = arith.constant 0 : index
    %c0_121 = arith.constant 0 : index
    %285 = vector.load %arg22[%c0_120, %c0_121] : memref<1x512xf32, #tpu.memory_space<vmem>>, vector<1x512xf32>
    %286 = vector.broadcast %285 : vector<1x512xf32> to vector<8x512xf32>
    %287 = arith.addf %284, %286 : vector<8x512xf32>
    %cst_122 = arith.constant 0.000000e+00 : f32
    %288 = vector.broadcast %cst_122 : f32 to vector<8x512xf32>
    %289 = arith.maximumf %287, %288 : vector<8x512xf32>
    %cst_123 = arith.constant dense<0.000000e+00> : vector<8x128xf32>
    %290 = tpu.matmul %289, %283, %cst_123 {dimension_numbers = #tpu.dot_dimension_numbers<[1], [0], [0], [1], [0, 0, 1, 1], [], []>} : vector<8x512xf32>, vector<512x128xf32>, vector<8x128xf32> -> vector<8x128xf32>
    %291 = arith.addf %257, %290 : vector<8x128xf32>
    %c0_124 = arith.constant 0 : index
    %c0_125 = arith.constant 0 : index
    %292 = vector.load %arg24[%c0_124, %c0_125] : memref<1x128xf32, #tpu.memory_space<vmem>>, vector<1x128xf32>
    %293 = vector.broadcast %292 : vector<1x128xf32> to vector<8x128xf32>
    %294 = arith.addf %291, %293 : vector<8x128xf32>
    %c0_126 = arith.constant 0 : index
    %c0_127 = arith.constant 0 : index
    %c0_128 = arith.constant 0 : index
    %295 = vector.load %arg31[%c0_126, %c0_127, %c0_128] : memref<1x8x128xf32, #tpu.memory_space<vmem>>, vector<1x8x128xf32>
    %296 = vector.shape_cast %295 : vector<1x8x128xf32> to vector<8x128xf32>
    %297 = vector.shape_cast %294 : vector<8x128xf32> to vector<1x8x128xf32>
    tpu.vector_store %arg31[%c0_126, %c0_127, %c0_128], %297 {strides = array<i32>} : memref<1x8x128xf32, #tpu.memory_space<vmem>>, vector<1x8x128xf32>,
    return
  }
  func.func @transform_0(%arg0: i32, %arg1: i32) -> (i32, i32, i32) {
    %c0_i32 = arith.constant 0 : i32
    %c0_i32_0 = arith.constant 0 : i32
    return %arg0, %arg1, %c0_i32 : i32, i32, i32
  }
  func.func @transform_1(%arg0: i32, %arg1: i32) -> (i32, i32, i32) {
    %c0_i32 = arith.constant 0 : i32
    %c0_i32_0 = arith.constant 0 : i32
    %c0_i32_1 = arith.constant 0 : i32
    return %arg0, %c0_i32, %c0_i32_0 : i32, i32, i32
  }
  func.func @transform_2(%arg0: i32, %arg1: i32) -> (i32, i32, i32) {
    %c0_i32 = arith.constant 0 : i32
    %c0_i32_0 = arith.constant 0 : i32
    %c0_i32_1 = arith.constant 0 : i32
    return %arg0, %c0_i32, %c0_i32_0 : i32, i32, i32
  }
  func.func @transform_3(%arg0: i32, %arg1: i32) -> (i32, i32) {
    %c0_i32 = arith.constant 0 : i32
    %c0_i32_0 = arith.constant 0 : i32
    %c0_i32_1 = arith.constant 0 : i32
    return %c0_i32, %c0_i32_0 : i32, i32
  }
  func.func @transform_4(%arg0: i32, %arg1: i32) -> (i32, i32) {
    %c0_i32 = arith.constant 0 : i32
    %c0_i32_0 = arith.constant 0 : i32
    %c0_i32_1 = arith.constant 0 : i32
    return %c0_i32, %c0_i32_0 : i32, i32
  }
  func.func @transform_5(%arg0: i32, %arg1: i32) -> (i32, i32) {
    %c0_i32 = arith.constant 0 : i32
    %c0_i32_0 = arith.constant 0 : i32
    %c0_i32_1 = arith.constant 0 : i32
    return %c0_i32, %c0_i32_0 : i32, i32
  }
  func.func @transform_6(%arg0: i32, %arg1: i32) -> (i32, i32) {
    %c0_i32 = arith.constant 0 : i32
    %c0_i32_0 = arith.constant 0 : i32
    %c0_i32_1 = arith.constant 0 : i32
    return %c0_i32, %c0_i32_0 : i32, i32
  }
  func.func @transform_7(%arg0: i32, %arg1: i32) -> (i32, i32) {
    %c0_i32 = arith.constant 0 : i32
    %c0_i32_0 = arith.constant 0 : i32
    %c0_i32_1 = arith.constant 0 : i32
    return %c0_i32, %c0_i32_0 : i32, i32
  }
  func.func @transform_8(%arg0: i32, %arg1: i32) -> (i32, i32) {
    %c0_i32 = arith.constant 0 : i32
    %c0_i32_0 = arith.constant 0 : i32
    %c0_i32_1 = arith.constant 0 : i32
    return %c0_i32, %c0_i32_0 : i32, i32
  }
  func.func @transform_9(%arg0: i32, %arg1: i32) -> (i32, i32) {
    %c0_i32 = arith.constant 0 : i32
    %c0_i32_0 = arith.constant 0 : i32
    %c0_i32_1 = arith.constant 0 : i32
    return %c0_i32, %c0_i32_0 : i32, i32
  }
  func.func @transform_10(%arg0: i32, %arg1: i32) -> (i32, i32) {
    %c0_i32 = arith.constant 0 : i32
    %c0_i32_0 = arith.constant 0 : i32
    %c0_i32_1 = arith.constant 0 : i32
    return %c0_i32, %c0_i32_0 : i32, i32
  }
  func.func @transform_11(%arg0: i32, %arg1: i32) -> (i32, i32) {
    %c0_i32 = arith.constant 0 : i32
    %c0_i32_0 = arith.constant 0 : i32
    %c0_i32_1 = arith.constant 0 : i32
    return %c0_i32, %c0_i32_0 : i32, i32
  }
  func.func @transform_12(%arg0: i32, %arg1: i32) -> (i32, i32) {
    %c0_i32 = arith.constant 0 : i32
    %c0_i32_0 = arith.constant 0 : i32
    %c0_i32_1 = arith.constant 0 : i32
    return %c0_i32, %c0_i32_0 : i32, i32
  }
  func.func @transform_13(%arg0: i32, %arg1: i32) -> (i32, i32) {
    %c0_i32 = arith.constant 0 : i32
    %c0_i32_0 = arith.constant 0 : i32
    %c0_i32_1 = arith.constant 0 : i32
    return %c0_i32, %c0_i32_0 : i32, i32
  }
  func.func @transform_14(%arg0: i32, %arg1: i32) -> (i32, i32) {
    %c0_i32 = arith.constant 0 : i32
    %c0_i32_0 = arith.constant 0 : i32
    %c0_i32_1 = arith.constant 0 : i32
    return %c0_i32, %c0_i32_0 : i32, i32
  }
  func.func @transform_15(%arg0: i32, %arg1: i32) -> (i32, i32) {
    %c0_i32 = arith.constant 0 : i32
    %c0_i32_0 = arith.constant 0 : i32
    %c0_i32_1 = arith.constant 0 : i32
    return %c0_i32, %c0_i32_0 : i32, i32
  }
  func.func @transform_16(%arg0: i32, %arg1: i32) -> (i32, i32) {
    %c0_i32 = arith.constant 0 : i32
    %c0_i32_0 = arith.constant 0 : i32
    %c0_i32_1 = arith.constant 0 : i32
    return %c0_i32, %c0_i32_0 : i32, i32
  }
  func.func @transform_17(%arg0: i32, %arg1: i32) -> (i32, i32) {
    %c0_i32 = arith.constant 0 : i32
    %c0_i32_0 = arith.constant 0 : i32
    %c0_i32_1 = arith.constant 0 : i32
    return %c0_i32, %c0_i32_0 : i32, i32
  }
  func.func @transform_18(%arg0: i32, %arg1: i32) -> (i32, i32) {
    %c0_i32 = arith.constant 0 : i32
    %c0_i32_0 = arith.constant 0 : i32
    %c0_i32_1 = arith.constant 0 : i32
    return %c0_i32, %c0_i32_0 : i32, i32
  }
  func.func @transform_19(%arg0: i32, %arg1: i32) -> (i32, i32) {
    %c0_i32 = arith.constant 0 : i32
    %c0_i32_0 = arith.constant 0 : i32
    %c0_i32_1 = arith.constant 0 : i32
    return %c0_i32, %c0_i32_0 : i32, i32
  }
  func.func @transform_20(%arg0: i32, %arg1: i32) -> (i32, i32) {
    %c0_i32 = arith.constant 0 : i32
    %c0_i32_0 = arith.constant 0 : i32
    %c0_i32_1 = arith.constant 0 : i32
    return %c0_i32, %c0_i32_0 : i32, i32
  }
  func.func @transform_21(%arg0: i32, %arg1: i32) -> (i32, i32) {
    %c0_i32 = arith.constant 0 : i32
    %c0_i32_0 = arith.constant 0 : i32
    %c0_i32_1 = arith.constant 0 : i32
    return %c0_i32, %c0_i32_0 : i32, i32
  }
  func.func @transform_22(%arg0: i32, %arg1: i32) -> (i32, i32) {
    %c0_i32 = arith.constant 0 : i32
    %c0_i32_0 = arith.constant 0 : i32
    %c0_i32_1 = arith.constant 0 : i32
    return %c0_i32, %c0_i32_0 : i32, i32
  }
  func.func @transform_23(%arg0: i32, %arg1: i32) -> (i32, i32) {
    %c0_i32 = arith.constant 0 : i32
    %c0_i32_0 = arith.constant 0 : i32
    %c0_i32_1 = arith.constant 0 : i32
    return %c0_i32, %c0_i32_0 : i32, i32
  }
  func.func @transform_24(%arg0: i32, %arg1: i32) -> (i32, i32) {
    %c0_i32 = arith.constant 0 : i32
    %c0_i32_0 = arith.constant 0 : i32
    %c0_i32_1 = arith.constant 0 : i32
    return %c0_i32, %c0_i32_0 : i32, i32
  }
  func.func @transform_25(%arg0: i32, %arg1: i32) -> (i32, i32) {
    %c0_i32 = arith.constant 0 : i32
    %c0_i32_0 = arith.constant 0 : i32
    %c0_i32_1 = arith.constant 0 : i32
    return %c0_i32, %c0_i32_0 : i32, i32
  }
  func.func @transform_26(%arg0: i32, %arg1: i32) -> (i32, i32) {
    %c0_i32 = arith.constant 0 : i32
    %c0_i32_0 = arith.constant 0 : i32
    %c0_i32_1 = arith.constant 0 : i32
    return %c0_i32, %c0_i32_0 : i32, i32
  }
  func.func @transform_27(%arg0: i32, %arg1: i32) -> (i32, i32) {
    %c0_i32 = arith.constant 0 : i32
    %c0_i32_0 = arith.constant 0 : i32
    %c0_i32_1 = arith.constant 0 : i32
    return %c0_i32, %c0_i32_0 : i32, i32
  }
  func.func @transform_28(%arg0: i32, %arg1: i32) -> (i32, i32) {
    %c0_i32 = arith.constant 0 : i32
    %c0_i32_0 = arith.constant 0 : i32
    %c0_i32_1 = arith.constant 0 : i32
    return %c0_i32, %c0_i32_0 : i32, i32
  }
  func.func @transform_29(%arg0: i32, %arg1: i32) -> (i32, i32, i32) {
    %c0_i32 = arith.constant 0 : i32
    %c0_i32_0 = arith.constant 0 : i32
    return %arg0, %arg1, %c0_i32 : i32, i32, i32
  }
}

</mosaic_0001>

<llo_original>
// kernel: tpu_custom_call.1
$region0: #{tpu_custom_call.1}
  #allocation0 [shape = 'u32[]', space=smem, size = 0x4, offset = 0x4, fixed_abs, tag = 'smem constant byte address 0x4 - core index']
  #allocation1 [shape = 'u32[144,128]{1,0:T(1,128)}', space=vmem, size = 0x12000, scoped, tag = 'internal scratch']
  %s0 = inlined_call_operand.smem [shape: u32[30], index: -1, kind: input, shape index: {}]
  %s1 = sld [smem:[%s0]]
  %s2 = scalar_lea.smem %s0, 1
  %s3 = sld [smem:[%s2]]
  %s4 = scalar_lea.smem %s0, 2
  %s5 = sld [smem:[%s4]]
  %s6 = scalar_lea.smem %s0, 3
  %s7 = sld [smem:[%s6]]
  %s8 = scalar_lea.smem %s0, 4
  %s9 = sld [smem:[%s8]]
  %s10 = scalar_lea.smem %s0, 5
  %s11 = sld [smem:[%s10]]
  %s12 = scalar_lea.smem %s0, 6
  %s13 = sld [smem:[%s12]]
  %s14 = scalar_lea.smem %s0, 7
  %s15 = sld [smem:[%s14]]
  %s16 = scalar_lea.smem %s0, 8
  %s17 = sld [smem:[%s16]]
  %s18 = scalar_lea.smem %s0, 9
  %s19 = sld [smem:[%s18]]
  %s20 = scalar_lea.smem %s0, 10
  %s21 = sld [smem:[%s20]]
  %s22 = scalar_lea.smem %s0, 11
  %s23 = sld [smem:[%s22]]
  %s24 = scalar_lea.smem %s0, 12
  %s25 = sld [smem:[%s24]]
  %s26 = scalar_lea.smem %s0, 13
  %s27 = sld [smem:[%s26]]
  %s28 = scalar_lea.smem %s0, 14
  %s29 = sld [smem:[%s28]]
  %s30 = scalar_lea.smem %s0, 15
  %s31 = sld [smem:[%s30]]
  %s32 = scalar_lea.smem %s0, 16
  %s33 = sld [smem:[%s32]]
  %s34 = scalar_lea.smem %s0, 17
  %s35 = sld [smem:[%s34]]
  %s36 = scalar_lea.smem %s0, 18
  %s37 = sld [smem:[%s36]]
  %s38 = scalar_lea.smem %s0, 19
  %s39 = sld [smem:[%s38]]
  %s40 = scalar_lea.smem %s0, 20
  %s41 = sld [smem:[%s40]]
  %s42 = scalar_lea.smem %s0, 21
  %s43 = sld [smem:[%s42]]
  %s44 = scalar_lea.smem %s0, 22
  %s45 = sld [smem:[%s44]]
  %s46 = scalar_lea.smem %s0, 23
  %s47 = sld [smem:[%s46]]
  %s48 = scalar_lea.smem %s0, 24
  %s49 = sld [smem:[%s48]]
  %s50 = scalar_lea.smem %s0, 25
  %s51 = sld [smem:[%s50]]
  %s52 = scalar_lea.smem %s0, 26
  %s53 = sld [smem:[%s52]]
  %s54 = scalar_lea.smem %s0, 27
  %s55 = sld [smem:[%s54]]
  %s56 = scalar_lea.smem %s0, 28
  %s57 = sld [smem:[%s56]]
  %s58 = scalar_lea.smem %s0, 29
  %s59 = sld [smem:[%s58]]
  %s60 = sld [smem:[#allocation0]]
  $region201: #{tpu_custom_call.1} parent=0
    _
  %s62 = ssub.s32 1, %s60
  %s63 = scalar_select 0, %s62, %s60
  $region1: #{tpu_custom_call.1} parent=0
    #allocation2 [shape = 'u8[8192]{0}', space=vmem, size = 0x2000, scoped, tag = 'input window, operand 0']
    #allocation3 [shape = 's32[2]{0}', space=sflag, size = 0x8, scoped, tag = 'scoped memory for tpu_custom_call.1']
    #allocation4 [shape = 's32[2]{0}', space=sflag, size = 0x8, scoped, tag = 'scoped memory for tpu_custom_call.1']
    #allocation5 [shape = 'u8[8192]{0}', space=vmem, size = 0x2000, scoped, tag = 'input window, operand 1']
    #allocation6 [shape = 's32[2]{0}', space=sflag, size = 0x8, scoped, tag = 'scoped memory for tpu_custom_call.1']
    #allocation7 [shape = 'u8[16384]{0}', space=vmem, size = 0x4000, scoped, tag = 'input window, operand 2']
    #allocation8 [shape = 'u8[65536]{0}', space=vmem, size = 0x10000, scoped, tag = 'input window, operand 3, single buffered']
    #allocation9 [shape = 's32[1]{0}', space=sflag, size = 0x4, scoped, tag = 'scoped memory for tpu_custom_call.1']
    #allocation10 [shape = 'u8[65536]{0}', space=vmem, size = 0x10000, scoped, tag = 'input window, operand 5, single buffered']
    #allocation11 [shape = 'u8[65536]{0}', space=vmem, size = 0x10000, scoped, tag = 'input window, operand 7, single buffered']
    #allocation12 [shape = 's32[1]{0}', space=sflag, size = 0x4, scoped, tag = 'scoped memory for tpu_custom_call.1']
    #allocation13 [shape = 'u8[65536]{0}', space=vmem, size = 0x10000, scoped, tag = 'input window, operand 9, single buffered']
    #allocation14 [shape = 'u8[65536]{0}', space=vmem, size = 0x10000, scoped, tag = 'input window, operand 11, single buffered']
    #allocation15 [shape = 's32[1]{0}', space=sflag, size = 0x4, scoped, tag = 'scoped memory for tpu_custom_call.1']
    #allocation16 [shape = 'u8[65536]{0}', space=vmem, size = 0x10000, scoped, tag = 'input window, operand 13, single buffered']
    #allocation17 [shape = 'u8[65536]{0}', space=vmem, size = 0x10000, scoped, tag = 'input window, operand 15, single buffered']
    #allocation18 [shape = 's32[1]{0}', space=sflag, size = 0x4, scoped, tag = 'scoped memory for tpu_custom_call.1']
    #allocation19 [shape = 'u8[65536]{0}', space=vmem, size = 0x10000, scoped, tag = 'input window, operand 17, single buffered']
    #allocation20 [shape = 'u8[262144]{0}', space=vmem, size = 0x40000, scoped, tag = 'input window, operand 19, single buffered']
    #allocation21 [shape = 's32[1]{0}', space=sflag, size = 0x4, scoped, tag = 'scoped memory for tpu_custom_call.1']
    #allocation22 [shape = 'u8[262144]{0}', space=vmem, size = 0x40000, scoped, tag = 'input window, operand 21, single buffered']
    #allocation23 [shape = 'u8[8192]{0}', space=vmem, size = 0x2000, scoped, tag = 'output window, operand 0']
    %64 = vsyncpa [#allocation3], 0
    %s65 = scalar_lea.sflag [#allocation3], 1
    %66 = vsyncpa %s65, 0
    %67 = vsyncpa [#allocation6], 0
    %s68 = scalar_lea.sflag [#allocation6], 1
    %69 = vsyncpa %s68, 0
    %70 = vsyncpa [#allocation9], 0
    %71 = vsyncpa [#allocation12], 0
    %72 = vsyncpa [#allocation15], 0
    %73 = vsyncpa [#allocation18], 0
    %74 = vsyncpa [#allocation21], 0
    %75 = vsyncpa [#allocation4], 0
    %s76 = scalar_lea.sflag [#allocation4], 1
    %77 = vsyncpa %s76, 0
    loop: start=0, step=1, limit=4
    $region2: #{tpu_custom_call.1} parent=1 // loop_pre_header
      _
    $region3: #{tpu_custom_call.1} parent=1 // loop_header
      %s79 = sphi 0, %s83
      %p80 = scmp.ge.s32.totalorder %s79, 4
      %s86 = sphi 0, %s98
      %s87 = sphi 0, %s94
      %s88 = sphi 0, %s86
      %s89 = sphi 0, %s87
      %s90 = sphi 0, %s88
      %s91 = sphi 0, %s89
      %s103 = sphi 0, %s105
      %s106 = sphi 0, %s103
      %s107 = sphi 0, %s106
      %s123 = sphi 0, %s107
      %s129 = sphi 0, %s131
      %s132 = sphi 0, %s129
      %s133 = sphi 0, %s132
      %s149 = sphi 0, %s133
      %s155 = sphi 0, %s157
      %s158 = sphi 0, %s155
      %s159 = sphi 0, %s158
      %s175 = sphi 0, %s159
      %s179 = sphi 0, %s179
      %s181 = sphi 0, %s179
      %s182 = sphi 0, %s181
      %s196 = sphi 0, %s182
      %s200 = sphi 0, %s200
      %s202 = sphi 0, %s200
      %s203 = sphi 0, %s202
      %s217 = sphi 0, %s203
      %s221 = sphi 0, %s221
      %s223 = sphi 0, %s221
      %s224 = sphi 0, %s223
      %s238 = sphi 0, %s224
      %s242 = sphi 0, %s242
      %s244 = sphi 0, %s242
      %s245 = sphi 0, %s244
      %s259 = sphi 0, %s245
      %s263 = sphi 0, %s263
      %s265 = sphi 0, %s263
      %s266 = sphi 0, %s265
      %s280 = sphi 0, %s266
      %s284 = sphi 0, %s284
      %s286 = sphi 0, %s284
      %s287 = sphi 0, %s286
      %s301 = sphi 0, %s287
      %s305 = sphi 0, %s305
      %s307 = sphi 0, %s305
      %s308 = sphi 0, %s307
      %s322 = sphi 0, %s308
      %s326 = sphi 0, %s326
      %s328 = sphi 0, %s326
      %s329 = sphi 0, %s328
      %s343 = sphi 0, %s329
      %s347 = sphi 0, %s347
      %s349 = sphi 0, %s347
      %s350 = sphi 0, %s349
      %s364 = sphi 0, %s350
      %s368 = sphi 0, %s368
      %s370 = sphi 0, %s368
      %s371 = sphi 0, %s370
      %s385 = sphi 0, %s371
      %s389 = sphi 0, %s389
      %s391 = sphi 0, %s389
      %s392 = sphi 0, %s391
      %s406 = sphi 0, %s392
      %s410 = sphi 0, %s410
      %s412 = sphi 0, %s410
      %s413 = sphi 0, %s412
      %s427 = sphi 0, %s413
      %s431 = sphi 0, %s431
      %s433 = sphi 0, %s431
      %s434 = sphi 0, %s433
      %s448 = sphi 0, %s434
      %s452 = sphi 0, %s452
      %s454 = sphi 0, %s452
      %s455 = sphi 0, %s454
      %s469 = sphi 0, %s455
      %s473 = sphi 0, %s473
      %s475 = sphi 0, %s473
      %s476 = sphi 0, %s475
      %s490 = sphi 0, %s476
      %s494 = sphi 0, %s494
      %s496 = sphi 0, %s494
      %s497 = sphi 0, %s496
      %s511 = sphi 0, %s497
      %s515 = sphi 0, %s515
      %s517 = sphi 0, %s515
      %s518 = sphi 0, %s517
      %s532 = sphi 0, %s518
      %s536 = sphi 0, %s536
      %s538 = sphi 0, %s536
      %s539 = sphi 0, %s538
      %s553 = sphi 0, %s539
      %s557 = sphi 0, %s557
      %s559 = sphi 0, %s557
      %s560 = sphi 0, %s559
      %s574 = sphi 0, %s560
      %s578 = sphi 0, %s578
      %s580 = sphi 0, %s578
      %s581 = sphi 0, %s580
      %s595 = sphi 0, %s581
      %s599 = sphi 0, %s599
      %s601 = sphi 0, %s599
      %s602 = sphi 0, %s601
      %s616 = sphi 0, %s602
      %s620 = sphi 0, %s620
      %s622 = sphi 0, %s620
      %s623 = sphi 0, %s622
      %s637 = sphi 0, %s623
      %s641 = sphi 0, %s641
      %s643 = sphi 0, %s641
      %s644 = sphi 0, %s643
      %s658 = sphi 0, %s644
      %s662 = sphi 0, %s662
      %s664 = sphi 0, %s662
      %s665 = sphi 0, %s664
      %s679 = sphi 0, %s665
      %s683 = sphi 0, %s683
      %s685 = sphi 0, %s683
      %s686 = sphi 0, %s685
      %s700 = sphi 0, %s686
      %s704 = sphi 0, %s704
      %s706 = sphi 0, %s704
      %s707 = sphi 0, %s706
      %s721 = sphi 0, %s707
      %s729 = sphi 0, %s731
      %s732 = sphi 0, %s729
      %s733 = sphi 0, %s732
      %s749 = sphi 0, %s733
    $region4: #{tpu_custom_call.1} parent=1 // loop_header_branch
      %82 = sbr.rel (%p80) target = $region8
    $region5: #{tpu_custom_call.1} parent=1 // loop_body
      %s84 = ssub.s32 %s79, 1
      %s85 = ssub.s32 %s79, 2
      %s92 = sadd.s32 1, %s87
      %p93 = scmp.ge.s32.totalorder %s92, 1
      %s94 = scalar_select %p93, 0, %s92
      %s95 = sadd.s32 1, %s86
      %s96 = scalar_select %p93, %s95, %s86
      %p97 = scmp.ge.s32.totalorder %s96, 2
      %s98 = scalar_select %p97, 0, %s96
      %s99 = ssub.s32 %s86, %s98
      %s100 = ssub.s32 %s87, %s94
      %s101 = sor.u32 %s99, %s100
      %p102 = scmp.eq.s32.totalorder %s101, 0
      %s104 = sadd.s32 %s103, 1
      %s105 = scalar_select %p102, %s103, %s104
      %p108 = pneg %p102
      %p109 = scmp.eq.s32.totalorder %s79, 1
      %p110 = por %p108, %p109
      %p111 = scmp.ne.s32.totalorder %s103, %s106
      %p112 = scmp.eq.s32.totalorder %s79, 0
      %p113 = por %p111, %p112
      %p114 = scmp.ne.s32.totalorder %s103, %s106
      %p115 = scmp.eq.s32.totalorder %s84, 1
      %p116 = por %p114, %p115
      %p117 = scmp.ne.s32.totalorder %s106, %s107
      %p118 = scmp.eq.s32.totalorder %s84, 0
      %p119 = por %p117, %p118
      %p120 = scmp.ne.s32.totalorder %s106, %s107
      %p121 = scmp.eq.s32.totalorder %s85, 1
      %p122 = por %p120, %p121
      %p124 = scmp.ne.s32.totalorder %s107, %s123
      %p125 = scmp.eq.s32.totalorder %s85, 0
      %p126 = por %p124, %p125
      %s127 = ssub.s32 %s86, %s98
      %p128 = scmp.eq.s32.totalorder %s127, 0
      %s130 = sadd.s32 %s129, 1
      %s131 = scalar_select %p128, %s129, %s130
      %p134 = pneg %p128
      %p135 = scmp.eq.s32.totalorder %s79, 1
      %p136 = por %p134, %p135
      %p137 = scmp.ne.s32.totalorder %s129, %s132
      %p138 = scmp.eq.s32.totalorder %s79, 0
      %p139 = por %p137, %p138
      %p140 = scmp.ne.s32.totalorder %s129, %s132
      %p141 = scmp.eq.s32.totalorder %s84, 1
      %p142 = por %p140, %p141
      %p143 = scmp.ne.s32.totalorder %s132, %s133
      %p144 = scmp.eq.s32.totalorder %s84, 0
      %p145 = por %p143, %p144
      %p146 = scmp.ne.s32.totalorder %s132, %s133
      %p147 = scmp.eq.s32.totalorder %s85, 1
      %p148 = por %p146, %p147
      %p150 = scmp.ne.s32.totalorder %s133, %s149
      %p151 = scmp.eq.s32.totalorder %s85, 0
      %p152 = por %p150, %p151
      %s153 = ssub.s32 %s86, %s98
      %p154 = scmp.eq.s32.totalorder %s153, 0
      %s156 = sadd.s32 %s155, 1
      %s157 = scalar_select %p154, %s155, %s156
      %p160 = pneg %p154
      %p161 = scmp.eq.s32.totalorder %s79, 1
      %p162 = por %p160, %p161
      %p163 = scmp.ne.s32.totalorder %s155, %s158
      %p164 = scmp.eq.s32.totalorder %s79, 0
      %p165 = por %p163, %p164
      %p166 = scmp.ne.s32.totalorder %s155, %s158
      %p167 = scmp.eq.s32.totalorder %s84, 1
      %p168 = por %p166, %p167
      %p169 = scmp.ne.s32.totalorder %s158, %s159
      %p170 = scmp.eq.s32.totalorder %s84, 0
      %p171 = por %p169, %p170
      %p172 = scmp.ne.s32.totalorder %s158, %s159
      %p173 = scmp.eq.s32.totalorder %s85, 1
      %p174 = por %p172, %p173
      %p176 = scmp.ne.s32.totalorder %s159, %s175
      %p177 = scmp.eq.s32.totalorder %s85, 0
      %p178 = por %p176, %p177
      %s180 = sadd.s32 %s179, 1
      %p183 = scmp.eq.s32.totalorder %s79, 1
      %p184 = scmp.ne.s32.totalorder %s179, %s181
      %p185 = scmp.eq.s32.totalorder %s79, 0
      %p186 = por %p184, %p185
      %p187 = scmp.ne.s32.totalorder %s179, %s181
      %p188 = scmp.eq.s32.totalorder %s84, 1
      %p189 = por %p187, %p188
      %p190 = scmp.ne.s32.totalorder %s181, %s182
      %p191 = scmp.eq.s32.totalorder %s84, 0
      %p192 = por %p190, %p191
      %p193 = scmp.ne.s32.totalorder %s181, %s182
      %p194 = scmp.eq.s32.totalorder %s85, 1
      %p195 = por %p193, %p194
      %p197 = scmp.ne.s32.totalorder %s182, %s196
      %p198 = scmp.eq.s32.totalorder %s85, 0
      %p199 = por %p197, %p198
      %s201 = sadd.s32 %s200, 1
      %p204 = scmp.eq.s32.totalorder %s79, 1
      %p205 = scmp.ne.s32.totalorder %s200, %s202
      %p206 = scmp.eq.s32.totalorder %s79, 0
      %p207 = por %p205, %p206
      %p208 = scmp.ne.s32.totalorder %s200, %s202
      %p209 = scmp.eq.s32.totalorder %s84, 1
      %p210 = por %p208, %p209
      %p211 = scmp.ne.s32.totalorder %s202, %s203
      %p212 = scmp.eq.s32.totalorder %s84, 0
      %p213 = por %p211, %p212
      %p214 = scmp.ne.s32.totalorder %s202, %s203
      %p215 = scmp.eq.s32.totalorder %s85, 1
      %p216 = por %p214, %p215
      %p218 = scmp.ne.s32.totalorder %s203, %s217
      %p219 = scmp.eq.s32.totalorder %s85, 0
      %p220 = por %p218, %p219
      %s222 = sadd.s32 %s221, 1
      %p225 = scmp.eq.s32.totalorder %s79, 1
      %p226 = scmp.ne.s32.totalorder %s221, %s223
      %p227 = scmp.eq.s32.totalorder %s79, 0
      %p228 = por %p226, %p227
      %p229 = scmp.ne.s32.totalorder %s221, %s223
      %p230 = scmp.eq.s32.totalorder %s84, 1
      %p231 = por %p229, %p230
      %p232 = scmp.ne.s32.totalorder %s223, %s224
      %p233 = scmp.eq.s32.totalorder %s84, 0
      %p234 = por %p232, %p233
      %p235 = scmp.ne.s32.totalorder %s223, %s224
      %p236 = scmp.eq.s32.totalorder %s85, 1
      %p237 = por %p235, %p236
      %p239 = scmp.ne.s32.totalorder %s224, %s238
      %p240 = scmp.eq.s32.totalorder %s85, 0
      %p241 = por %p239, %p240
      %s243 = sadd.s32 %s242, 1
      %p246 = scmp.eq.s32.totalorder %s79, 1
      %p247 = scmp.ne.s32.totalorder %s242, %s244
      %p248 = scmp.eq.s32.totalorder %s79, 0
      %p249 = por %p247, %p248
      %p250 = scmp.ne.s32.totalorder %s242, %s244
      %p251 = scmp.eq.s32.totalorder %s84, 1
      %p252 = por %p250, %p251
      %p253 = scmp.ne.s32.totalorder %s244, %s245
      %p254 = scmp.eq.s32.totalorder %s84, 0
      %p255 = por %p253, %p254
      %p256 = scmp.ne.s32.totalorder %s244, %s245
      %p257 = scmp.eq.s32.totalorder %s85, 1
      %p258 = por %p256, %p257
      %p260 = scmp.ne.s32.totalorder %s245, %s259
      %p261 = scmp.eq.s32.totalorder %s85, 0
      %p262 = por %p260, %p261
      %s264 = sadd.s32 %s263, 1
      %p267 = scmp.eq.s32.totalorder %s79, 1
      %p268 = scmp.ne.s32.totalorder %s263, %s265
      %p269 = scmp.eq.s32.totalorder %s79, 0
      %p270 = por %p268, %p269
      %p271 = scmp.ne.s32.totalorder %s263, %s265
      %p272 = scmp.eq.s32.totalorder %s84, 1
      %p273 = por %p271, %p272
      %p274 = scmp.ne.s32.totalorder %s265, %s266
      %p275 = scmp.eq.s32.totalorder %s84, 0
      %p276 = por %p274, %p275
      %p277 = scmp.ne.s32.totalorder %s265, %s266
      %p278 = scmp.eq.s32.totalorder %s85, 1
      %p279 = por %p277, %p278
      %p281 = scmp.ne.s32.totalorder %s266, %s280
      %p282 = scmp.eq.s32.totalorder %s85, 0
      %p283 = por %p281, %p282
      %s285 = sadd.s32 %s284, 1
      %p288 = scmp.eq.s32.totalorder %s79, 1
      %p289 = scmp.ne.s32.totalorder %s284, %s286
      %p290 = scmp.eq.s32.totalorder %s79, 0
      %p291 = por %p289, %p290
      %p292 = scmp.ne.s32.totalorder %s284, %s286
      %p293 = scmp.eq.s32.totalorder %s84, 1
      %p294 = por %p292, %p293
      %p295 = scmp.ne.s32.totalorder %s286, %s287
      %p296 = scmp.eq.s32.totalorder %s84, 0
      %p297 = por %p295, %p296
      %p298 = scmp.ne.s32.totalorder %s286, %s287
      %p299 = scmp.eq.s32.totalorder %s85, 1
      %p300 = por %p298, %p299
      %p302 = scmp.ne.s32.totalorder %s287, %s301
      %p303 = scmp.eq.s32.totalorder %s85, 0
      %p304 = por %p302, %p303
      %s306 = sadd.s32 %s305, 1
      %p309 = scmp.eq.s32.totalorder %s79, 1
      %p310 = scmp.ne.s32.totalorder %s305, %s307
      %p311 = scmp.eq.s32.totalorder %s79, 0
      %p312 = por %p310, %p311
      %p313 = scmp.ne.s32.totalorder %s305, %s307
      %p314 = scmp.eq.s32.totalorder %s84, 1
      %p315 = por %p313, %p314
      %p316 = scmp.ne.s32.totalorder %s307, %s308
      %p317 = scmp.eq.s32.totalorder %s84, 0
      %p318 = por %p316, %p317
      %p319 = scmp.ne.s32.totalorder %s307, %s308
      %p320 = scmp.eq.s32.totalorder %s85, 1
      %p321 = por %p319, %p320
      %p323 = scmp.ne.s32.totalorder %s308, %s322
      %p324 = scmp.eq.s32.totalorder %s85, 0
      %p325 = por %p323, %p324
      %s327 = sadd.s32 %s326, 1
      %p330 = scmp.eq.s32.totalorder %s79, 1
      %p331 = scmp.ne.s32.totalorder %s326, %s328
      %p332 = scmp.eq.s32.totalorder %s79, 0
      %p333 = por %p331, %p332
      %p334 = scmp.ne.s32.totalorder %s326, %s328
      %p335 = scmp.eq.s32.totalorder %s84, 1
      %p336 = por %p334, %p335
      %p337 = scmp.ne.s32.totalorder %s328, %s329
      %p338 = scmp.eq.s32.totalorder %s84, 0
      %p339 = por %p337, %p338
      %p340 = scmp.ne.s32.totalorder %s328, %s329
      %p341 = scmp.eq.s32.totalorder %s85, 1
      %p342 = por %p340, %p341
      %p344 = scmp.ne.s32.totalorder %s329, %s343
      %p345 = scmp.eq.s32.totalorder %s85, 0
      %p346 = por %p344, %p345
      %s348 = sadd.s32 %s347, 1
      %p351 = scmp.eq.s32.totalorder %s79, 1
      %p352 = scmp.ne.s32.totalorder %s347, %s349
      %p353 = scmp.eq.s32.totalorder %s79, 0
      %p354 = por %p352, %p353
      %p355 = scmp.ne.s32.totalorder %s347, %s349
      %p356 = scmp.eq.s32.totalorder %s84, 1
      %p357 = por %p355, %p356
      %p358 = scmp.ne.s32.totalorder %s349, %s350
      %p359 = scmp.eq.s32.totalorder %s84, 0
      %p360 = por %p358, %p359
      %p361 = scmp.ne.s32.totalorder %s349, %s350
      %p362 = scmp.eq.s32.totalorder %s85, 1
      %p363 = por %p361, %p362
      %p365 = scmp.ne.s32.totalorder %s350, %s364
      %p366 = scmp.eq.s32.totalorder %s85, 0
      %p367 = por %p365, %p366
      %s369 = sadd.s32 %s368, 1
      %p372 = scmp.eq.s32.totalorder %s79, 1
      %p373 = scmp.ne.s32.totalorder %s368, %s370
      %p374 = scmp.eq.s32.totalorder %s79, 0
      %p375 = por %p373, %p374
      %p376 = scmp.ne.s32.totalorder %s368, %s370
      %p377 = scmp.eq.s32.totalorder %s84, 1
      %p378 = por %p376, %p377
      %p379 = scmp.ne.s32.totalorder %s370, %s371
      %p380 = scmp.eq.s32.totalorder %s84, 0
      %p381 = por %p379, %p380
      %p382 = scmp.ne.s32.totalorder %s370, %s371
      %p383 = scmp.eq.s32.totalorder %s85, 1
      %p384 = por %p382, %p383
      %p386 = scmp.ne.s32.totalorder %s371, %s385
      %p387 = scmp.eq.s32.totalorder %s85, 0
      %p388 = por %p386, %p387
      %s390 = sadd.s32 %s389, 1
      %p393 = scmp.eq.s32.totalorder %s79, 1
      %p394 = scmp.ne.s32.totalorder %s389, %s391
      %p395 = scmp.eq.s32.totalorder %s79, 0
      %p396 = por %p394, %p395
      %p397 = scmp.ne.s32.totalorder %s389, %s391
      %p398 = scmp.eq.s32.totalorder %s84, 1
      %p399 = por %p397, %p398
      %p400 = scmp.ne.s32.totalorder %s391, %s392
      %p401 = scmp.eq.s32.totalorder %s84, 0
      %p402 = por %p400, %p401
      %p403 = scmp.ne.s32.totalorder %s391, %s392
      %p404 = scmp.eq.s32.totalorder %s85, 1
      %p405 = por %p403, %p404
      %p407 = scmp.ne.s32.totalorder %s392, %s406
      %p408 = scmp.eq.s32.totalorder %s85, 0
      %p409 = por %p407, %p408
      %s411 = sadd.s32 %s410, 1
      %p414 = scmp.eq.s32.totalorder %s79, 1
      %p415 = scmp.ne.s32.totalorder %s410, %s412
      %p416 = scmp.eq.s32.totalorder %s79, 0
      %p417 = por %p415, %p416
      %p418 = scmp.ne.s32.totalorder %s410, %s412
      %p419 = scmp.eq.s32.totalorder %s84, 1
      %p420 = por %p418, %p419
      %p421 = scmp.ne.s32.totalorder %s412, %s413
      %p422 = scmp.eq.s32.totalorder %s84, 0
      %p423 = por %p421, %p422
      %p424 = scmp.ne.s32.totalorder %s412, %s413
      %p425 = scmp.eq.s32.totalorder %s85, 1
      %p426 = por %p424, %p425
      %p428 = scmp.ne.s32.totalorder %s413, %s427
      %p429 = scmp.eq.s32.totalorder %s85, 0
      %p430 = por %p428, %p429
      %s432 = sadd.s32 %s431, 1
      %p435 = scmp.eq.s32.totalorder %s79, 1
      %p436 = scmp.ne.s32.totalorder %s431, %s433
      %p437 = scmp.eq.s32.totalorder %s79, 0
      %p438 = por %p436, %p437
      %p439 = scmp.ne.s32.totalorder %s431, %s433
      %p440 = scmp.eq.s32.totalorder %s84, 1
      %p441 = por %p439, %p440
      %p442 = scmp.ne.s32.totalorder %s433, %s434
      %p443 = scmp.eq.s32.totalorder %s84, 0
      %p444 = por %p442, %p443
      %p445 = scmp.ne.s32.totalorder %s433, %s434
      %p446 = scmp.eq.s32.totalorder %s85, 1
      %p447 = por %p445, %p446
      %p449 = scmp.ne.s32.totalorder %s434, %s448
      %p450 = scmp.eq.s32.totalorder %s85, 0
      %p451 = por %p449, %p450
      %s453 = sadd.s32 %s452, 1
      %p456 = scmp.eq.s32.totalorder %s79, 1
      %p457 = scmp.ne.s32.totalorder %s452, %s454
      %p458 = scmp.eq.s32.totalorder %s79, 0
      %p459 = por %p457, %p458
      %p460 = scmp.ne.s32.totalorder %s452, %s454
      %p461 = scmp.eq.s32.totalorder %s84, 1
      %p462 = por %p460, %p461
      %p463 = scmp.ne.s32.totalorder %s454, %s455
      %p464 = scmp.eq.s32.totalorder %s84, 0
      %p465 = por %p463, %p464
      %p466 = scmp.ne.s32.totalorder %s454, %s455
      %p467 = scmp.eq.s32.totalorder %s85, 1
      %p468 = por %p466, %p467
      %p470 = scmp.ne.s32.totalorder %s455, %s469
      %p471 = scmp.eq.s32.totalorder %s85, 0
      %p472 = por %p470, %p471
      %s474 = sadd.s32 %s473, 1
      %p477 = scmp.eq.s32.totalorder %s79, 1
      %p478 = scmp.ne.s32.totalorder %s473, %s475
      %p479 = scmp.eq.s32.totalorder %s79, 0
      %p480 = por %p478, %p479
      %p481 = scmp.ne.s32.totalorder %s473, %s475
      %p482 = scmp.eq.s32.totalorder %s84, 1
      %p483 = por %p481, %p482
      %p484 = scmp.ne.s32.totalorder %s475, %s476
      %p485 = scmp.eq.s32.totalorder %s84, 0
      %p486 = por %p484, %p485
      %p487 = scmp.ne.s32.totalorder %s475, %s476
      %p488 = scmp.eq.s32.totalorder %s85, 1
      %p489 = por %p487, %p488
      %p491 = scmp.ne.s32.totalorder %s476, %s490
      %p492 = scmp.eq.s32.totalorder %s85, 0
      %p493 = por %p491, %p492
      %s495 = sadd.s32 %s494, 1
      %p498 = scmp.eq.s32.totalorder %s79, 1
      %p499 = scmp.ne.s32.totalorder %s494, %s496
      %p500 = scmp.eq.s32.totalorder %s79, 0
      %p501 = por %p499, %p500
      %p502 = scmp.ne.s32.totalorder %s494, %s496
      %p503 = scmp.eq.s32.totalorder %s84, 1
      %p504 = por %p502, %p503
      %p505 = scmp.ne.s32.totalorder %s496, %s497
      %p506 = scmp.eq.s32.totalorder %s84, 0
      %p507 = por %p505, %p506
      %p508 = scmp.ne.s32.totalorder %s496, %s497
      %p509 = scmp.eq.s32.totalorder %s85, 1
      %p510 = por %p508, %p509
      %p512 = scmp.ne.s32.totalorder %s497, %s511
      %p513 = scmp.eq.s32.totalorder %s85, 0
      %p514 = por %p512, %p513
      %s516 = sadd.s32 %s515, 1
      %p519 = scmp.eq.s32.totalorder %s79, 1
      %p520 = scmp.ne.s32.totalorder %s515, %s517
      %p521 = scmp.eq.s32.totalorder %s79, 0
      %p522 = por %p520, %p521
      %p523 = scmp.ne.s32.totalorder %s515, %s517
      %p524 = scmp.eq.s32.totalorder %s84, 1
      %p525 = por %p523, %p524
      %p526 = scmp.ne.s32.totalorder %s517, %s518
      %p527 = scmp.eq.s32.totalorder %s84, 0
      %p528 = por %p526, %p527
      %p529 = scmp.ne.s32.totalorder %s517, %s518
      %p530 = scmp.eq.s32.totalorder %s85, 1
      %p531 = por %p529, %p530
      %p533 = scmp.ne.s32.totalorder %s518, %s532
      %p534 = scmp.eq.s32.totalorder %s85, 0
      %p535 = por %p533, %p534
      %s537 = sadd.s32 %s536, 1
      %p540 = scmp.eq.s32.totalorder %s79, 1
      %p541 = scmp.ne.s32.totalorder %s536, %s538
      %p542 = scmp.eq.s32.totalorder %s79, 0
      %p543 = por %p541, %p542
      %p544 = scmp.ne.s32.totalorder %s536, %s538
      %p545 = scmp.eq.s32.totalorder %s84, 1
      %p546 = por %p544, %p545
      %p547 = scmp.ne.s32.totalorder %s538, %s539
      %p548 = scmp.eq.s32.totalorder %s84, 0
      %p549 = por %p547, %p548
      %p550 = scmp.ne.s32.totalorder %s538, %s539
      %p551 = scmp.eq.s32.totalorder %s85, 1
      %p552 = por %p550, %p551
      %p554 = scmp.ne.s32.totalorder %s539, %s553
      %p555 = scmp.eq.s32.totalorder %s85, 0
      %p556 = por %p554, %p555
      %s558 = sadd.s32 %s557, 1
      %p561 = scmp.eq.s32.totalorder %s79, 1
      %p562 = scmp.ne.s32.totalorder %s557, %s559
      %p563 = scmp.eq.s32.totalorder %s79, 0
      %p564 = por %p562, %p563
      %p565 = scmp.ne.s32.totalorder %s557, %s559
      %p566 = scmp.eq.s32.totalorder %s84, 1
      %p567 = por %p565, %p566
      %p568 = scmp.ne.s32.totalorder %s559, %s560
      %p569 = scmp.eq.s32.totalorder %s84, 0
      %p570 = por %p568, %p569
      %p571 = scmp.ne.s32.totalorder %s559, %s560
      %p572 = scmp.eq.s32.totalorder %s85, 1
      %p573 = por %p571, %p572
      %p575 = scmp.ne.s32.totalorder %s560, %s574
      %p576 = scmp.eq.s32.totalorder %s85, 0
      %p577 = por %p575, %p576
      %s579 = sadd.s32 %s578, 1
      %p582 = scmp.eq.s32.totalorder %s79, 1
      %p583 = scmp.ne.s32.totalorder %s578, %s580
      %p584 = scmp.eq.s32.totalorder %s79, 0
      %p585 = por %p583, %p584
      %p586 = scmp.ne.s32.totalorder %s578, %s580
      %p587 = scmp.eq.s32.totalorder %s84, 1
      %p588 = por %p586, %p587
      %p589 = scmp.ne.s32.totalorder %s580, %s581
      %p590 = scmp.eq.s32.totalorder %s84, 0
      %p591 = por %p589, %p590
      %p592 = scmp.ne.s32.totalorder %s580, %s581
      %p593 = scmp.eq.s32.totalorder %s85, 1
      %p594 = por %p592, %p593
      %p596 = scmp.ne.s32.totalorder %s581, %s595
      %p597 = scmp.eq.s32.totalorder %s85, 0
      %p598 = por %p596, %p597
      %s600 = sadd.s32 %s599, 1
      %p603 = scmp.eq.s32.totalorder %s79, 1
      %p604 = scmp.ne.s32.totalorder %s599, %s601
      %p605 = scmp.eq.s32.totalorder %s79, 0
      %p606 = por %p604, %p605
      %p607 = scmp.ne.s32.totalorder %s599, %s601
      %p608 = scmp.eq.s32.totalorder %s84, 1
      %p609 = por %p607, %p608
      %p610 = scmp.ne.s32.totalorder %s601, %s602
      %p611 = scmp.eq.s32.totalorder %s84, 0
      %p612 = por %p610, %p611
      %p613 = scmp.ne.s32.totalorder %s601, %s602
      %p614 = scmp.eq.s32.totalorder %s85, 1
      %p615 = por %p613, %p614
      %p617 = scmp.ne.s32.totalorder %s602, %s616
      %p618 = scmp.eq.s32.totalorder %s85, 0
      %p619 = por %p617, %p618
      %s621 = sadd.s32 %s620, 1
      %p624 = scmp.eq.s32.totalorder %s79, 1
      %p625 = scmp.ne.s32.totalorder %s620, %s622
      %p626 = scmp.eq.s32.totalorder %s79, 0
      %p627 = por %p625, %p626
      %p628 = scmp.ne.s32.totalorder %s620, %s622
      %p629 = scmp.eq.s32.totalorder %s84, 1
      %p630 = por %p628, %p629
      %p631 = scmp.ne.s32.totalorder %s622, %s623
      %p632 = scmp.eq.s32.totalorder %s84, 0
      %p633 = por %p631, %p632
      %p634 = scmp.ne.s32.totalorder %s622, %s623
      %p635 = scmp.eq.s32.totalorder %s85, 1
      %p636 = por %p634, %p635
      %p638 = scmp.ne.s32.totalorder %s623, %s637
      %p639 = scmp.eq.s32.totalorder %s85, 0
      %p640 = por %p638, %p639
      %s642 = sadd.s32 %s641, 1
      %p645 = scmp.eq.s32.totalorder %s79, 1
      %p646 = scmp.ne.s32.totalorder %s641, %s643
      %p647 = scmp.eq.s32.totalorder %s79, 0
      %p648 = por %p646, %p647
      %p649 = scmp.ne.s32.totalorder %s641, %s643
      %p650 = scmp.eq.s32.totalorder %s84, 1
      %p651 = por %p649, %p650
      %p652 = scmp.ne.s32.totalorder %s643, %s644
      %p653 = scmp.eq.s32.totalorder %s84, 0
      %p654 = por %p652, %p653
      %p655 = scmp.ne.s32.totalorder %s643, %s644
      %p656 = scmp.eq.s32.totalorder %s85, 1
      %p657 = por %p655, %p656
      %p659 = scmp.ne.s32.totalorder %s644, %s658
      %p660 = scmp.eq.s32.totalorder %s85, 0
      %p661 = por %p659, %p660
      %s663 = sadd.s32 %s662, 1
      %p666 = scmp.eq.s32.totalorder %s79, 1
      %p667 = scmp.ne.s32.totalorder %s662, %s664
      %p668 = scmp.eq.s32.totalorder %s79, 0
      %p669 = por %p667, %p668
      %p670 = scmp.ne.s32.totalorder %s662, %s664
      %p671 = scmp.eq.s32.totalorder %s84, 1
      %p672 = por %p670, %p671
      %p673 = scmp.ne.s32.totalorder %s664, %s665
      %p674 = scmp.eq.s32.totalorder %s84, 0
      %p675 = por %p673, %p674
      %p676 = scmp.ne.s32.totalorder %s664, %s665
      %p677 = scmp.eq.s32.totalorder %s85, 1
      %p678 = por %p676, %p677
      %p680 = scmp.ne.s32.totalorder %s665, %s679
      %p681 = scmp.eq.s32.totalorder %s85, 0
      %p682 = por %p680, %p681
      %s684 = sadd.s32 %s683, 1
      %p687 = scmp.eq.s32.totalorder %s79, 1
      %p688 = scmp.ne.s32.totalorder %s683, %s685
      %p689 = scmp.eq.s32.totalorder %s79, 0
      %p690 = por %p688, %p689
      %p691 = scmp.ne.s32.totalorder %s683, %s685
      %p692 = scmp.eq.s32.totalorder %s84, 1
      %p693 = por %p691, %p692
      %p694 = scmp.ne.s32.totalorder %s685, %s686
      %p695 = scmp.eq.s32.totalorder %s84, 0
      %p696 = por %p694, %p695
      %p697 = scmp.ne.s32.totalorder %s685, %s686
      %p698 = scmp.eq.s32.totalorder %s85, 1
      %p699 = por %p697, %p698
      %p701 = scmp.ne.s32.totalorder %s686, %s700
      %p702 = scmp.eq.s32.totalorder %s85, 0
      %p703 = por %p701, %p702
      %s705 = sadd.s32 %s704, 1
      %p708 = scmp.eq.s32.totalorder %s79, 1
      %p709 = scmp.ne.s32.totalorder %s704, %s706
      %p710 = scmp.eq.s32.totalorder %s79, 0
      %p711 = por %p709, %p710
      %p712 = scmp.ne.s32.totalorder %s704, %s706
      %p713 = scmp.eq.s32.totalorder %s84, 1
      %p714 = por %p712, %p713
      %p715 = scmp.ne.s32.totalorder %s706, %s707
      %p716 = scmp.eq.s32.totalorder %s84, 0
      %p717 = por %p715, %p716
      %p718 = scmp.ne.s32.totalorder %s706, %s707
      %p719 = scmp.eq.s32.totalorder %s85, 1
      %p720 = por %p718, %p719
      %p722 = scmp.ne.s32.totalorder %s707, %s721
      %p723 = scmp.eq.s32.totalorder %s85, 0
      %p724 = por %p722, %p723
      %s725 = ssub.s32 %s86, %s98
      %s726 = ssub.s32 %s87, %s94
      %s727 = sor.u32 %s725, %s726
      %p728 = scmp.eq.s32.totalorder %s727, 0
      %s730 = sadd.s32 %s729, 1
      %s731 = scalar_select %p728, %s729, %s730
      %p734 = pneg %p728
      %p735 = scmp.eq.s32.totalorder %s79, 1
      %p736 = por %p734, %p735
      %p737 = scmp.ne.s32.totalorder %s729, %s732
      %p738 = scmp.eq.s32.totalorder %s79, 0
      %p739 = por %p737, %p738
      %p740 = scmp.ne.s32.totalorder %s729, %s732
      %p741 = scmp.eq.s32.totalorder %s84, 1
      %p742 = por %p740, %p741
      %p743 = scmp.ne.s32.totalorder %s732, %s733
      %p744 = scmp.eq.s32.totalorder %s84, 0
      %p745 = por %p743, %p744
      %p746 = scmp.ne.s32.totalorder %s732, %s733
      %p747 = scmp.eq.s32.totalorder %s85, 1
      %p748 = por %p746, %p747
      %p750 = scmp.ne.s32.totalorder %s733, %s749
      %p751 = scmp.eq.s32.totalorder %s85, 0
      %p752 = por %p750, %p751
      %p753 = scmp.le.s32.totalorder 1, %s79
      %p754 = scmp.lt.s32.totalorder %s79, 3
      %p755 = pnand %p753, %p754
      %p756 = pneg %p755
      // Predicated region
      $region9: #{tpu_custom_call.1} parent=5 // pred_check
        _
      $region10: #{tpu_custom_call.1} parent=5 // pred_check_branch
        %758 = sbr.rel (%p755) target = $region12
      $region11: #{tpu_custom_call.1} parent=5 // pred_region
        %s759 = ssub.s32 %s79, 1
        // Predicated region
        $region13: #{tpu_custom_call.1} parent=11 // pred_check
          %p760 = pneg %p192
        $region14: #{tpu_custom_call.1} parent=11 // pred_check_branch
          %762 = sbr.rel (%p760) target = $region16
        $region15: #{tpu_custom_call.1} parent=11 // pred_region
          %s764 = ssub.s32 2048, 2048
          %765 = vsyncadd [#allocation9], %s764
          %s766 = sshll.u32 [#allocation8], 4
          %s767 = int_to_ptr.vmem [resolvable:$true] %s766
          %772 = dma.hbm_to_vmem [thread:$0]  %s7, 2048, %s767, [#allocation9], 128, 128, 8
        $region16: #{tpu_custom_call.1} parent=11 // pred_fallthru
          _
        // Predicated region
        $region17: #{tpu_custom_call.1} parent=11 // pred_check
          %p773 = pneg %p213
        $region18: #{tpu_custom_call.1} parent=11 // pred_check_branch
          %775 = sbr.rel (%p773) target = $region20
        $region19: #{tpu_custom_call.1} parent=11 // pred_region
          _
        $region20: #{tpu_custom_call.1} parent=11 // pred_fallthru
          _
        // Predicated region
        $region21: #{tpu_custom_call.1} parent=11 // pred_check
          %p776 = pneg %p234
        $region22: #{tpu_custom_call.1} parent=11 // pred_check_branch
          %778 = sbr.rel (%p776) target = $region24
        $region23: #{tpu_custom_call.1} parent=11 // pred_region
          %s780 = ssub.s32 2048, 2048
          %781 = vsyncadd [#allocation9], %s780
          %s782 = sshll.u32 [#allocation10], 4
          %s783 = int_to_ptr.vmem [resolvable:$true] %s782
          %788 = dma.hbm_to_vmem [thread:$0]  %s11, 2048, %s783, [#allocation9], 128, 128, 8
        $region24: #{tpu_custom_call.1} parent=11 // pred_fallthru
          _
        // Predicated region
        $region25: #{tpu_custom_call.1} parent=11 // pred_check
          %p789 = pneg %p255
        $region26: #{tpu_custom_call.1} parent=11 // pred_check_branch
          %791 = sbr.rel (%p789) target = $region28
        $region27: #{tpu_custom_call.1} parent=11 // pred_region
          _
        $region28: #{tpu_custom_call.1} parent=11 // pred_fallthru
          _
        // Predicated region
        $region29: #{tpu_custom_call.1} parent=11 // pred_check
          %p792 = pneg %p276
        $region30: #{tpu_custom_call.1} parent=11 // pred_check_branch
          %794 = sbr.rel (%p792) target = $region32
        $region31: #{tpu_custom_call.1} parent=11 // pred_region
          %s796 = ssub.s32 2048, 2048
          %797 = vsyncadd [#allocation12], %s796
          %s798 = sshll.u32 [#allocation11], 4
          %s799 = int_to_ptr.vmem [resolvable:$true] %s798
          %804 = dma.hbm_to_vmem [thread:$0]  %s15, 2048, %s799, [#allocation12], 128, 128, 8
        $region32: #{tpu_custom_call.1} parent=11 // pred_fallthru
          _
        // Predicated region
        $region33: #{tpu_custom_call.1} parent=11 // pred_check
          %p805 = pneg %p297
        $region34: #{tpu_custom_call.1} parent=11 // pred_check_branch
          %807 = sbr.rel (%p805) target = $region36
        $region35: #{tpu_custom_call.1} parent=11 // pred_region
          _
        $region36: #{tpu_custom_call.1} parent=11 // pred_fallthru
          _
        // Predicated region
        $region37: #{tpu_custom_call.1} parent=11 // pred_check
          %p808 = pneg %p318
        $region38: #{tpu_custom_call.1} parent=11 // pred_check_branch
          %810 = sbr.rel (%p808) target = $region40
        $region39: #{tpu_custom_call.1} parent=11 // pred_region
          %s812 = ssub.s32 2048, 2048
          %813 = vsyncadd [#allocation12], %s812
          %s814 = sshll.u32 [#allocation13], 4
          %s815 = int_to_ptr.vmem [resolvable:$true] %s814
          %820 = dma.hbm_to_vmem [thread:$0]  %s19, 2048, %s815, [#allocation12], 128, 128, 8
        $region40: #{tpu_custom_call.1} parent=11 // pred_fallthru
          _
        // Predicated region
        $region41: #{tpu_custom_call.1} parent=11 // pred_check
          %p821 = pneg %p339
        $region42: #{tpu_custom_call.1} parent=11 // pred_check_branch
          %823 = sbr.rel (%p821) target = $region44
        $region43: #{tpu_custom_call.1} parent=11 // pred_region
          _
        $region44: #{tpu_custom_call.1} parent=11 // pred_fallthru
          _
        // Predicated region
        $region45: #{tpu_custom_call.1} parent=11 // pred_check
          %p824 = pneg %p360
        $region46: #{tpu_custom_call.1} parent=11 // pred_check_branch
          %826 = sbr.rel (%p824) target = $region48
        $region47: #{tpu_custom_call.1} parent=11 // pred_region
          %s828 = ssub.s32 2048, 2048
          %829 = vsyncadd [#allocation15], %s828
          %s830 = sshll.u32 [#allocation14], 4
          %s831 = int_to_ptr.vmem [resolvable:$true] %s830
          %836 = dma.hbm_to_vmem [thread:$0]  %s23, 2048, %s831, [#allocation15], 128, 128, 8
        $region48: #{tpu_custom_call.1} parent=11 // pred_fallthru
          _
        // Predicated region
        $region49: #{tpu_custom_call.1} parent=11 // pred_check
          %p837 = pneg %p381
        $region50: #{tpu_custom_call.1} parent=11 // pred_check_branch
          %839 = sbr.rel (%p837) target = $region52
        $region51: #{tpu_custom_call.1} parent=11 // pred_region
          _
        $region52: #{tpu_custom_call.1} parent=11 // pred_fallthru
          _
        // Predicated region
        $region53: #{tpu_custom_call.1} parent=11 // pred_check
          %p840 = pneg %p402
        $region54: #{tpu_custom_call.1} parent=11 // pred_check_branch
          %842 = sbr.rel (%p840) target = $region56
        $region55: #{tpu_custom_call.1} parent=11 // pred_region
          %s844 = ssub.s32 2048, 2048
          %845 = vsyncadd [#allocation15], %s844
          %s846 = sshll.u32 [#allocation16], 4
          %s847 = int_to_ptr.vmem [resolvable:$true] %s846
          %852 = dma.hbm_to_vmem [thread:$0]  %s27, 2048, %s847, [#allocation15], 128, 128, 8
        $region56: #{tpu_custom_call.1} parent=11 // pred_fallthru
          _
        // Predicated region
        $region57: #{tpu_custom_call.1} parent=11 // pred_check
          %p853 = pneg %p423
        $region58: #{tpu_custom_call.1} parent=11 // pred_check_branch
          %855 = sbr.rel (%p853) target = $region60
        $region59: #{tpu_custom_call.1} parent=11 // pred_region
          _
        $region60: #{tpu_custom_call.1} parent=11 // pred_fallthru
          _
        // Predicated region
        $region61: #{tpu_custom_call.1} parent=11 // pred_check
          %p856 = pneg %p444
        $region62: #{tpu_custom_call.1} parent=11 // pred_check_branch
          %858 = sbr.rel (%p856) target = $region64
        $region63: #{tpu_custom_call.1} parent=11 // pred_region
          %s860 = ssub.s32 2048, 2048
          %861 = vsyncadd [#allocation18], %s860
          %s862 = sshll.u32 [#allocation17], 4
          %s863 = int_to_ptr.vmem [resolvable:$true] %s862
          %868 = dma.hbm_to_vmem [thread:$0]  %s31, 2048, %s863, [#allocation18], 128, 128, 8
        $region64: #{tpu_custom_call.1} parent=11 // pred_fallthru
          _
        // Predicated region
        $region65: #{tpu_custom_call.1} parent=11 // pred_check
          %p869 = pneg %p465
        $region66: #{tpu_custom_call.1} parent=11 // pred_check_branch
          %871 = sbr.rel (%p869) target = $region68
        $region67: #{tpu_custom_call.1} parent=11 // pred_region
          _
        $region68: #{tpu_custom_call.1} parent=11 // pred_fallthru
          _
        // Predicated region
        $region69: #{tpu_custom_call.1} parent=11 // pred_check
          %p872 = pneg %p486
        $region70: #{tpu_custom_call.1} parent=11 // pred_check_branch
          %874 = sbr.rel (%p872) target = $region72
        $region71: #{tpu_custom_call.1} parent=11 // pred_region
          %s876 = ssub.s32 2048, 2048
          %877 = vsyncadd [#allocation18], %s876
          %s878 = sshll.u32 [#allocation19], 4
          %s879 = int_to_ptr.vmem [resolvable:$true] %s878
          %884 = dma.hbm_to_vmem [thread:$0]  %s35, 2048, %s879, [#allocation18], 128, 128, 8
        $region72: #{tpu_custom_call.1} parent=11 // pred_fallthru
          _
        // Predicated region
        $region73: #{tpu_custom_call.1} parent=11 // pred_check
          %p885 = pneg %p507
        $region74: #{tpu_custom_call.1} parent=11 // pred_check_branch
          %887 = sbr.rel (%p885) target = $region76
        $region75: #{tpu_custom_call.1} parent=11 // pred_region
          _
        $region76: #{tpu_custom_call.1} parent=11 // pred_fallthru
          _
        // Predicated region
        $region77: #{tpu_custom_call.1} parent=11 // pred_check
          %p888 = pneg %p528
        $region78: #{tpu_custom_call.1} parent=11 // pred_check_branch
          %890 = sbr.rel (%p888) target = $region80
        $region79: #{tpu_custom_call.1} parent=11 // pred_region
          %s892 = ssub.s32 8192, 8192
          %893 = vsyncadd [#allocation21], %s892
          %s894 = sshll.u32 [#allocation20], 4
          %s895 = int_to_ptr.vmem [resolvable:$true] %s894
          %900 = dma.hbm_to_vmem [thread:$0]  %s39, 8192, %s895, [#allocation21], 512, 512, 32
        $region80: #{tpu_custom_call.1} parent=11 // pred_fallthru
          _
        // Predicated region
        $region81: #{tpu_custom_call.1} parent=11 // pred_check
          %p901 = pneg %p549
        $region82: #{tpu_custom_call.1} parent=11 // pred_check_branch
          %903 = sbr.rel (%p901) target = $region84
        $region83: #{tpu_custom_call.1} parent=11 // pred_region
          _
        $region84: #{tpu_custom_call.1} parent=11 // pred_fallthru
          _
        // Predicated region
        $region85: #{tpu_custom_call.1} parent=11 // pred_check
          %p904 = pneg %p570
        $region86: #{tpu_custom_call.1} parent=11 // pred_check_branch
          %906 = sbr.rel (%p904) target = $region88
        $region87: #{tpu_custom_call.1} parent=11 // pred_region
          %s908 = ssub.s32 8192, 8192
          %909 = vsyncadd [#allocation21], %s908
          %s910 = sshll.u32 [#allocation22], 4
          %s911 = int_to_ptr.vmem [resolvable:$true] %s910
          %916 = dma.hbm_to_vmem [thread:$0]  %s43, 8192, %s911, [#allocation21], 128, 128, 8
        $region88: #{tpu_custom_call.1} parent=11 // pred_fallthru
          _
        // Predicated region
        $region89: #{tpu_custom_call.1} parent=11 // pred_check
          %p917 = pneg %p591
        $region90: #{tpu_custom_call.1} parent=11 // pred_check_branch
          %919 = sbr.rel (%p917) target = $region92
        $region91: #{tpu_custom_call.1} parent=11 // pred_region
          _
        $region92: #{tpu_custom_call.1} parent=11 // pred_fallthru
          _
        // Predicated region
        $region93: #{tpu_custom_call.1} parent=11 // pred_check
          %p920 = pneg %p612
        $region94: #{tpu_custom_call.1} parent=11 // pred_check_branch
          %922 = sbr.rel (%p920) target = $region96
        $region95: #{tpu_custom_call.1} parent=11 // pred_region
          _
        $region96: #{tpu_custom_call.1} parent=11 // pred_fallthru
          _
        // Predicated region
        $region97: #{tpu_custom_call.1} parent=11 // pred_check
          %p923 = pneg %p633
        $region98: #{tpu_custom_call.1} parent=11 // pred_check_branch
          %925 = sbr.rel (%p923) target = $region100
        $region99: #{tpu_custom_call.1} parent=11 // pred_region
          _
        $region100: #{tpu_custom_call.1} parent=11 // pred_fallthru
          _
        // Predicated region
        $region101: #{tpu_custom_call.1} parent=11 // pred_check
          %p926 = pneg %p654
        $region102: #{tpu_custom_call.1} parent=11 // pred_check_branch
          %928 = sbr.rel (%p926) target = $region104
        $region103: #{tpu_custom_call.1} parent=11 // pred_region
          _
        $region104: #{tpu_custom_call.1} parent=11 // pred_fallthru
          _
        // Predicated region
        $region105: #{tpu_custom_call.1} parent=11 // pred_check
          %p929 = pneg %p675
        $region106: #{tpu_custom_call.1} parent=11 // pred_check_branch
          %931 = sbr.rel (%p929) target = $region108
        $region107: #{tpu_custom_call.1} parent=11 // pred_region
          _
        $region108: #{tpu_custom_call.1} parent=11 // pred_fallthru
          _
        // Predicated region
        $region109: #{tpu_custom_call.1} parent=11 // pred_check
          %p932 = pneg %p696
        $region110: #{tpu_custom_call.1} parent=11 // pred_check_branch
          %934 = sbr.rel (%p932) target = $region112
        $region111: #{tpu_custom_call.1} parent=11 // pred_region
          _
        $region112: #{tpu_custom_call.1} parent=11 // pred_fallthru
          _
        // Predicated region
        $region113: #{tpu_custom_call.1} parent=11 // pred_check
          %p935 = pneg %p717
        $region114: #{tpu_custom_call.1} parent=11 // pred_check_branch
          %937 = sbr.rel (%p935) target = $region116
        $region115: #{tpu_custom_call.1} parent=11 // pred_region
          _
        $region116: #{tpu_custom_call.1} parent=11 // pred_fallthru
          _
      $region12: #{tpu_custom_call.1} parent=5 // pred_fallthru
        _
      %p938 = scmp.lt.s32.totalorder %s79, 2
      // Predicated region
      $region117: #{tpu_custom_call.1} parent=5 // pred_check
        %p939 = pneg %p938
      $region118: #{tpu_custom_call.1} parent=5 // pred_check_branch
        %941 = sbr.rel (%p939) target = $region120
      $region119: #{tpu_custom_call.1} parent=5 // pred_region
        // Predicated region
        $region121: #{tpu_custom_call.1} parent=119 // pred_check
          %p942 = pneg %p113
        $region122: #{tpu_custom_call.1} parent=119 // pred_check_branch
          %944 = sbr.rel (%p942) target = $region124
        $region123: #{tpu_custom_call.1} parent=119 // pred_region
          %s945 = sand.u32 %s103, 1
          %s946 = scalar_lea.sflag [#allocation3], %s945
          %s947 = sand.u32 %s103, 1
          %s948 = smul.addr %s947, 8
          %s949 = scalar_lea.vmem [#allocation2], %s948
          %s951 = ssub.s32 128, 128
          %952 = vsyncadd %s946, %s951
          %s953 = sadd.s32 %s87, %s86
          %s954 = smul.addr %s953, 128
          %s955 = scalar_lea.hbm %s1, %s954
          %s957 = sshll.u32 %s949, 4
          %s958 = int_to_ptr.vmem [resolvable:$true] %s957
          %960 = dma.hbm_to_vmem [thread:$0]  %s955, 128, %s958, %s946
        $region124: #{tpu_custom_call.1} parent=119 // pred_fallthru
          _
        // Predicated region
        $region125: #{tpu_custom_call.1} parent=119 // pred_check
          %p961 = pneg %p139
        $region126: #{tpu_custom_call.1} parent=119 // pred_check_branch
          %963 = sbr.rel (%p961) target = $region128
        $region127: #{tpu_custom_call.1} parent=119 // pred_region
          %s964 = sand.u32 %s79, 1
          %s965 = scalar_lea.sflag [#allocation6], %s964
          %s966 = sand.u32 %s129, 1
          %s967 = smul.addr %s966, 8
          %s968 = scalar_lea.vmem [#allocation5], %s967
          %s970 = ssub.s32 128, 128
          %971 = vsyncadd %s965, %s970
          %s972 = smul.addr %s86, 128
          %s973 = scalar_lea.hbm %s3, %s972
          %s975 = sshll.u32 %s968, 4
          %s976 = int_to_ptr.vmem [resolvable:$true] %s975
          %978 = dma.hbm_to_vmem [thread:$0]  %s973, 128, %s976, %s965
        $region128: #{tpu_custom_call.1} parent=119 // pred_fallthru
          _
        // Predicated region
        $region129: #{tpu_custom_call.1} parent=119 // pred_check
          %p979 = pneg %p165
        $region130: #{tpu_custom_call.1} parent=119 // pred_check_branch
          %981 = sbr.rel (%p979) target = $region132
        $region131: #{tpu_custom_call.1} parent=119 // pred_region
          %s982 = sand.u32 %s79, 1
          %s983 = scalar_lea.sflag [#allocation6], %s982
          %s984 = sand.u32 %s155, 1
          %s985 = smul.addr %s984, 16
          %s986 = scalar_lea.vmem [#allocation7], %s985
          %s988 = ssub.s32 256, 256
          %989 = vsyncadd %s983, %s988
          %s990 = smul.addr %s86, 2
          %s991 = smul.addr %s990, 128
          %s992 = scalar_lea.hbm %s5, %s991
          %s993 = sshll.u32 %s986, 4
          %s994 = int_to_ptr.vmem [resolvable:$true] %s993
          %999 = dma.hbm_to_vmem [thread:$0]  %s992, 256, %s994, %s983, 128, 128, 8
        $region132: #{tpu_custom_call.1} parent=119 // pred_fallthru
          _
      $region120: #{tpu_custom_call.1} parent=5 // pred_fallthru
        _
      %p1000 = scmp.le.s32.totalorder 1, %s79
      %p1001 = scmp.lt.s32.totalorder %s79, 3
      %p1002 = pnand %p1000, %p1001
      %p1003 = pneg %p1002
      // Predicated region
      $region133: #{tpu_custom_call.1} parent=5 // pred_check
        _
      $region134: #{tpu_custom_call.1} parent=5 // pred_check_branch
        %1005 = sbr.rel (%p1002) target = $region136
      $region135: #{tpu_custom_call.1} parent=5 // pred_region
        %s1006 = ssub.s32 %s79, 1
        %s1007 = sand.u32 %s106, 1
        %s1008 = scalar_lea.sflag [#allocation3], %s1007
        %s1009 = sand.u32 %s106, 1
        %s1010 = smul.addr %s1009, 8
        %s1011 = scalar_lea.vmem [#allocation2], %s1010
        // Predicated region
        $region137: #{tpu_custom_call.1} parent=135 // pred_check
          %p1012 = pneg %p119
        $region138: #{tpu_custom_call.1} parent=135 // pred_check_branch
          %1014 = sbr.rel (%p1012) target = $region140
        $region139: #{tpu_custom_call.1} parent=135 // pred_region
          %1015 = dma.done %s1008, 128
        $region140: #{tpu_custom_call.1} parent=135 // pred_fallthru
          _
        %s1016 = sand.u32 %s84, 1
        %s1017 = scalar_lea.sflag [#allocation6], %s1016
        %s1018 = sand.u32 %s132, 1
        %s1019 = smul.addr %s1018, 8
        %s1020 = scalar_lea.vmem [#allocation5], %s1019
        // Predicated region
        $region141: #{tpu_custom_call.1} parent=135 // pred_check
          %p1021 = pneg %p145
        $region142: #{tpu_custom_call.1} parent=135 // pred_check_branch
          %1023 = sbr.rel (%p1021) target = $region144
        $region143: #{tpu_custom_call.1} parent=135 // pred_region
          %1024 = dma.done %s1017, 128
        $region144: #{tpu_custom_call.1} parent=135 // pred_fallthru
          _
        %s1025 = sand.u32 %s84, 1
        %s1026 = scalar_lea.sflag [#allocation6], %s1025
        %s1027 = sand.u32 %s158, 1
        %s1028 = smul.addr %s1027, 16
        %s1029 = scalar_lea.vmem [#allocation7], %s1028
        // Predicated region
        $region145: #{tpu_custom_call.1} parent=135 // pred_check
          %p1030 = pneg %p171
        $region146: #{tpu_custom_call.1} parent=135 // pred_check_branch
          %1032 = sbr.rel (%p1030) target = $region148
        $region147: #{tpu_custom_call.1} parent=135 // pred_region
          %1033 = dma.done %s1026, 256
        $region148: #{tpu_custom_call.1} parent=135 // pred_fallthru
          _
        // Predicated region
        $region149: #{tpu_custom_call.1} parent=135 // pred_check
          %p1034 = pneg %p192
        $region150: #{tpu_custom_call.1} parent=135 // pred_check_branch
          %1036 = sbr.rel (%p1034) target = $region152
        $region151: #{tpu_custom_call.1} parent=135 // pred_region
          %1037 = dma.done [#allocation9], 2048
        $region152: #{tpu_custom_call.1} parent=135 // pred_fallthru
          _
        // Predicated region
        $region153: #{tpu_custom_call.1} parent=135 // pred_check
          %p1038 = pneg %p234
        $region154: #{tpu_custom_call.1} parent=135 // pred_check_branch
          %1040 = sbr.rel (%p1038) target = $region156
        $region155: #{tpu_custom_call.1} parent=135 // pred_region
          %1041 = dma.done [#allocation9], 2048
        $region156: #{tpu_custom_call.1} parent=135 // pred_fallthru
          _
        // Predicated region
        $region157: #{tpu_custom_call.1} parent=135 // pred_check
          %p1042 = pneg %p276
        $region158: #{tpu_custom_call.1} parent=135 // pred_check_branch
          %1044 = sbr.rel (%p1042) target = $region160
        $region159: #{tpu_custom_call.1} parent=135 // pred_region
          %1045 = dma.done [#allocation12], 2048
        $region160: #{tpu_custom_call.1} parent=135 // pred_fallthru
          _
        // Predicated region
        $region161: #{tpu_custom_call.1} parent=135 // pred_check
          %p1046 = pneg %p318
        $region162: #{tpu_custom_call.1} parent=135 // pred_check_branch
          %1048 = sbr.rel (%p1046) target = $region164
        $region163: #{tpu_custom_call.1} parent=135 // pred_region
          %1049 = dma.done [#allocation12], 2048
        $region164: #{tpu_custom_call.1} parent=135 // pred_fallthru
          _
        // Predicated region
        $region165: #{tpu_custom_call.1} parent=135 // pred_check
          %p1050 = pneg %p360
        $region166: #{tpu_custom_call.1} parent=135 // pred_check_branch
          %1052 = sbr.rel (%p1050) target = $region168
        $region167: #{tpu_custom_call.1} parent=135 // pred_region
          %1053 = dma.done [#allocation15], 2048
        $region168: #{tpu_custom_call.1} parent=135 // pred_fallthru
          _
        // Predicated region
        $region169: #{tpu_custom_call.1} parent=135 // pred_check
          %p1054 = pneg %p402
        $region170: #{tpu_custom_call.1} parent=135 // pred_check_branch
          %1056 = sbr.rel (%p1054) target = $region172
        $region171: #{tpu_custom_call.1} parent=135 // pred_region
          %1057 = dma.done [#allocation15], 2048
        $region172: #{tpu_custom_call.1} parent=135 // pred_fallthru
          _
        // Predicated region
        $region173: #{tpu_custom_call.1} parent=135 // pred_check
          %p1058 = pneg %p444
        $region174: #{tpu_custom_call.1} parent=135 // pred_check_branch
          %1060 = sbr.rel (%p1058) target = $region176
        $region175: #{tpu_custom_call.1} parent=135 // pred_region
          %1061 = dma.done [#allocation18], 2048
        $region176: #{tpu_custom_call.1} parent=135 // pred_fallthru
          _
        // Predicated region
        $region177: #{tpu_custom_call.1} parent=135 // pred_check
          %p1062 = pneg %p486
        $region178: #{tpu_custom_call.1} parent=135 // pred_check_branch
          %1064 = sbr.rel (%p1062) target = $region180
        $region179: #{tpu_custom_call.1} parent=135 // pred_region
          %1065 = dma.done [#allocation18], 2048
        $region180: #{tpu_custom_call.1} parent=135 // pred_fallthru
          _
        // Predicated region
        $region181: #{tpu_custom_call.1} parent=135 // pred_check
          %p1066 = pneg %p528
        $region182: #{tpu_custom_call.1} parent=135 // pred_check_branch
          %1068 = sbr.rel (%p1066) target = $region184
        $region183: #{tpu_custom_call.1} parent=135 // pred_region
          %1069 = dma.done [#allocation21], 8192
        $region184: #{tpu_custom_call.1} parent=135 // pred_fallthru
          _
        // Predicated region
        $region185: #{tpu_custom_call.1} parent=135 // pred_check
          %p1070 = pneg %p570
        $region186: #{tpu_custom_call.1} parent=135 // pred_check_branch
          %1072 = sbr.rel (%p1070) target = $region188
        $region187: #{tpu_custom_call.1} parent=135 // pred_region
          %1073 = dma.done [#allocation21], 8192
        $region188: #{tpu_custom_call.1} parent=135 // pred_fallthru
          _
        %s1074 = sand.u32 %s106, 1
        %s1075 = scalar_lea.sflag [#allocation3], %s1074
        %s1076 = sand.u32 %s106, 1
        %s1077 = smul.addr %s1076, 8
        %s1078 = scalar_lea.vmem [#allocation2], %s1077
        %p1079 = pneg %p119
        %p1080 = pneg %p116
        %s1081 = sand.u32 %s84, 1
        %s1082 = scalar_lea.sflag [#allocation6], %s1081
        %s1083 = sand.u32 %s132, 1
        %s1084 = smul.addr %s1083, 8
        %s1085 = scalar_lea.vmem [#allocation5], %s1084
        %p1086 = pneg %p145
        %p1087 = pneg %p142
        %s1088 = sand.u32 %s84, 1
        %s1089 = scalar_lea.sflag [#allocation6], %s1088
        %s1090 = sand.u32 %s158, 1
        %s1091 = smul.addr %s1090, 16
        %s1092 = scalar_lea.vmem [#allocation7], %s1091
        %p1093 = pneg %p171
        %p1094 = pneg %p168
        %p1095 = pneg %p192
        %p1096 = pneg %p189
        %p1097 = pneg %p213
        %p1098 = pneg %p210
        %p1099 = pneg %p234
        %p1100 = pneg %p231
        %p1101 = pneg %p255
        %p1102 = pneg %p252
        %p1103 = pneg %p276
        %p1104 = pneg %p273
        %p1105 = pneg %p297
        %p1106 = pneg %p294
        %p1107 = pneg %p318
        %p1108 = pneg %p315
        %p1109 = pneg %p339
        %p1110 = pneg %p336
        %p1111 = pneg %p360
        %p1112 = pneg %p357
        %p1113 = pneg %p381
        %p1114 = pneg %p378
        %p1115 = pneg %p402
        %p1116 = pneg %p399
        %p1117 = pneg %p423
        %p1118 = pneg %p420
        %p1119 = pneg %p444
        %p1120 = pneg %p441
        %p1121 = pneg %p465
        %p1122 = pneg %p462
        %p1123 = pneg %p486
        %p1124 = pneg %p483
        %p1125 = pneg %p507
        %p1126 = pneg %p504
        %p1127 = pneg %p528
        %p1128 = pneg %p525
        %p1129 = pneg %p549
        %p1130 = pneg %p546
        %p1131 = pneg %p570
        %p1132 = pneg %p567
        %p1133 = pneg %p591
        %p1134 = pneg %p588
        %p1135 = pneg %p612
        %p1136 = pneg %p609
        %p1137 = pneg %p633
        %p1138 = pneg %p630
        %p1139 = pneg %p654
        %p1140 = pneg %p651
        %p1141 = pneg %p675
        %p1142 = pneg %p672
        %p1143 = pneg %p696
        %p1144 = pneg %p693
        %p1145 = pneg %p717
        %p1146 = pneg %p714
        %p1147 = pneg %p745
        %p1148 = pneg %p742
        %s1149 = sand.u32 %s732, 1
        %s1150 = scalar_lea.sflag [#allocation4], %s1149
        %s1151 = sand.u32 %s732, 1
        %s1152 = smul.addr %s1151, 8
        %s1153 = scalar_lea.vmem [#allocation23], %s1152
        %v1154 = vld [vmem:[%s1011] sm:$0xff]
        %v1155 = vld [vmem:[%s1029] sm:$0xff]
        %v1156 = vld [vmem:[%s1029 + $0x8] sm:$0xff]
        %v1157 = vld [vmem:[%s47] sm:$0x1]
        %v1158 = vld [vmem:[%s49] sm:$0x1]
        %1159 = vadd.xlane.f32.xlu0 %v1154
        %v1160 = vpop.xlane.xlu0 %1159
        %v1161 = vrcp.pop 128.0
        %v1162 = vmul.f32 %v1160, %v1161
        %v1163 = vsub.f32 %v1154, %v1162
        %v1164 = vmul.f32 %v1163, %v1163
        %1165 = vadd.xlane.f32.xlu0 %v1164
        %v1166 = vpop.xlane.xlu0 %1165
        %v1167 = vrcp.pop 127.0
        %v1168 = vmul.f32 %v1166, %v1167
        %v1169 = vrsqrt.pop %v1168
        %v1170 = vmul.f32 %v1168, %v1169
        %vm1171 = vcmp.eq.f32.partialorder %v1168, inf
        %v1172 = vsel %vm1171, %v1168, %v1170
        %vm1173 = vcmp.eq.f32.partialorder %v1168, 0.0
        %v1174 = vand.u32 %v1168, 2147483648
        %v1175 = vsel %vm1173, %v1174, %v1172
        %v1177 = vlaneseq
        %v1178 = vshrl.u32 %v1177, 7
        %v1179 = vsub.s32 0, %v1178
        %v1180 = vrot.slane %v1157, %v1179
        %v1182 = vmul.f32 %v1180, %v1163
        %v1183 = vadd.f32 %v1175, 1e-06
        %v1184 = vrcp.pop %v1183
        %v1185 = vmul.f32 %v1182, %v1184
        %v1187 = vlaneseq
        %v1188 = vshrl.u32 %v1187, 7
        %v1189 = vsub.s32 0, %v1188
        %v1190 = vrot.slane %v1158, %v1189
        %v1192 = vadd.f32 %v1185, %v1190
        %v1193 = vld [vmem:[#allocation8] sm:$0xff]
        %v1194 = vld [vmem:[#allocation8 + $0x8] sm:$0xff]
        %v1195 = vld [vmem:[#allocation8 + $0x10] sm:$0xff]
        %v1196 = vld [vmem:[#allocation8 + $0x18] sm:$0xff]
        %v1197 = vld [vmem:[#allocation8 + $0x20] sm:$0xff]
        %v1198 = vld [vmem:[#allocation8 + $0x28] sm:$0xff]
        %v1199 = vld [vmem:[#allocation8 + $0x30] sm:$0xff]
        %v1200 = vld [vmem:[#allocation8 + $0x38] sm:$0xff]
        %v1201 = vld [vmem:[#allocation8 + $0x40] sm:$0xff]
        %v1202 = vld [vmem:[#allocation8 + $0x48] sm:$0xff]
        %v1203 = vld [vmem:[#allocation8 + $0x50] sm:$0xff]
        %v1204 = vld [vmem:[#allocation8 + $0x58] sm:$0xff]
        %v1205 = vld [vmem:[#allocation8 + $0x60] sm:$0xff]
        %v1206 = vld [vmem:[#allocation8 + $0x68] sm:$0xff]
        %v1207 = vld [vmem:[#allocation8 + $0x70] sm:$0xff]
        %v1208 = vld [vmem:[#allocation8 + $0x78] sm:$0xff]
        %v1209 = vld [vmem:[%s9] sm:$0x1]
        %v1210 = vld [vmem:[#allocation10] sm:$0xff]
        %v1211 = vld [vmem:[#allocation10 + $0x8] sm:$0xff]
        %v1212 = vld [vmem:[#allocation10 + $0x10] sm:$0xff]
        %v1213 = vld [vmem:[#allocation10 + $0x18] sm:$0xff]
        %v1214 = vld [vmem:[#allocation10 + $0x20] sm:$0xff]
        %v1215 = vld [vmem:[#allocation10 + $0x28] sm:$0xff]
        %v1216 = vld [vmem:[#allocation10 + $0x30] sm:$0xff]
        %v1217 = vld [vmem:[#allocation10 + $0x38] sm:$0xff]
        %v1218 = vld [vmem:[#allocation10 + $0x40] sm:$0xff]
        %v1219 = vld [vmem:[#allocation10 + $0x48] sm:$0xff]
        %v1220 = vld [vmem:[#allocation10 + $0x50] sm:$0xff]
        %v1221 = vld [vmem:[#allocation10 + $0x58] sm:$0xff]
        %v1222 = vld [vmem:[#allocation10 + $0x60] sm:$0xff]
        %v1223 = vld [vmem:[#allocation10 + $0x68] sm:$0xff]
        %v1224 = vld [vmem:[#allocation10 + $0x70] sm:$0xff]
        %v1225 = vld [vmem:[#allocation10 + $0x78] sm:$0xff]
        %v1226 = vld [vmem:[%s13] sm:$0x1]
        %v1227 = vld [vmem:[#allocation11] sm:$0xff]
        %v1228 = vld [vmem:[#allocation11 + $0x8] sm:$0xff]
        %v1229 = vld [vmem:[#allocation11 + $0x10] sm:$0xff]
        %v1230 = vld [vmem:[#allocation11 + $0x18] sm:$0xff]
        %v1231 = vld [vmem:[#allocation11 + $0x20] sm:$0xff]
        %v1232 = vld [vmem:[#allocation11 + $0x28] sm:$0xff]
        %v1233 = vld [vmem:[#allocation11 + $0x30] sm:$0xff]
        %v1234 = vld [vmem:[#allocation11 + $0x38] sm:$0xff]
        %v1235 = vld [vmem:[#allocation11 + $0x40] sm:$0xff]
        %v1236 = vld [vmem:[#allocation11 + $0x48] sm:$0xff]
        %v1237 = vld [vmem:[#allocation11 + $0x50] sm:$0xff]
        %v1238 = vld [vmem:[#allocation11 + $0x58] sm:$0xff]
        %v1239 = vld [vmem:[#allocation11 + $0x60] sm:$0xff]
        %v1240 = vld [vmem:[#allocation11 + $0x68] sm:$0xff]
        %v1241 = vld [vmem:[#allocation11 + $0x70] sm:$0xff]
        %v1242 = vld [vmem:[#allocation11 + $0x78] sm:$0xff]
        %v1243 = vld [vmem:[%s17] sm:$0x1]
        %v1244 = vld [vmem:[#allocation13] sm:$0xff]
        %v1245 = vld [vmem:[#allocation13 + $0x8] sm:$0xff]
        %v1246 = vld [vmem:[#allocation13 + $0x10] sm:$0xff]
        %v1247 = vld [vmem:[#allocation13 + $0x18] sm:$0xff]
        %v1248 = vld [vmem:[#allocation13 + $0x20] sm:$0xff]
        %v1249 = vld [vmem:[#allocation13 + $0x28] sm:$0xff]
        %v1250 = vld [vmem:[#allocation13 + $0x30] sm:$0xff]
        %v1251 = vld [vmem:[#allocation13 + $0x38] sm:$0xff]
        %v1252 = vld [vmem:[#allocation13 + $0x40] sm:$0xff]
        %v1253 = vld [vmem:[#allocation13 + $0x48] sm:$0xff]
        %v1254 = vld [vmem:[#allocation13 + $0x50] sm:$0xff]
        %v1255 = vld [vmem:[#allocation13 + $0x58] sm:$0xff]
        %v1256 = vld [vmem:[#allocation13 + $0x60] sm:$0xff]
        %v1257 = vld [vmem:[#allocation13 + $0x68] sm:$0xff]
        %v1258 = vld [vmem:[#allocation13 + $0x70] sm:$0xff]
        %v1259 = vld [vmem:[#allocation13 + $0x78] sm:$0xff]
        %v1260 = vld [vmem:[%s21] sm:$0x1]
        %v1262 = vlaneseq
        %v1263 = vshrl.u32 %v1262, 7
        %v1264 = vsub.s32 0, %v1263
        %v1265 = vrot.slane %v1209, %v1264
        %1267 = vmatprep.subr.mxu0 0.0
        %1268 = vmatpush1.msra.mxu0 %v1208
        %1269 = vmatprep.subr.mxu0 0.0
        %1270 = vmatpush1.msra.mxu0 %v1207
        %1271 = vmatprep.subr.mxu0 0.0
        %1272 = vmatpush1.msra.mxu0 %v1206
        %1273 = vmatprep.subr.mxu0 0.0
        %1274 = vmatpush1.msra.mxu0 %v1205
        %1275 = vmatprep.subr.mxu0 0.0
        %1276 = vmatpush1.msra.mxu0 %v1204
        %1277 = vmatprep.subr.mxu0 0.0
        %1278 = vmatpush1.msra.mxu0 %v1203
        %1279 = vmatprep.subr.mxu0 0.0
        %1280 = vmatpush1.msra.mxu0 %v1202
        %1281 = vmatprep.subr.mxu0 0.0
        %1282 = vmatpush1.msra.mxu0 %v1201
        %1283 = vmatprep.subr.mxu0 0.0
        %1284 = vmatpush1.msra.mxu0 %v1200
        %1285 = vmatprep.subr.mxu0 0.0
        %1286 = vmatpush1.msra.mxu0 %v1199
        %1287 = vmatprep.subr.mxu0 0.0
        %1288 = vmatpush1.msra.mxu0 %v1198
        %1289 = vmatprep.subr.mxu0 0.0
        %1290 = vmatpush1.msra.mxu0 %v1197
        %1291 = vmatprep.subr.mxu0 0.0
        %1292 = vmatpush1.msra.mxu0 %v1196
        %1293 = vmatprep.subr.mxu0 0.0
        %1294 = vmatpush1.msra.mxu0 %v1195
        %1295 = vmatprep.subr.mxu0 0.0
        %1296 = vmatpush1.msra.mxu0 %v1194
        %1297 = vmatprep.subr.mxu0 0.0
        %1298 = vmatpush1.msra.mxu0 %v1193
        %1299 = vmatprep.subr.mxu0 0.0
        %1300 = vmatpush2.msra.mxu0 0.0
        %1301 = vmatprep.subr.mxu0 0.0
        %1302 = vmatpush2.msra.mxu0 0.0
        %1303 = vmatprep.subr.mxu0 0.0
        %1304 = vmatpush2.msra.mxu0 0.0
        %1305 = vmatprep.subr.mxu0 0.0
        %1306 = vmatpush2.msra.mxu0 0.0
        %1307 = vmatprep.subr.mxu0 0.0
        %1308 = vmatpush2.msra.mxu0 0.0
        %1309 = vmatprep.subr.mxu0 0.0
        %1310 = vmatpush2.msra.mxu0 0.0
        %1311 = vmatprep.subr.mxu0 0.0
        %1312 = vmatpush2.msra.mxu0 0.0
        %1313 = vmatprep.subr.mxu0 0.0
        %1314 = vmatpush2.msra.mxu0 0.0
        %1315 = vmatprep.subr.mxu0 0.0
        %1316 = vmatpush2.msra.mxu0 0.0
        %1317 = vmatprep.subr.mxu0 0.0
        %1318 = vmatpush2.msra.mxu0 0.0
        %1319 = vmatprep.subr.mxu0 0.0
        %1320 = vmatpush2.msra.mxu0 0.0
        %1321 = vmatprep.subr.mxu0 0.0
        %1322 = vmatpush2.msra.mxu0 0.0
        %1323 = vmatprep.subr.mxu0 0.0
        %1324 = vmatpush2.msra.mxu0 0.0
        %1325 = vmatprep.subr.mxu0 0.0
        %1326 = vmatpush2.msra.mxu0 0.0
        %1327 = vmatprep.subr.mxu0 0.0
        %1328 = vmatpush2.msra.mxu0 0.0
        %1329 = vmatprep.subr.mxu0 0.0
        %1330 = vmatpush2.msra.mxu0 0.0
        %1331 = vmatprep.mubr.f32.mxu0 0.0
        %1332 = vmatmul.mubr.f32.gmra.mxu0 %v1192
        %v1333 = vpop.f32.mrf.mxu0
        %v1334 = vadd.f32 %v1265, %v1333
        %v1335 = vpop.f32.mrf.mxu0
        %1336 = vdwg.mxu0
        %v1338 = vlaneseq
        %v1339 = vshrl.u32 %v1338, 7
        %v1340 = vsub.s32 0, %v1339
        %v1341 = vrot.slane %v1226, %v1340
        %1343 = vmatprep.subr.mxu0 0.0
        %1344 = vmatpush1.msra.mxu0 %v1225
        %1345 = vmatprep.subr.mxu0 0.0
        %1346 = vmatpush1.msra.mxu0 %v1224
        %1347 = vmatprep.subr.mxu0 0.0
        %1348 = vmatpush1.msra.mxu0 %v1223
        %1349 = vmatprep.subr.mxu0 0.0
        %1350 = vmatpush1.msra.mxu0 %v1222
        %1351 = vmatprep.subr.mxu0 0.0
        %1352 = vmatpush1.msra.mxu0 %v1221
        %1353 = vmatprep.subr.mxu0 0.0
        %1354 = vmatpush1.msra.mxu0 %v1220
        %1355 = vmatprep.subr.mxu0 0.0
        %1356 = vmatpush1.msra.mxu0 %v1219
        %1357 = vmatprep.subr.mxu0 0.0
        %1358 = vmatpush1.msra.mxu0 %v1218
        %1359 = vmatprep.subr.mxu0 0.0
        %1360 = vmatpush1.msra.mxu0 %v1217
        %1361 = vmatprep.subr.mxu0 0.0
        %1362 = vmatpush1.msra.mxu0 %v1216
        %1363 = vmatprep.subr.mxu0 0.0
        %1364 = vmatpush1.msra.mxu0 %v1215
        %1365 = vmatprep.subr.mxu0 0.0
        %1366 = vmatpush1.msra.mxu0 %v1214
        %1367 = vmatprep.subr.mxu0 0.0
        %1368 = vmatpush1.msra.mxu0 %v1213
        %1369 = vmatprep.subr.mxu0 0.0
        %1370 = vmatpush1.msra.mxu0 %v1212
        %1371 = vmatprep.subr.mxu0 0.0
        %1372 = vmatpush1.msra.mxu0 %v1211
        %1373 = vmatprep.subr.mxu0 0.0
        %1374 = vmatpush1.msra.mxu0 %v1210
        %1375 = vmatprep.subr.mxu0 0.0
        %1376 = vmatpush2.msra.mxu0 0.0
        %1377 = vmatprep.subr.mxu0 0.0
        %1378 = vmatpush2.msra.mxu0 0.0
        %1379 = vmatprep.subr.mxu0 0.0
        %1380 = vmatpush2.msra.mxu0 0.0
        %1381 = vmatprep.subr.mxu0 0.0
        %1382 = vmatpush2.msra.mxu0 0.0
        %1383 = vmatprep.subr.mxu0 0.0
        %1384 = vmatpush2.msra.mxu0 0.0
        %1385 = vmatprep.subr.mxu0 0.0
        %1386 = vmatpush2.msra.mxu0 0.0
        %1387 = vmatprep.subr.mxu0 0.0
        %1388 = vmatpush2.msra.mxu0 0.0
        %1389 = vmatprep.subr.mxu0 0.0
        %1390 = vmatpush2.msra.mxu0 0.0
        %1391 = vmatprep.subr.mxu0 0.0
        %1392 = vmatpush2.msra.mxu0 0.0
        %1393 = vmatprep.subr.mxu0 0.0
        %1394 = vmatpush2.msra.mxu0 0.0
        %1395 = vmatprep.subr.mxu0 0.0
        %1396 = vmatpush2.msra.mxu0 0.0
        %1397 = vmatprep.subr.mxu0 0.0
        %1398 = vmatpush2.msra.mxu0 0.0
        %1399 = vmatprep.subr.mxu0 0.0
        %1400 = vmatpush2.msra.mxu0 0.0
        %1401 = vmatprep.subr.mxu0 0.0
        %1402 = vmatpush2.msra.mxu0 0.0
        %1403 = vmatprep.subr.mxu0 0.0
        %1404 = vmatpush2.msra.mxu0 0.0
        %1405 = vmatprep.subr.mxu0 0.0
        %1406 = vmatpush2.msra.mxu0 0.0
        %1407 = vmatprep.mubr.f32.mxu0 0.0
        %1408 = vmatmul.mubr.f32.gmra.mxu0 %v1192
        %v1409 = vpop.f32.mrf.mxu0
        %v1410 = vadd.f32 %v1341, %v1409
        %v1411 = vpop.f32.mrf.mxu0
        %1412 = vdwg.mxu0
        %v1414 = vlaneseq
        %v1415 = vshrl.u32 %v1414, 7
        %v1416 = vsub.s32 0, %v1415
        %v1417 = vrot.slane %v1243, %v1416
        %1419 = vmatprep.subr.mxu0 0.0
        %1420 = vmatpush1.msra.mxu0 %v1242
        %1421 = vmatprep.subr.mxu0 0.0
        %1422 = vmatpush1.msra.mxu0 %v1241
        %1423 = vmatprep.subr.mxu0 0.0
        %1424 = vmatpush1.msra.mxu0 %v1240
        %1425 = vmatprep.subr.mxu0 0.0
        %1426 = vmatpush1.msra.mxu0 %v1239
        %1427 = vmatprep.subr.mxu0 0.0
        %1428 = vmatpush1.msra.mxu0 %v1238
        %1429 = vmatprep.subr.mxu0 0.0
        %1430 = vmatpush1.msra.mxu0 %v1237
        %1431 = vmatprep.subr.mxu0 0.0
        %1432 = vmatpush1.msra.mxu0 %v1236
        %1433 = vmatprep.subr.mxu0 0.0
        %1434 = vmatpush1.msra.mxu0 %v1235
        %1435 = vmatprep.subr.mxu0 0.0
        %1436 = vmatpush1.msra.mxu0 %v1234
        %1437 = vmatprep.subr.mxu0 0.0
        %1438 = vmatpush1.msra.mxu0 %v1233
        %1439 = vmatprep.subr.mxu0 0.0
        %1440 = vmatpush1.msra.mxu0 %v1232
        %1441 = vmatprep.subr.mxu0 0.0
        %1442 = vmatpush1.msra.mxu0 %v1231
        %1443 = vmatprep.subr.mxu0 0.0
        %1444 = vmatpush1.msra.mxu0 %v1230
        %1445 = vmatprep.subr.mxu0 0.0
        %1446 = vmatpush1.msra.mxu0 %v1229
        %1447 = vmatprep.subr.mxu0 0.0
        %1448 = vmatpush1.msra.mxu0 %v1228
        %1449 = vmatprep.subr.mxu0 0.0
        %1450 = vmatpush1.msra.mxu0 %v1227
        %1451 = vmatprep.subr.mxu0 0.0
        %1452 = vmatpush2.msra.mxu0 0.0
        %1453 = vmatprep.subr.mxu0 0.0
        %1454 = vmatpush2.msra.mxu0 0.0
        %1455 = vmatprep.subr.mxu0 0.0
        %1456 = vmatpush2.msra.mxu0 0.0
        %1457 = vmatprep.subr.mxu0 0.0
        %1458 = vmatpush2.msra.mxu0 0.0
        %1459 = vmatprep.subr.mxu0 0.0
        %1460 = vmatpush2.msra.mxu0 0.0
        %1461 = vmatprep.subr.mxu0 0.0
        %1462 = vmatpush2.msra.mxu0 0.0
        %1463 = vmatprep.subr.mxu0 0.0
        %1464 = vmatpush2.msra.mxu0 0.0
        %1465 = vmatprep.subr.mxu0 0.0
        %1466 = vmatpush2.msra.mxu0 0.0
        %1467 = vmatprep.subr.mxu0 0.0
        %1468 = vmatpush2.msra.mxu0 0.0
        %1469 = vmatprep.subr.mxu0 0.0
        %1470 = vmatpush2.msra.mxu0 0.0
        %1471 = vmatprep.subr.mxu0 0.0
        %1472 = vmatpush2.msra.mxu0 0.0
        %1473 = vmatprep.subr.mxu0 0.0
        %1474 = vmatpush2.msra.mxu0 0.0
        %1475 = vmatprep.subr.mxu0 0.0
        %1476 = vmatpush2.msra.mxu0 0.0
        %1477 = vmatprep.subr.mxu0 0.0
        %1478 = vmatpush2.msra.mxu0 0.0
        %1479 = vmatprep.subr.mxu0 0.0
        %1480 = vmatpush2.msra.mxu0 0.0
        %1481 = vmatprep.subr.mxu0 0.0
        %1482 = vmatpush2.msra.mxu0 0.0
        %1483 = vmatprep.mubr.f32.mxu0 0.0
        %1484 = vmatmul.mubr.f32.gmra.mxu0 %v1192
        %v1485 = vpop.f32.mrf.mxu0
        %v1486 = vadd.f32 %v1417, %v1485
        %v1487 = vpop.f32.mrf.mxu0
        %1488 = vdwg.mxu0
        %vm1489 = vcmask 261120
        %v1491 = vsel %vm1489, %v1334, 0
        %v1494 = vsel %vm1489, %v1410, 0
        %1496 = vmatprep.subr.mxu0 0.0
        %1497 = vmatpush1.xpose.msra.mxu0 0.0
        %1498 = vmatprep.subr.mxu0 0.0
        %1499 = vmatpush1.xpose.msra.mxu0 0.0
        %1500 = vmatprep.subr.mxu0 0.0
        %1501 = vmatpush1.xpose.msra.mxu0 0.0
        %1502 = vmatprep.subr.mxu0 0.0
        %1503 = vmatpush1.xpose.msra.mxu0 0.0
        %1504 = vmatprep.subr.mxu0 0.0
        %1505 = vmatpush1.xpose.msra.mxu0 0.0
        %1506 = vmatprep.subr.mxu0 0.0
        %1507 = vmatpush1.xpose.msra.mxu0 0.0
        %1508 = vmatprep.subr.mxu0 0.0
        %1509 = vmatpush1.xpose.msra.mxu0 0.0
        %1510 = vmatprep.subr.mxu0 0.0
        %1511 = vmatpush1.xpose.msra.mxu0 0.0
        %1512 = vmatprep.subr.mxu0 0.0
        %1513 = vmatpush1.xpose.msra.mxu0 0.0
        %1514 = vmatprep.subr.mxu0 0.0
        %1515 = vmatpush1.xpose.msra.mxu0 0.0
        %1516 = vmatprep.subr.mxu0 0.0
        %1517 = vmatpush1.xpose.msra.mxu0 0.0
        %1518 = vmatprep.subr.mxu0 0.0
        %1519 = vmatpush1.xpose.msra.mxu0 0.0
        %1520 = vmatprep.subr.mxu0 0.0
        %1521 = vmatpush1.xpose.msra.mxu0 0.0
        %1522 = vmatprep.subr.mxu0 0.0
        %1523 = vmatpush1.xpose.msra.mxu0 0.0
        %1524 = vmatprep.subr.mxu0 0.0
        %1525 = vmatpush1.xpose.msra.mxu0 0.0
        %1526 = vmatprep.subr.mxu0 0.0
        %1527 = vmatpush1.xpose.msra.mxu0 %v1494
        %1528 = vmatprep.subr.mxu0 0.0
        %1529 = vmatpush2.xpose.msra.mxu0 0.0
        %1530 = vmatprep.subr.mxu0 0.0
        %1531 = vmatpush2.xpose.msra.mxu0 0.0
        %1532 = vmatprep.subr.mxu0 0.0
        %1533 = vmatpush2.xpose.msra.mxu0 0.0
        %1534 = vmatprep.subr.mxu0 0.0
        %1535 = vmatpush2.xpose.msra.mxu0 0.0
        %1536 = vmatprep.subr.mxu0 0.0
        %1537 = vmatpush2.xpose.msra.mxu0 0.0
        %1538 = vmatprep.subr.mxu0 0.0
        %1539 = vmatpush2.xpose.msra.mxu0 0.0
        %1540 = vmatprep.subr.mxu0 0.0
        %1541 = vmatpush2.xpose.msra.mxu0 0.0
        %1542 = vmatprep.subr.mxu0 0.0
        %1543 = vmatpush2.xpose.msra.mxu0 0.0
        %1544 = vmatprep.subr.mxu0 0.0
        %1545 = vmatpush2.xpose.msra.mxu0 0.0
        %1546 = vmatprep.subr.mxu0 0.0
        %1547 = vmatpush2.xpose.msra.mxu0 0.0
        %1548 = vmatprep.subr.mxu0 0.0
        %1549 = vmatpush2.xpose.msra.mxu0 0.0
        %1550 = vmatprep.subr.mxu0 0.0
        %1551 = vmatpush2.xpose.msra.mxu0 0.0
        %1552 = vmatprep.subr.mxu0 0.0
        %1553 = vmatpush2.xpose.msra.mxu0 0.0
        %1554 = vmatprep.subr.mxu0 0.0
        %1555 = vmatpush2.xpose.msra.mxu0 0.0
        %1556 = vmatprep.subr.mxu0 0.0
        %1557 = vmatpush2.xpose.msra.mxu0 0.0
        %1558 = vmatprep.subr.mxu0 0.0
        %1559 = vmatpush2.xpose.msra.mxu0 0.0
        %1560 = vmatprep.mubr.f32.mxu0 0.0
        %1561 = vmatmul.mubr.f32.gmra.mxu0 %v1491
        %v1562 = vpop.f32.mrf.mxu0
        %v1563 = vadd.f32 0.0, %v1562
        %v1564 = vpop.f32.mrf.mxu0
        %1565 = vdwg.mxu0
        %v1566 = vmul.f32 %v1563, 0.17677669
        %vm1567 = vcmask 64512
        %v1568 = vsel %vm1567, %v1566, -inf
        %1569 = vmax.xlane.f32.xlu0 %v1568
        %v1570 = vpop.xlane.xlu0 %1569
        %v1571 = vsub.f32 %v1566, %v1570
        %v1572 = vmul.f32 %v1571, 1.442695
        %v1573 = vpow.pop %v1572
        %v1574 = vsel %vm1567, %v1573, 0.0
        %1575 = vadd.xlane.f32.xlu0 %v1574
        %v1576 = vpop.xlane.xlu0 %1575
        %v1577 = vrcp.pop %v1576
        %v1578 = vmul.f32 %v1573, %v1577
        %v1580 = vsel %vm1567, %v1578, 0
        %1582 = vmatprep.subr.mxu0 0.0
        %1583 = vmatpush1.msra.mxu0 0.0
        %1584 = vmatprep.subr.mxu0 0.0
        %1585 = vmatpush1.msra.mxu0 0.0
        %1586 = vmatprep.subr.mxu0 0.0
        %1587 = vmatpush1.msra.mxu0 0.0
        %1588 = vmatprep.subr.mxu0 0.0
        %1589 = vmatpush1.msra.mxu0 0.0
        %1590 = vmatprep.subr.mxu0 0.0
        %1591 = vmatpush1.msra.mxu0 0.0
        %1592 = vmatprep.subr.mxu0 0.0
        %1593 = vmatpush1.msra.mxu0 0.0
        %1594 = vmatprep.subr.mxu0 0.0
        %1595 = vmatpush1.msra.mxu0 0.0
        %1596 = vmatprep.subr.mxu0 0.0
        %1597 = vmatpush1.msra.mxu0 0.0
        %1598 = vmatprep.subr.mxu0 0.0
        %1599 = vmatpush1.msra.mxu0 0.0
        %1600 = vmatprep.subr.mxu0 0.0
        %1601 = vmatpush1.msra.mxu0 0.0
        %1602 = vmatprep.subr.mxu0 0.0
        %1603 = vmatpush1.msra.mxu0 0.0
        %1604 = vmatprep.subr.mxu0 0.0
        %1605 = vmatpush1.msra.mxu0 0.0
        %1606 = vmatprep.subr.mxu0 0.0
        %1607 = vmatpush1.msra.mxu0 0.0
        %1608 = vmatprep.subr.mxu0 0.0
        %1609 = vmatpush1.msra.mxu0 0.0
        %1610 = vmatprep.subr.mxu0 0.0
        %1611 = vmatpush1.msra.mxu0 0.0
        %1612 = vmatprep.subr.mxu0 0.0
        %1613 = vmatpush1.msra.mxu0 %v1486
        %1614 = vmatprep.subr.mxu0 0.0
        %1615 = vmatpush2.msra.mxu0 0.0
        %1616 = vmatprep.subr.mxu0 0.0
        %1617 = vmatpush2.msra.mxu0 0.0
        %1618 = vmatprep.subr.mxu0 0.0
        %1619 = vmatpush2.msra.mxu0 0.0
        %1620 = vmatprep.subr.mxu0 0.0
        %1621 = vmatpush2.msra.mxu0 0.0
        %1622 = vmatprep.subr.mxu0 0.0
        %1623 = vmatpush2.msra.mxu0 0.0
        %1624 = vmatprep.subr.mxu0 0.0
        %1625 = vmatpush2.msra.mxu0 0.0
        %1626 = vmatprep.subr.mxu0 0.0
        %1627 = vmatpush2.msra.mxu0 0.0
        %1628 = vmatprep.subr.mxu0 0.0
        %1629 = vmatpush2.msra.mxu0 0.0
        %1630 = vmatprep.subr.mxu0 0.0
        %1631 = vmatpush2.msra.mxu0 0.0
        %1632 = vmatprep.subr.mxu0 0.0
        %1633 = vmatpush2.msra.mxu0 0.0
        %1634 = vmatprep.subr.mxu0 0.0
        %1635 = vmatpush2.msra.mxu0 0.0
        %1636 = vmatprep.subr.mxu0 0.0
        %1637 = vmatpush2.msra.mxu0 0.0
        %1638 = vmatprep.subr.mxu0 0.0
        %1639 = vmatpush2.msra.mxu0 0.0
        %1640 = vmatprep.subr.mxu0 0.0
        %1641 = vmatpush2.msra.mxu0 0.0
        %1642 = vmatprep.subr.mxu0 0.0
        %1643 = vmatpush2.msra.mxu0 0.0
        %1644 = vmatprep.subr.mxu0 0.0
        %1645 = vmatpush2.msra.mxu0 0.0
        %1646 = vmatprep.mubr.f32.mxu0 0.0
        %1647 = vmatmul.mubr.f32.gmra.mxu0 %v1580
        %v1648 = vpop.f32.mrf.mxu0
        %v1649 = vadd.f32 0.0, %v1648
        %v1650 = vpop.f32.mrf.mxu0
        %1651 = vdwg.mxu0
        %1652 = vrot.lane.b32.xlu0 %v1334, 96
        %v1653 = vpop.permute.xlu0 %1652
        %1654 = vrot.lane.b32.xlu0 %v1410, 96
        %v1655 = vpop.permute.xlu0 %1654
        %v1656 = vsel %vm1489, %v1653, 0
        %v1658 = vsel %vm1489, %v1655, 0
        %1660 = vmatprep.subr.mxu0 0.0
        %1661 = vmatpush1.xpose.msra.mxu0 0.0
        %1662 = vmatprep.subr.mxu0 0.0
        %1663 = vmatpush1.xpose.msra.mxu0 0.0
        %1664 = vmatprep.subr.mxu0 0.0
        %1665 = vmatpush1.xpose.msra.mxu0 0.0
        %1666 = vmatprep.subr.mxu0 0.0
        %1667 = vmatpush1.xpose.msra.mxu0 0.0
        %1668 = vmatprep.subr.mxu0 0.0
        %1669 = vmatpush1.xpose.msra.mxu0 0.0
        %1670 = vmatprep.subr.mxu0 0.0
        %1671 = vmatpush1.xpose.msra.mxu0 0.0
        %1672 = vmatprep.subr.mxu0 0.0
        %1673 = vmatpush1.xpose.msra.mxu0 0.0
        %1674 = vmatprep.subr.mxu0 0.0
        %1675 = vmatpush1.xpose.msra.mxu0 0.0
        %1676 = vmatprep.subr.mxu0 0.0
        %1677 = vmatpush1.xpose.msra.mxu0 0.0
        %1678 = vmatprep.subr.mxu0 0.0
        %1679 = vmatpush1.xpose.msra.mxu0 0.0
        %1680 = vmatprep.subr.mxu0 0.0
        %1681 = vmatpush1.xpose.msra.mxu0 0.0
        %1682 = vmatprep.subr.mxu0 0.0
        %1683 = vmatpush1.xpose.msra.mxu0 0.0
        %1684 = vmatprep.subr.mxu0 0.0
        %1685 = vmatpush1.xpose.msra.mxu0 0.0
        %1686 = vmatprep.subr.mxu0 0.0
        %1687 = vmatpush1.xpose.msra.mxu0 0.0
        %1688 = vmatprep.subr.mxu0 0.0
        %1689 = vmatpush1.xpose.msra.mxu0 0.0
        %1690 = vmatprep.subr.mxu0 0.0
        %1691 = vmatpush1.xpose.msra.mxu0 %v1658
        %1692 = vmatprep.subr.mxu0 0.0
        %1693 = vmatpush2.xpose.msra.mxu0 0.0
        %1694 = vmatprep.subr.mxu0 0.0
        %1695 = vmatpush2.xpose.msra.mxu0 0.0
        %1696 = vmatprep.subr.mxu0 0.0
        %1697 = vmatpush2.xpose.msra.mxu0 0.0
        %1698 = vmatprep.subr.mxu0 0.0
        %1699 = vmatpush2.xpose.msra.mxu0 0.0
        %1700 = vmatprep.subr.mxu0 0.0
        %1701 = vmatpush2.xpose.msra.mxu0 0.0
        %1702 = vmatprep.subr.mxu0 0.0
        %1703 = vmatpush2.xpose.msra.mxu0 0.0
        %1704 = vmatprep.subr.mxu0 0.0
        %1705 = vmatpush2.xpose.msra.mxu0 0.0
        %1706 = vmatprep.subr.mxu0 0.0
        %1707 = vmatpush2.xpose.msra.mxu0 0.0
        %1708 = vmatprep.subr.mxu0 0.0
        %1709 = vmatpush2.xpose.msra.mxu0 0.0
        %1710 = vmatprep.subr.mxu0 0.0
        %1711 = vmatpush2.xpose.msra.mxu0 0.0
        %1712 = vmatprep.subr.mxu0 0.0
        %1713 = vmatpush2.xpose.msra.mxu0 0.0
        %1714 = vmatprep.subr.mxu0 0.0
        %1715 = vmatpush2.xpose.msra.mxu0 0.0
        %1716 = vmatprep.subr.mxu0 0.0
        %1717 = vmatpush2.xpose.msra.mxu0 0.0
        %1718 = vmatprep.subr.mxu0 0.0
        %1719 = vmatpush2.xpose.msra.mxu0 0.0
        %1720 = vmatprep.subr.mxu0 0.0
        %1721 = vmatpush2.xpose.msra.mxu0 0.0
        %1722 = vmatprep.subr.mxu0 0.0
        %1723 = vmatpush2.xpose.msra.mxu0 0.0
        %1724 = vmatprep.mubr.f32.mxu0 0.0
        %1725 = vmatmul.mubr.f32.gmra.mxu0 %v1656
        %v1726 = vpop.f32.mrf.mxu0
        %v1727 = vadd.f32 0.0, %v1726
        %v1728 = vpop.f32.mrf.mxu0
        %1729 = vdwg.mxu0
        %v1730 = vmul.f32 %v1727, 0.17677669
        %v1731 = vsel %vm1567, %v1730, -inf
        %1732 = vmax.xlane.f32.xlu0 %v1731
        %v1733 = vpop.xlane.xlu0 %1732
        %v1734 = vsub.f32 %v1730, %v1733
        %v1735 = vmul.f32 %v1734, 1.442695
        %v1736 = vpow.pop %v1735
        %v1737 = vsel %vm1567, %v1736, 0.0
        %1738 = vadd.xlane.f32.xlu0 %v1737
        %v1739 = vpop.xlane.xlu0 %1738
        %v1740 = vrcp.pop %v1739
        %v1741 = vmul.f32 %v1736, %v1740
        %1743 = vrot.lane.b32.xlu0 %v1486, 96
        %v1744 = vpop.permute.xlu0 %1743
        %v1747 = vsel %vm1567, %v1741, 0
        %1749 = vmatprep.subr.mxu0 0.0
        %1750 = vmatpush1.msra.mxu0 0.0
        %1751 = vmatprep.subr.mxu0 0.0
        %1752 = vmatpush1.msra.mxu0 0.0
        %1753 = vmatprep.subr.mxu0 0.0
        %1754 = vmatpush1.msra.mxu0 0.0
        %1755 = vmatprep.subr.mxu0 0.0
        %1756 = vmatpush1.msra.mxu0 0.0
        %1757 = vmatprep.subr.mxu0 0.0
        %1758 = vmatpush1.msra.mxu0 0.0
        %1759 = vmatprep.subr.mxu0 0.0
        %1760 = vmatpush1.msra.mxu0 0.0
        %1761 = vmatprep.subr.mxu0 0.0
        %1762 = vmatpush1.msra.mxu0 0.0
        %1763 = vmatprep.subr.mxu0 0.0
        %1764 = vmatpush1.msra.mxu0 0.0
        %1765 = vmatprep.subr.mxu0 0.0
        %1766 = vmatpush1.msra.mxu0 0.0
        %1767 = vmatprep.subr.mxu0 0.0
        %1768 = vmatpush1.msra.mxu0 0.0
        %1769 = vmatprep.subr.mxu0 0.0
        %1770 = vmatpush1.msra.mxu0 0.0
        %1771 = vmatprep.subr.mxu0 0.0
        %1772 = vmatpush1.msra.mxu0 0.0
        %1773 = vmatprep.subr.mxu0 0.0
        %1774 = vmatpush1.msra.mxu0 0.0
        %1775 = vmatprep.subr.mxu0 0.0
        %1776 = vmatpush1.msra.mxu0 0.0
        %1777 = vmatprep.subr.mxu0 0.0
        %1778 = vmatpush1.msra.mxu0 0.0
        %1779 = vmatprep.subr.mxu0 0.0
        %1780 = vmatpush1.msra.mxu0 %v1744
        %1781 = vmatprep.subr.mxu0 0.0
        %1782 = vmatpush2.msra.mxu0 0.0
        %1783 = vmatprep.subr.mxu0 0.0
        %1784 = vmatpush2.msra.mxu0 0.0
        %1785 = vmatprep.subr.mxu0 0.0
        %1786 = vmatpush2.msra.mxu0 0.0
        %1787 = vmatprep.subr.mxu0 0.0
        %1788 = vmatpush2.msra.mxu0 0.0
        %1789 = vmatprep.subr.mxu0 0.0
        %1790 = vmatpush2.msra.mxu0 0.0
        %1791 = vmatprep.subr.mxu0 0.0
        %1792 = vmatpush2.msra.mxu0 0.0
        %1793 = vmatprep.subr.mxu0 0.0
        %1794 = vmatpush2.msra.mxu0 0.0
        %1795 = vmatprep.subr.mxu0 0.0
        %1796 = vmatpush2.msra.mxu0 0.0
        %1797 = vmatprep.subr.mxu0 0.0
        %1798 = vmatpush2.msra.mxu0 0.0
        %1799 = vmatprep.subr.mxu0 0.0
        %1800 = vmatpush2.msra.mxu0 0.0
        %1801 = vmatprep.subr.mxu0 0.0
        %1802 = vmatpush2.msra.mxu0 0.0
        %1803 = vmatprep.subr.mxu0 0.0
        %1804 = vmatpush2.msra.mxu0 0.0
        %1805 = vmatprep.subr.mxu0 0.0
        %1806 = vmatpush2.msra.mxu0 0.0
        %1807 = vmatprep.subr.mxu0 0.0
        %1808 = vmatpush2.msra.mxu0 0.0
        %1809 = vmatprep.subr.mxu0 0.0
        %1810 = vmatpush2.msra.mxu0 0.0
        %1811 = vmatprep.subr.mxu0 0.0
        %1812 = vmatpush2.msra.mxu0 0.0
        %1813 = vmatprep.mubr.f32.mxu0 0.0
        %1814 = vmatmul.mubr.f32.gmra.mxu0 %v1747
        %v1815 = vpop.f32.mrf.mxu0
        %v1816 = vadd.f32 0.0, %v1815
        %v1817 = vpop.f32.mrf.mxu0
        %1818 = vdwg.mxu0
        %v1820 = vsel %vm1489, %v1816, 0
        %1822 = vmatprep.subr.mxu0 0.0
        %1823 = vmatpush1.msra.mxu0 0.0
        %1824 = vmatprep.subr.mxu0 0.0
        %1825 = vmatpush1.msra.mxu0 0.0
        %1826 = vmatprep.subr.mxu0 0.0
        %1827 = vmatpush1.msra.mxu0 0.0
        %1828 = vmatprep.subr.mxu0 0.0
        %1829 = vmatpush1.msra.mxu0 0.0
        %1830 = vmatprep.subr.mxu0 0.0
        %1831 = vmatpush1.msra.mxu0 0.0
        %1832 = vmatprep.subr.mxu0 0.0
        %1833 = vmatpush1.msra.mxu0 0.0
        %1834 = vmatprep.subr.mxu0 0.0
        %1835 = vmatpush1.msra.mxu0 0.0
        %1836 = vmatprep.subr.mxu0 0.0
        %1837 = vmatpush1.msra.mxu0 0.0
        %1838 = vmatprep.subr.mxu0 0.0
        %1839 = vmatpush1.msra.mxu0 0.0
        %1840 = vmatprep.subr.mxu0 0.0
        %1841 = vmatpush1.msra.mxu0 0.0
        %1842 = vmatprep.subr.mxu0 0.0
        %1843 = vmatpush1.msra.mxu0 0.0
        %1844 = vmatprep.subr.mxu0 0.0
        %1845 = vmatpush1.msra.mxu0 0.0
        %1846 = vmatprep.subr.mxu0 0.0
        %1847 = vmatpush1.msra.mxu0 %v1251
        %1848 = vmatprep.subr.mxu0 0.0
        %1849 = vmatpush1.msra.mxu0 %v1250
        %1850 = vmatprep.subr.mxu0 0.0
        %1851 = vmatpush1.msra.mxu0 %v1249
        %1852 = vmatprep.subr.mxu0 0.0
        %1853 = vmatpush1.msra.mxu0 %v1248
        %1854 = vmatprep.subr.mxu0 0.0
        %1855 = vmatpush2.msra.mxu0 0.0
        %1856 = vmatprep.subr.mxu0 0.0
        %1857 = vmatpush2.msra.mxu0 0.0
        %1858 = vmatprep.subr.mxu0 0.0
        %1859 = vmatpush2.msra.mxu0 0.0
        %1860 = vmatprep.subr.mxu0 0.0
        %1861 = vmatpush2.msra.mxu0 0.0
        %1862 = vmatprep.subr.mxu0 0.0
        %1863 = vmatpush2.msra.mxu0 0.0
        %1864 = vmatprep.subr.mxu0 0.0
        %1865 = vmatpush2.msra.mxu0 0.0
        %1866 = vmatprep.subr.mxu0 0.0
        %1867 = vmatpush2.msra.mxu0 0.0
        %1868 = vmatprep.subr.mxu0 0.0
        %1869 = vmatpush2.msra.mxu0 0.0
        %1870 = vmatprep.subr.mxu0 0.0
        %1871 = vmatpush2.msra.mxu0 0.0
        %1872 = vmatprep.subr.mxu0 0.0
        %1873 = vmatpush2.msra.mxu0 0.0
        %1874 = vmatprep.subr.mxu0 0.0
        %1875 = vmatpush2.msra.mxu0 0.0
        %1876 = vmatprep.subr.mxu0 0.0
        %1877 = vmatpush2.msra.mxu0 0.0
        %1878 = vmatprep.subr.mxu0 0.0
        %1879 = vmatpush2.msra.mxu0 0.0
        %1880 = vmatprep.subr.mxu0 0.0
        %1881 = vmatpush2.msra.mxu0 0.0
        %1882 = vmatprep.subr.mxu0 0.0
        %1883 = vmatpush2.msra.mxu0 0.0
        %1884 = vmatprep.subr.mxu0 0.0
        %1885 = vmatpush2.msra.mxu0 0.0
        %1886 = vmatprep.mubr.f32.mxu0 0.0
        %1887 = vmatmul.mubr.f32.gmra.mxu0 %v1820
        %v1888 = vpop.f32.mrf.mxu0
        %v1889 = vadd.f32 0.0, %v1888
        %v1890 = vpop.f32.mrf.mxu0
        %1891 = vdwg.mxu0
        %v1893 = vsel %vm1489, %v1649, 0
        %1895 = vmatprep.subr.mxu0 0.0
        %1896 = vmatpush1.msra.mxu0 0.0
        %1897 = vmatprep.subr.mxu0 0.0
        %1898 = vmatpush1.msra.mxu0 0.0
        %1899 = vmatprep.subr.mxu0 0.0
        %1900 = vmatpush1.msra.mxu0 0.0
        %1901 = vmatprep.subr.mxu0 0.0
        %1902 = vmatpush1.msra.mxu0 0.0
        %1903 = vmatprep.subr.mxu0 0.0
        %1904 = vmatpush1.msra.mxu0 0.0
        %1905 = vmatprep.subr.mxu0 0.0
        %1906 = vmatpush1.msra.mxu0 0.0
        %1907 = vmatprep.subr.mxu0 0.0
        %1908 = vmatpush1.msra.mxu0 0.0
        %1909 = vmatprep.subr.mxu0 0.0
        %1910 = vmatpush1.msra.mxu0 0.0
        %1911 = vmatprep.subr.mxu0 0.0
        %1912 = vmatpush1.msra.mxu0 0.0
        %1913 = vmatprep.subr.mxu0 0.0
        %1914 = vmatpush1.msra.mxu0 0.0
        %1915 = vmatprep.subr.mxu0 0.0
        %1916 = vmatpush1.msra.mxu0 0.0
        %1917 = vmatprep.subr.mxu0 0.0
        %1918 = vmatpush1.msra.mxu0 0.0
        %1919 = vmatprep.subr.mxu0 0.0
        %1920 = vmatpush1.msra.mxu0 %v1247
        %1921 = vmatprep.subr.mxu0 0.0
        %1922 = vmatpush1.msra.mxu0 %v1246
        %1923 = vmatprep.subr.mxu0 0.0
        %1924 = vmatpush1.msra.mxu0 %v1245
        %1925 = vmatprep.subr.mxu0 0.0
        %1926 = vmatpush1.msra.mxu0 %v1244
        %1927 = vmatprep.subr.mxu0 0.0
        %1928 = vmatpush2.msra.mxu0 0.0
        %1929 = vmatprep.subr.mxu0 0.0
        %1930 = vmatpush2.msra.mxu0 0.0
        %1931 = vmatprep.subr.mxu0 0.0
        %1932 = vmatpush2.msra.mxu0 0.0
        %1933 = vmatprep.subr.mxu0 0.0
        %1934 = vmatpush2.msra.mxu0 0.0
        %1935 = vmatprep.subr.mxu0 0.0
        %1936 = vmatpush2.msra.mxu0 0.0
        %1937 = vmatprep.subr.mxu0 0.0
        %1938 = vmatpush2.msra.mxu0 0.0
        %1939 = vmatprep.subr.mxu0 0.0
        %1940 = vmatpush2.msra.mxu0 0.0
        %1941 = vmatprep.subr.mxu0 0.0
        %1942 = vmatpush2.msra.mxu0 0.0
        %1943 = vmatprep.subr.mxu0 0.0
        %1944 = vmatpush2.msra.mxu0 0.0
        %1945 = vmatprep.subr.mxu0 0.0
        %1946 = vmatpush2.msra.mxu0 0.0
        %1947 = vmatprep.subr.mxu0 0.0
        %1948 = vmatpush2.msra.mxu0 0.0
        %1949 = vmatprep.subr.mxu0 0.0
        %1950 = vmatpush2.msra.mxu0 0.0
        %1951 = vmatprep.subr.mxu0 0.0
        %1952 = vmatpush2.msra.mxu0 0.0
        %1953 = vmatprep.subr.mxu0 0.0
        %1954 = vmatpush2.msra.mxu0 0.0
        %1955 = vmatprep.subr.mxu0 0.0
        %1956 = vmatpush2.msra.mxu0 0.0
        %1957 = vmatprep.subr.mxu0 0.0
        %1958 = vmatpush2.msra.mxu0 0.0
        %1959 = vmatprep.mubr.f32.mxu0 0.0
        %1960 = vmatmul.mubr.f32.gmra.mxu0 %v1893
        %v1961 = vpop.f32.mrf.mxu0
        %v1962 = vadd.f32 %v1889, %v1961
        %v1963 = vpop.f32.mrf.mxu0
        %1964 = vdwg.mxu0
        %1965 = vrot.lane.b32.xlu0 %v1334, 64
        %v1966 = vpop.permute.xlu0 %1965
        %1967 = vrot.lane.b32.xlu0 %v1410, 64
        %v1968 = vpop.permute.xlu0 %1967
        %v1969 = vsel %vm1489, %v1966, 0
        %v1971 = vsel %vm1489, %v1968, 0
        %1973 = vmatprep.subr.mxu0 0.0
        %1974 = vmatpush1.xpose.msra.mxu0 0.0
        %1975 = vmatprep.subr.mxu0 0.0
        %1976 = vmatpush1.xpose.msra.mxu0 0.0
        %1977 = vmatprep.subr.mxu0 0.0
        %1978 = vmatpush1.xpose.msra.mxu0 0.0
        %1979 = vmatprep.subr.mxu0 0.0
        %1980 = vmatpush1.xpose.msra.mxu0 0.0
        %1981 = vmatprep.subr.mxu0 0.0
        %1982 = vmatpush1.xpose.msra.mxu0 0.0
        %1983 = vmatprep.subr.mxu0 0.0
        %1984 = vmatpush1.xpose.msra.mxu0 0.0
        %1985 = vmatprep.subr.mxu0 0.0
        %1986 = vmatpush1.xpose.msra.mxu0 0.0
        %1987 = vmatprep.subr.mxu0 0.0
        %1988 = vmatpush1.xpose.msra.mxu0 0.0
        %1989 = vmatprep.subr.mxu0 0.0
        %1990 = vmatpush1.xpose.msra.mxu0 0.0
        %1991 = vmatprep.subr.mxu0 0.0
        %1992 = vmatpush1.xpose.msra.mxu0 0.0
        %1993 = vmatprep.subr.mxu0 0.0
        %1994 = vmatpush1.xpose.msra.mxu0 0.0
        %1995 = vmatprep.subr.mxu0 0.0
        %1996 = vmatpush1.xpose.msra.mxu0 0.0
        %1997 = vmatprep.subr.mxu0 0.0
        %1998 = vmatpush1.xpose.msra.mxu0 0.0
        %1999 = vmatprep.subr.mxu0 0.0
        %2000 = vmatpush1.xpose.msra.mxu0 0.0
        %2001 = vmatprep.subr.mxu0 0.0
        %2002 = vmatpush1.xpose.msra.mxu0 0.0
        %2003 = vmatprep.subr.mxu0 0.0
        %2004 = vmatpush1.xpose.msra.mxu0 %v1971
        %2005 = vmatprep.subr.mxu0 0.0
        %2006 = vmatpush2.xpose.msra.mxu0 0.0
        %2007 = vmatprep.subr.mxu0 0.0
        %2008 = vmatpush2.xpose.msra.mxu0 0.0
        %2009 = vmatprep.subr.mxu0 0.0
        %2010 = vmatpush2.xpose.msra.mxu0 0.0
        %2011 = vmatprep.subr.mxu0 0.0
        %2012 = vmatpush2.xpose.msra.mxu0 0.0
        %2013 = vmatprep.subr.mxu0 0.0
        %2014 = vmatpush2.xpose.msra.mxu0 0.0
        %2015 = vmatprep.subr.mxu0 0.0
        %2016 = vmatpush2.xpose.msra.mxu0 0.0
        %2017 = vmatprep.subr.mxu0 0.0
        %2018 = vmatpush2.xpose.msra.mxu0 0.0
        %2019 = vmatprep.subr.mxu0 0.0
        %2020 = vmatpush2.xpose.msra.mxu0 0.0
        %2021 = vmatprep.subr.mxu0 0.0
        %2022 = vmatpush2.xpose.msra.mxu0 0.0
        %2023 = vmatprep.subr.mxu0 0.0
        %2024 = vmatpush2.xpose.msra.mxu0 0.0
        %2025 = vmatprep.subr.mxu0 0.0
        %2026 = vmatpush2.xpose.msra.mxu0 0.0
        %2027 = vmatprep.subr.mxu0 0.0
        %2028 = vmatpush2.xpose.msra.mxu0 0.0
        %2029 = vmatprep.subr.mxu0 0.0
        %2030 = vmatpush2.xpose.msra.mxu0 0.0
        %2031 = vmatprep.subr.mxu0 0.0
        %2032 = vmatpush2.xpose.msra.mxu0 0.0
        %2033 = vmatprep.subr.mxu0 0.0
        %2034 = vmatpush2.xpose.msra.mxu0 0.0
        %2035 = vmatprep.subr.mxu0 0.0
        %2036 = vmatpush2.xpose.msra.mxu0 0.0
        %2037 = vmatprep.mubr.f32.mxu0 0.0
        %2038 = vmatmul.mubr.f32.gmra.mxu0 %v1969
        %v2039 = vpop.f32.mrf.mxu0
        %v2040 = vadd.f32 0.0, %v2039
        %v2041 = vpop.f32.mrf.mxu0
        %2042 = vdwg.mxu0
        %v2043 = vmul.f32 %v2040, 0.17677669
        %v2044 = vsel %vm1567, %v2043, -inf
        %2045 = vmax.xlane.f32.xlu0 %v2044
        %v2046 = vpop.xlane.xlu0 %2045
        %v2047 = vsub.f32 %v2043, %v2046
        %v2048 = vmul.f32 %v2047, 1.442695
        %v2049 = vpow.pop %v2048
        %v2050 = vsel %vm1567, %v2049, 0.0
        %2051 = vadd.xlane.f32.xlu0 %v2050
        %v2052 = vpop.xlane.xlu0 %2051
        %v2053 = vrcp.pop %v2052
        %v2054 = vmul.f32 %v2049, %v2053
        %2055 = vrot.lane.b32.xlu0 %v1486, 64
        %v2056 = vpop.permute.xlu0 %2055
        %v2059 = vsel %vm1567, %v2054, 0
        %2061 = vmatprep.subr.mxu0 0.0
        %2062 = vmatpush1.msra.mxu0 0.0
        %2063 = vmatprep.subr.mxu0 0.0
        %2064 = vmatpush1.msra.mxu0 0.0
        %2065 = vmatprep.subr.mxu0 0.0
        %2066 = vmatpush1.msra.mxu0 0.0
        %2067 = vmatprep.subr.mxu0 0.0
        %2068 = vmatpush1.msra.mxu0 0.0
        %2069 = vmatprep.subr.mxu0 0.0
        %2070 = vmatpush1.msra.mxu0 0.0
        %2071 = vmatprep.subr.mxu0 0.0
        %2072 = vmatpush1.msra.mxu0 0.0
        %2073 = vmatprep.subr.mxu0 0.0
        %2074 = vmatpush1.msra.mxu0 0.0
        %2075 = vmatprep.subr.mxu0 0.0
        %2076 = vmatpush1.msra.mxu0 0.0
        %2077 = vmatprep.subr.mxu0 0.0
        %2078 = vmatpush1.msra.mxu0 0.0
        %2079 = vmatprep.subr.mxu0 0.0
        %2080 = vmatpush1.msra.mxu0 0.0
        %2081 = vmatprep.subr.mxu0 0.0
        %2082 = vmatpush1.msra.mxu0 0.0
        %2083 = vmatprep.subr.mxu0 0.0
        %2084 = vmatpush1.msra.mxu0 0.0
        %2085 = vmatprep.subr.mxu0 0.0
        %2086 = vmatpush1.msra.mxu0 0.0
        %2087 = vmatprep.subr.mxu0 0.0
        %2088 = vmatpush1.msra.mxu0 0.0
        %2089 = vmatprep.subr.mxu0 0.0
        %2090 = vmatpush1.msra.mxu0 0.0
        %2091 = vmatprep.subr.mxu0 0.0
        %2092 = vmatpush1.msra.mxu0 %v2056
        %2093 = vmatprep.subr.mxu0 0.0
        %2094 = vmatpush2.msra.mxu0 0.0
        %2095 = vmatprep.subr.mxu0 0.0
        %2096 = vmatpush2.msra.mxu0 0.0
        %2097 = vmatprep.subr.mxu0 0.0
        %2098 = vmatpush2.msra.mxu0 0.0
        %2099 = vmatprep.subr.mxu0 0.0
        %2100 = vmatpush2.msra.mxu0 0.0
        %2101 = vmatprep.subr.mxu0 0.0
        %2102 = vmatpush2.msra.mxu0 0.0
        %2103 = vmatprep.subr.mxu0 0.0
        %2104 = vmatpush2.msra.mxu0 0.0
        %2105 = vmatprep.subr.mxu0 0.0
        %2106 = vmatpush2.msra.mxu0 0.0
        %2107 = vmatprep.subr.mxu0 0.0
        %2108 = vmatpush2.msra.mxu0 0.0
        %2109 = vmatprep.subr.mxu0 0.0
        %2110 = vmatpush2.msra.mxu0 0.0
        %2111 = vmatprep.subr.mxu0 0.0
        %2112 = vmatpush2.msra.mxu0 0.0
        %2113 = vmatprep.subr.mxu0 0.0
        %2114 = vmatpush2.msra.mxu0 0.0
        %2115 = vmatprep.subr.mxu0 0.0
        %2116 = vmatpush2.msra.mxu0 0.0
        %2117 = vmatprep.subr.mxu0 0.0
        %2118 = vmatpush2.msra.mxu0 0.0
        %2119 = vmatprep.subr.mxu0 0.0
        %2120 = vmatpush2.msra.mxu0 0.0
        %2121 = vmatprep.subr.mxu0 0.0
        %2122 = vmatpush2.msra.mxu0 0.0
        %2123 = vmatprep.subr.mxu0 0.0
        %2124 = vmatpush2.msra.mxu0 0.0
        %2125 = vmatprep.mubr.f32.mxu0 0.0
        %2126 = vmatmul.mubr.f32.gmra.mxu0 %v2059
        %v2127 = vpop.f32.mrf.mxu0
        %v2128 = vadd.f32 0.0, %v2127
        %v2129 = vpop.f32.mrf.mxu0
        %2130 = vdwg.mxu0
        %v2132 = vsel %vm1489, %v2128, 0
        %2134 = vmatprep.subr.mxu0 0.0
        %2135 = vmatpush1.msra.mxu0 0.0
        %2136 = vmatprep.subr.mxu0 0.0
        %2137 = vmatpush1.msra.mxu0 0.0
        %2138 = vmatprep.subr.mxu0 0.0
        %2139 = vmatpush1.msra.mxu0 0.0
        %2140 = vmatprep.subr.mxu0 0.0
        %2141 = vmatpush1.msra.mxu0 0.0
        %2142 = vmatprep.subr.mxu0 0.0
        %2143 = vmatpush1.msra.mxu0 0.0
        %2144 = vmatprep.subr.mxu0 0.0
        %2145 = vmatpush1.msra.mxu0 0.0
        %2146 = vmatprep.subr.mxu0 0.0
        %2147 = vmatpush1.msra.mxu0 0.0
        %2148 = vmatprep.subr.mxu0 0.0
        %2149 = vmatpush1.msra.mxu0 0.0
        %2150 = vmatprep.subr.mxu0 0.0
        %2151 = vmatpush1.msra.mxu0 0.0
        %2152 = vmatprep.subr.mxu0 0.0
        %2153 = vmatpush1.msra.mxu0 0.0
        %2154 = vmatprep.subr.mxu0 0.0
        %2155 = vmatpush1.msra.mxu0 0.0
        %2156 = vmatprep.subr.mxu0 0.0
        %2157 = vmatpush1.msra.mxu0 0.0
        %2158 = vmatprep.subr.mxu0 0.0
        %2159 = vmatpush1.msra.mxu0 %v1255
        %2160 = vmatprep.subr.mxu0 0.0
        %2161 = vmatpush1.msra.mxu0 %v1254
        %2162 = vmatprep.subr.mxu0 0.0
        %2163 = vmatpush1.msra.mxu0 %v1253
        %2164 = vmatprep.subr.mxu0 0.0
        %2165 = vmatpush1.msra.mxu0 %v1252
        %2166 = vmatprep.subr.mxu0 0.0
        %2167 = vmatpush2.msra.mxu0 0.0
        %2168 = vmatprep.subr.mxu0 0.0
        %2169 = vmatpush2.msra.mxu0 0.0
        %2170 = vmatprep.subr.mxu0 0.0
        %2171 = vmatpush2.msra.mxu0 0.0
        %2172 = vmatprep.subr.mxu0 0.0
        %2173 = vmatpush2.msra.mxu0 0.0
        %2174 = vmatprep.subr.mxu0 0.0
        %2175 = vmatpush2.msra.mxu0 0.0
        %2176 = vmatprep.subr.mxu0 0.0
        %2177 = vmatpush2.msra.mxu0 0.0
        %2178 = vmatprep.subr.mxu0 0.0
        %2179 = vmatpush2.msra.mxu0 0.0
        %2180 = vmatprep.subr.mxu0 0.0
        %2181 = vmatpush2.msra.mxu0 0.0
        %2182 = vmatprep.subr.mxu0 0.0
        %2183 = vmatpush2.msra.mxu0 0.0
        %2184 = vmatprep.subr.mxu0 0.0
        %2185 = vmatpush2.msra.mxu0 0.0
        %2186 = vmatprep.subr.mxu0 0.0
        %2187 = vmatpush2.msra.mxu0 0.0
        %2188 = vmatprep.subr.mxu0 0.0
        %2189 = vmatpush2.msra.mxu0 0.0
        %2190 = vmatprep.subr.mxu0 0.0
        %2191 = vmatpush2.msra.mxu0 0.0
        %2192 = vmatprep.subr.mxu0 0.0
        %2193 = vmatpush2.msra.mxu0 0.0
        %2194 = vmatprep.subr.mxu0 0.0
        %2195 = vmatpush2.msra.mxu0 0.0
        %2196 = vmatprep.subr.mxu0 0.0
        %2197 = vmatpush2.msra.mxu0 0.0
        %2198 = vmatprep.mubr.f32.mxu0 0.0
        %2199 = vmatmul.mubr.f32.gmra.mxu0 %v2132
        %v2200 = vpop.f32.mrf.mxu0
        %v2201 = vadd.f32 0.0, %v2200
        %v2202 = vpop.f32.mrf.mxu0
        %2203 = vdwg.mxu0
        %v2204 = vadd.f32 %v1962, %v2201
        %2205 = vrot.lane.b32.xlu0 %v1334, 32
        %v2206 = vpop.permute.xlu0 %2205
        %2207 = vrot.lane.b32.xlu0 %v1410, 32
        %v2208 = vpop.permute.xlu0 %2207
        %v2209 = vsel %vm1489, %v2206, 0
        %v2211 = vsel %vm1489, %v2208, 0
        %2213 = vmatprep.subr.mxu0 0.0
        %2214 = vmatpush1.xpose.msra.mxu0 0.0
        %2215 = vmatprep.subr.mxu0 0.0
        %2216 = vmatpush1.xpose.msra.mxu0 0.0
        %2217 = vmatprep.subr.mxu0 0.0
        %2218 = vmatpush1.xpose.msra.mxu0 0.0
        %2219 = vmatprep.subr.mxu0 0.0
        %2220 = vmatpush1.xpose.msra.mxu0 0.0
        %2221 = vmatprep.subr.mxu0 0.0
        %2222 = vmatpush1.xpose.msra.mxu0 0.0
        %2223 = vmatprep.subr.mxu0 0.0
        %2224 = vmatpush1.xpose.msra.mxu0 0.0
        %2225 = vmatprep.subr.mxu0 0.0
        %2226 = vmatpush1.xpose.msra.mxu0 0.0
        %2227 = vmatprep.subr.mxu0 0.0
        %2228 = vmatpush1.xpose.msra.mxu0 0.0
        %2229 = vmatprep.subr.mxu0 0.0
        %2230 = vmatpush1.xpose.msra.mxu0 0.0
        %2231 = vmatprep.subr.mxu0 0.0
        %2232 = vmatpush1.xpose.msra.mxu0 0.0
        %2233 = vmatprep.subr.mxu0 0.0
        %2234 = vmatpush1.xpose.msra.mxu0 0.0
        %2235 = vmatprep.subr.mxu0 0.0
        %2236 = vmatpush1.xpose.msra.mxu0 0.0
        %2237 = vmatprep.subr.mxu0 0.0
        %2238 = vmatpush1.xpose.msra.mxu0 0.0
        %2239 = vmatprep.subr.mxu0 0.0
        %2240 = vmatpush1.xpose.msra.mxu0 0.0
        %2241 = vmatprep.subr.mxu0 0.0
        %2242 = vmatpush1.xpose.msra.mxu0 0.0
        %2243 = vmatprep.subr.mxu0 0.0
        %2244 = vmatpush1.xpose.msra.mxu0 %v2211
        %2245 = vmatprep.subr.mxu0 0.0
        %2246 = vmatpush2.xpose.msra.mxu0 0.0
        %2247 = vmatprep.subr.mxu0 0.0
        %2248 = vmatpush2.xpose.msra.mxu0 0.0
        %2249 = vmatprep.subr.mxu0 0.0
        %2250 = vmatpush2.xpose.msra.mxu0 0.0
        %2251 = vmatprep.subr.mxu0 0.0
        %2252 = vmatpush2.xpose.msra.mxu0 0.0
        %2253 = vmatprep.subr.mxu0 0.0
        %2254 = vmatpush2.xpose.msra.mxu0 0.0
        %2255 = vmatprep.subr.mxu0 0.0
        %2256 = vmatpush2.xpose.msra.mxu0 0.0
        %2257 = vmatprep.subr.mxu0 0.0
        %2258 = vmatpush2.xpose.msra.mxu0 0.0
        %2259 = vmatprep.subr.mxu0 0.0
        %2260 = vmatpush2.xpose.msra.mxu0 0.0
        %2261 = vmatprep.subr.mxu0 0.0
        %2262 = vmatpush2.xpose.msra.mxu0 0.0
        %2263 = vmatprep.subr.mxu0 0.0
        %2264 = vmatpush2.xpose.msra.mxu0 0.0
        %2265 = vmatprep.subr.mxu0 0.0
        %2266 = vmatpush2.xpose.msra.mxu0 0.0
        %2267 = vmatprep.subr.mxu0 0.0
        %2268 = vmatpush2.xpose.msra.mxu0 0.0
        %2269 = vmatprep.subr.mxu0 0.0
        %2270 = vmatpush2.xpose.msra.mxu0 0.0
        %2271 = vmatprep.subr.mxu0 0.0
        %2272 = vmatpush2.xpose.msra.mxu0 0.0
        %2273 = vmatprep.subr.mxu0 0.0
        %2274 = vmatpush2.xpose.msra.mxu0 0.0
        %2275 = vmatprep.subr.mxu0 0.0
        %2276 = vmatpush2.xpose.msra.mxu0 0.0
        %2277 = vmatprep.mubr.f32.mxu0 0.0
        %2278 = vmatmul.mubr.f32.gmra.mxu0 %v2209
        %v2279 = vpop.f32.mrf.mxu0
        %v2280 = vadd.f32 0.0, %v2279
        %v2281 = vpop.f32.mrf.mxu0
        %2282 = vdwg.mxu0
        %v2283 = vmul.f32 %v2280, 0.17677669
        %v2284 = vsel %vm1567, %v2283, -inf
        %2285 = vmax.xlane.f32.xlu0 %v2284
        %v2286 = vpop.xlane.xlu0 %2285
        %v2287 = vsub.f32 %v2283, %v2286
        %v2288 = vmul.f32 %v2287, 1.442695
        %v2289 = vpow.pop %v2288
        %v2290 = vsel %vm1567, %v2289, 0.0
        %2291 = vadd.xlane.f32.xlu0 %v2290
        %v2292 = vpop.xlane.xlu0 %2291
        %v2293 = vrcp.pop %v2292
        %v2294 = vmul.f32 %v2289, %v2293
        %2295 = vrot.lane.b32.xlu0 %v1486, 32
        %v2296 = vpop.permute.xlu0 %2295
        %v2299 = vsel %vm1567, %v2294, 0
        %2301 = vmatprep.subr.mxu0 0.0
        %2302 = vmatpush1.msra.mxu0 0.0
        %2303 = vmatprep.subr.mxu0 0.0
        %2304 = vmatpush1.msra.mxu0 0.0
        %2305 = vmatprep.subr.mxu0 0.0
        %2306 = vmatpush1.msra.mxu0 0.0
        %2307 = vmatprep.subr.mxu0 0.0
        %2308 = vmatpush1.msra.mxu0 0.0
        %2309 = vmatprep.subr.mxu0 0.0
        %2310 = vmatpush1.msra.mxu0 0.0
        %2311 = vmatprep.subr.mxu0 0.0
        %2312 = vmatpush1.msra.mxu0 0.0
        %2313 = vmatprep.subr.mxu0 0.0
        %2314 = vmatpush1.msra.mxu0 0.0
        %2315 = vmatprep.subr.mxu0 0.0
        %2316 = vmatpush1.msra.mxu0 0.0
        %2317 = vmatprep.subr.mxu0 0.0
        %2318 = vmatpush1.msra.mxu0 0.0
        %2319 = vmatprep.subr.mxu0 0.0
        %2320 = vmatpush1.msra.mxu0 0.0
        %2321 = vmatprep.subr.mxu0 0.0
        %2322 = vmatpush1.msra.mxu0 0.0
        %2323 = vmatprep.subr.mxu0 0.0
        %2324 = vmatpush1.msra.mxu0 0.0
        %2325 = vmatprep.subr.mxu0 0.0
        %2326 = vmatpush1.msra.mxu0 0.0
        %2327 = vmatprep.subr.mxu0 0.0
        %2328 = vmatpush1.msra.mxu0 0.0
        %2329 = vmatprep.subr.mxu0 0.0
        %2330 = vmatpush1.msra.mxu0 0.0
        %2331 = vmatprep.subr.mxu0 0.0
        %2332 = vmatpush1.msra.mxu0 %v2296
        %2333 = vmatprep.subr.mxu0 0.0
        %2334 = vmatpush2.msra.mxu0 0.0
        %2335 = vmatprep.subr.mxu0 0.0
        %2336 = vmatpush2.msra.mxu0 0.0
        %2337 = vmatprep.subr.mxu0 0.0
        %2338 = vmatpush2.msra.mxu0 0.0
        %2339 = vmatprep.subr.mxu0 0.0
        %2340 = vmatpush2.msra.mxu0 0.0
        %2341 = vmatprep.subr.mxu0 0.0
        %2342 = vmatpush2.msra.mxu0 0.0
        %2343 = vmatprep.subr.mxu0 0.0
        %2344 = vmatpush2.msra.mxu0 0.0
        %2345 = vmatprep.subr.mxu0 0.0
        %2346 = vmatpush2.msra.mxu0 0.0
        %2347 = vmatprep.subr.mxu0 0.0
        %2348 = vmatpush2.msra.mxu0 0.0
        %2349 = vmatprep.subr.mxu0 0.0
        %2350 = vmatpush2.msra.mxu0 0.0
        %2351 = vmatprep.subr.mxu0 0.0
        %2352 = vmatpush2.msra.mxu0 0.0
        %2353 = vmatprep.subr.mxu0 0.0
        %2354 = vmatpush2.msra.mxu0 0.0
        %2355 = vmatprep.subr.mxu0 0.0
        %2356 = vmatpush2.msra.mxu0 0.0
        %2357 = vmatprep.subr.mxu0 0.0
        %2358 = vmatpush2.msra.mxu0 0.0
        %2359 = vmatprep.subr.mxu0 0.0
        %2360 = vmatpush2.msra.mxu0 0.0
        %2361 = vmatprep.subr.mxu0 0.0
        %2362 = vmatpush2.msra.mxu0 0.0
        %2363 = vmatprep.subr.mxu0 0.0
        %2364 = vmatpush2.msra.mxu0 0.0
        %2365 = vmatprep.mubr.f32.mxu0 0.0
        %2366 = vmatmul.mubr.f32.gmra.mxu0 %v2299
        %v2367 = vpop.f32.mrf.mxu0
        %v2368 = vadd.f32 0.0, %v2367
        %v2369 = vpop.f32.mrf.mxu0
        %2370 = vdwg.mxu0
        %v2372 = vsel %vm1489, %v2368, 0
        %2374 = vmatprep.subr.mxu0 0.0
        %2375 = vmatpush1.msra.mxu0 0.0
        %2376 = vmatprep.subr.mxu0 0.0
        %2377 = vmatpush1.msra.mxu0 0.0
        %2378 = vmatprep.subr.mxu0 0.0
        %2379 = vmatpush1.msra.mxu0 0.0
        %2380 = vmatprep.subr.mxu0 0.0
        %2381 = vmatpush1.msra.mxu0 0.0
        %2382 = vmatprep.subr.mxu0 0.0
        %2383 = vmatpush1.msra.mxu0 0.0
        %2384 = vmatprep.subr.mxu0 0.0
        %2385 = vmatpush1.msra.mxu0 0.0
        %2386 = vmatprep.subr.mxu0 0.0
        %2387 = vmatpush1.msra.mxu0 0.0
        %2388 = vmatprep.subr.mxu0 0.0
        %2389 = vmatpush1.msra.mxu0 0.0
        %2390 = vmatprep.subr.mxu0 0.0
        %2391 = vmatpush1.msra.mxu0 0.0
        %2392 = vmatprep.subr.mxu0 0.0
        %2393 = vmatpush1.msra.mxu0 0.0
        %2394 = vmatprep.subr.mxu0 0.0
        %2395 = vmatpush1.msra.mxu0 0.0
        %2396 = vmatprep.subr.mxu0 0.0
        %2397 = vmatpush1.msra.mxu0 0.0
        %2398 = vmatprep.subr.mxu0 0.0
        %2399 = vmatpush1.msra.mxu0 %v1259
        %2400 = vmatprep.subr.mxu0 0.0
        %2401 = vmatpush1.msra.mxu0 %v1258
        %2402 = vmatprep.subr.mxu0 0.0
        %2403 = vmatpush1.msra.mxu0 %v1257
        %2404 = vmatprep.subr.mxu0 0.0
        %2405 = vmatpush1.msra.mxu0 %v1256
        %2406 = vmatprep.subr.mxu0 0.0
        %2407 = vmatpush2.msra.mxu0 0.0
        %2408 = vmatprep.subr.mxu0 0.0
        %2409 = vmatpush2.msra.mxu0 0.0
        %2410 = vmatprep.subr.mxu0 0.0
        %2411 = vmatpush2.msra.mxu0 0.0
        %2412 = vmatprep.subr.mxu0 0.0
        %2413 = vmatpush2.msra.mxu0 0.0
        %2414 = vmatprep.subr.mxu0 0.0
        %2415 = vmatpush2.msra.mxu0 0.0
        %2416 = vmatprep.subr.mxu0 0.0
        %2417 = vmatpush2.msra.mxu0 0.0
        %2418 = vmatprep.subr.mxu0 0.0
        %2419 = vmatpush2.msra.mxu0 0.0
        %2420 = vmatprep.subr.mxu0 0.0
        %2421 = vmatpush2.msra.mxu0 0.0
        %2422 = vmatprep.subr.mxu0 0.0
        %2423 = vmatpush2.msra.mxu0 0.0
        %2424 = vmatprep.subr.mxu0 0.0
        %2425 = vmatpush2.msra.mxu0 0.0
        %2426 = vmatprep.subr.mxu0 0.0
        %2427 = vmatpush2.msra.mxu0 0.0
        %2428 = vmatprep.subr.mxu0 0.0
        %2429 = vmatpush2.msra.mxu0 0.0
        %2430 = vmatprep.subr.mxu0 0.0
        %2431 = vmatpush2.msra.mxu0 0.0
        %2432 = vmatprep.subr.mxu0 0.0
        %2433 = vmatpush2.msra.mxu0 0.0
        %2434 = vmatprep.subr.mxu0 0.0
        %2435 = vmatpush2.msra.mxu0 0.0
        %2436 = vmatprep.subr.mxu0 0.0
        %2437 = vmatpush2.msra.mxu0 0.0
        %2438 = vmatprep.mubr.f32.mxu0 0.0
        %2439 = vmatmul.mubr.f32.gmra.mxu0 %v2372
        %v2440 = vpop.f32.mrf.mxu0
        %v2441 = vadd.f32 0.0, %v2440
        %v2442 = vpop.f32.mrf.mxu0
        %2443 = vdwg.mxu0
        %v2444 = vadd.f32 %v2204, %v2441
        %v2446 = vlaneseq
        %v2447 = vshrl.u32 %v2446, 7
        %v2448 = vsub.s32 0, %v2447
        %v2449 = vrot.slane %v1260, %v2448
        %v2451 = vadd.f32 %v2444, %v2449
        %v2452 = vadd.f32 %v1154, %v2451
        %v2453 = vld [vmem:[%s51] sm:$0x1]
        %v2454 = vld [vmem:[%s53] sm:$0x1]
        %2455 = vadd.xlane.f32.xlu0 %v2452
        %v2456 = vpop.xlane.xlu0 %2455
        %v2457 = vmul.f32 %v2456, %v1161
        %v2458 = vsub.f32 %v2452, %v2457
        %v2459 = vmul.f32 %v2458, %v2458
        %2460 = vadd.xlane.f32.xlu0 %v2459
        %v2461 = vpop.xlane.xlu0 %2460
        %v2462 = vmul.f32 %v2461, %v1167
        %v2463 = vrsqrt.pop %v2462
        %v2464 = vmul.f32 %v2462, %v2463
        %vm2465 = vcmp.eq.f32.partialorder %v2462, inf
        %v2466 = vsel %vm2465, %v2462, %v2464
        %vm2467 = vcmp.eq.f32.partialorder %v2462, 0.0
        %v2468 = vand.u32 %v2462, 2147483648
        %v2469 = vsel %vm2467, %v2468, %v2466
        %v2471 = vlaneseq
        %v2472 = vshrl.u32 %v2471, 7
        %v2473 = vsub.s32 0, %v2472
        %v2474 = vrot.slane %v2453, %v2473
        %v2476 = vmul.f32 %v2474, %v2458
        %v2477 = vadd.f32 %v2469, 1e-06
        %v2478 = vrcp.pop %v2477
        %v2479 = vmul.f32 %v2476, %v2478
        %v2481 = vlaneseq
        %v2482 = vshrl.u32 %v2481, 7
        %v2483 = vsub.s32 0, %v2482
        %v2484 = vrot.slane %v2454, %v2483
        %v2486 = vadd.f32 %v2479, %v2484
        %v2487 = vld [vmem:[#allocation14] sm:$0xff]
        %v2488 = vld [vmem:[#allocation14 + $0x8] sm:$0xff]
        %v2489 = vld [vmem:[#allocation14 + $0x10] sm:$0xff]
        %v2490 = vld [vmem:[#allocation14 + $0x18] sm:$0xff]
        %v2491 = vld [vmem:[#allocation14 + $0x20] sm:$0xff]
        %v2492 = vld [vmem:[#allocation14 + $0x28] sm:$0xff]
        %v2493 = vld [vmem:[#allocation14 + $0x30] sm:$0xff]
        %v2494 = vld [vmem:[#allocation14 + $0x38] sm:$0xff]
        %v2495 = vld [vmem:[#allocation14 + $0x40] sm:$0xff]
        %v2496 = vld [vmem:[#allocation14 + $0x48] sm:$0xff]
        %v2497 = vld [vmem:[#allocation14 + $0x50] sm:$0xff]
        %v2498 = vld [vmem:[#allocation14 + $0x58] sm:$0xff]
        %v2499 = vld [vmem:[#allocation14 + $0x60] sm:$0xff]
        %v2500 = vld [vmem:[#allocation14 + $0x68] sm:$0xff]
        %v2501 = vld [vmem:[#allocation14 + $0x70] sm:$0xff]
        %v2502 = vld [vmem:[#allocation14 + $0x78] sm:$0xff]
        %v2503 = vld [vmem:[%s25] sm:$0x1]
        %v2504 = vld [vmem:[#allocation16] sm:$0xff]
        %v2505 = vld [vmem:[#allocation16 + $0x8] sm:$0xff]
        %v2506 = vld [vmem:[#allocation16 + $0x10] sm:$0xff]
        %v2507 = vld [vmem:[#allocation16 + $0x18] sm:$0xff]
        %v2508 = vld [vmem:[#allocation16 + $0x20] sm:$0xff]
        %v2509 = vld [vmem:[#allocation16 + $0x28] sm:$0xff]
        %v2510 = vld [vmem:[#allocation16 + $0x30] sm:$0xff]
        %v2511 = vld [vmem:[#allocation16 + $0x38] sm:$0xff]
        %v2512 = vld [vmem:[#allocation16 + $0x40] sm:$0xff]
        %v2513 = vld [vmem:[#allocation16 + $0x48] sm:$0xff]
        %v2514 = vld [vmem:[#allocation16 + $0x50] sm:$0xff]
        %v2515 = vld [vmem:[#allocation16 + $0x58] sm:$0xff]
        %v2516 = vld [vmem:[#allocation16 + $0x60] sm:$0xff]
        %v2517 = vld [vmem:[#allocation16 + $0x68] sm:$0xff]
        %v2518 = vld [vmem:[#allocation16 + $0x70] sm:$0xff]
        %v2519 = vld [vmem:[#allocation16 + $0x78] sm:$0xff]
        %v2520 = vld [vmem:[%s29] sm:$0x1]
        %v2521 = vld [vmem:[#allocation17] sm:$0xff]
        %v2522 = vld [vmem:[#allocation17 + $0x8] sm:$0xff]
        %v2523 = vld [vmem:[#allocation17 + $0x10] sm:$0xff]
        %v2524 = vld [vmem:[#allocation17 + $0x18] sm:$0xff]
        %v2525 = vld [vmem:[#allocation17 + $0x20] sm:$0xff]
        %v2526 = vld [vmem:[#allocation17 + $0x28] sm:$0xff]
        %v2527 = vld [vmem:[#allocation17 + $0x30] sm:$0xff]
        %v2528 = vld [vmem:[#allocation17 + $0x38] sm:$0xff]
        %v2529 = vld [vmem:[#allocation17 + $0x40] sm:$0xff]
        %v2530 = vld [vmem:[#allocation17 + $0x48] sm:$0xff]
        %v2531 = vld [vmem:[#allocation17 + $0x50] sm:$0xff]
        %v2532 = vld [vmem:[#allocation17 + $0x58] sm:$0xff]
        %v2533 = vld [vmem:[#allocation17 + $0x60] sm:$0xff]
        %v2534 = vld [vmem:[#allocation17 + $0x68] sm:$0xff]
        %v2535 = vld [vmem:[#allocation17 + $0x70] sm:$0xff]
        %v2536 = vld [vmem:[#allocation17 + $0x78] sm:$0xff]
        %v2537 = vld [vmem:[%s33] sm:$0x1]
        %v2538 = vld [vmem:[#allocation19] sm:$0xff]
        %v2539 = vld [vmem:[#allocation19 + $0x8] sm:$0xff]
        %v2540 = vld [vmem:[#allocation19 + $0x10] sm:$0xff]
        %v2541 = vld [vmem:[#allocation19 + $0x18] sm:$0xff]
        %v2542 = vld [vmem:[#allocation19 + $0x20] sm:$0xff]
        %v2543 = vld [vmem:[#allocation19 + $0x28] sm:$0xff]
        %v2544 = vld [vmem:[#allocation19 + $0x30] sm:$0xff]
        %v2545 = vld [vmem:[#allocation19 + $0x38] sm:$0xff]
        %v2546 = vld [vmem:[#allocation19 + $0x40] sm:$0xff]
        %v2547 = vld [vmem:[#allocation19 + $0x48] sm:$0xff]
        %v2548 = vld [vmem:[#allocation19 + $0x50] sm:$0xff]
        %v2549 = vld [vmem:[#allocation19 + $0x58] sm:$0xff]
        %v2550 = vld [vmem:[#allocation19 + $0x60] sm:$0xff]
        %v2551 = vld [vmem:[#allocation19 + $0x68] sm:$0xff]
        %v2552 = vld [vmem:[#allocation19 + $0x70] sm:$0xff]
        %v2553 = vld [vmem:[#allocation19 + $0x78] sm:$0xff]
        %v2554 = vld [vmem:[%s37] sm:$0x1]
        %v2556 = vlaneseq
        %v2557 = vshrl.u32 %v2556, 7
        %v2558 = vsub.s32 0, %v2557
        %v2559 = vrot.slane %v2503, %v2558
        %2561 = vmatprep.subr.mxu0 0.0
        %2562 = vmatpush1.msra.mxu0 %v2502
        %2563 = vmatprep.subr.mxu0 0.0
        %2564 = vmatpush1.msra.mxu0 %v2501
        %2565 = vmatprep.subr.mxu0 0.0
        %2566 = vmatpush1.msra.mxu0 %v2500
        %2567 = vmatprep.subr.mxu0 0.0
        %2568 = vmatpush1.msra.mxu0 %v2499
        %2569 = vmatprep.subr.mxu0 0.0
        %2570 = vmatpush1.msra.mxu0 %v2498
        %2571 = vmatprep.subr.mxu0 0.0
        %2572 = vmatpush1.msra.mxu0 %v2497
        %2573 = vmatprep.subr.mxu0 0.0
        %2574 = vmatpush1.msra.mxu0 %v2496
        %2575 = vmatprep.subr.mxu0 0.0
        %2576 = vmatpush1.msra.mxu0 %v2495
        %2577 = vmatprep.subr.mxu0 0.0
        %2578 = vmatpush1.msra.mxu0 %v2494
        %2579 = vmatprep.subr.mxu0 0.0
        %2580 = vmatpush1.msra.mxu0 %v2493
        %2581 = vmatprep.subr.mxu0 0.0
        %2582 = vmatpush1.msra.mxu0 %v2492
        %2583 = vmatprep.subr.mxu0 0.0
        %2584 = vmatpush1.msra.mxu0 %v2491
        %2585 = vmatprep.subr.mxu0 0.0
        %2586 = vmatpush1.msra.mxu0 %v2490
        %2587 = vmatprep.subr.mxu0 0.0
        %2588 = vmatpush1.msra.mxu0 %v2489
        %2589 = vmatprep.subr.mxu0 0.0
        %2590 = vmatpush1.msra.mxu0 %v2488
        %2591 = vmatprep.subr.mxu0 0.0
        %2592 = vmatpush1.msra.mxu0 %v2487
        %2593 = vmatprep.subr.mxu0 0.0
        %2594 = vmatpush2.msra.mxu0 0.0
        %2595 = vmatprep.subr.mxu0 0.0
        %2596 = vmatpush2.msra.mxu0 0.0
        %2597 = vmatprep.subr.mxu0 0.0
        %2598 = vmatpush2.msra.mxu0 0.0
        %2599 = vmatprep.subr.mxu0 0.0
        %2600 = vmatpush2.msra.mxu0 0.0
        %2601 = vmatprep.subr.mxu0 0.0
        %2602 = vmatpush2.msra.mxu0 0.0
        %2603 = vmatprep.subr.mxu0 0.0
        %2604 = vmatpush2.msra.mxu0 0.0
        %2605 = vmatprep.subr.mxu0 0.0
        %2606 = vmatpush2.msra.mxu0 0.0
        %2607 = vmatprep.subr.mxu0 0.0
        %2608 = vmatpush2.msra.mxu0 0.0
        %2609 = vmatprep.subr.mxu0 0.0
        %2610 = vmatpush2.msra.mxu0 0.0
        %2611 = vmatprep.subr.mxu0 0.0
        %2612 = vmatpush2.msra.mxu0 0.0
        %2613 = vmatprep.subr.mxu0 0.0
        %2614 = vmatpush2.msra.mxu0 0.0
        %2615 = vmatprep.subr.mxu0 0.0
        %2616 = vmatpush2.msra.mxu0 0.0
        %2617 = vmatprep.subr.mxu0 0.0
        %2618 = vmatpush2.msra.mxu0 0.0
        %2619 = vmatprep.subr.mxu0 0.0
        %2620 = vmatpush2.msra.mxu0 0.0
        %2621 = vmatprep.subr.mxu0 0.0
        %2622 = vmatpush2.msra.mxu0 0.0
        %2623 = vmatprep.subr.mxu0 0.0
        %2624 = vmatpush2.msra.mxu0 0.0
        %2625 = vmatprep.mubr.f32.mxu0 0.0
        %2626 = vmatmul.mubr.f32.gmra.mxu0 %v2486
        %v2627 = vpop.f32.mrf.mxu0
        %v2628 = vadd.f32 %v2559, %v2627
        %v2629 = vpop.f32.mrf.mxu0
        %2630 = vdwg.mxu0
        %v2632 = vlaneseq
        %v2633 = vshrl.u32 %v2632, 7
        %v2634 = vsub.s32 0, %v2633
        %v2635 = vrot.slane %v2520, %v2634
        %2637 = vmatprep.subr.mxu0 0.0
        %2638 = vmatpush1.msra.mxu0 %v2519
        %2639 = vmatprep.subr.mxu0 0.0
        %2640 = vmatpush1.msra.mxu0 %v2518
        %2641 = vmatprep.subr.mxu0 0.0
        %2642 = vmatpush1.msra.mxu0 %v2517
        %2643 = vmatprep.subr.mxu0 0.0
        %2644 = vmatpush1.msra.mxu0 %v2516
        %2645 = vmatprep.subr.mxu0 0.0
        %2646 = vmatpush1.msra.mxu0 %v2515
        %2647 = vmatprep.subr.mxu0 0.0
        %2648 = vmatpush1.msra.mxu0 %v2514
        %2649 = vmatprep.subr.mxu0 0.0
        %2650 = vmatpush1.msra.mxu0 %v2513
        %2651 = vmatprep.subr.mxu0 0.0
        %2652 = vmatpush1.msra.mxu0 %v2512
        %2653 = vmatprep.subr.mxu0 0.0
        %2654 = vmatpush1.msra.mxu0 %v2511
        %2655 = vmatprep.subr.mxu0 0.0
        %2656 = vmatpush1.msra.mxu0 %v2510
        %2657 = vmatprep.subr.mxu0 0.0
        %2658 = vmatpush1.msra.mxu0 %v2509
        %2659 = vmatprep.subr.mxu0 0.0
        %2660 = vmatpush1.msra.mxu0 %v2508
        %2661 = vmatprep.subr.mxu0 0.0
        %2662 = vmatpush1.msra.mxu0 %v2507
        %2663 = vmatprep.subr.mxu0 0.0
        %2664 = vmatpush1.msra.mxu0 %v2506
        %2665 = vmatprep.subr.mxu0 0.0
        %2666 = vmatpush1.msra.mxu0 %v2505
        %2667 = vmatprep.subr.mxu0 0.0
        %2668 = vmatpush1.msra.mxu0 %v2504
        %2669 = vmatprep.subr.mxu0 0.0
        %2670 = vmatpush2.msra.mxu0 0.0
        %2671 = vmatprep.subr.mxu0 0.0
        %2672 = vmatpush2.msra.mxu0 0.0
        %2673 = vmatprep.subr.mxu0 0.0
        %2674 = vmatpush2.msra.mxu0 0.0
        %2675 = vmatprep.subr.mxu0 0.0
        %2676 = vmatpush2.msra.mxu0 0.0
        %2677 = vmatprep.subr.mxu0 0.0
        %2678 = vmatpush2.msra.mxu0 0.0
        %2679 = vmatprep.subr.mxu0 0.0
        %2680 = vmatpush2.msra.mxu0 0.0
        %2681 = vmatprep.subr.mxu0 0.0
        %2682 = vmatpush2.msra.mxu0 0.0
        %2683 = vmatprep.subr.mxu0 0.0
        %2684 = vmatpush2.msra.mxu0 0.0
        %2685 = vmatprep.subr.mxu0 0.0
        %2686 = vmatpush2.msra.mxu0 0.0
        %2687 = vmatprep.subr.mxu0 0.0
        %2688 = vmatpush2.msra.mxu0 0.0
        %2689 = vmatprep.subr.mxu0 0.0
        %2690 = vmatpush2.msra.mxu0 0.0
        %2691 = vmatprep.subr.mxu0 0.0
        %2692 = vmatpush2.msra.mxu0 0.0
        %2693 = vmatprep.subr.mxu0 0.0
        %2694 = vmatpush2.msra.mxu0 0.0
        %2695 = vmatprep.subr.mxu0 0.0
        %2696 = vmatpush2.msra.mxu0 0.0
        %2697 = vmatprep.subr.mxu0 0.0
        %2698 = vmatpush2.msra.mxu0 0.0
        %2699 = vmatprep.subr.mxu0 0.0
        %2700 = vmatpush2.msra.mxu0 0.0
        %2701 = vmatprep.mubr.f32.mxu0 0.0
        %2702 = vmatmul.mubr.f32.gmra.mxu0 %v1155
        %v2703 = vpop.f32.mrf.mxu0
        %v2704 = vadd.f32 %v2635, %v2703
        %v2705 = vpop.f32.mrf.mxu0
        %2706 = vmatprep.mubr.f32.mxu0 0.0
        %2707 = vmatmul.mubr.f32.gmra.mxu0 %v1156
        %v2708 = vpop.f32.mrf.mxu0
        %v2709 = vadd.f32 %v2635, %v2708
        %v2710 = vpop.f32.mrf.mxu0
        %2711 = vdwg.mxu0
        %v2713 = vlaneseq
        %v2714 = vshrl.u32 %v2713, 7
        %v2715 = vsub.s32 0, %v2714
        %v2716 = vrot.slane %v2537, %v2715
        %2718 = vmatprep.subr.mxu0 0.0
        %2719 = vmatpush1.msra.mxu0 %v2536
        %2720 = vmatprep.subr.mxu0 0.0
        %2721 = vmatpush1.msra.mxu0 %v2535
        %2722 = vmatprep.subr.mxu0 0.0
        %2723 = vmatpush1.msra.mxu0 %v2534
        %2724 = vmatprep.subr.mxu0 0.0
        %2725 = vmatpush1.msra.mxu0 %v2533
        %2726 = vmatprep.subr.mxu0 0.0
        %2727 = vmatpush1.msra.mxu0 %v2532
        %2728 = vmatprep.subr.mxu0 0.0
        %2729 = vmatpush1.msra.mxu0 %v2531
        %2730 = vmatprep.subr.mxu0 0.0
        %2731 = vmatpush1.msra.mxu0 %v2530
        %2732 = vmatprep.subr.mxu0 0.0
        %2733 = vmatpush1.msra.mxu0 %v2529
        %2734 = vmatprep.subr.mxu0 0.0
        %2735 = vmatpush1.msra.mxu0 %v2528
        %2736 = vmatprep.subr.mxu0 0.0
        %2737 = vmatpush1.msra.mxu0 %v2527
        %2738 = vmatprep.subr.mxu0 0.0
        %2739 = vmatpush1.msra.mxu0 %v2526
        %2740 = vmatprep.subr.mxu0 0.0
        %2741 = vmatpush1.msra.mxu0 %v2525
        %2742 = vmatprep.subr.mxu0 0.0
        %2743 = vmatpush1.msra.mxu0 %v2524
        %2744 = vmatprep.subr.mxu0 0.0
        %2745 = vmatpush1.msra.mxu0 %v2523
        %2746 = vmatprep.subr.mxu0 0.0
        %2747 = vmatpush1.msra.mxu0 %v2522
        %2748 = vmatprep.subr.mxu0 0.0
        %2749 = vmatpush1.msra.mxu0 %v2521
        %2750 = vmatprep.subr.mxu0 0.0
        %2751 = vmatpush2.msra.mxu0 0.0
        %2752 = vmatprep.subr.mxu0 0.0
        %2753 = vmatpush2.msra.mxu0 0.0
        %2754 = vmatprep.subr.mxu0 0.0
        %2755 = vmatpush2.msra.mxu0 0.0
        %2756 = vmatprep.subr.mxu0 0.0
        %2757 = vmatpush2.msra.mxu0 0.0
        %2758 = vmatprep.subr.mxu0 0.0
        %2759 = vmatpush2.msra.mxu0 0.0
        %2760 = vmatprep.subr.mxu0 0.0
        %2761 = vmatpush2.msra.mxu0 0.0
        %2762 = vmatprep.subr.mxu0 0.0
        %2763 = vmatpush2.msra.mxu0 0.0
        %2764 = vmatprep.subr.mxu0 0.0
        %2765 = vmatpush2.msra.mxu0 0.0
        %2766 = vmatprep.subr.mxu0 0.0
        %2767 = vmatpush2.msra.mxu0 0.0
        %2768 = vmatprep.subr.mxu0 0.0
        %2769 = vmatpush2.msra.mxu0 0.0
        %2770 = vmatprep.subr.mxu0 0.0
        %2771 = vmatpush2.msra.mxu0 0.0
        %2772 = vmatprep.subr.mxu0 0.0
        %2773 = vmatpush2.msra.mxu0 0.0
        %2774 = vmatprep.subr.mxu0 0.0
        %2775 = vmatpush2.msra.mxu0 0.0
        %2776 = vmatprep.subr.mxu0 0.0
        %2777 = vmatpush2.msra.mxu0 0.0
        %2778 = vmatprep.subr.mxu0 0.0
        %2779 = vmatpush2.msra.mxu0 0.0
        %2780 = vmatprep.subr.mxu0 0.0
        %2781 = vmatpush2.msra.mxu0 0.0
        %2782 = vmatprep.mubr.f32.mxu0 0.0
        %2783 = vmatmul.mubr.f32.gmra.mxu0 %v1155
        %v2784 = vpop.f32.mrf.mxu0
        %v2785 = vadd.f32 %v2716, %v2784
        %v2786 = vpop.f32.mrf.mxu0
        %2787 = vmatprep.mubr.f32.mxu0 0.0
        %2788 = vmatmul.mubr.f32.gmra.mxu0 %v1156
        %v2789 = vpop.f32.mrf.mxu0
        %v2790 = vadd.f32 %v2716, %v2789
        %v2791 = vpop.f32.mrf.mxu0
        %2792 = vdwg.mxu0
        %v2794 = vsel %vm1489, %v2628, 0
        %v2797 = vsel %vm1489, %v2704, 0
        %v2800 = vsel %vm1489, %v2709, 0
        %2802 = vmatprep.subr.mxu0 0.0
        %2803 = vmatpush1.xpose.msra.mxu0 0.0
        %2804 = vmatprep.subr.mxu0 0.0
        %2805 = vmatpush1.xpose.msra.mxu0 0.0
        %2806 = vmatprep.subr.mxu0 0.0
        %2807 = vmatpush1.xpose.msra.mxu0 0.0
        %2808 = vmatprep.subr.mxu0 0.0
        %2809 = vmatpush1.xpose.msra.mxu0 0.0
        %2810 = vmatprep.subr.mxu0 0.0
        %2811 = vmatpush1.xpose.msra.mxu0 0.0
        %2812 = vmatprep.subr.mxu0 0.0
        %2813 = vmatpush1.xpose.msra.mxu0 0.0
        %2814 = vmatprep.subr.mxu0 0.0
        %2815 = vmatpush1.xpose.msra.mxu0 0.0
        %2816 = vmatprep.subr.mxu0 0.0
        %2817 = vmatpush1.xpose.msra.mxu0 0.0
        %2818 = vmatprep.subr.mxu0 0.0
        %2819 = vmatpush1.xpose.msra.mxu0 0.0
        %2820 = vmatprep.subr.mxu0 0.0
        %2821 = vmatpush1.xpose.msra.mxu0 0.0
        %2822 = vmatprep.subr.mxu0 0.0
        %2823 = vmatpush1.xpose.msra.mxu0 0.0
        %2824 = vmatprep.subr.mxu0 0.0
        %2825 = vmatpush1.xpose.msra.mxu0 0.0
        %2826 = vmatprep.subr.mxu0 0.0
        %2827 = vmatpush1.xpose.msra.mxu0 0.0
        %2828 = vmatprep.subr.mxu0 0.0
        %2829 = vmatpush1.xpose.msra.mxu0 0.0
        %2830 = vmatprep.subr.mxu0 0.0
        %2831 = vmatpush1.xpose.msra.mxu0 %v2800
        %2832 = vmatprep.subr.mxu0 0.0
        %2833 = vmatpush1.xpose.msra.mxu0 %v2797
        %2834 = vmatprep.subr.mxu0 0.0
        %2835 = vmatpush2.xpose.msra.mxu0 0.0
        %2836 = vmatprep.subr.mxu0 0.0
        %2837 = vmatpush2.xpose.msra.mxu0 0.0
        %2838 = vmatprep.subr.mxu0 0.0
        %2839 = vmatpush2.xpose.msra.mxu0 0.0
        %2840 = vmatprep.subr.mxu0 0.0
        %2841 = vmatpush2.xpose.msra.mxu0 0.0
        %2842 = vmatprep.subr.mxu0 0.0
        %2843 = vmatpush2.xpose.msra.mxu0 0.0
        %2844 = vmatprep.subr.mxu0 0.0
        %2845 = vmatpush2.xpose.msra.mxu0 0.0
        %2846 = vmatprep.subr.mxu0 0.0
        %2847 = vmatpush2.xpose.msra.mxu0 0.0
        %2848 = vmatprep.subr.mxu0 0.0
        %2849 = vmatpush2.xpose.msra.mxu0 0.0
        %2850 = vmatprep.subr.mxu0 0.0
        %2851 = vmatpush2.xpose.msra.mxu0 0.0
        %2852 = vmatprep.subr.mxu0 0.0
        %2853 = vmatpush2.xpose.msra.mxu0 0.0
        %2854 = vmatprep.subr.mxu0 0.0
        %2855 = vmatpush2.xpose.msra.mxu0 0.0
        %2856 = vmatprep.subr.mxu0 0.0
        %2857 = vmatpush2.xpose.msra.mxu0 0.0
        %2858 = vmatprep.subr.mxu0 0.0
        %2859 = vmatpush2.xpose.msra.mxu0 0.0
        %2860 = vmatprep.subr.mxu0 0.0
        %2861 = vmatpush2.xpose.msra.mxu0 0.0
        %2862 = vmatprep.subr.mxu0 0.0
        %2863 = vmatpush2.xpose.msra.mxu0 0.0
        %2864 = vmatprep.subr.mxu0 0.0
        %2865 = vmatpush2.xpose.msra.mxu0 0.0
        %2866 = vmatprep.mubr.f32.mxu0 0.0
        %2867 = vmatmul.mubr.f32.gmra.mxu0 %v2794
        %v2868 = vpop.f32.mrf.mxu0
        %v2869 = vadd.f32 0.0, %v2868
        %v2870 = vpop.f32.mrf.mxu0
        %2871 = vdwg.mxu0
        %v2872 = vmul.f32 %v2869, 0.17677669
        %vm2873 = vcmask 130048
        %v2874 = vsel %vm2873, %v2872, -inf
        %2875 = vmax.xlane.f32.xlu0 %v2874
        %v2876 = vpop.xlane.xlu0 %2875
        %v2877 = vsub.f32 %v2872, %v2876
        %v2878 = vmul.f32 %v2877, 1.442695
        %v2879 = vpow.pop %v2878
        %v2880 = vsel %vm2873, %v2879, 0.0
        %2881 = vadd.xlane.f32.xlu0 %v2880
        %v2882 = vpop.xlane.xlu0 %2881
        %v2883 = vrcp.pop %v2882
        %v2884 = vmul.f32 %v2879, %v2883
        %v2886 = vsel %vm2873, %v2884, 0
        %2888 = vmatprep.subr.mxu0 0.0
        %2889 = vmatpush1.msra.mxu0 0.0
        %2890 = vmatprep.subr.mxu0 0.0
        %2891 = vmatpush1.msra.mxu0 0.0
        %2892 = vmatprep.subr.mxu0 0.0
        %2893 = vmatpush1.msra.mxu0 0.0
        %2894 = vmatprep.subr.mxu0 0.0
        %2895 = vmatpush1.msra.mxu0 0.0
        %2896 = vmatprep.subr.mxu0 0.0
        %2897 = vmatpush1.msra.mxu0 0.0
        %2898 = vmatprep.subr.mxu0 0.0
        %2899 = vmatpush1.msra.mxu0 0.0
        %2900 = vmatprep.subr.mxu0 0.0
        %2901 = vmatpush1.msra.mxu0 0.0
        %2902 = vmatprep.subr.mxu0 0.0
        %2903 = vmatpush1.msra.mxu0 0.0
        %2904 = vmatprep.subr.mxu0 0.0
        %2905 = vmatpush1.msra.mxu0 0.0
        %2906 = vmatprep.subr.mxu0 0.0
        %2907 = vmatpush1.msra.mxu0 0.0
        %2908 = vmatprep.subr.mxu0 0.0
        %2909 = vmatpush1.msra.mxu0 0.0
        %2910 = vmatprep.subr.mxu0 0.0
        %2911 = vmatpush1.msra.mxu0 0.0
        %2912 = vmatprep.subr.mxu0 0.0
        %2913 = vmatpush1.msra.mxu0 0.0
        %2914 = vmatprep.subr.mxu0 0.0
        %2915 = vmatpush1.msra.mxu0 0.0
        %2916 = vmatprep.subr.mxu0 0.0
        %2917 = vmatpush1.msra.mxu0 %v2790
        %2918 = vmatprep.subr.mxu0 0.0
        %2919 = vmatpush1.msra.mxu0 %v2785
        %2920 = vmatprep.subr.mxu0 0.0
        %2921 = vmatpush2.msra.mxu0 0.0
        %2922 = vmatprep.subr.mxu0 0.0
        %2923 = vmatpush2.msra.mxu0 0.0
        %2924 = vmatprep.subr.mxu0 0.0
        %2925 = vmatpush2.msra.mxu0 0.0
        %2926 = vmatprep.subr.mxu0 0.0
        %2927 = vmatpush2.msra.mxu0 0.0
        %2928 = vmatprep.subr.mxu0 0.0
        %2929 = vmatpush2.msra.mxu0 0.0
        %2930 = vmatprep.subr.mxu0 0.0
        %2931 = vmatpush2.msra.mxu0 0.0
        %2932 = vmatprep.subr.mxu0 0.0
        %2933 = vmatpush2.msra.mxu0 0.0
        %2934 = vmatprep.subr.mxu0 0.0
        %2935 = vmatpush2.msra.mxu0 0.0
        %2936 = vmatprep.subr.mxu0 0.0
        %2937 = vmatpush2.msra.mxu0 0.0
        %2938 = vmatprep.subr.mxu0 0.0
        %2939 = vmatpush2.msra.mxu0 0.0
        %2940 = vmatprep.subr.mxu0 0.0
        %2941 = vmatpush2.msra.mxu0 0.0
        %2942 = vmatprep.subr.mxu0 0.0
        %2943 = vmatpush2.msra.mxu0 0.0
        %2944 = vmatprep.subr.mxu0 0.0
        %2945 = vmatpush2.msra.mxu0 0.0
        %2946 = vmatprep.subr.mxu0 0.0
        %2947 = vmatpush2.msra.mxu0 0.0
        %2948 = vmatprep.subr.mxu0 0.0
        %2949 = vmatpush2.msra.mxu0 0.0
        %2950 = vmatprep.subr.mxu0 0.0
        %2951 = vmatpush2.msra.mxu0 0.0
        %2952 = vmatprep.mubr.f32.mxu0 0.0
        %2953 = vmatmul.mubr.f32.gmra.mxu0 %v2886
        %v2954 = vpop.f32.mrf.mxu0
        %v2955 = vadd.f32 0.0, %v2954
        %v2956 = vpop.f32.mrf.mxu0
        %2957 = vdwg.mxu0
        %2958 = vrot.lane.b32.xlu0 %v2628, 96
        %v2959 = vpop.permute.xlu0 %2958
        %2960 = vrot.lane.b32.xlu0 %v2704, 96
        %v2961 = vpop.permute.xlu0 %2960
        %2962 = vrot.lane.b32.xlu0 %v2709, 96
        %v2963 = vpop.permute.xlu0 %2962
        %v2964 = vsel %vm1489, %v2959, 0
        %v2966 = vsel %vm1489, %v2961, 0
        %v2968 = vsel %vm1489, %v2963, 0
        %2970 = vmatprep.subr.mxu0 0.0
        %2971 = vmatpush1.xpose.msra.mxu0 0.0
        %2972 = vmatprep.subr.mxu0 0.0
        %2973 = vmatpush1.xpose.msra.mxu0 0.0
        %2974 = vmatprep.subr.mxu0 0.0
        %2975 = vmatpush1.xpose.msra.mxu0 0.0
        %2976 = vmatprep.subr.mxu0 0.0
        %2977 = vmatpush1.xpose.msra.mxu0 0.0
        %2978 = vmatprep.subr.mxu0 0.0
        %2979 = vmatpush1.xpose.msra.mxu0 0.0
        %2980 = vmatprep.subr.mxu0 0.0
        %2981 = vmatpush1.xpose.msra.mxu0 0.0
        %2982 = vmatprep.subr.mxu0 0.0
        %2983 = vmatpush1.xpose.msra.mxu0 0.0
        %2984 = vmatprep.subr.mxu0 0.0
        %2985 = vmatpush1.xpose.msra.mxu0 0.0
        %2986 = vmatprep.subr.mxu0 0.0
        %2987 = vmatpush1.xpose.msra.mxu0 0.0
        %2988 = vmatprep.subr.mxu0 0.0
        %2989 = vmatpush1.xpose.msra.mxu0 0.0
        %2990 = vmatprep.subr.mxu0 0.0
        %2991 = vmatpush1.xpose.msra.mxu0 0.0
        %2992 = vmatprep.subr.mxu0 0.0
        %2993 = vmatpush1.xpose.msra.mxu0 0.0
        %2994 = vmatprep.subr.mxu0 0.0
        %2995 = vmatpush1.xpose.msra.mxu0 0.0
        %2996 = vmatprep.subr.mxu0 0.0
        %2997 = vmatpush1.xpose.msra.mxu0 0.0
        %2998 = vmatprep.subr.mxu0 0.0
        %2999 = vmatpush1.xpose.msra.mxu0 %v2968
        %3000 = vmatprep.subr.mxu0 0.0
        %3001 = vmatpush1.xpose.msra.mxu0 %v2966
        %3002 = vmatprep.subr.mxu0 0.0
        %3003 = vmatpush2.xpose.msra.mxu0 0.0
        %3004 = vmatprep.subr.mxu0 0.0
        %3005 = vmatpush2.xpose.msra.mxu0 0.0
        %3006 = vmatprep.subr.mxu0 0.0
        %3007 = vmatpush2.xpose.msra.mxu0 0.0
        %3008 = vmatprep.subr.mxu0 0.0
        %3009 = vmatpush2.xpose.msra.mxu0 0.0
        %3010 = vmatprep.subr.mxu0 0.0
        %3011 = vmatpush2.xpose.msra.mxu0 0.0
        %3012 = vmatprep.subr.mxu0 0.0
        %3013 = vmatpush2.xpose.msra.mxu0 0.0
        %3014 = vmatprep.subr.mxu0 0.0
        %3015 = vmatpush2.xpose.msra.mxu0 0.0
        %3016 = vmatprep.subr.mxu0 0.0
        %3017 = vmatpush2.xpose.msra.mxu0 0.0
        %3018 = vmatprep.subr.mxu0 0.0
        %3019 = vmatpush2.xpose.msra.mxu0 0.0
        %3020 = vmatprep.subr.mxu0 0.0
        %3021 = vmatpush2.xpose.msra.mxu0 0.0
        %3022 = vmatprep.subr.mxu0 0.0
        %3023 = vmatpush2.xpose.msra.mxu0 0.0
        %3024 = vmatprep.subr.mxu0 0.0
        %3025 = vmatpush2.xpose.msra.mxu0 0.0
        %3026 = vmatprep.subr.mxu0 0.0
        %3027 = vmatpush2.xpose.msra.mxu0 0.0
        %3028 = vmatprep.subr.mxu0 0.0
        %3029 = vmatpush2.xpose.msra.mxu0 0.0
        %3030 = vmatprep.subr.mxu0 0.0
        %3031 = vmatpush2.xpose.msra.mxu0 0.0
        %3032 = vmatprep.subr.mxu0 0.0
        %3033 = vmatpush2.xpose.msra.mxu0 0.0
        %3034 = vmatprep.mubr.f32.mxu0 0.0
        %3035 = vmatmul.mubr.f32.gmra.mxu0 %v2964
        %v3036 = vpop.f32.mrf.mxu0
        %v3037 = vadd.f32 0.0, %v3036
        %v3038 = vpop.f32.mrf.mxu0
        %3039 = vdwg.mxu0
        %v3040 = vmul.f32 %v3037, 0.17677669
        %v3041 = vsel %vm2873, %v3040, -inf
        %3042 = vmax.xlane.f32.xlu0 %v3041
        %v3043 = vpop.xlane.xlu0 %3042
        %v3044 = vsub.f32 %v3040, %v3043
        %v3045 = vmul.f32 %v3044, 1.442695
        %v3046 = vpow.pop %v3045
        %v3047 = vsel %vm2873, %v3046, 0.0
        %3048 = vadd.xlane.f32.xlu0 %v3047
        %v3049 = vpop.xlane.xlu0 %3048
        %v3050 = vrcp.pop %v3049
        %v3051 = vmul.f32 %v3046, %v3050
        %3054 = vrot.lane.b32.xlu0 %v2785, 96
        %v3055 = vpop.permute.xlu0 %3054
        %3056 = vrot.lane.b32.xlu0 %v2790, 96
        %v3057 = vpop.permute.xlu0 %3056
        %v3061 = vsel %vm2873, %v3051, 0
        %3063 = vmatprep.subr.mxu0 0.0
        %3064 = vmatpush1.msra.mxu0 0.0
        %3065 = vmatprep.subr.mxu0 0.0
        %3066 = vmatpush1.msra.mxu0 0.0
        %3067 = vmatprep.subr.mxu0 0.0
        %3068 = vmatpush1.msra.mxu0 0.0
        %3069 = vmatprep.subr.mxu0 0.0
        %3070 = vmatpush1.msra.mxu0 0.0
        %3071 = vmatprep.subr.mxu0 0.0
        %3072 = vmatpush1.msra.mxu0 0.0
        %3073 = vmatprep.subr.mxu0 0.0
        %3074 = vmatpush1.msra.mxu0 0.0
        %3075 = vmatprep.subr.mxu0 0.0
        %3076 = vmatpush1.msra.mxu0 0.0
        %3077 = vmatprep.subr.mxu0 0.0
        %3078 = vmatpush1.msra.mxu0 0.0
        %3079 = vmatprep.subr.mxu0 0.0
        %3080 = vmatpush1.msra.mxu0 0.0
        %3081 = vmatprep.subr.mxu0 0.0
        %3082 = vmatpush1.msra.mxu0 0.0
        %3083 = vmatprep.subr.mxu0 0.0
        %3084 = vmatpush1.msra.mxu0 0.0
        %3085 = vmatprep.subr.mxu0 0.0
        %3086 = vmatpush1.msra.mxu0 0.0
        %3087 = vmatprep.subr.mxu0 0.0
        %3088 = vmatpush1.msra.mxu0 0.0
        %3089 = vmatprep.subr.mxu0 0.0
        %3090 = vmatpush1.msra.mxu0 0.0
        %3091 = vmatprep.subr.mxu0 0.0
        %3092 = vmatpush1.msra.mxu0 %v3057
        %3093 = vmatprep.subr.mxu0 0.0
        %3094 = vmatpush1.msra.mxu0 %v3055
        %3095 = vmatprep.subr.mxu0 0.0
        %3096 = vmatpush2.msra.mxu0 0.0
        %3097 = vmatprep.subr.mxu0 0.0
        %3098 = vmatpush2.msra.mxu0 0.0
        %3099 = vmatprep.subr.mxu0 0.0
        %3100 = vmatpush2.msra.mxu0 0.0
        %3101 = vmatprep.subr.mxu0 0.0
        %3102 = vmatpush2.msra.mxu0 0.0
        %3103 = vmatprep.subr.mxu0 0.0
        %3104 = vmatpush2.msra.mxu0 0.0
        %3105 = vmatprep.subr.mxu0 0.0
        %3106 = vmatpush2.msra.mxu0 0.0
        %3107 = vmatprep.subr.mxu0 0.0
        %3108 = vmatpush2.msra.mxu0 0.0
        %3109 = vmatprep.subr.mxu0 0.0
        %3110 = vmatpush2.msra.mxu0 0.0
        %3111 = vmatprep.subr.mxu0 0.0
        %3112 = vmatpush2.msra.mxu0 0.0
        %3113 = vmatprep.subr.mxu0 0.0
        %3114 = vmatpush2.msra.mxu0 0.0
        %3115 = vmatprep.subr.mxu0 0.0
        %3116 = vmatpush2.msra.mxu0 0.0
        %3117 = vmatprep.subr.mxu0 0.0
        %3118 = vmatpush2.msra.mxu0 0.0
        %3119 = vmatprep.subr.mxu0 0.0
        %3120 = vmatpush2.msra.mxu0 0.0
        %3121 = vmatprep.subr.mxu0 0.0
        %3122 = vmatpush2.msra.mxu0 0.0
        %3123 = vmatprep.subr.mxu0 0.0
        %3124 = vmatpush2.msra.mxu0 0.0
        %3125 = vmatprep.subr.mxu0 0.0
        %3126 = vmatpush2.msra.mxu0 0.0
        %3127 = vmatprep.mubr.f32.mxu0 0.0
        %3128 = vmatmul.mubr.f32.gmra.mxu0 %v3061
        %v3129 = vpop.f32.mrf.mxu0
        %v3130 = vadd.f32 0.0, %v3129
        %v3131 = vpop.f32.mrf.mxu0
        %3132 = vdwg.mxu0
        %v3134 = vsel %vm1489, %v3130, 0
        %3136 = vmatprep.subr.mxu0 0.0
        %3137 = vmatpush1.msra.mxu0 0.0
        %3138 = vmatprep.subr.mxu0 0.0
        %3139 = vmatpush1.msra.mxu0 0.0
        %3140 = vmatprep.subr.mxu0 0.0
        %3141 = vmatpush1.msra.mxu0 0.0
        %3142 = vmatprep.subr.mxu0 0.0
        %3143 = vmatpush1.msra.mxu0 0.0
        %3144 = vmatprep.subr.mxu0 0.0
        %3145 = vmatpush1.msra.mxu0 0.0
        %3146 = vmatprep.subr.mxu0 0.0
        %3147 = vmatpush1.msra.mxu0 0.0
        %3148 = vmatprep.subr.mxu0 0.0
        %3149 = vmatpush1.msra.mxu0 0.0
        %3150 = vmatprep.subr.mxu0 0.0
        %3151 = vmatpush1.msra.mxu0 0.0
        %3152 = vmatprep.subr.mxu0 0.0
        %3153 = vmatpush1.msra.mxu0 0.0
        %3154 = vmatprep.subr.mxu0 0.0
        %3155 = vmatpush1.msra.mxu0 0.0
        %3156 = vmatprep.subr.mxu0 0.0
        %3157 = vmatpush1.msra.mxu0 0.0
        %3158 = vmatprep.subr.mxu0 0.0
        %3159 = vmatpush1.msra.mxu0 0.0
        %3160 = vmatprep.subr.mxu0 0.0
        %3161 = vmatpush1.msra.mxu0 %v2545
        %3162 = vmatprep.subr.mxu0 0.0
        %3163 = vmatpush1.msra.mxu0 %v2544
        %3164 = vmatprep.subr.mxu0 0.0
        %3165 = vmatpush1.msra.mxu0 %v2543
        %3166 = vmatprep.subr.mxu0 0.0
        %3167 = vmatpush1.msra.mxu0 %v2542
        %3168 = vmatprep.subr.mxu0 0.0
        %3169 = vmatpush2.msra.mxu0 0.0
        %3170 = vmatprep.subr.mxu0 0.0
        %3171 = vmatpush2.msra.mxu0 0.0
        %3172 = vmatprep.subr.mxu0 0.0
        %3173 = vmatpush2.msra.mxu0 0.0
        %3174 = vmatprep.subr.mxu0 0.0
        %3175 = vmatpush2.msra.mxu0 0.0
        %3176 = vmatprep.subr.mxu0 0.0
        %3177 = vmatpush2.msra.mxu0 0.0
        %3178 = vmatprep.subr.mxu0 0.0
        %3179 = vmatpush2.msra.mxu0 0.0
        %3180 = vmatprep.subr.mxu0 0.0
        %3181 = vmatpush2.msra.mxu0 0.0
        %3182 = vmatprep.subr.mxu0 0.0
        %3183 = vmatpush2.msra.mxu0 0.0
        %3184 = vmatprep.subr.mxu0 0.0
        %3185 = vmatpush2.msra.mxu0 0.0
        %3186 = vmatprep.subr.mxu0 0.0
        %3187 = vmatpush2.msra.mxu0 0.0
        %3188 = vmatprep.subr.mxu0 0.0
        %3189 = vmatpush2.msra.mxu0 0.0
        %3190 = vmatprep.subr.mxu0 0.0
        %3191 = vmatpush2.msra.mxu0 0.0
        %3192 = vmatprep.subr.mxu0 0.0
        %3193 = vmatpush2.msra.mxu0 0.0
        %3194 = vmatprep.subr.mxu0 0.0
        %3195 = vmatpush2.msra.mxu0 0.0
        %3196 = vmatprep.subr.mxu0 0.0
        %3197 = vmatpush2.msra.mxu0 0.0
        %3198 = vmatprep.subr.mxu0 0.0
        %3199 = vmatpush2.msra.mxu0 0.0
        %3200 = vmatprep.mubr.f32.mxu0 0.0
        %3201 = vmatmul.mubr.f32.gmra.mxu0 %v3134
        %v3202 = vpop.f32.mrf.mxu0
        %v3203 = vadd.f32 0.0, %v3202
        %v3204 = vpop.f32.mrf.mxu0
        %3205 = vdwg.mxu0
        %v3207 = vsel %vm1489, %v2955, 0
        %3209 = vmatprep.subr.mxu0 0.0
        %3210 = vmatpush1.msra.mxu0 0.0
        %3211 = vmatprep.subr.mxu0 0.0
        %3212 = vmatpush1.msra.mxu0 0.0
        %3213 = vmatprep.subr.mxu0 0.0
        %3214 = vmatpush1.msra.mxu0 0.0
        %3215 = vmatprep.subr.mxu0 0.0
        %3216 = vmatpush1.msra.mxu0 0.0
        %3217 = vmatprep.subr.mxu0 0.0
        %3218 = vmatpush1.msra.mxu0 0.0
        %3219 = vmatprep.subr.mxu0 0.0
        %3220 = vmatpush1.msra.mxu0 0.0
        %3221 = vmatprep.subr.mxu0 0.0
        %3222 = vmatpush1.msra.mxu0 0.0
        %3223 = vmatprep.subr.mxu0 0.0
        %3224 = vmatpush1.msra.mxu0 0.0
        %3225 = vmatprep.subr.mxu0 0.0
        %3226 = vmatpush1.msra.mxu0 0.0
        %3227 = vmatprep.subr.mxu0 0.0
        %3228 = vmatpush1.msra.mxu0 0.0
        %3229 = vmatprep.subr.mxu0 0.0
        %3230 = vmatpush1.msra.mxu0 0.0
        %3231 = vmatprep.subr.mxu0 0.0
        %3232 = vmatpush1.msra.mxu0 0.0
        %3233 = vmatprep.subr.mxu0 0.0
        %3234 = vmatpush1.msra.mxu0 %v2541
        %3235 = vmatprep.subr.mxu0 0.0
        %3236 = vmatpush1.msra.mxu0 %v2540
        %3237 = vmatprep.subr.mxu0 0.0
        %3238 = vmatpush1.msra.mxu0 %v2539
        %3239 = vmatprep.subr.mxu0 0.0
        %3240 = vmatpush1.msra.mxu0 %v2538
        %3241 = vmatprep.subr.mxu0 0.0
        %3242 = vmatpush2.msra.mxu0 0.0
        %3243 = vmatprep.subr.mxu0 0.0
        %3244 = vmatpush2.msra.mxu0 0.0
        %3245 = vmatprep.subr.mxu0 0.0
        %3246 = vmatpush2.msra.mxu0 0.0
        %3247 = vmatprep.subr.mxu0 0.0
        %3248 = vmatpush2.msra.mxu0 0.0
        %3249 = vmatprep.subr.mxu0 0.0
        %3250 = vmatpush2.msra.mxu0 0.0
        %3251 = vmatprep.subr.mxu0 0.0
        %3252 = vmatpush2.msra.mxu0 0.0
        %3253 = vmatprep.subr.mxu0 0.0
        %3254 = vmatpush2.msra.mxu0 0.0
        %3255 = vmatprep.subr.mxu0 0.0
        %3256 = vmatpush2.msra.mxu0 0.0
        %3257 = vmatprep.subr.mxu0 0.0
        %3258 = vmatpush2.msra.mxu0 0.0
        %3259 = vmatprep.subr.mxu0 0.0
        %3260 = vmatpush2.msra.mxu0 0.0
        %3261 = vmatprep.subr.mxu0 0.0
        %3262 = vmatpush2.msra.mxu0 0.0
        %3263 = vmatprep.subr.mxu0 0.0
        %3264 = vmatpush2.msra.mxu0 0.0
        %3265 = vmatprep.subr.mxu0 0.0
        %3266 = vmatpush2.msra.mxu0 0.0
        %3267 = vmatprep.subr.mxu0 0.0
        %3268 = vmatpush2.msra.mxu0 0.0
        %3269 = vmatprep.subr.mxu0 0.0
        %3270 = vmatpush2.msra.mxu0 0.0
        %3271 = vmatprep.subr.mxu0 0.0
        %3272 = vmatpush2.msra.mxu0 0.0
        %3273 = vmatprep.mubr.f32.mxu0 0.0
        %3274 = vmatmul.mubr.f32.gmra.mxu0 %v3207
        %v3275 = vpop.f32.mrf.mxu0
        %v3276 = vadd.f32 %v3203, %v3275
        %v3277 = vpop.f32.mrf.mxu0
        %3278 = vdwg.mxu0
        %3279 = vrot.lane.b32.xlu0 %v2628, 64
        %v3280 = vpop.permute.xlu0 %3279
        %3281 = vrot.lane.b32.xlu0 %v2704, 64
        %v3282 = vpop.permute.xlu0 %3281
        %3283 = vrot.lane.b32.xlu0 %v2709, 64
        %v3284 = vpop.permute.xlu0 %3283
        %v3285 = vsel %vm1489, %v3280, 0
        %v3287 = vsel %vm1489, %v3282, 0
        %v3289 = vsel %vm1489, %v3284, 0
        %3291 = vmatprep.subr.mxu0 0.0
        %3292 = vmatpush1.xpose.msra.mxu0 0.0
        %3293 = vmatprep.subr.mxu0 0.0
        %3294 = vmatpush1.xpose.msra.mxu0 0.0
        %3295 = vmatprep.subr.mxu0 0.0
        %3296 = vmatpush1.xpose.msra.mxu0 0.0
        %3297 = vmatprep.subr.mxu0 0.0
        %3298 = vmatpush1.xpose.msra.mxu0 0.0
        %3299 = vmatprep.subr.mxu0 0.0
        %3300 = vmatpush1.xpose.msra.mxu0 0.0
        %3301 = vmatprep.subr.mxu0 0.0
        %3302 = vmatpush1.xpose.msra.mxu0 0.0
        %3303 = vmatprep.subr.mxu0 0.0
        %3304 = vmatpush1.xpose.msra.mxu0 0.0
        %3305 = vmatprep.subr.mxu0 0.0
        %3306 = vmatpush1.xpose.msra.mxu0 0.0
        %3307 = vmatprep.subr.mxu0 0.0
        %3308 = vmatpush1.xpose.msra.mxu0 0.0
        %3309 = vmatprep.subr.mxu0 0.0
        %3310 = vmatpush1.xpose.msra.mxu0 0.0
        %3311 = vmatprep.subr.mxu0 0.0
        %3312 = vmatpush1.xpose.msra.mxu0 0.0
        %3313 = vmatprep.subr.mxu0 0.0
        %3314 = vmatpush1.xpose.msra.mxu0 0.0
        %3315 = vmatprep.subr.mxu0 0.0
        %3316 = vmatpush1.xpose.msra.mxu0 0.0
        %3317 = vmatprep.subr.mxu0 0.0
        %3318 = vmatpush1.xpose.msra.mxu0 0.0
        %3319 = vmatprep.subr.mxu0 0.0
        %3320 = vmatpush1.xpose.msra.mxu0 %v3289
        %3321 = vmatprep.subr.mxu0 0.0
        %3322 = vmatpush1.xpose.msra.mxu0 %v3287
        %3323 = vmatprep.subr.mxu0 0.0
        %3324 = vmatpush2.xpose.msra.mxu0 0.0
        %3325 = vmatprep.subr.mxu0 0.0
        %3326 = vmatpush2.xpose.msra.mxu0 0.0
        %3327 = vmatprep.subr.mxu0 0.0
        %3328 = vmatpush2.xpose.msra.mxu0 0.0
        %3329 = vmatprep.subr.mxu0 0.0
        %3330 = vmatpush2.xpose.msra.mxu0 0.0
        %3331 = vmatprep.subr.mxu0 0.0
        %3332 = vmatpush2.xpose.msra.mxu0 0.0
        %3333 = vmatprep.subr.mxu0 0.0
        %3334 = vmatpush2.xpose.msra.mxu0 0.0
        %3335 = vmatprep.subr.mxu0 0.0
        %3336 = vmatpush2.xpose.msra.mxu0 0.0
        %3337 = vmatprep.subr.mxu0 0.0
        %3338 = vmatpush2.xpose.msra.mxu0 0.0
        %3339 = vmatprep.subr.mxu0 0.0
        %3340 = vmatpush2.xpose.msra.mxu0 0.0
        %3341 = vmatprep.subr.mxu0 0.0
        %3342 = vmatpush2.xpose.msra.mxu0 0.0
        %3343 = vmatprep.subr.mxu0 0.0
        %3344 = vmatpush2.xpose.msra.mxu0 0.0
        %3345 = vmatprep.subr.mxu0 0.0
        %3346 = vmatpush2.xpose.msra.mxu0 0.0
        %3347 = vmatprep.subr.mxu0 0.0
        %3348 = vmatpush2.xpose.msra.mxu0 0.0
        %3349 = vmatprep.subr.mxu0 0.0
        %3350 = vmatpush2.xpose.msra.mxu0 0.0
        %3351 = vmatprep.subr.mxu0 0.0
        %3352 = vmatpush2.xpose.msra.mxu0 0.0
        %3353 = vmatprep.subr.mxu0 0.0
        %3354 = vmatpush2.xpose.msra.mxu0 0.0
        %3355 = vmatprep.mubr.f32.mxu0 0.0
        %3356 = vmatmul.mubr.f32.gmra.mxu0 %v3285
        %v3357 = vpop.f32.mrf.mxu0
        %v3358 = vadd.f32 0.0, %v3357
        %v3359 = vpop.f32.mrf.mxu0
        %3360 = vdwg.mxu0
        %v3361 = vmul.f32 %v3358, 0.17677669
        %v3362 = vsel %vm2873, %v3361, -inf
        %3363 = vmax.xlane.f32.xlu0 %v3362
        %v3364 = vpop.xlane.xlu0 %3363
        %v3365 = vsub.f32 %v3361, %v3364
        %v3366 = vmul.f32 %v3365, 1.442695
        %v3367 = vpow.pop %v3366
        %v3368 = vsel %vm2873, %v3367, 0.0
        %3369 = vadd.xlane.f32.xlu0 %v3368
        %v3370 = vpop.xlane.xlu0 %3369
        %v3371 = vrcp.pop %v3370
        %v3372 = vmul.f32 %v3367, %v3371
        %3373 = vrot.lane.b32.xlu0 %v2785, 64
        %v3374 = vpop.permute.xlu0 %3373
        %3375 = vrot.lane.b32.xlu0 %v2790, 64
        %v3376 = vpop.permute.xlu0 %3375
        %v3380 = vsel %vm2873, %v3372, 0
        %3382 = vmatprep.subr.mxu0 0.0
        %3383 = vmatpush1.msra.mxu0 0.0
        %3384 = vmatprep.subr.mxu0 0.0
        %3385 = vmatpush1.msra.mxu0 0.0
        %3386 = vmatprep.subr.mxu0 0.0
        %3387 = vmatpush1.msra.mxu0 0.0
        %3388 = vmatprep.subr.mxu0 0.0
        %3389 = vmatpush1.msra.mxu0 0.0
        %3390 = vmatprep.subr.mxu0 0.0
        %3391 = vmatpush1.msra.mxu0 0.0
        %3392 = vmatprep.subr.mxu0 0.0
        %3393 = vmatpush1.msra.mxu0 0.0
        %3394 = vmatprep.subr.mxu0 0.0
        %3395 = vmatpush1.msra.mxu0 0.0
        %3396 = vmatprep.subr.mxu0 0.0
        %3397 = vmatpush1.msra.mxu0 0.0
        %3398 = vmatprep.subr.mxu0 0.0
        %3399 = vmatpush1.msra.mxu0 0.0
        %3400 = vmatprep.subr.mxu0 0.0
        %3401 = vmatpush1.msra.mxu0 0.0
        %3402 = vmatprep.subr.mxu0 0.0
        %3403 = vmatpush1.msra.mxu0 0.0
        %3404 = vmatprep.subr.mxu0 0.0
        %3405 = vmatpush1.msra.mxu0 0.0
        %3406 = vmatprep.subr.mxu0 0.0
        %3407 = vmatpush1.msra.mxu0 0.0
        %3408 = vmatprep.subr.mxu0 0.0
        %3409 = vmatpush1.msra.mxu0 0.0
        %3410 = vmatprep.subr.mxu0 0.0
        %3411 = vmatpush1.msra.mxu0 %v3376
        %3412 = vmatprep.subr.mxu0 0.0
        %3413 = vmatpush1.msra.mxu0 %v3374
        %3414 = vmatprep.subr.mxu0 0.0
        %3415 = vmatpush2.msra.mxu0 0.0
        %3416 = vmatprep.subr.mxu0 0.0
        %3417 = vmatpush2.msra.mxu0 0.0
        %3418 = vmatprep.subr.mxu0 0.0
        %3419 = vmatpush2.msra.mxu0 0.0
        %3420 = vmatprep.subr.mxu0 0.0
        %3421 = vmatpush2.msra.mxu0 0.0
        %3422 = vmatprep.subr.mxu0 0.0
        %3423 = vmatpush2.msra.mxu0 0.0
        %3424 = vmatprep.subr.mxu0 0.0
        %3425 = vmatpush2.msra.mxu0 0.0
        %3426 = vmatprep.subr.mxu0 0.0
        %3427 = vmatpush2.msra.mxu0 0.0
        %3428 = vmatprep.subr.mxu0 0.0
        %3429 = vmatpush2.msra.mxu0 0.0
        %3430 = vmatprep.subr.mxu0 0.0
        %3431 = vmatpush2.msra.mxu0 0.0
        %3432 = vmatprep.subr.mxu0 0.0
        %3433 = vmatpush2.msra.mxu0 0.0
        %3434 = vmatprep.subr.mxu0 0.0
        %3435 = vmatpush2.msra.mxu0 0.0
        %3436 = vmatprep.subr.mxu0 0.0
        %3437 = vmatpush2.msra.mxu0 0.0
        %3438 = vmatprep.subr.mxu0 0.0
        %3439 = vmatpush2.msra.mxu0 0.0
        %3440 = vmatprep.subr.mxu0 0.0
        %3441 = vmatpush2.msra.mxu0 0.0
        %3442 = vmatprep.subr.mxu0 0.0
        %3443 = vmatpush2.msra.mxu0 0.0
        %3444 = vmatprep.subr.mxu0 0.0
        %3445 = vmatpush2.msra.mxu0 0.0
        %3446 = vmatprep.mubr.f32.mxu0 0.0
        %3447 = vmatmul.mubr.f32.gmra.mxu0 %v3380
        %v3448 = vpop.f32.mrf.mxu0
        %v3449 = vadd.f32 0.0, %v3448
        %v3450 = vpop.f32.mrf.mxu0
        %3451 = vdwg.mxu0
        %v3453 = vsel %vm1489, %v3449, 0
        %3455 = vmatprep.subr.mxu0 0.0
        %3456 = vmatpush1.msra.mxu0 0.0
        %3457 = vmatprep.subr.mxu0 0.0
        %3458 = vmatpush1.msra.mxu0 0.0
        %3459 = vmatprep.subr.mxu0 0.0
        %3460 = vmatpush1.msra.mxu0 0.0
        %3461 = vmatprep.subr.mxu0 0.0
        %3462 = vmatpush1.msra.mxu0 0.0
        %3463 = vmatprep.subr.mxu0 0.0
        %3464 = vmatpush1.msra.mxu0 0.0
        %3465 = vmatprep.subr.mxu0 0.0
        %3466 = vmatpush1.msra.mxu0 0.0
        %3467 = vmatprep.subr.mxu0 0.0
        %3468 = vmatpush1.msra.mxu0 0.0
        %3469 = vmatprep.subr.mxu0 0.0
        %3470 = vmatpush1.msra.mxu0 0.0
        %3471 = vmatprep.subr.mxu0 0.0
        %3472 = vmatpush1.msra.mxu0 0.0
        %3473 = vmatprep.subr.mxu0 0.0
        %3474 = vmatpush1.msra.mxu0 0.0
        %3475 = vmatprep.subr.mxu0 0.0
        %3476 = vmatpush1.msra.mxu0 0.0
        %3477 = vmatprep.subr.mxu0 0.0
        %3478 = vmatpush1.msra.mxu0 0.0
        %3479 = vmatprep.subr.mxu0 0.0
        %3480 = vmatpush1.msra.mxu0 %v2549
        %3481 = vmatprep.subr.mxu0 0.0
        %3482 = vmatpush1.msra.mxu0 %v2548
        %3483 = vmatprep.subr.mxu0 0.0
        %3484 = vmatpush1.msra.mxu0 %v2547
        %3485 = vmatprep.subr.mxu0 0.0
        %3486 = vmatpush1.msra.mxu0 %v2546
        %3487 = vmatprep.subr.mxu0 0.0
        %3488 = vmatpush2.msra.mxu0 0.0
        %3489 = vmatprep.subr.mxu0 0.0
        %3490 = vmatpush2.msra.mxu0 0.0
        %3491 = vmatprep.subr.mxu0 0.0
        %3492 = vmatpush2.msra.mxu0 0.0
        %3493 = vmatprep.subr.mxu0 0.0
        %3494 = vmatpush2.msra.mxu0 0.0
        %3495 = vmatprep.subr.mxu0 0.0
        %3496 = vmatpush2.msra.mxu0 0.0
        %3497 = vmatprep.subr.mxu0 0.0
        %3498 = vmatpush2.msra.mxu0 0.0
        %3499 = vmatprep.subr.mxu0 0.0
        %3500 = vmatpush2.msra.mxu0 0.0
        %3501 = vmatprep.subr.mxu0 0.0
        %3502 = vmatpush2.msra.mxu0 0.0
        %3503 = vmatprep.subr.mxu0 0.0
        %3504 = vmatpush2.msra.mxu0 0.0
        %3505 = vmatprep.subr.mxu0 0.0
        %3506 = vmatpush2.msra.mxu0 0.0
        %3507 = vmatprep.subr.mxu0 0.0
        %3508 = vmatpush2.msra.mxu0 0.0
        %3509 = vmatprep.subr.mxu0 0.0
        %3510 = vmatpush2.msra.mxu0 0.0
        %3511 = vmatprep.subr.mxu0 0.0
        %3512 = vmatpush2.msra.mxu0 0.0
        %3513 = vmatprep.subr.mxu0 0.0
        %3514 = vmatpush2.msra.mxu0 0.0
        %3515 = vmatprep.subr.mxu0 0.0
        %3516 = vmatpush2.msra.mxu0 0.0
        %3517 = vmatprep.subr.mxu0 0.0
        %3518 = vmatpush2.msra.mxu0 0.0
        %3519 = vmatprep.mubr.f32.mxu0 0.0
        %3520 = vmatmul.mubr.f32.gmra.mxu0 %v3453
        %v3521 = vpop.f32.mrf.mxu0
        %v3522 = vadd.f32 0.0, %v3521
        %v3523 = vpop.f32.mrf.mxu0
        %3524 = vdwg.mxu0
        %v3525 = vadd.f32 %v3276, %v3522
        %3526 = vrot.lane.b32.xlu0 %v2628, 32
        %v3527 = vpop.permute.xlu0 %3526
        %3528 = vrot.lane.b32.xlu0 %v2704, 32
        %v3529 = vpop.permute.xlu0 %3528
        %3530 = vrot.lane.b32.xlu0 %v2709, 32
        %v3531 = vpop.permute.xlu0 %3530
        %v3532 = vsel %vm1489, %v3527, 0
        %v3534 = vsel %vm1489, %v3529, 0
        %v3536 = vsel %vm1489, %v3531, 0
        %3538 = vmatprep.subr.mxu0 0.0
        %3539 = vmatpush1.xpose.msra.mxu0 0.0
        %3540 = vmatprep.subr.mxu0 0.0
        %3541 = vmatpush1.xpose.msra.mxu0 0.0
        %3542 = vmatprep.subr.mxu0 0.0
        %3543 = vmatpush1.xpose.msra.mxu0 0.0
        %3544 = vmatprep.subr.mxu0 0.0
        %3545 = vmatpush1.xpose.msra.mxu0 0.0
        %3546 = vmatprep.subr.mxu0 0.0
        %3547 = vmatpush1.xpose.msra.mxu0 0.0
        %3548 = vmatprep.subr.mxu0 0.0
        %3549 = vmatpush1.xpose.msra.mxu0 0.0
        %3550 = vmatprep.subr.mxu0 0.0
        %3551 = vmatpush1.xpose.msra.mxu0 0.0
        %3552 = vmatprep.subr.mxu0 0.0
        %3553 = vmatpush1.xpose.msra.mxu0 0.0
        %3554 = vmatprep.subr.mxu0 0.0
        %3555 = vmatpush1.xpose.msra.mxu0 0.0
        %3556 = vmatprep.subr.mxu0 0.0
        %3557 = vmatpush1.xpose.msra.mxu0 0.0
        %3558 = vmatprep.subr.mxu0 0.0
        %3559 = vmatpush1.xpose.msra.mxu0 0.0
        %3560 = vmatprep.subr.mxu0 0.0
        %3561 = vmatpush1.xpose.msra.mxu0 0.0
        %3562 = vmatprep.subr.mxu0 0.0
        %3563 = vmatpush1.xpose.msra.mxu0 0.0
        %3564 = vmatprep.subr.mxu0 0.0
        %3565 = vmatpush1.xpose.msra.mxu0 0.0
        %3566 = vmatprep.subr.mxu0 0.0
        %3567 = vmatpush1.xpose.msra.mxu0 %v3536
        %3568 = vmatprep.subr.mxu0 0.0
        %3569 = vmatpush1.xpose.msra.mxu0 %v3534
        %3570 = vmatprep.subr.mxu0 0.0
        %3571 = vmatpush2.xpose.msra.mxu0 0.0
        %3572 = vmatprep.subr.mxu0 0.0
        %3573 = vmatpush2.xpose.msra.mxu0 0.0
        %3574 = vmatprep.subr.mxu0 0.0
        %3575 = vmatpush2.xpose.msra.mxu0 0.0
        %3576 = vmatprep.subr.mxu0 0.0
        %3577 = vmatpush2.xpose.msra.mxu0 0.0
        %3578 = vmatprep.subr.mxu0 0.0
        %3579 = vmatpush2.xpose.msra.mxu0 0.0
        %3580 = vmatprep.subr.mxu0 0.0
        %3581 = vmatpush2.xpose.msra.mxu0 0.0
        %3582 = vmatprep.subr.mxu0 0.0
        %3583 = vmatpush2.xpose.msra.mxu0 0.0
        %3584 = vmatprep.subr.mxu0 0.0
        %3585 = vmatpush2.xpose.msra.mxu0 0.0
        %3586 = vmatprep.subr.mxu0 0.0
        %3587 = vmatpush2.xpose.msra.mxu0 0.0
        %3588 = vmatprep.subr.mxu0 0.0
        %3589 = vmatpush2.xpose.msra.mxu0 0.0
        %3590 = vmatprep.subr.mxu0 0.0
        %3591 = vmatpush2.xpose.msra.mxu0 0.0
        %3592 = vmatprep.subr.mxu0 0.0
        %3593 = vmatpush2.xpose.msra.mxu0 0.0
        %3594 = vmatprep.subr.mxu0 0.0
        %3595 = vmatpush2.xpose.msra.mxu0 0.0
        %3596 = vmatprep.subr.mxu0 0.0
        %3597 = vmatpush2.xpose.msra.mxu0 0.0
        %3598 = vmatprep.subr.mxu0 0.0
        %3599 = vmatpush2.xpose.msra.mxu0 0.0
        %3600 = vmatprep.subr.mxu0 0.0
        %3601 = vmatpush2.xpose.msra.mxu0 0.0
        %3602 = vmatprep.mubr.f32.mxu0 0.0
        %3603 = vmatmul.mubr.f32.gmra.mxu0 %v3532
        %v3604 = vpop.f32.mrf.mxu0
        %v3605 = vadd.f32 0.0, %v3604
        %v3606 = vpop.f32.mrf.mxu0
        %3607 = vdwg.mxu0
        %v3608 = vmul.f32 %v3605, 0.17677669
        %v3609 = vsel %vm2873, %v3608, -inf
        %3610 = vmax.xlane.f32.xlu0 %v3609
        %v3611 = vpop.xlane.xlu0 %3610
        %v3612 = vsub.f32 %v3608, %v3611
        %v3613 = vmul.f32 %v3612, 1.442695
        %v3614 = vpow.pop %v3613
        %v3615 = vsel %vm2873, %v3614, 0.0
        %3616 = vadd.xlane.f32.xlu0 %v3615
        %v3617 = vpop.xlane.xlu0 %3616
        %v3618 = vrcp.pop %v3617
        %v3619 = vmul.f32 %v3614, %v3618
        %3620 = vrot.lane.b32.xlu0 %v2785, 32
        %v3621 = vpop.permute.xlu0 %3620
        %3622 = vrot.lane.b32.xlu0 %v2790, 32
        %v3623 = vpop.permute.xlu0 %3622
        %v3627 = vsel %vm2873, %v3619, 0
        %3629 = vmatprep.subr.mxu0 0.0
        %3630 = vmatpush1.msra.mxu0 0.0
        %3631 = vmatprep.subr.mxu0 0.0
        %3632 = vmatpush1.msra.mxu0 0.0
        %3633 = vmatprep.subr.mxu0 0.0
        %3634 = vmatpush1.msra.mxu0 0.0
        %3635 = vmatprep.subr.mxu0 0.0
        %3636 = vmatpush1.msra.mxu0 0.0
        %3637 = vmatprep.subr.mxu0 0.0
        %3638 = vmatpush1.msra.mxu0 0.0
        %3639 = vmatprep.subr.mxu0 0.0
        %3640 = vmatpush1.msra.mxu0 0.0
        %3641 = vmatprep.subr.mxu0 0.0
        %3642 = vmatpush1.msra.mxu0 0.0
        %3643 = vmatprep.subr.mxu0 0.0
        %3644 = vmatpush1.msra.mxu0 0.0
        %3645 = vmatprep.subr.mxu0 0.0
        %3646 = vmatpush1.msra.mxu0 0.0
        %3647 = vmatprep.subr.mxu0 0.0
        %3648 = vmatpush1.msra.mxu0 0.0
        %3649 = vmatprep.subr.mxu0 0.0
        %3650 = vmatpush1.msra.mxu0 0.0
        %3651 = vmatprep.subr.mxu0 0.0
        %3652 = vmatpush1.msra.mxu0 0.0
        %3653 = vmatprep.subr.mxu0 0.0
        %3654 = vmatpush1.msra.mxu0 0.0
        %3655 = vmatprep.subr.mxu0 0.0
        %3656 = vmatpush1.msra.mxu0 0.0
        %3657 = vmatprep.subr.mxu0 0.0
        %3658 = vmatpush1.msra.mxu0 %v3623
        %3659 = vmatprep.subr.mxu0 0.0
        %3660 = vmatpush1.msra.mxu0 %v3621
        %3661 = vmatprep.subr.mxu0 0.0
        %3662 = vmatpush2.msra.mxu0 0.0
        %3663 = vmatprep.subr.mxu0 0.0
        %3664 = vmatpush2.msra.mxu0 0.0
        %3665 = vmatprep.subr.mxu0 0.0
        %3666 = vmatpush2.msra.mxu0 0.0
        %3667 = vmatprep.subr.mxu0 0.0
        %3668 = vmatpush2.msra.mxu0 0.0
        %3669 = vmatprep.subr.mxu0 0.0
        %3670 = vmatpush2.msra.mxu0 0.0
        %3671 = vmatprep.subr.mxu0 0.0
        %3672 = vmatpush2.msra.mxu0 0.0
        %3673 = vmatprep.subr.mxu0 0.0
        %3674 = vmatpush2.msra.mxu0 0.0
        %3675 = vmatprep.subr.mxu0 0.0
        %3676 = vmatpush2.msra.mxu0 0.0
        %3677 = vmatprep.subr.mxu0 0.0
        %3678 = vmatpush2.msra.mxu0 0.0
        %3679 = vmatprep.subr.mxu0 0.0
        %3680 = vmatpush2.msra.mxu0 0.0
        %3681 = vmatprep.subr.mxu0 0.0
        %3682 = vmatpush2.msra.mxu0 0.0
        %3683 = vmatprep.subr.mxu0 0.0
        %3684 = vmatpush2.msra.mxu0 0.0
        %3685 = vmatprep.subr.mxu0 0.0
        %3686 = vmatpush2.msra.mxu0 0.0
        %3687 = vmatprep.subr.mxu0 0.0
        %3688 = vmatpush2.msra.mxu0 0.0
        %3689 = vmatprep.subr.mxu0 0.0
        %3690 = vmatpush2.msra.mxu0 0.0
        %3691 = vmatprep.subr.mxu0 0.0
        %3692 = vmatpush2.msra.mxu0 0.0
        %3693 = vmatprep.mubr.f32.mxu0 0.0
        %3694 = vmatmul.mubr.f32.gmra.mxu0 %v3627
        %v3695 = vpop.f32.mrf.mxu0
        %v3696 = vadd.f32 0.0, %v3695
        %v3697 = vpop.f32.mrf.mxu0
        %3698 = vdwg.mxu0
        %v3700 = vsel %vm1489, %v3696, 0
        %3702 = vmatprep.subr.mxu0 0.0
        %3703 = vmatpush1.msra.mxu0 0.0
        %3704 = vmatprep.subr.mxu0 0.0
        %3705 = vmatpush1.msra.mxu0 0.0
        %3706 = vmatprep.subr.mxu0 0.0
        %3707 = vmatpush1.msra.mxu0 0.0
        %3708 = vmatprep.subr.mxu0 0.0
        %3709 = vmatpush1.msra.mxu0 0.0
        %3710 = vmatprep.subr.mxu0 0.0
        %3711 = vmatpush1.msra.mxu0 0.0
        %3712 = vmatprep.subr.mxu0 0.0
        %3713 = vmatpush1.msra.mxu0 0.0
        %3714 = vmatprep.subr.mxu0 0.0
        %3715 = vmatpush1.msra.mxu0 0.0
        %3716 = vmatprep.subr.mxu0 0.0
        %3717 = vmatpush1.msra.mxu0 0.0
        %3718 = vmatprep.subr.mxu0 0.0
        %3719 = vmatpush1.msra.mxu0 0.0
        %3720 = vmatprep.subr.mxu0 0.0
        %3721 = vmatpush1.msra.mxu0 0.0
        %3722 = vmatprep.subr.mxu0 0.0
        %3723 = vmatpush1.msra.mxu0 0.0
        %3724 = vmatprep.subr.mxu0 0.0
        %3725 = vmatpush1.msra.mxu0 0.0
        %3726 = vmatprep.subr.mxu0 0.0
        %3727 = vmatpush1.msra.mxu0 %v2553
        %3728 = vmatprep.subr.mxu0 0.0
        %3729 = vmatpush1.msra.mxu0 %v2552
        %3730 = vmatprep.subr.mxu0 0.0
        %3731 = vmatpush1.msra.mxu0 %v2551
        %3732 = vmatprep.subr.mxu0 0.0
        %3733 = vmatpush1.msra.mxu0 %v2550
        %3734 = vmatprep.subr.mxu0 0.0
        %3735 = vmatpush2.msra.mxu0 0.0
        %3736 = vmatprep.subr.mxu0 0.0
        %3737 = vmatpush2.msra.mxu0 0.0
        %3738 = vmatprep.subr.mxu0 0.0
        %3739 = vmatpush2.msra.mxu0 0.0
        %3740 = vmatprep.subr.mxu0 0.0
        %3741 = vmatpush2.msra.mxu0 0.0
        %3742 = vmatprep.subr.mxu0 0.0
        %3743 = vmatpush2.msra.mxu0 0.0
        %3744 = vmatprep.subr.mxu0 0.0
        %3745 = vmatpush2.msra.mxu0 0.0
        %3746 = vmatprep.subr.mxu0 0.0
        %3747 = vmatpush2.msra.mxu0 0.0
        %3748 = vmatprep.subr.mxu0 0.0
        %3749 = vmatpush2.msra.mxu0 0.0
        %3750 = vmatprep.subr.mxu0 0.0
        %3751 = vmatpush2.msra.mxu0 0.0
        %3752 = vmatprep.subr.mxu0 0.0
        %3753 = vmatpush2.msra.mxu0 0.0
        %3754 = vmatprep.subr.mxu0 0.0
        %3755 = vmatpush2.msra.mxu0 0.0
        %3756 = vmatprep.subr.mxu0 0.0
        %3757 = vmatpush2.msra.mxu0 0.0
        %3758 = vmatprep.subr.mxu0 0.0
        %3759 = vmatpush2.msra.mxu0 0.0
        %3760 = vmatprep.subr.mxu0 0.0
        %3761 = vmatpush2.msra.mxu0 0.0
        %3762 = vmatprep.subr.mxu0 0.0
        %3763 = vmatpush2.msra.mxu0 0.0
        %3764 = vmatprep.subr.mxu0 0.0
        %3765 = vmatpush2.msra.mxu0 0.0
        %3766 = vmatprep.mubr.f32.mxu0 0.0
        %3767 = vmatmul.mubr.f32.gmra.mxu0 %v3700
        %v3768 = vpop.f32.mrf.mxu0
        %v3769 = vadd.f32 0.0, %v3768
        %v3770 = vpop.f32.mrf.mxu0
        %3771 = vdwg.mxu0
        %v3772 = vadd.f32 %v3525, %v3769
        %v3774 = vlaneseq
        %v3775 = vshrl.u32 %v3774, 7
        %v3776 = vsub.s32 0, %v3775
        %v3777 = vrot.slane %v2554, %v3776
        %v3779 = vadd.f32 %v3772, %v3777
        %v3780 = vadd.f32 %v2452, %v3779
        %v3781 = vld [vmem:[%s55] sm:$0x1]
        %v3782 = vld [vmem:[%s57] sm:$0x1]
        %3783 = vadd.xlane.f32.xlu0 %v3780
        %v3784 = vpop.xlane.xlu0 %3783
        %v3785 = vmul.f32 %v3784, %v1161
        %v3786 = vsub.f32 %v3780, %v3785
        %v3787 = vmul.f32 %v3786, %v3786
        %3788 = vadd.xlane.f32.xlu0 %v3787
        %v3789 = vpop.xlane.xlu0 %3788
        %v3790 = vmul.f32 %v3789, %v1167
        %v3791 = vrsqrt.pop %v3790
        %v3792 = vmul.f32 %v3790, %v3791
        %vm3793 = vcmp.eq.f32.partialorder %v3790, inf
        %v3794 = vsel %vm3793, %v3790, %v3792
        %vm3795 = vcmp.eq.f32.partialorder %v3790, 0.0
        %v3796 = vand.u32 %v3790, 2147483648
        %v3797 = vsel %vm3795, %v3796, %v3794
        %v3799 = vlaneseq
        %v3800 = vshrl.u32 %v3799, 7
        %v3801 = vsub.s32 0, %v3800
        %v3802 = vrot.slane %v3781, %v3801
        %v3804 = vmul.f32 %v3802, %v3786
        %v3805 = vadd.f32 %v3797, 1e-06
        %v3806 = vrcp.pop %v3805
        %v3807 = vmul.f32 %v3804, %v3806
        %v3809 = vlaneseq
        %v3810 = vshrl.u32 %v3809, 7
        %v3811 = vsub.s32 0, %v3810
        %v3812 = vrot.slane %v3782, %v3811
        %v3814 = vadd.f32 %v3807, %v3812
        %v3815 = vld [vmem:[#allocation20] sm:$0xff]
        %v3816 = vld [vmem:[#allocation20 + $0x8] sm:$0xff]
        %v3817 = vld [vmem:[#allocation20 + $0x10] sm:$0xff]
        %v3818 = vld [vmem:[#allocation20 + $0x18] sm:$0xff]
        %v3819 = vld [vmem:[#allocation20 + $0x20] sm:$0xff]
        %v3820 = vld [vmem:[#allocation20 + $0x28] sm:$0xff]
        %v3821 = vld [vmem:[#allocation20 + $0x30] sm:$0xff]
        %v3822 = vld [vmem:[#allocation20 + $0x38] sm:$0xff]
        %v3823 = vld [vmem:[#allocation20 + $0x40] sm:$0xff]
        %v3824 = vld [vmem:[#allocation20 + $0x48] sm:$0xff]
        %v3825 = vld [vmem:[#allocation20 + $0x50] sm:$0xff]
        %v3826 = vld [vmem:[#allocation20 + $0x58] sm:$0xff]
        %v3827 = vld [vmem:[#allocation20 + $0x60] sm:$0xff]
        %v3828 = vld [vmem:[#allocation20 + $0x68] sm:$0xff]
        %v3829 = vld [vmem:[#allocation20 + $0x70] sm:$0xff]
        %v3830 = vld [vmem:[#allocation20 + $0x78] sm:$0xff]
        %v3831 = vld [vmem:[#allocation20 + $0x80] sm:$0xff]
        %v3832 = vld [vmem:[#allocation20 + $0x88] sm:$0xff]
        %v3833 = vld [vmem:[#allocation20 + $0x90] sm:$0xff]
        %v3834 = vld [vmem:[#allocation20 + $0x98] sm:$0xff]
        %v3835 = vld [vmem:[#allocation20 + $0xa0] sm:$0xff]
        %v3836 = vld [vmem:[#allocation20 + $0xa8] sm:$0xff]
        %v3837 = vld [vmem:[#allocation20 + $0xb0] sm:$0xff]
        %v3838 = vld [vmem:[#allocation20 + $0xb8] sm:$0xff]
        %v3839 = vld [vmem:[#allocation20 + $0xc0] sm:$0xff]
        %v3840 = vld [vmem:[#allocation20 + $0xc8] sm:$0xff]
        %v3841 = vld [vmem:[#allocation20 + $0xd0] sm:$0xff]
        %v3842 = vld [vmem:[#allocation20 + $0xd8] sm:$0xff]
        %v3843 = vld [vmem:[#allocation20 + $0xe0] sm:$0xff]
        %v3844 = vld [vmem:[#allocation20 + $0xe8] sm:$0xff]
        %v3845 = vld [vmem:[#allocation20 + $0xf0] sm:$0xff]
        %v3846 = vld [vmem:[#allocation20 + $0xf8] sm:$0xff]
        %v3847 = vld [vmem:[#allocation20 + $0x100] sm:$0xff]
        %v3848 = vld [vmem:[#allocation20 + $0x108] sm:$0xff]
        %v3849 = vld [vmem:[#allocation20 + $0x110] sm:$0xff]
        %v3850 = vld [vmem:[#allocation20 + $0x118] sm:$0xff]
        %v3851 = vld [vmem:[#allocation20 + $0x120] sm:$0xff]
        %v3852 = vld [vmem:[#allocation20 + $0x128] sm:$0xff]
        %v3853 = vld [vmem:[#allocation20 + $0x130] sm:$0xff]
        %v3854 = vld [vmem:[#allocation20 + $0x138] sm:$0xff]
        %v3855 = vld [vmem:[#allocation20 + $0x140] sm:$0xff]
        %v3856 = vld [vmem:[#allocation20 + $0x148] sm:$0xff]
        %v3857 = vld [vmem:[#allocation20 + $0x150] sm:$0xff]
        %v3858 = vld [vmem:[#allocation20 + $0x158] sm:$0xff]
        %v3859 = vld [vmem:[#allocation20 + $0x160] sm:$0xff]
        %v3860 = vld [vmem:[#allocation20 + $0x168] sm:$0xff]
        %v3861 = vld [vmem:[#allocation20 + $0x170] sm:$0xff]
        %v3862 = vld [vmem:[#allocation20 + $0x178] sm:$0xff]
        %v3863 = vld [vmem:[#allocation20 + $0x180] sm:$0xff]
        %v3864 = vld [vmem:[#allocation20 + $0x188] sm:$0xff]
        %v3865 = vld [vmem:[#allocation20 + $0x190] sm:$0xff]
        %v3866 = vld [vmem:[#allocation20 + $0x198] sm:$0xff]
        %v3867 = vld [vmem:[#allocation20 + $0x1a0] sm:$0xff]
        %v3868 = vld [vmem:[#allocation20 + $0x1a8] sm:$0xff]
        %v3869 = vld [vmem:[#allocation20 + $0x1b0] sm:$0xff]
        %v3870 = vld [vmem:[#allocation20 + $0x1b8] sm:$0xff]
        %v3871 = vld [vmem:[#allocation20 + $0x1c0] sm:$0xff]
        %v3872 = vld [vmem:[#allocation20 + $0x1c8] sm:$0xff]
        %v3873 = vld [vmem:[#allocation20 + $0x1d0] sm:$0xff]
        %v3874 = vld [vmem:[#allocation20 + $0x1d8] sm:$0xff]
        %v3875 = vld [vmem:[#allocation20 + $0x1e0] sm:$0xff]
        %v3876 = vld [vmem:[#allocation20 + $0x1e8] sm:$0xff]
        %v3877 = vld [vmem:[#allocation20 + $0x1f0] sm:$0xff]
        %v3878 = vld [vmem:[#allocation20 + $0x1f8] sm:$0xff]
        %v3879 = vld [vmem:[#allocation22] sm:$0xff]
        %v3880 = vld [vmem:[#allocation22 + $0x8] sm:$0xff]
        %v3881 = vld [vmem:[#allocation22 + $0x10] sm:$0xff]
        %v3882 = vld [vmem:[#allocation22 + $0x18] sm:$0xff]
        %v3883 = vld [vmem:[#allocation22 + $0x20] sm:$0xff]
        %v3884 = vld [vmem:[#allocation22 + $0x28] sm:$0xff]
        %v3885 = vld [vmem:[#allocation22 + $0x30] sm:$0xff]
        %v3886 = vld [vmem:[#allocation22 + $0x38] sm:$0xff]
        %v3887 = vld [vmem:[#allocation22 + $0x40] sm:$0xff]
        %v3888 = vld [vmem:[#allocation22 + $0x48] sm:$0xff]
        %v3889 = vld [vmem:[#allocation22 + $0x50] sm:$0xff]
        %v3890 = vld [vmem:[#allocation22 + $0x58] sm:$0xff]
        %v3891 = vld [vmem:[#allocation22 + $0x60] sm:$0xff]
        %v3892 = vld [vmem:[#allocation22 + $0x68] sm:$0xff]
        %v3893 = vld [vmem:[#allocation22 + $0x70] sm:$0xff]
        %v3894 = vld [vmem:[#allocation22 + $0x78] sm:$0xff]
        %v3895 = vld [vmem:[#allocation22 + $0x80] sm:$0xff]
        %v3896 = vld [vmem:[#allocation22 + $0x88] sm:$0xff]
        %v3897 = vld [vmem:[#allocation22 + $0x90] sm:$0xff]
        %v3898 = vld [vmem:[#allocation22 + $0x98] sm:$0xff]
        %v3899 = vld [vmem:[#allocation22 + $0xa0] sm:$0xff]
        %v3900 = vld [vmem:[#allocation22 + $0xa8] sm:$0xff]
        %v3901 = vld [vmem:[#allocation22 + $0xb0] sm:$0xff]
        %v3902 = vld [vmem:[#allocation22 + $0xb8] sm:$0xff]
        %v3903 = vld [vmem:[#allocation22 + $0xc0] sm:$0xff]
        %v3904 = vld [vmem:[#allocation22 + $0xc8] sm:$0xff]
        %v3905 = vld [vmem:[#allocation22 + $0xd0] sm:$0xff]
        %v3906 = vld [vmem:[#allocation22 + $0xd8] sm:$0xff]
        %v3907 = vld [vmem:[#allocation22 + $0xe0] sm:$0xff]
        %v3908 = vld [vmem:[#allocation22 + $0xe8] sm:$0xff]
        %v3909 = vld [vmem:[#allocation22 + $0xf0] sm:$0xff]
        %v3910 = vld [vmem:[#allocation22 + $0xf8] sm:$0xff]
        %v3911 = vld [vmem:[#allocation22 + $0x100] sm:$0xff]
        %v3912 = vld [vmem:[#allocation22 + $0x108] sm:$0xff]
        %v3913 = vld [vmem:[#allocation22 + $0x110] sm:$0xff]
        %v3914 = vld [vmem:[#allocation22 + $0x118] sm:$0xff]
        %v3915 = vld [vmem:[#allocation22 + $0x120] sm:$0xff]
        %v3916 = vld [vmem:[#allocation22 + $0x128] sm:$0xff]
        %v3917 = vld [vmem:[#allocation22 + $0x130] sm:$0xff]
        %v3918 = vld [vmem:[#allocation22 + $0x138] sm:$0xff]
        %v3919 = vld [vmem:[#allocation22 + $0x140] sm:$0xff]
        %v3920 = vld [vmem:[#allocation22 + $0x148] sm:$0xff]
        %v3921 = vld [vmem:[#allocation22 + $0x150] sm:$0xff]
        %v3922 = vld [vmem:[#allocation22 + $0x158] sm:$0xff]
        %v3923 = vld [vmem:[#allocation22 + $0x160] sm:$0xff]
        %v3924 = vld [vmem:[#allocation22 + $0x168] sm:$0xff]
        %v3925 = vld [vmem:[#allocation22 + $0x170] sm:$0xff]
        %v3926 = vld [vmem:[#allocation22 + $0x178] sm:$0xff]
        %v3927 = vld [vmem:[#allocation22 + $0x180] sm:$0xff]
        %v3928 = vld [vmem:[#allocation22 + $0x188] sm:$0xff]
        %v3929 = vld [vmem:[#allocation22 + $0x190] sm:$0xff]
        %v3930 = vld [vmem:[#allocation22 + $0x198] sm:$0xff]
        %v3931 = vld [vmem:[#allocation22 + $0x1a0] sm:$0xff]
        %v3932 = vld [vmem:[#allocation22 + $0x1a8] sm:$0xff]
        %v3933 = vld [vmem:[#allocation22 + $0x1b0] sm:$0xff]
        %v3934 = vld [vmem:[#allocation22 + $0x1b8] sm:$0xff]
        %v3935 = vld [vmem:[#allocation22 + $0x1c0] sm:$0xff]
        %v3936 = vld [vmem:[#allocation22 + $0x1c8] sm:$0xff]
        %v3937 = vld [vmem:[#allocation22 + $0x1d0] sm:$0xff]
        %v3938 = vld [vmem:[#allocation22 + $0x1d8] sm:$0xff]
        %v3939 = vld [vmem:[#allocation22 + $0x1e0] sm:$0xff]
        %v3940 = vld [vmem:[#allocation22 + $0x1e8] sm:$0xff]
        %v3941 = vld [vmem:[#allocation22 + $0x1f0] sm:$0xff]
        %v3942 = vld [vmem:[#allocation22 + $0x1f8] sm:$0xff]
        %v3943 = vld [vmem:[%s41] sm:$0xf]
        %v3945 = vlaneseq
        %v3946 = vshrl.u32 %v3945, 7
        %v3947 = vsub.s32 0, %v3946
        %v3948 = vrot.slane %v3943, %v3947
        %v3949 = vlaneseq
        %v3950 = vshrl.u32 %v3949, 7
        %v3951 = vsub.s32 1, %v3950
        %v3952 = vrot.slane %v3943, %v3951
        %v3953 = vlaneseq
        %v3954 = vshrl.u32 %v3953, 7
        %v3955 = vsub.s32 2, %v3954
        %v3956 = vrot.slane %v3943, %v3955
        %v3957 = vlaneseq
        %v3958 = vshrl.u32 %v3957, 7
        %v3959 = vsub.s32 3, %v3958
        %v3960 = vrot.slane %v3943, %v3959
        %3965 = vmatprep.subr.mxu0 %v3876
        %3966 = vmatpush1.msra.mxu0 %v3875
        %3967 = vmatprep.subr.mxu0 %v3872
        %3968 = vmatpush1.msra.mxu0 %v3871
        %3969 = vmatprep.subr.mxu0 %v3868
        %3970 = vmatpush1.msra.mxu0 %v3867
        %3971 = vmatprep.subr.mxu0 %v3864
        %3972 = vmatpush1.msra.mxu0 %v3863
        %3973 = vmatprep.subr.mxu0 %v3860
        %3974 = vmatpush1.msra.mxu0 %v3859
        %3975 = vmatprep.subr.mxu0 %v3856
        %3976 = vmatpush1.msra.mxu0 %v3855
        %3977 = vmatprep.subr.mxu0 %v3852
        %3978 = vmatpush1.msra.mxu0 %v3851
        %3979 = vmatprep.subr.mxu0 %v3848
        %3980 = vmatpush1.msra.mxu0 %v3847
        %3981 = vmatprep.subr.mxu0 %v3844
        %3982 = vmatpush1.msra.mxu0 %v3843
        %3983 = vmatprep.subr.mxu0 %v3840
        %3984 = vmatpush1.msra.mxu0 %v3839
        %3985 = vmatprep.subr.mxu0 %v3836
        %3986 = vmatpush1.msra.mxu0 %v3835
        %3987 = vmatprep.subr.mxu0 %v3832
        %3988 = vmatpush1.msra.mxu0 %v3831
        %3989 = vmatprep.subr.mxu0 %v3828
        %3990 = vmatpush1.msra.mxu0 %v3827
        %3991 = vmatprep.subr.mxu0 %v3824
        %3992 = vmatpush1.msra.mxu0 %v3823
        %3993 = vmatprep.subr.mxu0 %v3820
        %3994 = vmatpush1.msra.mxu0 %v3819
        %3995 = vmatprep.subr.mxu0 %v3816
        %3996 = vmatpush1.msra.mxu0 %v3815
        %3997 = vmatprep.subr.mxu0 0.0
        %3998 = vmatpush2.msra.mxu0 0.0
        %3999 = vmatprep.subr.mxu0 0.0
        %4000 = vmatpush2.msra.mxu0 0.0
        %4001 = vmatprep.subr.mxu0 0.0
        %4002 = vmatpush2.msra.mxu0 0.0
        %4003 = vmatprep.subr.mxu0 0.0
        %4004 = vmatpush2.msra.mxu0 0.0
        %4005 = vmatprep.subr.mxu0 0.0
        %4006 = vmatpush2.msra.mxu0 0.0
        %4007 = vmatprep.subr.mxu0 0.0
        %4008 = vmatpush2.msra.mxu0 0.0
        %4009 = vmatprep.subr.mxu0 0.0
        %4010 = vmatpush2.msra.mxu0 0.0
        %4011 = vmatprep.subr.mxu0 0.0
        %4012 = vmatpush2.msra.mxu0 0.0
        %4013 = vmatprep.subr.mxu0 0.0
        %4014 = vmatpush2.msra.mxu0 0.0
        %4015 = vmatprep.subr.mxu0 0.0
        %4016 = vmatpush2.msra.mxu0 0.0
        %4017 = vmatprep.subr.mxu0 0.0
        %4018 = vmatpush2.msra.mxu0 0.0
        %4019 = vmatprep.subr.mxu0 0.0
        %4020 = vmatpush2.msra.mxu0 0.0
        %4021 = vmatprep.subr.mxu0 0.0
        %4022 = vmatpush2.msra.mxu0 0.0
        %4023 = vmatprep.subr.mxu0 0.0
        %4024 = vmatpush2.msra.mxu0 0.0
        %4025 = vmatprep.subr.mxu0 0.0
        %4026 = vmatpush2.msra.mxu0 0.0
        %4027 = vmatprep.subr.mxu0 0.0
        %4028 = vmatpush2.msra.mxu0 0.0
        %4029 = vmatprep.mubr.f32.mxu0 0.0
        %4030 = vmatmul.mubr.f32.gmra.mxu0 %v3814
        %v4031 = vpop.f32.mrf.mxu0
        %v4032 = vadd.f32 %v3948, %v4031
        %v4033 = vpop.f32.mrf.mxu0
        %v4034 = vadd.f32 %v3952, %v4033
        %4035 = vdwg.mxu0
        %4036 = vmatprep.subr.mxu0 %v3878
        %4037 = vmatpush1.msra.mxu0 %v3877
        %4038 = vmatprep.subr.mxu0 %v3874
        %4039 = vmatpush1.msra.mxu0 %v3873
        %4040 = vmatprep.subr.mxu0 %v3870
        %4041 = vmatpush1.msra.mxu0 %v3869
        %4042 = vmatprep.subr.mxu0 %v3866
        %4043 = vmatpush1.msra.mxu0 %v3865
        %4044 = vmatprep.subr.mxu0 %v3862
        %4045 = vmatpush1.msra.mxu0 %v3861
        %4046 = vmatprep.subr.mxu0 %v3858
        %4047 = vmatpush1.msra.mxu0 %v3857
        %4048 = vmatprep.subr.mxu0 %v3854
        %4049 = vmatpush1.msra.mxu0 %v3853
        %4050 = vmatprep.subr.mxu0 %v3850
        %4051 = vmatpush1.msra.mxu0 %v3849
        %4052 = vmatprep.subr.mxu0 %v3846
        %4053 = vmatpush1.msra.mxu0 %v3845
        %4054 = vmatprep.subr.mxu0 %v3842
        %4055 = vmatpush1.msra.mxu0 %v3841
        %4056 = vmatprep.subr.mxu0 %v3838
        %4057 = vmatpush1.msra.mxu0 %v3837
        %4058 = vmatprep.subr.mxu0 %v3834
        %4059 = vmatpush1.msra.mxu0 %v3833
        %4060 = vmatprep.subr.mxu0 %v3830
        %4061 = vmatpush1.msra.mxu0 %v3829
        %4062 = vmatprep.subr.mxu0 %v3826
        %4063 = vmatpush1.msra.mxu0 %v3825
        %4064 = vmatprep.subr.mxu0 %v3822
        %4065 = vmatpush1.msra.mxu0 %v3821
        %4066 = vmatprep.subr.mxu0 %v3818
        %4067 = vmatpush1.msra.mxu0 %v3817
        %4068 = vmatprep.subr.mxu0 0.0
        %4069 = vmatpush2.msra.mxu0 0.0
        %4070 = vmatprep.subr.mxu0 0.0
        %4071 = vmatpush2.msra.mxu0 0.0
        %4072 = vmatprep.subr.mxu0 0.0
        %4073 = vmatpush2.msra.mxu0 0.0
        %4074 = vmatprep.subr.mxu0 0.0
        %4075 = vmatpush2.msra.mxu0 0.0
        %4076 = vmatprep.subr.mxu0 0.0
        %4077 = vmatpush2.msra.mxu0 0.0
        %4078 = vmatprep.subr.mxu0 0.0
        %4079 = vmatpush2.msra.mxu0 0.0
        %4080 = vmatprep.subr.mxu0 0.0
        %4081 = vmatpush2.msra.mxu0 0.0
        %4082 = vmatprep.subr.mxu0 0.0
        %4083 = vmatpush2.msra.mxu0 0.0
        %4084 = vmatprep.subr.mxu0 0.0
        %4085 = vmatpush2.msra.mxu0 0.0
        %4086 = vmatprep.subr.mxu0 0.0
        %4087 = vmatpush2.msra.mxu0 0.0
        %4088 = vmatprep.subr.mxu0 0.0
        %4089 = vmatpush2.msra.mxu0 0.0
        %4090 = vmatprep.subr.mxu0 0.0
        %4091 = vmatpush2.msra.mxu0 0.0
        %4092 = vmatprep.subr.mxu0 0.0
        %4093 = vmatpush2.msra.mxu0 0.0
        %4094 = vmatprep.subr.mxu0 0.0
        %4095 = vmatpush2.msra.mxu0 0.0
        %4096 = vmatprep.subr.mxu0 0.0
        %4097 = vmatpush2.msra.mxu0 0.0
        %4098 = vmatprep.subr.mxu0 0.0
        %4099 = vmatpush2.msra.mxu0 0.0
        %4100 = vmatprep.mubr.f32.mxu0 0.0
        %4101 = vmatmul.mubr.f32.gmra.mxu0 %v3814
        %v4102 = vpop.f32.mrf.mxu0
        %v4103 = vadd.f32 %v3956, %v4102
        %v4104 = vpop.f32.mrf.mxu0
        %v4105 = vadd.f32 %v3960, %v4104
        %4106 = vdwg.mxu0
        %v4107 = vmax.f32 %v4032, 0.0
        %v4108 = vmax.f32 %v4034, 0.0
        %v4109 = vmax.f32 %v4103, 0.0
        %v4110 = vmax.f32 %v4105, 0.0
        %4111 = vmatprep.subr.mxu0 0.0
        %4112 = vmatpush1.msra.mxu0 %v3894
        %4113 = vmatprep.subr.mxu0 0.0
        %4114 = vmatpush1.msra.mxu0 %v3893
        %4115 = vmatprep.subr.mxu0 0.0
        %4116 = vmatpush1.msra.mxu0 %v3892
        %4117 = vmatprep.subr.mxu0 0.0
        %4118 = vmatpush1.msra.mxu0 %v3891
        %4119 = vmatprep.subr.mxu0 0.0
        %4120 = vmatpush1.msra.mxu0 %v3890
        %4121 = vmatprep.subr.mxu0 0.0
        %4122 = vmatpush1.msra.mxu0 %v3889
        %4123 = vmatprep.subr.mxu0 0.0
        %4124 = vmatpush1.msra.mxu0 %v3888
        %4125 = vmatprep.subr.mxu0 0.0
        %4126 = vmatpush1.msra.mxu0 %v3887
        %4127 = vmatprep.subr.mxu0 0.0
        %4128 = vmatpush1.msra.mxu0 %v3886
        %4129 = vmatprep.subr.mxu0 0.0
        %4130 = vmatpush1.msra.mxu0 %v3885
        %4131 = vmatprep.subr.mxu0 0.0
        %4132 = vmatpush1.msra.mxu0 %v3884
        %4133 = vmatprep.subr.mxu0 0.0
        %4134 = vmatpush1.msra.mxu0 %v3883
        %4135 = vmatprep.subr.mxu0 0.0
        %4136 = vmatpush1.msra.mxu0 %v3882
        %4137 = vmatprep.subr.mxu0 0.0
        %4138 = vmatpush1.msra.mxu0 %v3881
        %4139 = vmatprep.subr.mxu0 0.0
        %4140 = vmatpush1.msra.mxu0 %v3880
        %4141 = vmatprep.subr.mxu0 0.0
        %4142 = vmatpush1.msra.mxu0 %v3879
        %4143 = vmatprep.subr.mxu0 0.0
        %4144 = vmatpush2.msra.mxu0 %v3910
        %4145 = vmatprep.subr.mxu0 0.0
        %4146 = vmatpush2.msra.mxu0 %v3909
        %4147 = vmatprep.subr.mxu0 0.0
        %4148 = vmatpush2.msra.mxu0 %v3908
        %4149 = vmatprep.subr.mxu0 0.0
        %4150 = vmatpush2.msra.mxu0 %v3907
        %4151 = vmatprep.subr.mxu0 0.0
        %4152 = vmatpush2.msra.mxu0 %v3906
        %4153 = vmatprep.subr.mxu0 0.0
        %4154 = vmatpush2.msra.mxu0 %v3905
        %4155 = vmatprep.subr.mxu0 0.0
        %4156 = vmatpush2.msra.mxu0 %v3904
        %4157 = vmatprep.subr.mxu0 0.0
        %4158 = vmatpush2.msra.mxu0 %v3903
        %4159 = vmatprep.subr.mxu0 0.0
        %4160 = vmatpush2.msra.mxu0 %v3902
        %4161 = vmatprep.subr.mxu0 0.0
        %4162 = vmatpush2.msra.mxu0 %v3901
        %4163 = vmatprep.subr.mxu0 0.0
        %4164 = vmatpush2.msra.mxu0 %v3900
        %4165 = vmatprep.subr.mxu0 0.0
        %4166 = vmatpush2.msra.mxu0 %v3899
        %4167 = vmatprep.subr.mxu0 0.0
        %4168 = vmatpush2.msra.mxu0 %v3898
        %4169 = vmatprep.subr.mxu0 0.0
        %4170 = vmatpush2.msra.mxu0 %v3897
        %4171 = vmatprep.subr.mxu0 0.0
        %4172 = vmatpush2.msra.mxu0 %v3896
        %4173 = vmatprep.subr.mxu0 0.0
        %4174 = vmatpush2.msra.mxu0 %v3895
        %4175 = vmatprep.mubr.f32.mxu0 %v4108
        %4176 = vmatmul.mubr.f32.gmra.mxu0 %v4107
        %v4177 = vpop.f32.mrf.mxu0
        %v4178 = vadd.f32 0.0, %v4177
        %v4179 = vpop.f32.mrf.mxu0
        %4180 = vdwg.mxu0
        %4181 = vmatprep.subr.mxu0 0.0
        %4182 = vmatpush1.msra.mxu0 %v3926
        %4183 = vmatprep.subr.mxu0 0.0
        %4184 = vmatpush1.msra.mxu0 %v3925
        %4185 = vmatprep.subr.mxu0 0.0
        %4186 = vmatpush1.msra.mxu0 %v3924
        %4187 = vmatprep.subr.mxu0 0.0
        %4188 = vmatpush1.msra.mxu0 %v3923
        %4189 = vmatprep.subr.mxu0 0.0
        %4190 = vmatpush1.msra.mxu0 %v3922
        %4191 = vmatprep.subr.mxu0 0.0
        %4192 = vmatpush1.msra.mxu0 %v3921
        %4193 = vmatprep.subr.mxu0 0.0
        %4194 = vmatpush1.msra.mxu0 %v3920
        %4195 = vmatprep.subr.mxu0 0.0
        %4196 = vmatpush1.msra.mxu0 %v3919
        %4197 = vmatprep.subr.mxu0 0.0
        %4198 = vmatpush1.msra.mxu0 %v3918
        %4199 = vmatprep.subr.mxu0 0.0
        %4200 = vmatpush1.msra.mxu0 %v3917
        %4201 = vmatprep.subr.mxu0 0.0
        %4202 = vmatpush1.msra.mxu0 %v3916
        %4203 = vmatprep.subr.mxu0 0.0
        %4204 = vmatpush1.msra.mxu0 %v3915
        %4205 = vmatprep.subr.mxu0 0.0
        %4206 = vmatpush1.msra.mxu0 %v3914
        %4207 = vmatprep.subr.mxu0 0.0
        %4208 = vmatpush1.msra.mxu0 %v3913
        %4209 = vmatprep.subr.mxu0 0.0
        %4210 = vmatpush1.msra.mxu0 %v3912
        %4211 = vmatprep.subr.mxu0 0.0
        %4212 = vmatpush1.msra.mxu0 %v3911
        %4213 = vmatprep.subr.mxu0 0.0
        %4214 = vmatpush2.msra.mxu0 %v3942
        %4215 = vmatprep.subr.mxu0 0.0
        %4216 = vmatpush2.msra.mxu0 %v3941
        %4217 = vmatprep.subr.mxu0 0.0
        %4218 = vmatpush2.msra.mxu0 %v3940
        %4219 = vmatprep.subr.mxu0 0.0
        %4220 = vmatpush2.msra.mxu0 %v3939
        %4221 = vmatprep.subr.mxu0 0.0
        %4222 = vmatpush2.msra.mxu0 %v3938
        %4223 = vmatprep.subr.mxu0 0.0
        %4224 = vmatpush2.msra.mxu0 %v3937
        %4225 = vmatprep.subr.mxu0 0.0
        %4226 = vmatpush2.msra.mxu0 %v3936
        %4227 = vmatprep.subr.mxu0 0.0
        %4228 = vmatpush2.msra.mxu0 %v3935
        %4229 = vmatprep.subr.mxu0 0.0
        %4230 = vmatpush2.msra.mxu0 %v3934
        %4231 = vmatprep.subr.mxu0 0.0
        %4232 = vmatpush2.msra.mxu0 %v3933
        %4233 = vmatprep.subr.mxu0 0.0
        %4234 = vmatpush2.msra.mxu0 %v3932
        %4235 = vmatprep.subr.mxu0 0.0
        %4236 = vmatpush2.msra.mxu0 %v3931
        %4237 = vmatprep.subr.mxu0 0.0
        %4238 = vmatpush2.msra.mxu0 %v3930
        %4239 = vmatprep.subr.mxu0 0.0
        %4240 = vmatpush2.msra.mxu0 %v3929
        %4241 = vmatprep.subr.mxu0 0.0
        %4242 = vmatpush2.msra.mxu0 %v3928
        %4243 = vmatprep.subr.mxu0 0.0
        %4244 = vmatpush2.msra.mxu0 %v3927
        %4245 = vmatprep.mubr.f32.mxu0 %v4110
        %4246 = vmatmul.mubr.f32.gmra.mxu0 %v4109
        %v4247 = vpop.f32.mrf.mxu0
        %v4248 = vadd.f32 %v4178, %v4247
        %v4249 = vpop.f32.mrf.mxu0
        %4250 = vdwg.mxu0
        %v4251 = vadd.f32 %v3780, %v4248
        %v4252 = vld [vmem:[%s45] sm:$0x1]
        %v4254 = vlaneseq
        %v4255 = vshrl.u32 %v4254, 7
        %v4256 = vsub.s32 0, %v4255
        %v4257 = vrot.slane %v4252, %v4256
        %v4259 = vadd.f32 %v4251, %v4257
        %4260 = vst [vmem:[%s1153] sm:$0xff] %v4259
        %s4261 = sand.u32 %s732, 1
        %s4262 = scalar_lea.sflag [#allocation4], %s4261
        %s4263 = sand.u32 %s732, 1
        %s4264 = smul.addr %s4263, 8
        %s4265 = scalar_lea.vmem [#allocation23], %s4264
        // Predicated region
        $region189: #{tpu_custom_call.1} parent=135 // pred_check
          %p4266 = pneg %p742
        $region190: #{tpu_custom_call.1} parent=135 // pred_check_branch
          %4268 = sbr.rel (%p4266) target = $region192
        $region191: #{tpu_custom_call.1} parent=135 // pred_region
          %s4270 = ssub.s32 128, 128
          %4271 = vsyncadd %s4262, %s4270
          %s4272 = sadd.s32 %s89, %s88
          %s4273 = smul.addr %s4272, 128
          %s4274 = scalar_lea.hbm %s59, %s4273
          %s4276 = sshll.u32 %s4265, 4
          %s4277 = int_to_ptr.vmem [resolvable:$true] %s4276
          %4279 = dma.vmem_to_hbm [thread:$0]  %s4277, 128, %s4274, %s4262
        $region192: #{tpu_custom_call.1} parent=135 // pred_fallthru
          _
      $region136: #{tpu_custom_call.1} parent=5 // pred_fallthru
        _
      %p4280 = scmp.le.s32.totalorder 2, %s79
      // Predicated region
      $region193: #{tpu_custom_call.1} parent=5 // pred_check
        %p4281 = pneg %p4280
      $region194: #{tpu_custom_call.1} parent=5 // pred_check_branch
        %4283 = sbr.rel (%p4281) target = $region196
      $region195: #{tpu_custom_call.1} parent=5 // pred_region
        %s4284 = ssub.s32 %s79, 2
        // Predicated region
        $region197: #{tpu_custom_call.1} parent=195 // pred_check
          %p4285 = pneg %p748
        $region198: #{tpu_custom_call.1} parent=195 // pred_check_branch
          %4287 = sbr.rel (%p4285) target = $region200
        $region199: #{tpu_custom_call.1} parent=195 // pred_region
          %s4288 = sand.u32 %s733, 1
          %s4289 = scalar_lea.sflag [#allocation4], %s4288
          %s4290 = sand.u32 %s733, 1
          %s4291 = smul.addr %s4290, 8
          %s4292 = scalar_lea.vmem [#allocation23], %s4291
          %4293 = dma.done %s4289, 128
        $region200: #{tpu_custom_call.1} parent=195 // pred_fallthru
          _
      $region196: #{tpu_custom_call.1} parent=5 // pred_fallthru
        _
    $region6: #{tpu_custom_call.1} parent=1 // loop_footer
      %s83 = sadd.s32 1, %s79
    $region7: #{tpu_custom_call.1} parent=1 // loop_footer_branch
      %78 = sbr.rel target = $region3
    $region8: #{tpu_custom_call.1} parent=1 // loop_exit
      _
    %4294 = vsyncpa [#allocation3], 1
    %s4295 = scalar_lea.sflag [#allocation3], 1
    %4296 = vsyncpa %s4295, 1
    %4297 = vsyncpa [#allocation6], 1
    %s4298 = scalar_lea.sflag [#allocation6], 1
    %4299 = vsyncpa %s4298, 1
    %4300 = vsyncpa [#allocation9], 1
    %4301 = vsyncpa [#allocation12], 1
    %4302 = vsyncpa [#allocation15], 1
    %4303 = vsyncpa [#allocation18], 1
    %4304 = vsyncpa [#allocation21], 1
    %4305 = vsyncpa [#allocation4], 1
    %s4306 = scalar_lea.sflag [#allocation4], 1
    %4307 = vsyncpa %s4306, 1

// kernel: tpu_custom_call.1
$region0: #{tpu_custom_call.1}
  #allocation0 [shape = 'u32[]', space=smem, size = 0x4, offset = 0x4, fixed_abs, tag = 'smem constant byte address 0x4 - core index']
  #allocation1 [shape = 'u32[144,128]{1,0:T(1,128)}', space=vmem, size = 0x12000, scoped, tag = 'internal scratch']
  %s0 = inlined_call_operand.smem [shape: u32[30], index: -1, kind: input, shape index: {}]
  %s1 = sld [smem:[%s0]]
  %s2 = scalar_lea.smem %s0, 1
  %s3 = sld [smem:[%s2]]
  %s4 = scalar_lea.smem %s0, 2
  %s5 = sld [smem:[%s4]]
  %s6 = scalar_lea.smem %s0, 3
  %s7 = sld [smem:[%s6]]
  %s8 = scalar_lea.smem %s0, 4
  %s9 = sld [smem:[%s8]]
  %s10 = scalar_lea.smem %s0, 5
  %s11 = sld [smem:[%s10]]
  %s12 = scalar_lea.smem %s0, 6
  %s13 = sld [smem:[%s12]]
  %s14 = scalar_lea.smem %s0, 7
  %s15 = sld [smem:[%s14]]
  %s16 = scalar_lea.smem %s0, 8
  %s17 = sld [smem:[%s16]]
  %s18 = scalar_lea.smem %s0, 9
  %s19 = sld [smem:[%s18]]
  %s20 = scalar_lea.smem %s0, 10
  %s21 = sld [smem:[%s20]]
  %s22 = scalar_lea.smem %s0, 11
  %s23 = sld [smem:[%s22]]
  %s24 = scalar_lea.smem %s0, 12
  %s25 = sld [smem:[%s24]]
  %s26 = scalar_lea.smem %s0, 13
  %s27 = sld [smem:[%s26]]
  %s28 = scalar_lea.smem %s0, 14
  %s29 = sld [smem:[%s28]]
  %s30 = scalar_lea.smem %s0, 15
  %s31 = sld [smem:[%s30]]
  %s32 = scalar_lea.smem %s0, 16
  %s33 = sld [smem:[%s32]]
  %s34 = scalar_lea.smem %s0, 17
  %s35 = sld [smem:[%s34]]
  %s36 = scalar_lea.smem %s0, 18
  %s37 = sld [smem:[%s36]]
  %s38 = scalar_lea.smem %s0, 19
  %s39 = sld [smem:[%s38]]
  %s40 = scalar_lea.smem %s0, 20
  %s41 = sld [smem:[%s40]]
  %s42 = scalar_lea.smem %s0, 21
  %s43 = sld [smem:[%s42]]
  %s44 = scalar_lea.smem %s0, 22
  %s45 = sld [smem:[%s44]]
  %s46 = scalar_lea.smem %s0, 23
  %s47 = sld [smem:[%s46]]
  %s48 = scalar_lea.smem %s0, 24
  %s49 = sld [smem:[%s48]]
  %s50 = scalar_lea.smem %s0, 25
  %s51 = sld [smem:[%s50]]
  %s52 = scalar_lea.smem %s0, 26
  %s53 = sld [smem:[%s52]]
  %s54 = scalar_lea.smem %s0, 27
  %s55 = sld [smem:[%s54]]
  %s56 = scalar_lea.smem %s0, 28
  %s57 = sld [smem:[%s56]]
  %s58 = scalar_lea.smem %s0, 29
  %s59 = sld [smem:[%s58]]
  %s60 = sld [smem:[#allocation0]]
  $region201: #{tpu_custom_call.1} parent=0
    _
  %s62 = ssub.s32 1, %s60
  %s63 = scalar_select 0, %s62, %s60
  $region1: #{tpu_custom_call.1} parent=0
    #allocation2 [shape = 'u8[8192]{0}', space=vmem, size = 0x2000, scoped, tag = 'input window, operand 0']
    #allocation3 [shape = 's32[2]{0}', space=sflag, size = 0x8, scoped, tag = 'scoped memory for tpu_custom_call.1']
    #allocation4 [shape = 's32[2]{0}', space=sflag, size = 0x8, scoped, tag = 'scoped memory for tpu_custom_call.1']
    #allocation5 [shape = 'u8[8192]{0}', space=vmem, size = 0x2000, scoped, tag = 'input window, operand 1']
    #allocation6 [shape = 's32[2]{0}', space=sflag, size = 0x8, scoped, tag = 'scoped memory for tpu_custom_call.1']
    #allocation7 [shape = 'u8[16384]{0}', space=vmem, size = 0x4000, scoped, tag = 'input window, operand 2']
    #allocation8 [shape = 'u8[65536]{0}', space=vmem, size = 0x10000, scoped, tag = 'input window, operand 3, single buffered']
    #allocation9 [shape = 's32[1]{0}', space=sflag, size = 0x4, scoped, tag = 'scoped memory for tpu_custom_call.1']
    #allocation10 [shape = 'u8[65536]{0}', space=vmem, size = 0x10000, scoped, tag = 'input window, operand 5, single buffered']
    #allocation11 [shape = 'u8[65536]{0}', space=vmem, size = 0x10000, scoped, tag = 'input window, operand 7, single buffered']
    #allocation12 [shape = 's32[1]{0}', space=sflag, size = 0x4, scoped, tag = 'scoped memory for tpu_custom_call.1']
    #allocation13 [shape = 'u8[65536]{0}', space=vmem, size = 0x10000, scoped, tag = 'input window, operand 9, single buffered']
    #allocation14 [shape = 'u8[65536]{0}', space=vmem, size = 0x10000, scoped, tag = 'input window, operand 11, single buffered']
    #allocation15 [shape = 's32[1]{0}', space=sflag, size = 0x4, scoped, tag = 'scoped memory for tpu_custom_call.1']
    #allocation16 [shape = 'u8[65536]{0}', space=vmem, size = 0x10000, scoped, tag = 'input window, operand 13, single buffered']
    #allocation17 [shape = 'u8[65536]{0}', space=vmem, size = 0x10000, scoped, tag = 'input window, operand 15, single buffered']
    #allocation18 [shape = 's32[1]{0}', space=sflag, size = 0x4, scoped, tag = 'scoped memory for tpu_custom_call.1']
    #allocation19 [shape = 'u8[65536]{0}', space=vmem, size = 0x10000, scoped, tag = 'input window, operand 17, single buffered']
    #allocation20 [shape = 'u8[262144]{0}', space=vmem, size = 0x40000, scoped, tag = 'input window, operand 19, single buffered']
    #allocation21 [shape = 's32[1]{0}', space=sflag, size = 0x4, scoped, tag = 'scoped memory for tpu_custom_call.1']
    #allocation22 [shape = 'u8[262144]{0}', space=vmem, size = 0x40000, scoped, tag = 'input window, operand 21, single buffered']
    #allocation23 [shape = 'u8[8192]{0}', space=vmem, size = 0x2000, scoped, tag = 'output window, operand 0']
    %64 = vsyncpa [#allocation3], 0
    %s65 = scalar_lea.sflag [#allocation3], 1
    %66 = vsyncpa %s65, 0
    %67 = vsyncpa [#allocation6], 0
    %s68 = scalar_lea.sflag [#allocation6], 1
    %69 = vsyncpa %s68, 0
    %70 = vsyncpa [#allocation9], 0
    %71 = vsyncpa [#allocation12], 0
    %72 = vsyncpa [#allocation15], 0
    %73 = vsyncpa [#allocation18], 0
    %74 = vsyncpa [#allocation21], 0
    %75 = vsyncpa [#allocation4], 0
    %s76 = scalar_lea.sflag [#allocation4], 1
    %77 = vsyncpa %s76, 0
    loop: start=0, step=1, limit=4
    $region2: #{tpu_custom_call.1} parent=1 // loop_pre_header
      _
    $region3: #{tpu_custom_call.1} parent=1 // loop_header
      %s79 = sphi 0, %s83
      %p80 = scmp.ge.s32.totalorder %s79, 4
      %s86 = sphi 0, %s98
      %s87 = sphi 0, %s94
      %s88 = sphi 0, %s86
      %s89 = sphi 0, %s87
      %s90 = sphi 0, %s88
      %s91 = sphi 0, %s89
      %s103 = sphi 0, %s105
      %s106 = sphi 0, %s103
      %s107 = sphi 0, %s106
      %s123 = sphi 0, %s107
      %s129 = sphi 0, %s131
      %s132 = sphi 0, %s129
      %s133 = sphi 0, %s132
      %s149 = sphi 0, %s133
      %s155 = sphi 0, %s157
      %s158 = sphi 0, %s155
      %s159 = sphi 0, %s158
      %s175 = sphi 0, %s159
      %s179 = sphi 0, %s179
      %s181 = sphi 0, %s179
      %s182 = sphi 0, %s181
      %s196 = sphi 0, %s182
      %s200 = sphi 0, %s200
      %s202 = sphi 0, %s200
      %s203 = sphi 0, %s202
      %s217 = sphi 0, %s203
      %s221 = sphi 0, %s221
      %s223 = sphi 0, %s221
      %s224 = sphi 0, %s223
      %s238 = sphi 0, %s224
      %s242 = sphi 0, %s242
      %s244 = sphi 0, %s242
      %s245 = sphi 0, %s244
      %s259 = sphi 0, %s245
      %s263 = sphi 0, %s263
      %s265 = sphi 0, %s263
      %s266 = sphi 0, %s265
      %s280 = sphi 0, %s266
      %s284 = sphi 0, %s284
      %s286 = sphi 0, %s284
      %s287 = sphi 0, %s286
      %s301 = sphi 0, %s287
      %s305 = sphi 0, %s305
      %s307 = sphi 0, %s305
      %s308 = sphi 0, %s307
      %s322 = sphi 0, %s308
      %s326 = sphi 0, %s326
      %s328 = sphi 0, %s326
      %s329 = sphi 0, %s328
      %s343 = sphi 0, %s329
      %s347 = sphi 0, %s347
      %s349 = sphi 0, %s347
      %s350 = sphi 0, %s349
      %s364 = sphi 0, %s350
      %s368 = sphi 0, %s368
      %s370 = sphi 0, %s368
      %s371 = sphi 0, %s370
      %s385 = sphi 0, %s371
      %s389 = sphi 0, %s389
      %s391 = sphi 0, %s389
      %s392 = sphi 0, %s391
      %s406 = sphi 0, %s392
      %s410 = sphi 0, %s410
      %s412 = sphi 0, %s410
      %s413 = sphi 0, %s412
      %s427 = sphi 0, %s413
      %s431 = sphi 0, %s431
      %s433 = sphi 0, %s431
      %s434 = sphi 0, %s433
      %s448 = sphi 0, %s434
      %s452 = sphi 0, %s452
      %s454 = sphi 0, %s452
      %s455 = sphi 0, %s454
      %s469 = sphi 0, %s455
      %s473 = sphi 0, %s473
      %s475 = sphi 0, %s473
      %s476 = sphi 0, %s475
      %s490 = sphi 0, %s476
      %s494 = sphi 0, %s494
      %s496 = sphi 0, %s494
      %s497 = sphi 0, %s496
      %s511 = sphi 0, %s497
      %s515 = sphi 0, %s515
      %s517 = sphi 0, %s515
      %s518 = sphi 0, %s517
      %s532 = sphi 0, %s518
      %s536 = sphi 0, %s536
      %s538 = sphi 0, %s536
      %s539 = sphi 0, %s538
      %s553 = sphi 0, %s539
      %s557 = sphi 0, %s557
      %s559 = sphi 0, %s557
      %s560 = sphi 0, %s559
      %s574 = sphi 0, %s560
      %s578 = sphi 0, %s578
      %s580 = sphi 0, %s578
      %s581 = sphi 0, %s580
      %s595 = sphi 0, %s581
      %s599 = sphi 0, %s599
      %s601 = sphi 0, %s599
      %s602 = sphi 0, %s601
      %s616 = sphi 0, %s602
      %s620 = sphi 0, %s620
      %s622 = sphi 0, %s620
      %s623 = sphi 0, %s622
      %s637 = sphi 0, %s623
      %s641 = sphi 0, %s641
      %s643 = sphi 0, %s641
      %s644 = sphi 0, %s643
      %s658 = sphi 0, %s644
      %s662 = sphi 0, %s662
      %s664 = sphi 0, %s662
      %s665 = sphi 0, %s664
      %s679 = sphi 0, %s665
      %s683 = sphi 0, %s683
      %s685 = sphi 0, %s683
      %s686 = sphi 0, %s685
      %s700 = sphi 0, %s686
      %s704 = sphi 0, %s704
      %s706 = sphi 0, %s704
      %s707 = sphi 0, %s706
      %s721 = sphi 0, %s707
      %s729 = sphi 0, %s731
      %s732 = sphi 0, %s729
      %s733 = sphi 0, %s732
      %s749 = sphi 0, %s733
    $region4: #{tpu_custom_call.1} parent=1 // loop_header_branch
      %82 = sbr.rel (%p80) target = $region8
    $region5: #{tpu_custom_call.1} parent=1 // loop_body
      %s84 = ssub.s32 %s79, 1
      %s85 = ssub.s32 %s79, 2
      %s92 = sadd.s32 1, %s87
      %p93 = scmp.ge.s32.totalorder %s92, 1
      %s94 = scalar_select %p93, 0, %s92
      %s95 = sadd.s32 1, %s86
      %s96 = scalar_select %p93, %s95, %s86
      %p97 = scmp.ge.s32.totalorder %s96, 2
      %s98 = scalar_select %p97, 0, %s96
      %s99 = ssub.s32 %s86, %s98
      %s100 = ssub.s32 %s87, %s94
      %s101 = sor.u32 %s99, %s100
      %p102 = scmp.eq.s32.totalorder %s101, 0
      %s104 = sadd.s32 %s103, 1
      %s105 = scalar_select %p102, %s103, %s104
      %p108 = pneg %p102
      %p109 = scmp.eq.s32.totalorder %s79, 1
      %p110 = por %p108, %p109
      %p111 = scmp.ne.s32.totalorder %s103, %s106
      %p112 = scmp.eq.s32.totalorder %s79, 0
      %p113 = por %p111, %p112
      %p114 = scmp.ne.s32.totalorder %s103, %s106
      %p115 = scmp.eq.s32.totalorder %s84, 1
      %p116 = por %p114, %p115
      %p117 = scmp.ne.s32.totalorder %s106, %s107
      %p118 = scmp.eq.s32.totalorder %s84, 0
      %p119 = por %p117, %p118
      %p120 = scmp.ne.s32.totalorder %s106, %s107
      %p121 = scmp.eq.s32.totalorder %s85, 1
      %p122 = por %p120, %p121
      %p124 = scmp.ne.s32.totalorder %s107, %s123
      %p125 = scmp.eq.s32.totalorder %s85, 0
      %p126 = por %p124, %p125
      %s127 = ssub.s32 %s86, %s98
      %p128 = scmp.eq.s32.totalorder %s127, 0
      %s130 = sadd.s32 %s129, 1
      %s131 = scalar_select %p128, %s129, %s130
      %p134 = pneg %p128
      %p135 = scmp.eq.s32.totalorder %s79, 1
      %p136 = por %p134, %p135
      %p137 = scmp.ne.s32.totalorder %s129, %s132
      %p138 = scmp.eq.s32.totalorder %s79, 0
      %p139 = por %p137, %p138
      %p140 = scmp.ne.s32.totalorder %s129, %s132
      %p141 = scmp.eq.s32.totalorder %s84, 1
      %p142 = por %p140, %p141
      %p143 = scmp.ne.s32.totalorder %s132, %s133
      %p144 = scmp.eq.s32.totalorder %s84, 0
      %p145 = por %p143, %p144
      %p146 = scmp.ne.s32.totalorder %s132, %s133
      %p147 = scmp.eq.s32.totalorder %s85, 1
      %p148 = por %p146, %p147
      %p150 = scmp.ne.s32.totalorder %s133, %s149
      %p151 = scmp.eq.s32.totalorder %s85, 0
      %p152 = por %p150, %p151
      %s153 = ssub.s32 %s86, %s98
      %p154 = scmp.eq.s32.totalorder %s153, 0
      %s156 = sadd.s32 %s155, 1
      %s157 = scalar_select %p154, %s155, %s156
      %p160 = pneg %p154
      %p161 = scmp.eq.s32.totalorder %s79, 1
      %p162 = por %p160, %p161
      %p163 = scmp.ne.s32.totalorder %s155, %s158
      %p164 = scmp.eq.s32.totalorder %s79, 0
      %p165 = por %p163, %p164
      %p166 = scmp.ne.s32.totalorder %s155, %s158
      %p167 = scmp.eq.s32.totalorder %s84, 1
      %p168 = por %p166, %p167
      %p169 = scmp.ne.s32.totalorder %s158, %s159
      %p170 = scmp.eq.s32.totalorder %s84, 0
      %p171 = por %p169, %p170
      %p172 = scmp.ne.s32.totalorder %s158, %s159
      %p173 = scmp.eq.s32.totalorder %s85, 1
      %p174 = por %p172, %p173
      %p176 = scmp.ne.s32.totalorder %s159, %s175
      %p177 = scmp.eq.s32.totalorder %s85, 0
      %p178 = por %p176, %p177
      %s180 = sadd.s32 %s179, 1
      %p183 = scmp.eq.s32.totalorder %s79, 1
      %p184 = scmp.ne.s32.totalorder %s179, %s181
      %p185 = scmp.eq.s32.totalorder %s79, 0
      %p186 = por %p184, %p185
      %p187 = scmp.ne.s32.totalorder %s179, %s181
      %p188 = scmp.eq.s32.totalorder %s84, 1
      %p189 = por %p187, %p188
      %p190 = scmp.ne.s32.totalorder %s181, %s182
      %p191 = scmp.eq.s32.totalorder %s84, 0
      %p192 = por %p190, %p191
      %p193 = scmp.ne.s32.totalorder %s181, %s182
      %p194 = scmp.eq.s32.totalorder %s85, 1
      %p195 = por %p193, %p194
      %p197 = scmp.ne.s32.totalorder %s182, %s196
      %p198 = scmp.eq.s32.totalorder %s85, 0
      %p199 = por %p197, %p198
      %s201 = sadd.s32 %s200, 1
      %p204 = scmp.eq.s32.totalorder %s79, 1
      %p205 = scmp.ne.s32.totalorder %s200, %s202
      %p206 = scmp.eq.s32.totalorder %s79, 0
      %p207 = por %p205, %p206
      %p208 = scmp.ne.s32.totalorder %s200, %s202
      %p209 = scmp.eq.s32.totalorder %s84, 1
      %p210 = por %p208, %p209
      %p211 = scmp.ne.s32.totalorder %s202, %s203
      %p212 = scmp.eq.s32.totalorder %s84, 0
      %p213 = por %p211, %p212
      %p214 = scmp.ne.s32.totalorder %s202, %s203
      %p215 = scmp.eq.s32.totalorder %s85, 1
      %p216 = por %p214, %p215
      %p218 = scmp.ne.s32.totalorder %s203, %s217
      %p219 = scmp.eq.s32.totalorder %s85, 0
      %p220 = por %p218, %p219
      %s222 = sadd.s32 %s221, 1
      %p225 = scmp.eq.s32.totalorder %s79, 1
      %p226 = scmp.ne.s32.totalorder %s221, %s223
      %p227 = scmp.eq.s32.totalorder %s79, 0
      %p228 = por %p226, %p227
      %p229 = scmp.ne.s32.totalorder %s221, %s223
      %p230 = scmp.eq.s32.totalorder %s84, 1
      %p231 = por %p229, %p230
      %p232 = scmp.ne.s32.totalorder %s223, %s224
      %p233 = scmp.eq.s32.totalorder %s84, 0
      %p234 = por %p232, %p233
      %p235 = scmp.ne.s32.totalorder %s223, %s224
      %p236 = scmp.eq.s32.totalorder %s85, 1
      %p237 = por %p235, %p236
      %p239 = scmp.ne.s32.totalorder %s224, %s238
      %p240 = scmp.eq.s32.totalorder %s85, 0
      %p241 = por %p239, %p240
      %s243 = sadd.s32 %s242, 1
      %p246 = scmp.eq.s32.totalorder %s79, 1
      %p247 = scmp.ne.s32.totalorder %s242, %s244
      %p248 = scmp.eq.s32.totalorder %s79, 0
      %p249 = por %p247, %p248
      %p250 = scmp.ne.s32.totalorder %s242, %s244
      %p251 = scmp.eq.s32.totalorder %s84, 1
      %p252 = por %p250, %p251
      %p253 = scmp.ne.s32.totalorder %s244, %s245
      %p254 = scmp.eq.s32.totalorder %s84, 0
      %p255 = por %p253, %p254
      %p256 = scmp.ne.s32.totalorder %s244, %s245
      %p257 = scmp.eq.s32.totalorder %s85, 1
      %p258 = por %p256, %p257
      %p260 = scmp.ne.s32.totalorder %s245, %s259
      %p261 = scmp.eq.s32.totalorder %s85, 0
      %p262 = por %p260, %p261
      %s264 = sadd.s32 %s263, 1
      %p267 = scmp.eq.s32.totalorder %s79, 1
      %p268 = scmp.ne.s32.totalorder %s263, %s265
      %p269 = scmp.eq.s32.totalorder %s79, 0
      %p270 = por %p268, %p269
      %p271 = scmp.ne.s32.totalorder %s263, %s265
      %p272 = scmp.eq.s32.totalorder %s84, 1
      %p273 = por %p271, %p272
      %p274 = scmp.ne.s32.totalorder %s265, %s266
      %p275 = scmp.eq.s32.totalorder %s84, 0
      %p276 = por %p274, %p275
      %p277 = scmp.ne.s32.totalorder %s265, %s266
      %p278 = scmp.eq.s32.totalorder %s85, 1
      %p279 = por %p277, %p278
      %p281 = scmp.ne.s32.totalorder %s266, %s280
      %p282 = scmp.eq.s32.totalorder %s85, 0
      %p283 = por %p281, %p282
      %s285 = sadd.s32 %s284, 1
      %p288 = scmp.eq.s32.totalorder %s79, 1
      %p289 = scmp.ne.s32.totalorder %s284, %s286
      %p290 = scmp.eq.s32.totalorder %s79, 0
      %p291 = por %p289, %p290
      %p292 = scmp.ne.s32.totalorder %s284, %s286
      %p293 = scmp.eq.s32.totalorder %s84, 1
      %p294 = por %p292, %p293
      %p295 = scmp.ne.s32.totalorder %s286, %s287
      %p296 = scmp.eq.s32.totalorder %s84, 0
      %p297 = por %p295, %p296
      %p298 = scmp.ne.s32.totalorder %s286, %s287
      %p299 = scmp.eq.s32.totalorder %s85, 1
      %p300 = por %p298, %p299
      %p302 = scmp.ne.s32.totalorder %s287, %s301
      %p303 = scmp.eq.s32.totalorder %s85, 0
      %p304 = por %p302, %p303
      %s306 = sadd.s32 %s305, 1
      %p309 = scmp.eq.s32.totalorder %s79, 1
      %p310 = scmp.ne.s32.totalorder %s305, %s307
      %p311 = scmp.eq.s32.totalorder %s79, 0
      %p312 = por %p310, %p311
      %p313 = scmp.ne.s32.totalorder %s305, %s307
      %p314 = scmp.eq.s32.totalorder %s84, 1
      %p315 = por %p313, %p314
      %p316 = scmp.ne.s32.totalorder %s307, %s308
      %p317 = scmp.eq.s32.totalorder %s84, 0
      %p318 = por %p316, %p317
      %p319 = scmp.ne.s32.totalorder %s307, %s308
      %p320 = scmp.eq.s32.totalorder %s85, 1
      %p321 = por %p319, %p320
      %p323 = scmp.ne.s32.totalorder %s308, %s322
      %p324 = scmp.eq.s32.totalorder %s85, 0
      %p325 = por %p323, %p324
      %s327 = sadd.s32 %s326, 1
      %p330 = scmp.eq.s32.totalorder %s79, 1
      %p331 = scmp.ne.s32.totalorder %s326, %s328
      %p332 = scmp.eq.s32.totalorder %s79, 0
      %p333 = por %p331, %p332
      %p334 = scmp.ne.s32.totalorder %s326, %s328
      %p335 = scmp.eq.s32.totalorder %s84, 1
      %p336 = por %p334, %p335
      %p337 = scmp.ne.s32.totalorder %s328, %s329
      %p338 = scmp.eq.s32.totalorder %s84, 0
      %p339 = por %p337, %p338
      %p340 = scmp.ne.s32.totalorder %s328, %s329
      %p341 = scmp.eq.s32.totalorder %s85, 1
      %p342 = por %p340, %p341
      %p344 = scmp.ne.s32.totalorder %s329, %s343
      %p345 = scmp.eq.s32.totalorder %s85, 0
      %p346 = por %p344, %p345
      %s348 = sadd.s32 %s347, 1
      %p351 = scmp.eq.s32.totalorder %s79, 1
      %p352 = scmp.ne.s32.totalorder %s347, %s349
      %p353 = scmp.eq.s32.totalorder %s79, 0
      %p354 = por %p352, %p353
      %p355 = scmp.ne.s32.totalorder %s347, %s349
      %p356 = scmp.eq.s32.totalorder %s84, 1
      %p357 = por %p355, %p356
      %p358 = scmp.ne.s32.totalorder %s349, %s350
      %p359 = scmp.eq.s32.totalorder %s84, 0
      %p360 = por %p358, %p359
      %p361 = scmp.ne.s32.totalorder %s349, %s350
      %p362 = scmp.eq.s32.totalorder %s85, 1
      %p363 = por %p361, %p362
      %p365 = scmp.ne.s32.totalorder %s350, %s364
      %p366 = scmp.eq.s32.totalorder %s85, 0
      %p367 = por %p365, %p366
      %s369 = sadd.s32 %s368, 1
      %p372 = scmp.eq.s32.totalorder %s79, 1
      %p373 = scmp.ne.s32.totalorder %s368, %s370
      %p374 = scmp.eq.s32.totalorder %s79, 0
      %p375 = por %p373, %p374
      %p376 = scmp.ne.s32.totalorder %s368, %s370
      %p377 = scmp.eq.s32.totalorder %s84, 1
      %p378 = por %p376, %p377
      %p379 = scmp.ne.s32.totalorder %s370, %s371
      %p380 = scmp.eq.s32.totalorder %s84, 0
      %p381 = por %p379, %p380
      %p382 = scmp.ne.s32.totalorder %s370, %s371
      %p383 = scmp.eq.s32.totalorder %s85, 1
      %p384 = por %p382, %p383
      %p386 = scmp.ne.s32.totalorder %s371, %s385
      %p387 = scmp.eq.s32.totalorder %s85, 0
      %p388 = por %p386, %p387
      %s390 = sadd.s32 %s389, 1
      %p393 = scmp.eq.s32.totalorder %s79, 1
      %p394 = scmp.ne.s32.totalorder %s389, %s391
      %p395 = scmp.eq.s32.totalorder %s79, 0
      %p396 = por %p394, %p395
      %p397 = scmp.ne.s32.totalorder %s389, %s391
      %p398 = scmp.eq.s32.totalorder %s84, 1
      %p399 = por %p397, %p398
      %p400 = scmp.ne.s32.totalorder %s391, %s392
      %p401 = scmp.eq.s32.totalorder %s84, 0
      %p402 = por %p400, %p401
      %p403 = scmp.ne.s32.totalorder %s391, %s392
      %p404 = scmp.eq.s32.totalorder %s85, 1
      %p405 = por %p403, %p404
      %p407 = scmp.ne.s32.totalorder %s392, %s406
      %p408 = scmp.eq.s32.totalorder %s85, 0
      %p409 = por %p407, %p408
      %s411 = sadd.s32 %s410, 1
      %p414 = scmp.eq.s32.totalorder %s79, 1
      %p415 = scmp.ne.s32.totalorder %s410, %s412
      %p416 = scmp.eq.s32.totalorder %s79, 0
      %p417 = por %p415, %p416
      %p418 = scmp.ne.s32.totalorder %s410, %s412
      %p419 = scmp.eq.s32.totalorder %s84, 1
      %p420 = por %p418, %p419
      %p421 = scmp.ne.s32.totalorder %s412, %s413
      %p422 = scmp.eq.s32.totalorder %s84, 0
      %p423 = por %p421, %p422
      %p424 = scmp.ne.s32.totalorder %s412, %s413
      %p425 = scmp.eq.s32.totalorder %s85, 1
      %p426 = por %p424, %p425
      %p428 = scmp.ne.s32.totalorder %s413, %s427
      %p429 = scmp.eq.s32.totalorder %s85, 0
      %p430 = por %p428, %p429
      %s432 = sadd.s32 %s431, 1
      %p435 = scmp.eq.s32.totalorder %s79, 1
      %p436 = scmp.ne.s32.totalorder %s431, %s433
      %p437 = scmp.eq.s32.totalorder %s79, 0
      %p438 = por %p436, %p437
      %p439 = scmp.ne.s32.totalorder %s431, %s433
      %p440 = scmp.eq.s32.totalorder %s84, 1
      %p441 = por %p439, %p440
      %p442 = scmp.ne.s32.totalorder %s433, %s434
      %p443 = scmp.eq.s32.totalorder %s84, 0
      %p444 = por %p442, %p443
      %p445 = scmp.ne.s32.totalorder %s433, %s434
      %p446 = scmp.eq.s32.totalorder %s85, 1
      %p447 = por %p445, %p446
      %p449 = scmp.ne.s32.totalorder %s434, %s448
      %p450 = scmp.eq.s32.totalorder %s85, 0
      %p451 = por %p449, %p450
      %s453 = sadd.s32 %s452, 1
      %p456 = scmp.eq.s32.totalorder %s79, 1
      %p457 = scmp.ne.s32.totalorder %s452, %s454
      %p458 = scmp.eq.s32.totalorder %s79, 0
      %p459 = por %p457, %p458
      %p460 = scmp.ne.s32.totalorder %s452, %s454
      %p461 = scmp.eq.s32.totalorder %s84, 1
      %p462 = por %p460, %p461
      %p463 = scmp.ne.s32.totalorder %s454, %s455
      %p464 = scmp.eq.s32.totalorder %s84, 0
      %p465 = por %p463, %p464
      %p466 = scmp.ne.s32.totalorder %s454, %s455
      %p467 = scmp.eq.s32.totalorder %s85, 1
      %p468 = por %p466, %p467
      %p470 = scmp.ne.s32.totalorder %s455, %s469
      %p471 = scmp.eq.s32.totalorder %s85, 0
      %p472 = por %p470, %p471
      %s474 = sadd.s32 %s473, 1
      %p477 = scmp.eq.s32.totalorder %s79, 1
      %p478 = scmp.ne.s32.totalorder %s473, %s475
      %p479 = scmp.eq.s32.totalorder %s79, 0
      %p480 = por %p478, %p479
      %p481 = scmp.ne.s32.totalorder %s473, %s475
      %p482 = scmp.eq.s32.totalorder %s84, 1
      %p483 = por %p481, %p482
      %p484 = scmp.ne.s32.totalorder %s475, %s476
      %p485 = scmp.eq.s32.totalorder %s84, 0
      %p486 = por %p484, %p485
      %p487 = scmp.ne.s32.totalorder %s475, %s476
      %p488 = scmp.eq.s32.totalorder %s85, 1
      %p489 = por %p487, %p488
      %p491 = scmp.ne.s32.totalorder %s476, %s490
      %p492 = scmp.eq.s32.totalorder %s85, 0
      %p493 = por %p491, %p492
      %s495 = sadd.s32 %s494, 1
      %p498 = scmp.eq.s32.totalorder %s79, 1
      %p499 = scmp.ne.s32.totalorder %s494, %s496
      %p500 = scmp.eq.s32.totalorder %s79, 0
      %p501 = por %p499, %p500
      %p502 = scmp.ne.s32.totalorder %s494, %s496
      %p503 = scmp.eq.s32.totalorder %s84, 1
      %p504 = por %p502, %p503
      %p505 = scmp.ne.s32.totalorder %s496, %s497
      %p506 = scmp.eq.s32.totalorder %s84, 0
      %p507 = por %p505, %p506
      %p508 = scmp.ne.s32.totalorder %s496, %s497
      %p509 = scmp.eq.s32.totalorder %s85, 1
      %p510 = por %p508, %p509
      %p512 = scmp.ne.s32.totalorder %s497, %s511
      %p513 = scmp.eq.s32.totalorder %s85, 0
      %p514 = por %p512, %p513
      %s516 = sadd.s32 %s515, 1
      %p519 = scmp.eq.s32.totalorder %s79, 1
      %p520 = scmp.ne.s32.totalorder %s515, %s517
      %p521 = scmp.eq.s32.totalorder %s79, 0
      %p522 = por %p520, %p521
      %p523 = scmp.ne.s32.totalorder %s515, %s517
      %p524 = scmp.eq.s32.totalorder %s84, 1
      %p525 = por %p523, %p524
      %p526 = scmp.ne.s32.totalorder %s517, %s518
      %p527 = scmp.eq.s32.totalorder %s84, 0
      %p528 = por %p526, %p527
      %p529 = scmp.ne.s32.totalorder %s517, %s518
      %p530 = scmp.eq.s32.totalorder %s85, 1
      %p531 = por %p529, %p530
      %p533 = scmp.ne.s32.totalorder %s518, %s532
      %p534 = scmp.eq.s32.totalorder %s85, 0
      %p535 = por %p533, %p534
      %s537 = sadd.s32 %s536, 1
      %p540 = scmp.eq.s32.totalorder %s79, 1
      %p541 = scmp.ne.s32.totalorder %s536, %s538
      %p542 = scmp.eq.s32.totalorder %s79, 0
      %p543 = por %p541, %p542
      %p544 = scmp.ne.s32.totalorder %s536, %s538
      %p545 = scmp.eq.s32.totalorder %s84, 1
      %p546 = por %p544, %p545
      %p547 = scmp.ne.s32.totalorder %s538, %s539
      %p548 = scmp.eq.s32.totalorder %s84, 0
      %p549 = por %p547, %p548
      %p550 = scmp.ne.s32.totalorder %s538, %s539
      %p551 = scmp.eq.s32.totalorder %s85, 1
      %p552 = por %p550, %p551
      %p554 = scmp.ne.s32.totalorder %s539, %s553
      %p555 = scmp.eq.s32.totalorder %s85, 0
      %p556 = por %p554, %p555
      %s558 = sadd.s32 %s557, 1
      %p561 = scmp.eq.s32.totalorder %s79, 1
      %p562 = scmp.ne.s32.totalorder %s557, %s559
      %p563 = scmp.eq.s32.totalorder %s79, 0
      %p564 = por %p562, %p563
      %p565 = scmp.ne.s32.totalorder %s557, %s559
      %p566 = scmp.eq.s32.totalorder %s84, 1
      %p567 = por %p565, %p566
      %p568 = scmp.ne.s32.totalorder %s559, %s560
      %p569 = scmp.eq.s32.totalorder %s84, 0
      %p570 = por %p568, %p569
      %p571 = scmp.ne.s32.totalorder %s559, %s560
      %p572 = scmp.eq.s32.totalorder %s85, 1
      %p573 = por %p571, %p572
      %p575 = scmp.ne.s32.totalorder %s560, %s574
      %p576 = scmp.eq.s32.totalorder %s85, 0
      %p577 = por %p575, %p576
      %s579 = sadd.s32 %s578, 1
      %p582 = scmp.eq.s32.totalorder %s79, 1
      %p583 = scmp.ne.s32.totalorder %s578, %s580
      %p584 = scmp.eq.s32.totalorder %s79, 0
      %p585 = por %p583, %p584
      %p586 = scmp.ne.s32.totalorder %s578, %s580
      %p587 = scmp.eq.s32.totalorder %s84, 1
      %p588 = por %p586, %p587
      %p589 = scmp.ne.s32.totalorder %s580, %s581
      %p590 = scmp.eq.s32.totalorder %s84, 0
      %p591 = por %p589, %p590
      %p592 = scmp.ne.s32.totalorder %s580, %s581
      %p593 = scmp.eq.s32.totalorder %s85, 1
      %p594 = por %p592, %p593
      %p596 = scmp.ne.s32.totalorder %s581, %s595
      %p597 = scmp.eq.s32.totalorder %s85, 0
      %p598 = por %p596, %p597
      %s600 = sadd.s32 %s599, 1
      %p603 = scmp.eq.s32.totalorder %s79, 1
      %p604 = scmp.ne.s32.totalorder %s599, %s601
      %p605 = scmp.eq.s32.totalorder %s79, 0
      %p606 = por %p604, %p605
      %p607 = scmp.ne.s32.totalorder %s599, %s601
      %p608 = scmp.eq.s32.totalorder %s84, 1
      %p609 = por %p607, %p608
      %p610 = scmp.ne.s32.totalorder %s601, %s602
      %p611 = scmp.eq.s32.totalorder %s84, 0
      %p612 = por %p610, %p611
      %p613 = scmp.ne.s32.totalorder %s601, %s602
      %p614 = scmp.eq.s32.totalorder %s85, 1
      %p615 = por %p613, %p614
      %p617 = scmp.ne.s32.totalorder %s602, %s616
      %p618 = scmp.eq.s32.totalorder %s85, 0
      %p619 = por %p617, %p618
      %s621 = sadd.s32 %s620, 1
      %p624 = scmp.eq.s32.totalorder %s79, 1
      %p625 = scmp.ne.s32.totalorder %s620, %s622
      %p626 = scmp.eq.s32.totalorder %s79, 0
      %p627 = por %p625, %p626
      %p628 = scmp.ne.s32.totalorder %s620, %s622
      %p629 = scmp.eq.s32.totalorder %s84, 1
      %p630 = por %p628, %p629
      %p631 = scmp.ne.s32.totalorder %s622, %s623
      %p632 = scmp.eq.s32.totalorder %s84, 0
      %p633 = por %p631, %p632
      %p634 = scmp.ne.s32.totalorder %s622, %s623
      %p635 = scmp.eq.s32.totalorder %s85, 1
      %p636 = por %p634, %p635
      %p638 = scmp.ne.s32.totalorder %s623, %s637
      %p639 = scmp.eq.s32.totalorder %s85, 0
      %p640 = por %p638, %p639
      %s642 = sadd.s32 %s641, 1
      %p645 = scmp.eq.s32.totalorder %s79, 1
      %p646 = scmp.ne.s32.totalorder %s641, %s643
      %p647 = scmp.eq.s32.totalorder %s79, 0
      %p648 = por %p646, %p647
      %p649 = scmp.ne.s32.totalorder %s641, %s643
      %p650 = scmp.eq.s32.totalorder %s84, 1
      %p651 = por %p649, %p650
      %p652 = scmp.ne.s32.totalorder %s643, %s644
      %p653 = scmp.eq.s32.totalorder %s84, 0
      %p654 = por %p652, %p653
      %p655 = scmp.ne.s32.totalorder %s643, %s644
      %p656 = scmp.eq.s32.totalorder %s85, 1
      %p657 = por %p655, %p656
      %p659 = scmp.ne.s32.totalorder %s644, %s658
      %p660 = scmp.eq.s32.totalorder %s85, 0
      %p661 = por %p659, %p660
      %s663 = sadd.s32 %s662, 1
      %p666 = scmp.eq.s32.totalorder %s79, 1
      %p667 = scmp.ne.s32.totalorder %s662, %s664
      %p668 = scmp.eq.s32.totalorder %s79, 0
      %p669 = por %p667, %p668
      %p670 = scmp.ne.s32.totalorder %s662, %s664
      %p671 = scmp.eq.s32.totalorder %s84, 1
      %p672 = por %p670, %p671
      %p673 = scmp.ne.s32.totalorder %s664, %s665
      %p674 = scmp.eq.s32.totalorder %s84, 0
      %p675 = por %p673, %p674
      %p676 = scmp.ne.s32.totalorder %s664, %s665
      %p677 = scmp.eq.s32.totalorder %s85, 1
      %p678 = por %p676, %p677
      %p680 = scmp.ne.s32.totalorder %s665, %s679
      %p681 = scmp.eq.s32.totalorder %s85, 0
      %p682 = por %p680, %p681
      %s684 = sadd.s32 %s683, 1
      %p687 = scmp.eq.s32.totalorder %s79, 1
      %p688 = scmp.ne.s32.totalorder %s683, %s685
      %p689 = scmp.eq.s32.totalorder %s79, 0
      %p690 = por %p688, %p689
      %p691 = scmp.ne.s32.totalorder %s683, %s685
      %p692 = scmp.eq.s32.totalorder %s84, 1
      %p693 = por %p691, %p692
      %p694 = scmp.ne.s32.totalorder %s685, %s686
      %p695 = scmp.eq.s32.totalorder %s84, 0
      %p696 = por %p694, %p695
      %p697 = scmp.ne.s32.totalorder %s685, %s686
      %p698 = scmp.eq.s32.totalorder %s85, 1
      %p699 = por %p697, %p698
      %p701 = scmp.ne.s32.totalorder %s686, %s700
      %p702 = scmp.eq.s32.totalorder %s85, 0
      %p703 = por %p701, %p702
      %s705 = sadd.s32 %s704, 1
      %p708 = scmp.eq.s32.totalorder %s79, 1
      %p709 = scmp.ne.s32.totalorder %s704, %s706
      %p710 = scmp.eq.s32.totalorder %s79, 0
      %p711 = por %p709, %p710
      %p712 = scmp.ne.s32.totalorder %s704, %s706
      %p713 = scmp.eq.s32.totalorder %s84, 1
      %p714 = por %p712, %p713
      %p715 = scmp.ne.s32.totalorder %s706, %s707
      %p716 = scmp.eq.s32.totalorder %s84, 0
      %p717 = por %p715, %p716
      %p718 = scmp.ne.s32.totalorder %s706, %s707
      %p719 = scmp.eq.s32.totalorder %s85, 1
      %p720 = por %p718, %p719
      %p722 = scmp.ne.s32.totalorder %s707, %s721
      %p723 = scmp.eq.s32.totalorder %s85, 0
      %p724 = por %p722, %p723
      %s725 = ssub.s32 %s86, %s98
      %s726 = ssub.s32 %s87, %s94
      %s727 = sor.u32 %s725, %s726
      %p728 = scmp.eq.s32.totalorder %s727, 0
      %s730 = sadd.s32 %s729, 1
      %s731 = scalar_select %p728, %s729, %s730
      %p734 = pneg %p728
      %p735 = scmp.eq.s32.totalorder %s79, 1
      %p736 = por %p734, %p735
      %p737 = scmp.ne.s32.totalorder %s729, %s732
      %p738 = scmp.eq.s32.totalorder %s79, 0
      %p739 = por %p737, %p738
      %p740 = scmp.ne.s32.totalorder %s729, %s732
      %p741 = scmp.eq.s32.totalorder %s84, 1
      %p742 = por %p740, %p741
      %p743 = scmp.ne.s32.totalorder %s732, %s733
      %p744 = scmp.eq.s32.totalorder %s84, 0
      %p745 = por %p743, %p744
      %p746 = scmp.ne.s32.totalorder %s732, %s733
      %p747 = scmp.eq.s32.totalorder %s85, 1
      %p748 = por %p746, %p747
      %p750 = scmp.ne.s32.totalorder %s733, %s749
      %p751 = scmp.eq.s32.totalorder %s85, 0
      %p752 = por %p750, %p751
      %p753 = scmp.le.s32.totalorder 1, %s79
      %p754 = scmp.lt.s32.totalorder %s79, 3
      %p755 = pnand %p753, %p754
      %p756 = pneg %p755
      // Predicated region
      $region9: #{tpu_custom_call.1} parent=5 // pred_check
        _
      $region10: #{tpu_custom_call.1} parent=5 // pred_check_branch
        %758 = sbr.rel (%p755) target = $region12
      $region11: #{tpu_custom_call.1} parent=5 // pred_region
        %s759 = ssub.s32 %s79, 1
        // Predicated region
        $region13: #{tpu_custom_call.1} parent=11 // pred_check
          %p760 = pneg %p192
        $region14: #{tpu_custom_call.1} parent=11 // pred_check_branch
          %762 = sbr.rel (%p760) target = $region16
        $region15: #{tpu_custom_call.1} parent=11 // pred_region
          %s764 = ssub.s32 2048, 2048
          %765 = vsyncadd [#allocation9], %s764
          %s766 = sshll.u32 [#allocation8], 4
          %s767 = int_to_ptr.vmem [resolvable:$true] %s766
          %772 = dma.hbm_to_vmem [thread:$0]  %s7, 2048, %s767, [#allocation9], 128, 128, 8
        $region16: #{tpu_custom_call.1} parent=11 // pred_fallthru
          _
        // Predicated region
        $region17: #{tpu_custom_call.1} parent=11 // pred_check
          %p773 = pneg %p213
        $region18: #{tpu_custom_call.1} parent=11 // pred_check_branch
          %775 = sbr.rel (%p773) target = $region20
        $region19: #{tpu_custom_call.1} parent=11 // pred_region
          _
        $region20: #{tpu_custom_call.1} parent=11 // pred_fallthru
          _
        // Predicated region
        $region21: #{tpu_custom_call.1} parent=11 // pred_check
          %p776 = pneg %p234
        $region22: #{tpu_custom_call.1} parent=11 // pred_check_branch
          %778 = sbr.rel (%p776) target = $region24
        $region23: #{tpu_custom_call.1} parent=11 // pred_region
          %s780 = ssub.s32 2048, 2048
          %781 = vsyncadd [#allocation9], %s780
          %s782 = sshll.u32 [#allocation10], 4
          %s783 = int_to_ptr.vmem [resolvable:$true] %s782
          %788 = dma.hbm_to_vmem [thread:$0]  %s11, 2048, %s783, [#allocation9], 128, 128, 8
        $region24: #{tpu_custom_call.1} parent=11 // pred_fallthru
          _
        // Predicated region
        $region25: #{tpu_custom_call.1} parent=11 // pred_check
          %p789 = pneg %p255
        $region26: #{tpu_custom_call.1} parent=11 // pred_check_branch
          %791 = sbr.rel (%p789) target = $region28
        $region27: #{tpu_custom_call.1} parent=11 // pred_region
          _
        $region28: #{tpu_custom_call.1} parent=11 // pred_fallthru
          _
        // Predicated region
        $region29: #{tpu_custom_call.1} parent=11 // pred_check
          %p792 = pneg %p276
        $region30: #{tpu_custom_call.1} parent=11 // pred_check_branch
          %794 = sbr.rel (%p792) target = $region32
        $region31: #{tpu_custom_call.1} parent=11 // pred_region
          %s796 = ssub.s32 2048, 2048
          %797 = vsyncadd [#allocation12], %s796
          %s798 = sshll.u32 [#allocation11], 4
          %s799 = int_to_ptr.vmem [resolvable:$true] %s798
          %804 = dma.hbm_to_vmem [thread:$0]  %s15, 2048, %s799, [#allocation12], 128, 128, 8
        $region32: #{tpu_custom_call.1} parent=11 // pred_fallthru
          _
        // Predicated region
        $region33: #{tpu_custom_call.1} parent=11 // pred_check
          %p805 = pneg %p297
        $region34: #{tpu_custom_call.1} parent=11 // pred_check_branch
          %807 = sbr.rel (%p805) target = $region36
        $region35: #{tpu_custom_call.1} parent=11 // pred_region
          _
        $region36: #{tpu_custom_call.1} parent=11 // pred_fallthru
          _
        // Predicated region
        $region37: #{tpu_custom_call.1} parent=11 // pred_check
          %p808 = pneg %p318
        $region38: #{tpu_custom_call.1} parent=11 // pred_check_branch
          %810 = sbr.rel (%p808) target = $region40
        $region39: #{tpu_custom_call.1} parent=11 // pred_region
          %s812 = ssub.s32 2048, 2048
          %813 = vsyncadd [#allocation12], %s812
          %s814 = sshll.u32 [#allocation13], 4
          %s815 = int_to_ptr.vmem [resolvable:$true] %s814
          %820 = dma.hbm_to_vmem [thread:$0]  %s19, 2048, %s815, [#allocation12], 128, 128, 8
        $region40: #{tpu_custom_call.1} parent=11 // pred_fallthru
          _
        // Predicated region
        $region41: #{tpu_custom_call.1} parent=11 // pred_check
          %p821 = pneg %p339
        $region42: #{tpu_custom_call.1} parent=11 // pred_check_branch
          %823 = sbr.rel (%p821) target = $region44
        $region43: #{tpu_custom_call.1} parent=11 // pred_region
          _
        $region44: #{tpu_custom_call.1} parent=11 // pred_fallthru
          _
        // Predicated region
        $region45: #{tpu_custom_call.1} parent=11 // pred_check
          %p824 = pneg %p360
        $region46: #{tpu_custom_call.1} parent=11 // pred_check_branch
          %826 = sbr.rel (%p824) target = $region48
        $region47: #{tpu_custom_call.1} parent=11 // pred_region
          %s828 = ssub.s32 2048, 2048
          %829 = vsyncadd [#allocation15], %s828
          %s830 = sshll.u32 [#allocation14], 4
          %s831 = int_to_ptr.vmem [resolvable:$true] %s830
          %836 = dma.hbm_to_vmem [thread:$0]  %s23, 2048, %s831, [#allocation15], 128, 128, 8
        $region48: #{tpu_custom_call.1} parent=11 // pred_fallthru
          _
        // Predicated region
        $region49: #{tpu_custom_call.1} parent=11 // pred_check
          %p837 = pneg %p381
        $region50: #{tpu_custom_call.1} parent=11 // pred_check_branch
          %839 = sbr.rel (%p837) target = $region52
        $region51: #{tpu_custom_call.1} parent=11 // pred_region
          _
        $region52: #{tpu_custom_call.1} parent=11 // pred_fallthru
          _
        // Predicated region
        $region53: #{tpu_custom_call.1} parent=11 // pred_check
          %p840 = pneg %p402
        $region54: #{tpu_custom_call.1} parent=11 // pred_check_branch
          %842 = sbr.rel (%p840) target = $region56
        $region55: #{tpu_custom_call.1} parent=11 // pred_region
          %s844 = ssub.s32 2048, 2048
          %845 = vsyncadd [#allocation15], %s844
          %s846 = sshll.u32 [#allocation16], 4
          %s847 = int_to_ptr.vmem [resolvable:$true] %s846
          %852 = dma.hbm_to_vmem [thread:$0]  %s27, 2048, %s847, [#allocation15], 128, 128, 8
        $region56: #{tpu_custom_call.1} parent=11 // pred_fallthru
          _
        // Predicated region
        $region57: #{tpu_custom_call.1} parent=11 // pred_check
          %p853 = pneg %p423
        $region58: #{tpu_custom_call.1} parent=11 // pred_check_branch
          %855 = sbr.rel (%p853) target = $region60
        $region59: #{tpu_custom_call.1} parent=11 // pred_region
          _
        $region60: #{tpu_custom_call.1} parent=11 // pred_fallthru
          _
        // Predicated region
        $region61: #{tpu_custom_call.1} parent=11 // pred_check
          %p856 = pneg %p444
        $region62: #{tpu_custom_call.1} parent=11 // pred_check_branch
          %858 = sbr.rel (%p856) target = $region64
        $region63: #{tpu_custom_call.1} parent=11 // pred_region
          %s860 = ssub.s32 2048, 2048
          %861 = vsyncadd [#allocation18], %s860
          %s862 = sshll.u32 [#allocation17], 4
          %s863 = int_to_ptr.vmem [resolvable:$true] %s862
          %868 = dma.hbm_to_vmem [thread:$0]  %s31, 2048, %s863, [#allocation18], 128, 128, 8
        $region64: #{tpu_custom_call.1} parent=11 // pred_fallthru
          _
        // Predicated region
        $region65: #{tpu_custom_call.1} parent=11 // pred_check
          %p869 = pneg %p465
        $region66: #{tpu_custom_call.1} parent=11 // pred_check_branch
          %871 = sbr.rel (%p869) target = $region68
        $region67: #{tpu_custom_call.1} parent=11 // pred_region
          _
        $region68: #{tpu_custom_call.1} parent=11 // pred_fallthru
          _
        // Predicated region
        $region69: #{tpu_custom_call.1} parent=11 // pred_check
          %p872 = pneg %p486
        $region70: #{tpu_custom_call.1} parent=11 // pred_check_branch
          %874 = sbr.rel (%p872) target = $region72
        $region71: #{tpu_custom_call.1} parent=11 // pred_region
          %s876 = ssub.s32 2048, 2048
          %877 = vsyncadd [#allocation18], %s876
          %s878 = sshll.u32 [#allocation19], 4
          %s879 = int_to_ptr.vmem [resolvable:$true] %s878
          %884 = dma.hbm_to_vmem [thread:$0]  %s35, 2048, %s879, [#allocation18], 128, 128, 8
        $region72: #{tpu_custom_call.1} parent=11 // pred_fallthru
          _
        // Predicated region
        $region73: #{tpu_custom_call.1} parent=11 // pred_check
          %p885 = pneg %p507
        $region74: #{tpu_custom_call.1} parent=11 // pred_check_branch
          %887 = sbr.rel (%p885) target = $region76
        $region75: #{tpu_custom_call.1} parent=11 // pred_region
          _
        $region76: #{tpu_custom_call.1} parent=11 // pred_fallthru
          _
        // Predicated region
        $region77: #{tpu_custom_call.1} parent=11 // pred_check
          %p888 = pneg %p528
        $region78: #{tpu_custom_call.1} parent=11 // pred_check_branch
          %890 = sbr.rel (%p888) target = $region80
        $region79: #{tpu_custom_call.1} parent=11 // pred_region
          %s892 = ssub.s32 8192, 8192
          %893 = vsyncadd [#allocation21], %s892
          %s894 = sshll.u32 [#allocation20], 4
          %s895 = int_to_ptr.vmem [resolvable:$true] %s894
          %900 = dma.hbm_to_vmem [thread:$0]  %s39, 8192, %s895, [#allocation21], 512, 512, 32
        $region80: #{tpu_custom_call.1} parent=11 // pred_fallthru
          _
        // Predicated region
        $region81: #{tpu_custom_call.1} parent=11 // pred_check
          %p901 = pneg %p549
        $region82: #{tpu_custom_call.1} parent=11 // pred_check_branch
          %903 = sbr.rel (%p901) target = $region84
        $region83: #{tpu_custom_call.1} parent=11 // pred_region
          _
        $region84: #{tpu_custom_call.1} parent=11 // pred_fallthru
          _
        // Predicated region
        $region85: #{tpu_custom_call.1} parent=11 // pred_check
          %p904 = pneg %p570
        $region86: #{tpu_custom_call.1} parent=11 // pred_check_branch
          %906 = sbr.rel (%p904) target = $region88
        $region87: #{tpu_custom_call.1} parent=11 // pred_region
          %s908 = ssub.s32 8192, 8192
          %909 = vsyncadd [#allocation21], %s908
          %s910 = sshll.u32 [#allocation22], 4
          %s911 = int_to_ptr.vmem [resolvable:$true] %s910
          %916 = dma.hbm_to_vmem [thread:$0]  %s43, 8192, %s911, [#allocation21], 128, 128, 8
        $region88: #{tpu_custom_call.1} parent=11 // pred_fallthru
          _
        // Predicated region
        $region89: #{tpu_custom_call.1} parent=11 // pred_check
          %p917 = pneg %p591
        $region90: #{tpu_custom_call.1} parent=11 // pred_check_branch
          %919 = sbr.rel (%p917) target = $region92
        $region91: #{tpu_custom_call.1} parent=11 // pred_region
          _
        $region92: #{tpu_custom_call.1} parent=11 // pred_fallthru
          _
        // Predicated region
        $region93: #{tpu_custom_call.1} parent=11 // pred_check
          %p920 = pneg %p612
        $region94: #{tpu_custom_call.1} parent=11 // pred_check_branch
          %922 = sbr.rel (%p920) target = $region96
        $region95: #{tpu_custom_call.1} parent=11 // pred_region
          _
        $region96: #{tpu_custom_call.1} parent=11 // pred_fallthru
          _
        // Predicated region
        $region97: #{tpu_custom_call.1} parent=11 // pred_check
          %p923 = pneg %p633
        $region98: #{tpu_custom_call.1} parent=11 // pred_check_branch
          %925 = sbr.rel (%p923) target = $region100
        $region99: #{tpu_custom_call.1} parent=11 // pred_region
          _
        $region100: #{tpu_custom_call.1} parent=11 // pred_fallthru
          _
        // Predicated region
        $region101: #{tpu_custom_call.1} parent=11 // pred_check
          %p926 = pneg %p654
        $region102: #{tpu_custom_call.1} parent=11 // pred_check_branch
          %928 = sbr.rel (%p926) target = $region104
        $region103: #{tpu_custom_call.1} parent=11 // pred_region
          _
        $region104: #{tpu_custom_call.1} parent=11 // pred_fallthru
          _
        // Predicated region
        $region105: #{tpu_custom_call.1} parent=11 // pred_check
          %p929 = pneg %p675
        $region106: #{tpu_custom_call.1} parent=11 // pred_check_branch
          %931 = sbr.rel (%p929) target = $region108
        $region107: #{tpu_custom_call.1} parent=11 // pred_region
          _
        $region108: #{tpu_custom_call.1} parent=11 // pred_fallthru
          _
        // Predicated region
        $region109: #{tpu_custom_call.1} parent=11 // pred_check
          %p932 = pneg %p696
        $region110: #{tpu_custom_call.1} parent=11 // pred_check_branch
          %934 = sbr.rel (%p932) target = $region112
        $region111: #{tpu_custom_call.1} parent=11 // pred_region
          _
        $region112: #{tpu_custom_call.1} parent=11 // pred_fallthru
          _
        // Predicated region
        $region113: #{tpu_custom_call.1} parent=11 // pred_check
          %p935 = pneg %p717
        $region114: #{tpu_custom_call.1} parent=11 // pred_check_branch
          %937 = sbr.rel (%p935) target = $region116
        $region115: #{tpu_custom_call.1} parent=11 // pred_region
          _
        $region116: #{tpu_custom_call.1} parent=11 // pred_fallthru
          _
      $region12: #{tpu_custom_call.1} parent=5 // pred_fallthru
        _
      %p938 = scmp.lt.s32.totalorder %s79, 2
      // Predicated region
      $region117: #{tpu_custom_call.1} parent=5 // pred_check
        %p939 = pneg %p938
      $region118: #{tpu_custom_call.1} parent=5 // pred_check_branch
        %941 = sbr.rel (%p939) target = $region120
      $region119: #{tpu_custom_call.1} parent=5 // pred_region
        // Predicated region
        $region121: #{tpu_custom_call.1} parent=119 // pred_check
          %p942 = pneg %p113
        $region122: #{tpu_custom_call.1} parent=119 // pred_check_branch
          %944 = sbr.rel (%p942) target = $region124
        $region123: #{tpu_custom_call.1} parent=119 // pred_region
          %s945 = sand.u32 %s103, 1
          %s946 = scalar_lea.sflag [#allocation3], %s945
          %s947 = sand.u32 %s103, 1
          %s948 = smul.addr %s947, 8
          %s949 = scalar_lea.vmem [#allocation2], %s948
          %s951 = ssub.s32 128, 128
          %952 = vsyncadd %s946, %s951
          %s953 = sadd.s32 %s87, %s86
          %s954 = smul.addr %s953, 128
          %s955 = scalar_lea.hbm %s1, %s954
          %s957 = sshll.u32 %s949, 4
          %s958 = int_to_ptr.vmem [resolvable:$true] %s957
          %960 = dma.hbm_to_vmem [thread:$0]  %s955, 128, %s958, %s946
        $region124: #{tpu_custom_call.1} parent=119 // pred_fallthru
          _
        // Predicated region
        $region125: #{tpu_custom_call.1} parent=119 // pred_check
          %p961 = pneg %p139
        $region126: #{tpu_custom_call.1} parent=119 // pred_check_branch
          %963 = sbr.rel (%p961) target = $region128
        $region127: #{tpu_custom_call.1} parent=119 // pred_region
          %s964 = sand.u32 %s79, 1
          %s965 = scalar_lea.sflag [#allocation6], %s964
          %s966 = sand.u32 %s129, 1
          %s967 = smul.addr %s966, 8
          %s968 = scalar_lea.vmem [#allocation5], %s967
          %s970 = ssub.s32 128, 128
          %971 = vsyncadd %s965, %s970
          %s972 = smul.addr %s86, 128
          %s973 = scalar_lea.hbm %s3, %s972
          %s975 = sshll.u32 %s968, 4
          %s976 = int_to_ptr.vmem [resolvable:$true] %s975
          %978 = dma.hbm_to_vmem [thread:$0]  %s973, 128, %s976, %s965
        $region128: #{tpu_custom_call.1} parent=119 // pred_fallthru
          _
        // Predicated region
        $region129: #{tpu_custom_call.1} parent=119 // pred_check
          %p979 = pneg %p165
        $region130: #{tpu_custom_call.1} parent=119 // pred_check_branch
          %981 = sbr.rel (%p979) target = $region132
        $region131: #{tpu_custom_call.1} parent=119 // pred_region
          %s982 = sand.u32 %s79, 1
          %s983 = scalar_lea.sflag [#allocation6], %s982
          %s984 = sand.u32 %s155, 1
          %s985 = smul.addr %s984, 16
          %s986 = scalar_lea.vmem [#allocation7], %s985
          %s988 = ssub.s32 256, 256
          %989 = vsyncadd %s983, %s988
          %s990 = smul.addr %s86, 2
          %s991 = smul.addr %s990, 128
          %s992 = scalar_lea.hbm %s5, %s991
          %s993 = sshll.u32 %s986, 4
          %s994 = int_to_ptr.vmem [resolvable:$true] %s993
          %999 = dma.hbm_to_vmem [thread:$0]  %s992, 256, %s994, %s983, 128, 128, 8
        $region132: #{tpu_custom_call.1} parent=119 // pred_fallthru
          _
      $region120: #{tpu_custom_call.1} parent=5 // pred_fallthru
        _
      %p1000 = scmp.le.s32.totalorder 1, %s79
      %p1001 = scmp.lt.s32.totalorder %s79, 3
      %p1002 = pnand %p1000, %p1001
      %p1003 = pneg %p1002
      // Predicated region
      $region133: #{tpu_custom_call.1} parent=5 // pred_check
        _
      $region134: #{tpu_custom_call.1} parent=5 // pred_check_branch
        %1005 = sbr.rel (%p1002) target = $region136
      $region135: #{tpu_custom_call.1} parent=5 // pred_region
        %s1006 = ssub.s32 %s79, 1
        %s1007 = sand.u32 %s106, 1
        %s1008 = scalar_lea.sflag [#allocation3], %s1007
        %s1009 = sand.u32 %s106, 1
        %s1010 = smul.addr %s1009, 8
        %s1011 = scalar_lea.vmem [#allocation2], %s1010
        // Predicated region
        $region137: #{tpu_custom_call.1} parent=135 // pred_check
          %p1012 = pneg %p119
        $region138: #{tpu_custom_call.1} parent=135 // pred_check_branch
          %1014 = sbr.rel (%p1012) target = $region140
        $region139: #{tpu_custom_call.1} parent=135 // pred_region
          %1015 = dma.done %s1008, 128
        $region140: #{tpu_custom_call.1} parent=135 // pred_fallthru
          _
        %s1016 = sand.u32 %s84, 1
        %s1017 = scalar_lea.sflag [#allocation6], %s1016
        %s1018 = sand.u32 %s132, 1
        %s1019 = smul.addr %s1018, 8
        %s1020 = scalar_lea.vmem [#allocation5], %s1019
        // Predicated region
        $region141: #{tpu_custom_call.1} parent=135 // pred_check
          %p1021 = pneg %p145
        $region142: #{tpu_custom_call.1} parent=135 // pred_check_branch
          %1023 = sbr.rel (%p1021) target = $region144
        $region143: #{tpu_custom_call.1} parent=135 // pred_region
          %1024 = dma.done %s1017, 128
        $region144: #{tpu_custom_call.1} parent=135 // pred_fallthru
          _
        %s1025 = sand.u32 %s84, 1
        %s1026 = scalar_lea.sflag [#allocation6], %s1025
        %s1027 = sand.u32 %s158, 1
        %s1028 = smul.addr %s1027, 16
        %s1029 = scalar_lea.vmem [#allocation7], %s1028
        // Predicated region
        $region145: #{tpu_custom_call.1} parent=135 // pred_check
          %p1030 = pneg %p171
        $region146: #{tpu_custom_call.1} parent=135 // pred_check_branch
          %1032 = sbr.rel (%p1030) target = $region148
        $region147: #{tpu_custom_call.1} parent=135 // pred_region
          %1033 = dma.done %s1026, 256
        $region148: #{tpu_custom_call.1} parent=135 // pred_fallthru
          _
        // Predicated region
        $region149: #{tpu_custom_call.1} parent=135 // pred_check
          %p1034 = pneg %p192
        $region150: #{tpu_custom_call.1} parent=135 // pred_check_branch
          %1036 = sbr.rel (%p1034) target = $region152
        $region151: #{tpu_custom_call.1} parent=135 // pred_region
          %1037 = dma.done [#allocation9], 2048
        $region152: #{tpu_custom_call.1} parent=135 // pred_fallthru
          _
        // Predicated region
        $region153: #{tpu_custom_call.1} parent=135 // pred_check
          %p1038 = pneg %p234
        $region154: #{tpu_custom_call.1} parent=135 // pred_check_branch
          %1040 = sbr.rel (%p1038) target = $region156
        $region155: #{tpu_custom_call.1} parent=135 // pred_region
          %1041 = dma.done [#allocation9], 2048
        $region156: #{tpu_custom_call.1} parent=135 // pred_fallthru
          _
        // Predicated region
        $region157: #{tpu_custom_call.1} parent=135 // pred_check
          %p1042 = pneg %p276
        $region158: #{tpu_custom_call.1} parent=135 // pred_check_branch
          %1044 = sbr.rel (%p1042) target = $region160
        $region159: #{tpu_custom_call.1} parent=135 // pred_region
          %1045 = dma.done [#allocation12], 2048
        $region160: #{tpu_custom_call.1} parent=135 // pred_fallthru
          _
        // Predicated region
        $region161: #{tpu_custom_call.1} parent=135 // pred_check
          %p1046 = pneg %p318
        $region162: #{tpu_custom_call.1} parent=135 // pred_check_branch
          %1048 = sbr.rel (%p1046) target = $region164
        $region163: #{tpu_custom_call.1} parent=135 // pred_region
          %1049 = dma.done [#allocation12], 2048
        $region164: #{tpu_custom_call.1} parent=135 // pred_fallthru
          _
        // Predicated region
        $region165: #{tpu_custom_call.1} parent=135 // pred_check
          %p1050 = pneg %p360
        $region166: #{tpu_custom_call.1} parent=135 // pred_check_branch
          %1052 = sbr.rel (%p1050) target = $region168
        $region167: #{tpu_custom_call.1} parent=135 // pred_region
          %1053 = dma.done [#allocation15], 2048
        $region168: #{tpu_custom_call.1} parent=135 // pred_fallthru
          _
        // Predicated region
        $region169: #{tpu_custom_call.1} parent=135 // pred_check
          %p1054 = pneg %p402
        $region170: #{tpu_custom_call.1} parent=135 // pred_check_branch
          %1056 = sbr.rel (%p1054) target = $region172
        $region171: #{tpu_custom_call.1} parent=135 // pred_region
          %1057 = dma.done [#allocation15], 2048
        $region172: #{tpu_custom_call.1} parent=135 // pred_fallthru
          _
        // Predicated region
        $region173: #{tpu_custom_call.1} parent=135 // pred_check
          %p1058 = pneg %p444
        $region174: #{tpu_custom_call.1} parent=135 // pred_check_branch
          %1060 = sbr.rel (%p1058) target = $region176
        $region175: #{tpu_custom_call.1} parent=135 // pred_region
          %1061 = dma.done [#allocation18], 2048
        $region176: #{tpu_custom_call.1} parent=135 // pred_fallthru
          _
        // Predicated region
        $region177: #{tpu_custom_call.1} parent=135 // pred_check
          %p1062 = pneg %p486
        $region178: #{tpu_custom_call.1} parent=135 // pred_check_branch
          %1064 = sbr.rel (%p1062) target = $region180
        $region179: #{tpu_custom_call.1} parent=135 // pred_region
          %1065 = dma.done [#allocation18], 2048
        $region180: #{tpu_custom_call.1} parent=135 // pred_fallthru
          _
        // Predicated region
        $region181: #{tpu_custom_call.1} parent=135 // pred_check
          %p1066 = pneg %p528
        $region182: #{tpu_custom_call.1} parent=135 // pred_check_branch
          %1068 = sbr.rel (%p1066) target = $region184
        $region183: #{tpu_custom_call.1} parent=135 // pred_region
          %1069 = dma.done [#allocation21], 8192
        $region184: #{tpu_custom_call.1} parent=135 // pred_fallthru
          _
        // Predicated region
        $region185: #{tpu_custom_call.1} parent=135 // pred_check
          %p1070 = pneg %p570
        $region186: #{tpu_custom_call.1} parent=135 // pred_check_branch
          %1072 = sbr.rel (%p1070) target = $region188
        $region187: #{tpu_custom_call.1} parent=135 // pred_region
          %1073 = dma.done [#allocation21], 8192
        $region188: #{tpu_custom_call.1} parent=135 // pred_fallthru
          _
        %s1074 = sand.u32 %s106, 1
        %s1075 = scalar_lea.sflag [#allocation3], %s1074
        %s1076 = sand.u32 %s106, 1
        %s1077 = smul.addr %s1076, 8
        %s1078 = scalar_lea.vmem [#allocation2], %s1077
        %p1079 = pneg %p119
        %p1080 = pneg %p116
        %s1081 = sand.u32 %s84, 1
        %s1082 = scalar_lea.sflag [#allocation6], %s1081
        %s1083 = sand.u32 %s132, 1
        %s1084 = smul.addr %s1083, 8
        %s1085 = scalar_lea.vmem [#allocation5], %s1084
        %p1086 = pneg %p145
        %p1087 = pneg %p142
        %s1088 = sand.u32 %s84, 1
        %s1089 = scalar_lea.sflag [#allocation6], %s1088
        %s1090 = sand.u32 %s158, 1
        %s1091 = smul.addr %s1090, 16
        %s1092 = scalar_lea.vmem [#allocation7], %s1091
        %p1093 = pneg %p171
        %p1094 = pneg %p168
        %p1095 = pneg %p192
        %p1096 = pneg %p189
        %p1097 = pneg %p213
        %p1098 = pneg %p210
        %p1099 = pneg %p234
        %p1100 = pneg %p231
        %p1101 = pneg %p255
        %p1102 = pneg %p252
        %p1103 = pneg %p276
        %p1104 = pneg %p273
        %p1105 = pneg %p297
        %p1106 = pneg %p294
        %p1107 = pneg %p318
        %p1108 = pneg %p315
        %p1109 = pneg %p339
        %p1110 = pneg %p336
        %p1111 = pneg %p360
        %p1112 = pneg %p357
        %p1113 = pneg %p381
        %p1114 = pneg %p378
        %p1115 = pneg %p402
        %p1116 = pneg %p399
        %p1117 = pneg %p423
        %p1118 = pneg %p420
        %p1119 = pneg %p444
        %p1120 = pneg %p441
        %p1121 = pneg %p465
        %p1122 = pneg %p462
        %p1123 = pneg %p486
        %p1124 = pneg %p483
        %p1125 = pneg %p507
        %p1126 = pneg %p504
        %p1127 = pneg %p528
        %p1128 = pneg %p525
        %p1129 = pneg %p549
        %p1130 = pneg %p546
        %p1131 = pneg %p570
        %p1132 = pneg %p567
        %p1133 = pneg %p591
        %p1134 = pneg %p588
        %p1135 = pneg %p612
        %p1136 = pneg %p609
        %p1137 = pneg %p633
        %p1138 = pneg %p630
        %p1139 = pneg %p654
        %p1140 = pneg %p651
        %p1141 = pneg %p675
        %p1142 = pneg %p672
        %p1143 = pneg %p696
        %p1144 = pneg %p693
        %p1145 = pneg %p717
        %p1146 = pneg %p714
        %p1147 = pneg %p745
        %p1148 = pneg %p742
        %s1149 = sand.u32 %s732, 1
        %s1150 = scalar_lea.sflag [#allocation4], %s1149
        %s1151 = sand.u32 %s732, 1
        %s1152 = smul.addr %s1151, 8
        %s1153 = scalar_lea.vmem [#allocation23], %s1152
        %v1154 = vld [vmem:[%s1011] sm:$0xff]
        %v1155 = vld [vmem:[%s1029] sm:$0xff]
        %v1156 = vld [vmem:[%s1029 + $0x8] sm:$0xff]
        %v1157 = vld [vmem:[%s47] sm:$0x1]
        %v1158 = vld [vmem:[%s49] sm:$0x1]
        %1159 = vadd.xlane.f32.xlu0 %v1154
        %v1160 = vpop.xlane.xlu0 %1159
        %v1161 = vrcp.pop 128.0
        %v1162 = vmul.f32 %v1160, %v1161
        %v1163 = vsub.f32 %v1154, %v1162
        %v1164 = vmul.f32 %v1163, %v1163
        %1165 = vadd.xlane.f32.xlu0 %v1164
        %v1166 = vpop.xlane.xlu0 %1165
        %v1167 = vrcp.pop 127.0
        %v1168 = vmul.f32 %v1166, %v1167
        %v1169 = vrsqrt.pop %v1168
        %v1170 = vmul.f32 %v1168, %v1169
        %vm1171 = vcmp.eq.f32.partialorder %v1168, inf
        %v1172 = vsel %vm1171, %v1168, %v1170
        %vm1173 = vcmp.eq.f32.partialorder %v1168, 0.0
        %v1174 = vand.u32 %v1168, 2147483648
        %v1175 = vsel %vm1173, %v1174, %v1172
        %v1177 = vlaneseq
        %v1178 = vshrl.u32 %v1177, 7
        %v1179 = vsub.s32 0, %v1178
        %v1180 = vrot.slane %v1157, %v1179
        %v1182 = vmul.f32 %v1180, %v1163
        %v1183 = vadd.f32 %v1175, 1e-06
        %v1184 = vrcp.pop %v1183
        %v1185 = vmul.f32 %v1182, %v1184
        %v1187 = vlaneseq
        %v1188 = vshrl.u32 %v1187, 7
        %v1189 = vsub.s32 0, %v1188
        %v1190 = vrot.slane %v1158, %v1189
        %v1192 = vadd.f32 %v1185, %v1190
        %v1193 = vld [vmem:[#allocation8] sm:$0xff]
        %v1194 = vld [vmem:[#allocation8 + $0x8] sm:$0xff]
        %v1195 = vld [vmem:[#allocation8 + $0x10] sm:$0xff]
        %v1196 = vld [vmem:[#allocation8 + $0x18] sm:$0xff]
        %v1197 = vld [vmem:[#allocation8 + $0x20] sm:$0xff]
        %v1198 = vld [vmem:[#allocation8 + $0x28] sm:$0xff]
        %v1199 = vld [vmem:[#allocation8 + $0x30] sm:$0xff]
        %v1200 = vld [vmem:[#allocation8 + $0x38] sm:$0xff]
        %v1201 = vld [vmem:[#allocation8 + $0x40] sm:$0xff]
        %v1202 = vld [vmem:[#allocation8 + $0x48] sm:$0xff]
        %v1203 = vld [vmem:[#allocation8 + $0x50] sm:$0xff]
        %v1204 = vld [vmem:[#allocation8 + $0x58] sm:$0xff]
        %v1205 = vld [vmem:[#allocation8 + $0x60] sm:$0xff]
        %v1206 = vld [vmem:[#allocation8 + $0x68] sm:$0xff]
        %v1207 = vld [vmem:[#allocation8 + $0x70] sm:$0xff]
        %v1208 = vld [vmem:[#allocation8 + $0x78] sm:$0xff]
        %v1209 = vld [vmem:[%s9] sm:$0x1]
        %v1210 = vld [vmem:[#allocation10] sm:$0xff]
        %v1211 = vld [vmem:[#allocation10 + $0x8] sm:$0xff]
        %v1212 = vld [vmem:[#allocation10 + $0x10] sm:$0xff]
        %v1213 = vld [vmem:[#allocation10 + $0x18] sm:$0xff]
        %v1214 = vld [vmem:[#allocation10 + $0x20] sm:$0xff]
        %v1215 = vld [vmem:[#allocation10 + $0x28] sm:$0xff]
        %v1216 = vld [vmem:[#allocation10 + $0x30] sm:$0xff]
        %v1217 = vld [vmem:[#allocation10 + $0x38] sm:$0xff]
        %v1218 = vld [vmem:[#allocation10 + $0x40] sm:$0xff]
        %v1219 = vld [vmem:[#allocation10 + $0x48] sm:$0xff]
        %v1220 = vld [vmem:[#allocation10 + $0x50] sm:$0xff]
        %v1221 = vld [vmem:[#allocation10 + $0x58] sm:$0xff]
        %v1222 = vld [vmem:[#allocation10 + $0x60] sm:$0xff]
        %v1223 = vld [vmem:[#allocation10 + $0x68] sm:$0xff]
        %v1224 = vld [vmem:[#allocation10 + $0x70] sm:$0xff]
        %v1225 = vld [vmem:[#allocation10 + $0x78] sm:$0xff]
        %v1226 = vld [vmem:[%s13] sm:$0x1]
        %v1227 = vld [vmem:[#allocation11] sm:$0xff]
        %v1228 = vld [vmem:[#allocation11 + $0x8] sm:$0xff]
        %v1229 = vld [vmem:[#allocation11 + $0x10] sm:$0xff]
        %v1230 = vld [vmem:[#allocation11 + $0x18] sm:$0xff]
        %v1231 = vld [vmem:[#allocation11 + $0x20] sm:$0xff]
        %v1232 = vld [vmem:[#allocation11 + $0x28] sm:$0xff]
        %v1233 = vld [vmem:[#allocation11 + $0x30] sm:$0xff]
        %v1234 = vld [vmem:[#allocation11 + $0x38] sm:$0xff]
        %v1235 = vld [vmem:[#allocation11 + $0x40] sm:$0xff]
        %v1236 = vld [vmem:[#allocation11 + $0x48] sm:$0xff]
        %v1237 = vld [vmem:[#allocation11 + $0x50] sm:$0xff]
        %v1238 = vld [vmem:[#allocation11 + $0x58] sm:$0xff]
        %v1239 = vld [vmem:[#allocation11 + $0x60] sm:$0xff]
        %v1240 = vld [vmem:[#allocation11 + $0x68] sm:$0xff]
        %v1241 = vld [vmem:[#allocation11 + $0x70] sm:$0xff]
        %v1242 = vld [vmem:[#allocation11 + $0x78] sm:$0xff]
        %v1243 = vld [vmem:[%s17] sm:$0x1]
        %v1244 = vld [vmem:[#allocation13] sm:$0xff]
        %v1245 = vld [vmem:[#allocation13 + $0x8] sm:$0xff]
        %v1246 = vld [vmem:[#allocation13 + $0x10] sm:$0xff]
        %v1247 = vld [vmem:[#allocation13 + $0x18] sm:$0xff]
        %v1248 = vld [vmem:[#allocation13 + $0x20] sm:$0xff]
        %v1249 = vld [vmem:[#allocation13 + $0x28] sm:$0xff]
        %v1250 = vld [vmem:[#allocation13 + $0x30] sm:$0xff]
        %v1251 = vld [vmem:[#allocation13 + $0x38] sm:$0xff]
        %v1252 = vld [vmem:[#allocation13 + $0x40] sm:$0xff]
        %v1253 = vld [vmem:[#allocation13 + $0x48] sm:$0xff]
        %v1254 = vld [vmem:[#allocation13 + $0x50] sm:$0xff]
        %v1255 = vld [vmem:[#allocation13 + $0x58] sm:$0xff]
        %v1256 = vld [vmem:[#allocation13 + $0x60] sm:$0xff]
        %v1257 = vld [vmem:[#allocation13 + $0x68] sm:$0xff]
        %v1258 = vld [vmem:[#allocation13 + $0x70] sm:$0xff]
        %v1259 = vld [vmem:[#allocation13 + $0x78] sm:$0xff]
        %v1260 = vld [vmem:[%s21] sm:$0x1]
        %v1262 = vlaneseq
        %v1263 = vshrl.u32 %v1262, 7
        %v1264 = vsub.s32 0, %v1263
        %v1265 = vrot.slane %v1209, %v1264
        %1267 = vmatprep.subr.mxu0 0.0
        %1268 = vmatpush1.msra.mxu0 %v1208
        %1269 = vmatprep.subr.mxu0 0.0
        %1270 = vmatpush1.msra.mxu0 %v1207
        %1271 = vmatprep.subr.mxu0 0.0
        %1272 = vmatpush1.msra.mxu0 %v1206
        %1273 = vmatprep.subr.mxu0 0.0
        %1274 = vmatpush1.msra.mxu0 %v1205
        %1275 = vmatprep.subr.mxu0 0.0
        %1276 = vmatpush1.msra.mxu0 %v1204
        %1277 = vmatprep.subr.mxu0 0.0
        %1278 = vmatpush1.msra.mxu0 %v1203
        %1279 = vmatprep.subr.mxu0 0.0
        %1280 = vmatpush1.msra.mxu0 %v1202
        %1281 = vmatprep.subr.mxu0 0.0
        %1282 = vmatpush1.msra.mxu0 %v1201
        %1283 = vmatprep.subr.mxu0 0.0
        %1284 = vmatpush1.msra.mxu0 %v1200
        %1285 = vmatprep.subr.mxu0 0.0
        %1286 = vmatpush1.msra.mxu0 %v1199
        %1287 = vmatprep.subr.mxu0 0.0
        %1288 = vmatpush1.msra.mxu0 %v1198
        %1289 = vmatprep.subr.mxu0 0.0
        %1290 = vmatpush1.msra.mxu0 %v1197
        %1291 = vmatprep.subr.mxu0 0.0
        %1292 = vmatpush1.msra.mxu0 %v1196
        %1293 = vmatprep.subr.mxu0 0.0
        %1294 = vmatpush1.msra.mxu0 %v1195
        %1295 = vmatprep.subr.mxu0 0.0
        %1296 = vmatpush1.msra.mxu0 %v1194
        %1297 = vmatprep.subr.mxu0 0.0
        %1298 = vmatpush1.msra.mxu0 %v1193
        %1299 = vmatprep.subr.mxu0 0.0
        %1300 = vmatpush2.msra.mxu0 0.0
        %1301 = vmatprep.subr.mxu0 0.0
        %1302 = vmatpush2.msra.mxu0 0.0
        %1303 = vmatprep.subr.mxu0 0.0
        %1304 = vmatpush2.msra.mxu0 0.0
        %1305 = vmatprep.subr.mxu0 0.0
        %1306 = vmatpush2.msra.mxu0 0.0
        %1307 = vmatprep.subr.mxu0 0.0
        %1308 = vmatpush2.msra.mxu0 0.0
        %1309 = vmatprep.subr.mxu0 0.0
        %1310 = vmatpush2.msra.mxu0 0.0
        %1311 = vmatprep.subr.mxu0 0.0
        %1312 = vmatpush2.msra.mxu0 0.0
        %1313 = vmatprep.subr.mxu0 0.0
        %1314 = vmatpush2.msra.mxu0 0.0
        %1315 = vmatprep.subr.mxu0 0.0
        %1316 = vmatpush2.msra.mxu0 0.0
        %1317 = vmatprep.subr.mxu0 0.0
        %1318 = vmatpush2.msra.mxu0 0.0
        %1319 = vmatprep.subr.mxu0 0.0
        %1320 = vmatpush2.msra.mxu0 0.0
        %1321 = vmatprep.subr.mxu0 0.0
        %1322 = vmatpush2.msra.mxu0 0.0
        %1323 = vmatprep.subr.mxu0 0.0
        %1324 = vmatpush2.msra.mxu0 0.0
        %1325 = vmatprep.subr.mxu0 0.0
        %1326 = vmatpush2.msra.mxu0 0.0
        %1327 = vmatprep.subr.mxu0 0.0
        %1328 = vmatpush2.msra.mxu0 0.0
        %1329 = vmatprep.subr.mxu0 0.0
        %1330 = vmatpush2.msra.mxu0 0.0
        %1331 = vmatprep.mubr.f32.mxu0 0.0
        %1332 = vmatmul.mubr.f32.gmra.mxu0 %v1192
        %v1333 = vpop.f32.mrf.mxu0
        %v1334 = vadd.f32 %v1265, %v1333
        %v1335 = vpop.f32.mrf.mxu0
        %1336 = vdwg.mxu0
        %v1338 = vlaneseq
        %v1339 = vshrl.u32 %v1338, 7
        %v1340 = vsub.s32 0, %v1339
        %v1341 = vrot.slane %v1226, %v1340
        %1343 = vmatprep.subr.mxu0 0.0
        %1344 = vmatpush1.msra.mxu0 %v1225
        %1345 = vmatprep.subr.mxu0 0.0
        %1346 = vmatpush1.msra.mxu0 %v1224
        %1347 = vmatprep.subr.mxu0 0.0
        %1348 = vmatpush1.msra.mxu0 %v1223
        %1349 = vmatprep.subr.mxu0 0.0
        %1350 = vmatpush1.msra.mxu0 %v1222
        %1351 = vmatprep.subr.mxu0 0.0
        %1352 = vmatpush1.msra.mxu0 %v1221
        %1353 = vmatprep.subr.mxu0 0.0
        %1354 = vmatpush1.msra.mxu0 %v1220
        %1355 = vmatprep.subr.mxu0 0.0
        %1356 = vmatpush1.msra.mxu0 %v1219
        %1357 = vmatprep.subr.mxu0 0.0
        %1358 = vmatpush1.msra.mxu0 %v1218
        %1359 = vmatprep.subr.mxu0 0.0
        %1360 = vmatpush1.msra.mxu0 %v1217
        %1361 = vmatprep.subr.mxu0 0.0
        %1362 = vmatpush1.msra.mxu0 %v1216
        %1363 = vmatprep.subr.mxu0 0.0
        %1364 = vmatpush1.msra.mxu0 %v1215
        %1365 = vmatprep.subr.mxu0 0.0
        %1366 = vmatpush1.msra.mxu0 %v1214
        %1367 = vmatprep.subr.mxu0 0.0
        %1368 = vmatpush1.msra.mxu0 %v1213
        %1369 = vmatprep.subr.mxu0 0.0
        %1370 = vmatpush1.msra.mxu0 %v1212
        %1371 = vmatprep.subr.mxu0 0.0
        %1372 = vmatpush1.msra.mxu0 %v1211
        %1373 = vmatprep.subr.mxu0 0.0
        %1374 = vmatpush1.msra.mxu0 %v1210
        %1375 = vmatprep.subr.mxu0 0.0
        %1376 = vmatpush2.msra.mxu0 0.0
        %1377 = vmatprep.subr.mxu0 0.0
        %1378 = vmatpush2.msra.mxu0 0.0
        %1379 = vmatprep.subr.mxu0 0.0
        %1380 = vmatpush2.msra.mxu0 0.0
        %1381 = vmatprep.subr.mxu0 0.0
        %1382 = vmatpush2.msra.mxu0 0.0
        %1383 = vmatprep.subr.mxu0 0.0
        %1384 = vmatpush2.msra.mxu0 0.0
        %1385 = vmatprep.subr.mxu0 0.0
        %1386 = vmatpush2.msra.mxu0 0.0
        %1387 = vmatprep.subr.mxu0 0.0
        %1388 = vmatpush2.msra.mxu0 0.0
        %1389 = vmatprep.subr.mxu0 0.0
        %1390 = vmatpush2.msra.mxu0 0.0
        %1391 = vmatprep.subr.mxu0 0.0
        %1392 = vmatpush2.msra.mxu0 0.0
        %1393 = vmatprep.subr.mxu0 0.0
        %1394 = vmatpush2.msra.mxu0 0.0
        %1395 = vmatprep.subr.mxu0 0.0
        %1396 = vmatpush2.msra.mxu0 0.0
        %1397 = vmatprep.subr.mxu0 0.0
        %1398 = vmatpush2.msra.mxu0 0.0
        %1399 = vmatprep.subr.mxu0 0.0
        %1400 = vmatpush2.msra.mxu0 0.0
        %1401 = vmatprep.subr.mxu0 0.0
        %1402 = vmatpush2.msra.mxu0 0.0
        %1403 = vmatprep.subr.mxu0 0.0
        %1404 = vmatpush2.msra.mxu0 0.0
        %1405 = vmatprep.subr.mxu0 0.0
        %1406 = vmatpush2.msra.mxu0 0.0
        %1407 = vmatprep.mubr.f32.mxu0 0.0
        %1408 = vmatmul.mubr.f32.gmra.mxu0 %v1192
        %v1409 = vpop.f32.mrf.mxu0
        %v1410 = vadd.f32 %v1341, %v1409
        %v1411 = vpop.f32.mrf.mxu0
        %1412 = vdwg.mxu0
        %v1414 = vlaneseq
        %v1415 = vshrl.u32 %v1414, 7
        %v1416 = vsub.s32 0, %v1415
        %v1417 = vrot.slane %v1243, %v1416
        %1419 = vmatprep.subr.mxu0 0.0
        %1420 = vmatpush1.msra.mxu0 %v1242
        %1421 = vmatprep.subr.mxu0 0.0
        %1422 = vmatpush1.msra.mxu0 %v1241
        %1423 = vmatprep.subr.mxu0 0.0
        %1424 = vmatpush1.msra.mxu0 %v1240
        %1425 = vmatprep.subr.mxu0 0.0
        %1426 = vmatpush1.msra.mxu0 %v1239
        %1427 = vmatprep.subr.mxu0 0.0
        %1428 = vmatpush1.msra.mxu0 %v1238
        %1429 = vmatprep.subr.mxu0 0.0
        %1430 = vmatpush1.msra.mxu0 %v1237
        %1431 = vmatprep.subr.mxu0 0.0
        %1432 = vmatpush1.msra.mxu0 %v1236
        %1433 = vmatprep.subr.mxu0 0.0
        %1434 = vmatpush1.msra.mxu0 %v1235
        %1435 = vmatprep.subr.mxu0 0.0
        %1436 = vmatpush1.msra.mxu0 %v1234
        %1437 = vmatprep.subr.mxu0 0.0
        %1438 = vmatpush1.msra.mxu0 %v1233
        %1439 = vmatprep.subr.mxu0 0.0
        %1440 = vmatpush1.msra.mxu0 %v1232
        %1441 = vmatprep.subr.mxu0 0.0
        %1442 = vmatpush1.msra.mxu0 %v1231
        %1443 = vmatprep.subr.mxu0 0.0
        %1444 = vmatpush1.msra.mxu0 %v1230
        %1445 = vmatprep.subr.mxu0 0.0
        %1446 = vmatpush1.msra.mxu0 %v1229
        %1447 = vmatprep.subr.mxu0 0.0
        %1448 = vmatpush1.msra.mxu0 %v1228
        %1449 = vmatprep.subr.mxu0 0.0
        %1450 = vmatpush1.msra.mxu0 %v1227
        %1451 = vmatprep.subr.mxu0 0.0
        %1452 = vmatpush2.msra.mxu0 0.0
        %1453 = vmatprep.subr.mxu0 0.0
        %1454 = vmatpush2.msra.mxu0 0.0
        %1455 = vmatprep.subr.mxu0 0.0
        %1456 = vmatpush2.msra.mxu0 0.0
        %1457 = vmatprep.subr.mxu0 0.0
        %1458 = vmatpush2.msra.mxu0 0.0
        %1459 = vmatprep.subr.mxu0 0.0
        %1460 = vmatpush2.msra.mxu0 0.0
        %1461 = vmatprep.subr.mxu0 0.0
        %1462 = vmatpush2.msra.mxu0 0.0
        %1463 = vmatprep.subr.mxu0 0.0
        %1464 = vmatpush2.msra.mxu0 0.0
        %1465 = vmatprep.subr.mxu0 0.0
        %1466 = vmatpush2.msra.mxu0 0.0
        %1467 = vmatprep.subr.mxu0 0.0
        %1468 = vmatpush2.msra.mxu0 0.0
        %1469 = vmatprep.subr.mxu0 0.0
        %1470 = vmatpush2.msra.mxu0 0.0
        %1471 = vmatprep.subr.mxu0 0.0
        %1472 = vmatpush2.msra.mxu0 0.0
        %1473 = vmatprep.subr.mxu0 0.0
        %1474 = vmatpush2.msra.mxu0 0.0
        %1475 = vmatprep.subr.mxu0 0.0
        %1476 = vmatpush2.msra.mxu0 0.0
        %1477 = vmatprep.subr.mxu0 0.0
        %1478 = vmatpush2.msra.mxu0 0.0
        %1479 = vmatprep.subr.mxu0 0.0
        %1480 = vmatpush2.msra.mxu0 0.0
        %1481 = vmatprep.subr.mxu0 0.0
        %1482 = vmatpush2.msra.mxu0 0.0
        %1483 = vmatprep.mubr.f32.mxu0 0.0
        %1484 = vmatmul.mubr.f32.gmra.mxu0 %v1192
        %v1485 = vpop.f32.mrf.mxu0
        %v1486 = vadd.f32 %v1417, %v1485
        %v1487 = vpop.f32.mrf.mxu0
        %1488 = vdwg.mxu0
        %vm1489 = vcmask 261120
        %v1491 = vsel %vm1489, %v1334, 0
        %v1494 = vsel %vm1489, %v1410, 0
        %1496 = vmatprep.subr.mxu0 0.0
        %1497 = vmatpush1.xpose.msra.mxu0 0.0
        %1498 = vmatprep.subr.mxu0 0.0
        %1499 = vmatpush1.xpose.msra.mxu0 0.0
        %1500 = vmatprep.subr.mxu0 0.0
        %1501 = vmatpush1.xpose.msra.mxu0 0.0
        %1502 = vmatprep.subr.mxu0 0.0
        %1503 = vmatpush1.xpose.msra.mxu0 0.0
        %1504 = vmatprep.subr.mxu0 0.0
        %1505 = vmatpush1.xpose.msra.mxu0 0.0
        %1506 = vmatprep.subr.mxu0 0.0
        %1507 = vmatpush1.xpose.msra.mxu0 0.0
        %1508 = vmatprep.subr.mxu0 0.0
        %1509 = vmatpush1.xpose.msra.mxu0 0.0
        %1510 = vmatprep.subr.mxu0 0.0
        %1511 = vmatpush1.xpose.msra.mxu0 0.0
        %1512 = vmatprep.subr.mxu0 0.0
        %1513 = vmatpush1.xpose.msra.mxu0 0.0
        %1514 = vmatprep.subr.mxu0 0.0
        %1515 = vmatpush1.xpose.msra.mxu0 0.0
        %1516 = vmatprep.subr.mxu0 0.0
        %1517 = vmatpush1.xpose.msra.mxu0 0.0
        %1518 = vmatprep.subr.mxu0 0.0
        %1519 = vmatpush1.xpose.msra.mxu0 0.0
        %1520 = vmatprep.subr.mxu0 0.0
        %1521 = vmatpush1.xpose.msra.mxu0 0.0
        %1522 = vmatprep.subr.mxu0 0.0
        %1523 = vmatpush1.xpose.msra.mxu0 0.0
        %1524 = vmatprep.subr.mxu0 0.0
        %1525 = vmatpush1.xpose.msra.mxu0 0.0
        %1526 = vmatprep.subr.mxu0 0.0
        %1527 = vmatpush1.xpose.msra.mxu0 %v1494
        %1528 = vmatprep.subr.mxu0 0.0
        %1529 = vmatpush2.xpose.msra.mxu0 0.0
        %1530 = vmatprep.subr.mxu0 0.0
        %1531 = vmatpush2.xpose.msra.mxu0 0.0
        %1532 = vmatprep.subr.mxu0 0.0
        %1533 = vmatpush2.xpose.msra.mxu0 0.0
        %1534 = vmatprep.subr.mxu0 0.0
        %1535 = vmatpush2.xpose.msra.mxu0 0.0
        %1536 = vmatprep.subr.mxu0 0.0
        %1537 = vmatpush2.xpose.msra.mxu0 0.0
        %1538 = vmatprep.subr.mxu0 0.0
        %1539 = vmatpush2.xpose.msra.mxu0 0.0
        %1540 = vmatprep.subr.mxu0 0.0
        %1541 = vmatpush2.xpose.msra.mxu0 0.0
        %1542 = vmatprep.subr.mxu0 0.0
        %1543 = vmatpush2.xpose.msra.mxu0 0.0
        %1544 = vmatprep.subr.mxu0 0.0
        %1545 = vmatpush2.xpose.msra.mxu0 0.0
        %1546 = vmatprep.subr.mxu0 0.0
        %1547 = vmatpush2.xpose.msra.mxu0 0.0
        %1548 = vmatprep.subr.mxu0 0.0
        %1549 = vmatpush2.xpose.msra.mxu0 0.0
        %1550 = vmatprep.subr.mxu0 0.0
        %1551 = vmatpush2.xpose.msra.mxu0 0.0
        %1552 = vmatprep.subr.mxu0 0.0
        %1553 = vmatpush2.xpose.msra.mxu0 0.0
        %1554 = vmatprep.subr.mxu0 0.0
        %1555 = vmatpush2.xpose.msra.mxu0 0.0
        %1556 = vmatprep.subr.mxu0 0.0
        %1557 = vmatpush2.xpose.msra.mxu0 0.0
        %1558 = vmatprep.subr.mxu0 0.0
        %1559 = vmatpush2.xpose.msra.mxu0 0.0
        %1560 = vmatprep.mubr.f32.mxu0 0.0
        %1561 = vmatmul.mubr.f32.gmra.mxu0 %v1491
        %v1562 = vpop.f32.mrf.mxu0
        %v1563 = vadd.f32 0.0, %v1562
        %v1564 = vpop.f32.mrf.mxu0
        %1565 = vdwg.mxu0
        %v1566 = vmul.f32 %v1563, 0.17677669
        %vm1567 = vcmask 64512
        %v1568 = vsel %vm1567, %v1566, -inf
        %1569 = vmax.xlane.f32.xlu0 %v1568
        %v1570 = vpop.xlane.xlu0 %1569
        %v1571 = vsub.f32 %v1566, %v1570
        %v1572 = vmul.f32 %v1571, 1.442695
        %v1573 = vpow.pop %v1572
        %v1574 = vsel %vm1567, %v1573, 0.0
        %1575 = vadd.xlane.f32.xlu0 %v1574
        %v1576 = vpop.xlane.xlu0 %1575
        %v1577 = vrcp.pop %v1576
        %v1578 = vmul.f32 %v1573, %v1577
        %v1580 = vsel %vm1567, %v1578, 0
        %1582 = vmatprep.subr.mxu0 0.0
        %1583 = vmatpush1.msra.mxu0 0.0
        %1584 = vmatprep.subr.mxu0 0.0
        %1585 = vmatpush1.msra.mxu0 0.0
        %1586 = vmatprep.subr.mxu0 0.0
        %1587 = vmatpush1.msra.mxu0 0.0
        %1588 = vmatprep.subr.mxu0 0.0
        %1589 = vmatpush1.msra.mxu0 0.0
        %1590 = vmatprep.subr.mxu0 0.0
        %1591 = vmatpush1.msra.mxu0 0.0
        %1592 = vmatprep.subr.mxu0 0.0
        %1593 = vmatpush1.msra.mxu0 0.0
        %1594 = vmatprep.subr.mxu0 0.0
        %1595 = vmatpush1.msra.mxu0 0.0
        %1596 = vmatprep.subr.mxu0 0.0
        %1597 = vmatpush1.msra.mxu0 0.0
        %1598 = vmatprep.subr.mxu0 0.0
        %1599 = vmatpush1.msra.mxu0 0.0
        %1600 = vmatprep.subr.mxu0 0.0
        %1601 = vmatpush1.msra.mxu0 0.0
        %1602 = vmatprep.subr.mxu0 0.0
        %1603 = vmatpush1.msra.mxu0 0.0
        %1604 = vmatprep.subr.mxu0 0.0
        %1605 = vmatpush1.msra.mxu0 0.0
        %1606 = vmatprep.subr.mxu0 0.0
        %1607 = vmatpush1.msra.mxu0 0.0
        %1608 = vmatprep.subr.mxu0 0.0
        %1609 = vmatpush1.msra.mxu0 0.0
        %1610 = vmatprep.subr.mxu0 0.0
        %1611 = vmatpush1.msra.mxu0 0.0
        %1612 = vmatprep.subr.mxu0 0.0
        %1613 = vmatpush1.msra.mxu0 %v1486
        %1614 = vmatprep.subr.mxu0 0.0
        %1615 = vmatpush2.msra.mxu0 0.0
        %1616 = vmatprep.subr.mxu0 0.0
        %1617 = vmatpush2.msra.mxu0 0.0
        %1618 = vmatprep.subr.mxu0 0.0
        %1619 = vmatpush2.msra.mxu0 0.0
        %1620 = vmatprep.subr.mxu0 0.0
        %1621 = vmatpush2.msra.mxu0 0.0
        %1622 = vmatprep.subr.mxu0 0.0
        %1623 = vmatpush2.msra.mxu0 0.0
        %1624 = vmatprep.subr.mxu0 0.0
        %1625 = vmatpush2.msra.mxu0 0.0
        %1626 = vmatprep.subr.mxu0 0.0
        %1627 = vmatpush2.msra.mxu0 0.0
        %1628 = vmatprep.subr.mxu0 0.0
        %1629 = vmatpush2.msra.mxu0 0.0
        %1630 = vmatprep.subr.mxu0 0.0
        %1631 = vmatpush2.msra.mxu0 0.0
        %1632 = vmatprep.subr.mxu0 0.0
        %1633 = vmatpush2.msra.mxu0 0.0
        %1634 = vmatprep.subr.mxu0 0.0
        %1635 = vmatpush2.msra.mxu0 0.0
        %1636 = vmatprep.subr.mxu0 0.0
        %1637 = vmatpush2.msra.mxu0 0.0
        %1638 = vmatprep.subr.mxu0 0.0
        %1639 = vmatpush2.msra.mxu0 0.0
        %1640 = vmatprep.subr.mxu0 0.0
        %1641 = vmatpush2.msra.mxu0 0.0
        %1642 = vmatprep.subr.mxu0 0.0
        %1643 = vmatpush2.msra.mxu0 0.0
        %1644 = vmatprep.subr.mxu0 0.0
        %1645 = vmatpush2.msra.mxu0 0.0
        %1646 = vmatprep.mubr.f32.mxu0 0.0
        %1647 = vmatmul.mubr.f32.gmra.mxu0 %v1580
        %v1648 = vpop.f32.mrf.mxu0
        %v1649 = vadd.f32 0.0, %v1648
        %v1650 = vpop.f32.mrf.mxu0
        %1651 = vdwg.mxu0
        %1652 = vrot.lane.b32.xlu0 %v1334, 96
        %v1653 = vpop.permute.xlu0 %1652
        %1654 = vrot.lane.b32.xlu0 %v1410, 96
        %v1655 = vpop.permute.xlu0 %1654
        %v1656 = vsel %vm1489, %v1653, 0
        %v1658 = vsel %vm1489, %v1655, 0
        %1660 = vmatprep.subr.mxu0 0.0
        %1661 = vmatpush1.xpose.msra.mxu0 0.0
        %1662 = vmatprep.subr.mxu0 0.0
        %1663 = vmatpush1.xpose.msra.mxu0 0.0
        %1664 = vmatprep.subr.mxu0 0.0
        %1665 = vmatpush1.xpose.msra.mxu0 0.0
        %1666 = vmatprep.subr.mxu0 0.0
        %1667 = vmatpush1.xpose.msra.mxu0 0.0
        %1668 = vmatprep.subr.mxu0 0.0
        %1669 = vmatpush1.xpose.msra.mxu0 0.0
        %1670 = vmatprep.subr.mxu0 0.0
        %1671 = vmatpush1.xpose.msra.mxu0 0.0
        %1672 = vmatprep.subr.mxu0 0.0
        %1673 = vmatpush1.xpose.msra.mxu0 0.0
        %1674 = vmatprep.subr.mxu0 0.0
        %1675 = vmatpush1.xpose.msra.mxu0 0.0
        %1676 = vmatprep.subr.mxu0 0.0
        %1677 = vmatpush1.xpose.msra.mxu0 0.0
        %1678 = vmatprep.subr.mxu0 0.0
        %1679 = vmatpush1.xpose.msra.mxu0 0.0
        %1680 = vmatprep.subr.mxu0 0.0
        %1681 = vmatpush1.xpose.msra.mxu0 0.0
        %1682 = vmatprep.subr.mxu0 0.0
        %1683 = vmatpush1.xpose.msra.mxu0 0.0
        %1684 = vmatprep.subr.mxu0 0.0
        %1685 = vmatpush1.xpose.msra.mxu0 0.0
        %1686 = vmatprep.subr.mxu0 0.0
        %1687 = vmatpush1.xpose.msra.mxu0 0.0
        %1688 = vmatprep.subr.mxu0 0.0
        %1689 = vmatpush1.xpose.msra.mxu0 0.0
        %1690 = vmatprep.subr.mxu0 0.0
        %1691 = vmatpush1.xpose.msra.mxu0 %v1658
        %1692 = vmatprep.subr.mxu0 0.0
        %1693 = vmatpush2.xpose.msra.mxu0 0.0
        %1694 = vmatprep.subr.mxu0 0.0
        %1695 = vmatpush2.xpose.msra.mxu0 0.0
        %1696 = vmatprep.subr.mxu0 0.0
        %1697 = vmatpush2.xpose.msra.mxu0 0.0
        %1698 = vmatprep.subr.mxu0 0.0
        %1699 = vmatpush2.xpose.msra.mxu0 0.0
        %1700 = vmatprep.subr.mxu0 0.0
        %1701 = vmatpush2.xpose.msra.mxu0 0.0
        %1702 = vmatprep.subr.mxu0 0.0
        %1703 = vmatpush2.xpose.msra.mxu0 0.0
        %1704 = vmatprep.subr.mxu0 0.0
        %1705 = vmatpush2.xpose.msra.mxu0 0.0
        %1706 = vmatprep.subr.mxu0 0.0
        %1707 = vmatpush2.xpose.msra.mxu0 0.0
        %1708 = vmatprep.subr.mxu0 0.0
        %1709 = vmatpush2.xpose.msra.mxu0 0.0
        %1710 = vmatprep.subr.mxu0 0.0
        %1711 = vmatpush2.xpose.msra.mxu0 0.0
        %1712 = vmatprep.subr.mxu0 0.0
        %1713 = vmatpush2.xpose.msra.mxu0 0.0
        %1714 = vmatprep.subr.mxu0 0.0
        %1715 = vmatpush2.xpose.msra.mxu0 0.0
        %1716 = vmatprep.subr.mxu0 0.0
        %1717 = vmatpush2.xpose.msra.mxu0 0.0
        %1718 = vmatprep.subr.mxu0 0.0
        %1719 = vmatpush2.xpose.msra.mxu0 0.0
        %1720 = vmatprep.subr.mxu0 0.0
        %1721 = vmatpush2.xpose.msra.mxu0 0.0
        %1722 = vmatprep.subr.mxu0 0.0
        %1723 = vmatpush2.xpose.msra.mxu0 0.0
        %1724 = vmatprep.mubr.f32.mxu0 0.0
        %1725 = vmatmul.mubr.f32.gmra.mxu0 %v1656
        %v1726 = vpop.f32.mrf.mxu0
        %v1727 = vadd.f32 0.0, %v1726
        %v1728 = vpop.f32.mrf.mxu0
        %1729 = vdwg.mxu0
        %v1730 = vmul.f32 %v1727, 0.17677669
        %v1731 = vsel %vm1567, %v1730, -inf
        %1732 = vmax.xlane.f32.xlu0 %v1731
        %v1733 = vpop.xlane.xlu0 %1732
        %v1734 = vsub.f32 %v1730, %v1733
        %v1735 = vmul.f32 %v1734, 1.442695
        %v1736 = vpow.pop %v1735
        %v1737 = vsel %vm1567, %v1736, 0.0
        %1738 = vadd.xlane.f32.xlu0 %v1737
        %v1739 = vpop.xlane.xlu0 %1738
        %v1740 = vrcp.pop %v1739
        %v1741 = vmul.f32 %v1736, %v1740
        %1743 = vrot.lane.b32.xlu0 %v1486, 96
        %v1744 = vpop.permute.xlu0 %1743
        %v1747 = vsel %vm1567, %v1741, 0
        %1749 = vmatprep.subr.mxu0 0.0
        %1750 = vmatpush1.msra.mxu0 0.0
        %1751 = vmatprep.subr.mxu0 0.0
        %1752 = vmatpush1.msra.mxu0 0.0
        %1753 = vmatprep.subr.mxu0 0.0
        %1754 = vmatpush1.msra.mxu0 0.0
        %1755 = vmatprep.subr.mxu0 0.0
        %1756 = vmatpush1.msra.mxu0 0.0
        %1757 = vmatprep.subr.mxu0 0.0
        %1758 = vmatpush1.msra.mxu0 0.0
        %1759 = vmatprep.subr.mxu0 0.0
        %1760 = vmatpush1.msra.mxu0 0.0
        %1761 = vmatprep.subr.mxu0 0.0
        %1762 = vmatpush1.msra.mxu0 0.0
        %1763 = vmatprep.subr.mxu0 0.0
        %1764 = vmatpush1.msra.mxu0 0.0
        %1765 = vmatprep.subr.mxu0 0.0
        %1766 = vmatpush1.msra.mxu0 0.0
        %1767 = vmatprep.subr.mxu0 0.0
        %1768 = vmatpush1.msra.mxu0 0.0
        %1769 = vmatprep.subr.mxu0 0.0
        %1770 = vmatpush1.msra.mxu0 0.0
        %1771 = vmatprep.subr.mxu0 0.0
        %1772 = vmatpush1.msra.mxu0 0.0
        %1773 = vmatprep.subr.mxu0 0.0
        %1774 = vmatpush1.msra.mxu0 0.0
        %1775 = vmatprep.subr.mxu0 0.0
        %1776 = vmatpush1.msra.mxu0 0.0
        %1777 = vmatprep.subr.mxu0 0.0
        %1778 = vmatpush1.msra.mxu0 0.0
        %1779 = vmatprep.subr.mxu0 0.0
        %1780 = vmatpush1.msra.mxu0 %v1744
        %1781 = vmatprep.subr.mxu0 0.0
        %1782 = vmatpush2.msra.mxu0 0.0
        %1783 = vmatprep.subr.mxu0 0.0
        %1784 = vmatpush2.msra.mxu0 0.0
        %1785 = vmatprep.subr.mxu0 0.0
        %1786 = vmatpush2.msra.mxu0 0.0
        %1787 = vmatprep.subr.mxu0 0.0
        %1788 = vmatpush2.msra.mxu0 0.0
        %1789 = vmatprep.subr.mxu0 0.0
        %1790 = vmatpush2.msra.mxu0 0.0
        %1791 = vmatprep.subr.mxu0 0.0
        %1792 = vmatpush2.msra.mxu0 0.0
        %1793 = vmatprep.subr.mxu0 0.0
        %1794 = vmatpush2.msra.mxu0 0.0
        %1795 = vmatprep.subr.mxu0 0.0
        %1796 = vmatpush2.msra.mxu0 0.0
        %1797 = vmatprep.subr.mxu0 0.0
        %1798 = vmatpush2.msra.mxu0 0.0
        %1799 = vmatprep.subr.mxu0 0.0
        %1800 = vmatpush2.msra.mxu0 0.0
        %1801 = vmatprep.subr.mxu0 0.0
        %1802 = vmatpush2.msra.mxu0 0.0
        %1803 = vmatprep.subr.mxu0 0.0
        %1804 = vmatpush2.msra.mxu0 0.0
        %1805 = vmatprep.subr.mxu0 0.0
        %1806 = vmatpush2.msra.mxu0 0.0
        %1807 = vmatprep.subr.mxu0 0.0
        %1808 = vmatpush2.msra.mxu0 0.0
        %1809 = vmatprep.subr.mxu0 0.0
        %1810 = vmatpush2.msra.mxu0 0.0
        %1811 = vmatprep.subr.mxu0 0.0
        %1812 = vmatpush2.msra.mxu0 0.0
        %1813 = vmatprep.mubr.f32.mxu0 0.0
        %1814 = vmatmul.mubr.f32.gmra.mxu0 %v1747
        %v1815 = vpop.f32.mrf.mxu0
        %v1816 = vadd.f32 0.0, %v1815
        %v1817 = vpop.f32.mrf.mxu0
        %1818 = vdwg.mxu0
        %v1820 = vsel %vm1489, %v1816, 0
        %1822 = vmatprep.subr.mxu0 0.0
        %1823 = vmatpush1.msra.mxu0 0.0
        %1824 = vmatprep.subr.mxu0 0.0
        %1825 = vmatpush1.msra.mxu0 0.0
        %1826 = vmatprep.subr.mxu0 0.0
        %1827 = vmatpush1.msra.mxu0 0.0
        %1828 = vmatprep.subr.mxu0 0.0
        %1829 = vmatpush1.msra.mxu0 0.0
        %1830 = vmatprep.subr.mxu0 0.0
        %1831 = vmatpush1.msra.mxu0 0.0
        %1832 = vmatprep.subr.mxu0 0.0
        %1833 = vmatpush1.msra.mxu0 0.0
        %1834 = vmatprep.subr.mxu0 0.0
        %1835 = vmatpush1.msra.mxu0 0.0
        %1836 = vmatprep.subr.mxu0 0.0
        %1837 = vmatpush1.msra.mxu0 0.0
        %1838 = vmatprep.subr.mxu0 0.0
        %1839 = vmatpush1.msra.mxu0 0.0
        %1840 = vmatprep.subr.mxu0 0.0
        %1841 = vmatpush1.msra.mxu0 0.0
        %1842 = vmatprep.subr.mxu0 0.0
        %1843 = vmatpush1.msra.mxu0 0.0
        %1844 = vmatprep.subr.mxu0 0.0
        %1845 = vmatpush1.msra.mxu0 0.0
        %1846 = vmatprep.subr.mxu0 0.0
        %1847 = vmatpush1.msra.mxu0 %v1251
        %1848 = vmatprep.subr.mxu0 0.0
        %1849 = vmatpush1.msra.mxu0 %v1250
        %1850 = vmatprep.subr.mxu0 0.0
        %1851 = vmatpush1.msra.mxu0 %v1249
        %1852 = vmatprep.subr.mxu0 0.0
        %1853 = vmatpush1.msra.mxu0 %v1248
        %1854 = vmatprep.subr.mxu0 0.0
        %1855 = vmatpush2.msra.mxu0 0.0
        %1856 = vmatprep.subr.mxu0 0.0
        %1857 = vmatpush2.msra.mxu0 0.0
        %1858 = vmatprep.subr.mxu0 0.0
        %1859 = vmatpush2.msra.mxu0 0.0
        %1860 = vmatprep.subr.mxu0 0.0
        %1861 = vmatpush2.msra.mxu0 0.0
        %1862 = vmatprep.subr.mxu0 0.0
        %1863 = vmatpush2.msra.mxu0 0.0
        %1864 = vmatprep.subr.mxu0 0.0
        %1865 = vmatpush2.msra.mxu0 0.0
        %1866 = vmatprep.subr.mxu0 0.0
        %1867 = vmatpush2.msra.mxu0 0.0
        %1868 = vmatprep.subr.mxu0 0.0
        %1869 = vmatpush2.msra.mxu0 0.0
        %1870 = vmatprep.subr.mxu0 0.0
        %1871 = vmatpush2.msra.mxu0 0.0
        %1872 = vmatprep.subr.mxu0 0.0
        %1873 = vmatpush2.msra.mxu0 0.0
        %1874 = vmatprep.subr.mxu0 0.0
        %1875 = vmatpush2.msra.mxu0 0.0
        %1876 = vmatprep.subr.mxu0 0.0
        %1877 = vmatpush2.msra.mxu0 0.0
        %1878 = vmatprep.subr.mxu0 0.0
        %1879 = vmatpush2.msra.mxu0 0.0
        %1880 = vmatprep.subr.mxu0 0.0
        %1881 = vmatpush2.msra.mxu0 0.0
        %1882 = vmatprep.subr.mxu0 0.0
        %1883 = vmatpush2.msra.mxu0 0.0
        %1884 = vmatprep.subr.mxu0 0.0
        %1885 = vmatpush2.msra.mxu0 0.0
        %1886 = vmatprep.mubr.f32.mxu0 0.0
        %1887 = vmatmul.mubr.f32.gmra.mxu0 %v1820
        %v1888 = vpop.f32.mrf.mxu0
        %v1889 = vadd.f32 0.0, %v1888
        %v1890 = vpop.f32.mrf.mxu0
        %1891 = vdwg.mxu0
        %v1893 = vsel %vm1489, %v1649, 0
        %1895 = vmatprep.subr.mxu0 0.0
        %1896 = vmatpush1.msra.mxu0 0.0
        %1897 = vmatprep.subr.mxu0 0.0
        %1898 = vmatpush1.msra.mxu0 0.0
        %1899 = vmatprep.subr.mxu0 0.0
        %1900 = vmatpush1.msra.mxu0 0.0
        %1901 = vmatprep.subr.mxu0 0.0
        %1902 = vmatpush1.msra.mxu0 0.0
        %1903 = vmatprep.subr.mxu0 0.0
        %1904 = vmatpush1.msra.mxu0 0.0
        %1905 = vmatprep.subr.mxu0 0.0
        %1906 = vmatpush1.msra.mxu0 0.0
        %1907 = vmatprep.subr.mxu0 0.0
        %1908 = vmatpush1.msra.mxu0 0.0
        %1909 = vmatprep.subr.mxu0 0.0
        %1910 = vmatpush1.msra.mxu0 0.0
        %1911 = vmatprep.subr.mxu0 0.0
        %1912 = vmatpush1.msra.mxu0 0.0
        %1913 = vmatprep.subr.mxu0 0.0
        %1914 = vmatpush1.msra.mxu0 0.0
        %1915 = vmatprep.subr.mxu0 0.0
        %1916 = vmatpush1.msra.mxu0 0.0
        %1917 = vmatprep.subr.mxu0 0.0
        %1918 = vmatpush1.msra.mxu0 0.0
        %1919 = vmatprep.subr.mxu0 0.0
        %1920 = vmatpush1.msra.mxu0 %v1247
        %1921 = vmatprep.subr.mxu0 0.0
        %1922 = vmatpush1.msra.mxu0 %v1246
        %1923 = vmatprep.subr.mxu0 0.0
        %1924 = vmatpush1.msra.mxu0 %v1245
        %1925 = vmatprep.subr.mxu0 0.0
        %1926 = vmatpush1.msra.mxu0 %v1244
        %1927 = vmatprep.subr.mxu0 0.0
        %1928 = vmatpush2.msra.mxu0 0.0
        %1929 = vmatprep.subr.mxu0 0.0
        %1930 = vmatpush2.msra.mxu0 0.0
        %1931 = vmatprep.subr.mxu0 0.0
        %1932 = vmatpush2.msra.mxu0 0.0
        %1933 = vmatprep.subr.mxu0 0.0
        %1934 = vmatpush2.msra.mxu0 0.0
        %1935 = vmatprep.subr.mxu0 0.0
        %1936 = vmatpush2.msra.mxu0 0.0
        %1937 = vmatprep.subr.mxu0 0.0
        %1938 = vmatpush2.msra.mxu0 0.0
        %1939 = vmatprep.subr.mxu0 0.0
        %1940 = vmatpush2.msra.mxu0 0.0
        %1941 = vmatprep.subr.mxu0 0.0
        %1942 = vmatpush2.msra.mxu0 0.0
        %1943 = vmatprep.subr.mxu0 0.0
        %1944 = vmatpush2.msra.mxu0 0.0
        %1945 = vmatprep.subr.mxu0 0.0
        %1946 = vmatpush2.msra.mxu0 0.0
        %1947 = vmatprep.subr.mxu0 0.0
        %1948 = vmatpush2.msra.mxu0 0.0
        %1949 = vmatprep.subr.mxu0 0.0
        %1950 = vmatpush2.msra.mxu0 0.0
        %1951 = vmatprep.subr.mxu0 0.0
        %1952 = vmatpush2.msra.mxu0 0.0
        %1953 = vmatprep.subr.mxu0 0.0
        %1954 = vmatpush2.msra.mxu0 0.0
        %1955 = vmatprep.subr.mxu0 0.0
        %1956 = vmatpush2.msra.mxu0 0.0
        %1957 = vmatprep.subr.mxu0 0.0
        %1958 = vmatpush2.msra.mxu0 0.0
        %1959 = vmatprep.mubr.f32.mxu0 0.0
        %1960 = vmatmul.mubr.f32.gmra.mxu0 %v1893
        %v1961 = vpop.f32.mrf.mxu0
        %v1962 = vadd.f32 %v1889, %v1961
        %v1963 = vpop.f32.mrf.mxu0
        %1964 = vdwg.mxu0
        %1965 = vrot.lane.b32.xlu0 %v1334, 64
        %v1966 = vpop.permute.xlu0 %1965
        %1967 = vrot.lane.b32.xlu0 %v1410, 64
        %v1968 = vpop.permute.xlu0 %1967
        %v1969 = vsel %vm1489, %v1966, 0
        %v1971 = vsel %vm1489, %v1968, 0
        %1973 = vmatprep.subr.mxu0 0.0
        %1974 = vmatpush1.xpose.msra.mxu0 0.0
        %1975 = vmatprep.subr.mxu0 0.0
        %1976 = vmatpush1.xpose.msra.mxu0 0.0
        %1977 = vmatprep.subr.mxu0 0.0
        %1978 = vmatpush1.xpose.msra.mxu0 0.0
        %1979 = vmatprep.subr.mxu0 0.0
        %1980 = vmatpush1.xpose.msra.mxu0 0.0
        %1981 = vmatprep.subr.mxu0 0.0
        %1982 = vmatpush1.xpose.msra.mxu0 0.0
        %1983 = vmatprep.subr.mxu0 0.0
        %1984 = vmatpush1.xpose.msra.mxu0 0.0
        %1985 = vmatprep.subr.mxu0 0.0
        %1986 = vmatpush1.xpose.msra.mxu0 0.0
        %1987 = vmatprep.subr.mxu0 0.0
        %1988 = vmatpush1.xpose.msra.mxu0 0.0
        %1989 = vmatprep.subr.mxu0 0.0
        %1990 = vmatpush1.xpose.msra.mxu0 0.0
        %1991 = vmatprep.subr.mxu0 0.0
        %1992 = vmatpush1.xpose.msra.mxu0 0.0
        %1993 = vmatprep.subr.mxu0 0.0
        %1994 = vmatpush1.xpose.msra.mxu0 0.0
        %1995 = vmatprep.subr.mxu0 0.0
        %1996 = vmatpush1.xpose.msra.mxu0 0.0
        %1997 = vmatprep.subr.mxu0 0.0
        %1998 = vmatpush1.xpose.msra.mxu0 0.0
        %1999 = vmatprep.subr.mxu0 0.0
        %2000 = vmatpush1.xpose.msra.mxu0 0.0
        %2001 = vmatprep.subr.mxu0 0.0
        %2002 = vmatpush1.xpose.msra.mxu0 0.0
        %2003 = vmatprep.subr.mxu0 0.0
        %2004 = vmatpush1.xpose.msra.mxu0 %v1971
        %2005 = vmatprep.subr.mxu0 0.0
        %2006 = vmatpush2.xpose.msra.mxu0 0.0
        %2007 = vmatprep.subr.mxu0 0.0
        %2008 = vmatpush2.xpose.msra.mxu0 0.0
        %2009 = vmatprep.subr.mxu0 0.0
        %2010 = vmatpush2.xpose.msra.mxu0 0.0
        %2011 = vmatprep.subr.mxu0 0.0
        %2012 = vmatpush2.xpose.msra.mxu0 0.0
        %2013 = vmatprep.subr.mxu0 0.0
        %2014 = vmatpush2.xpose.msra.mxu0 0.0
        %2015 = vmatprep.subr.mxu0 0.0
        %2016 = vmatpush2.xpose.msra.mxu0 0.0
        %2017 = vmatprep.subr.mxu0 0.0
        %2018 = vmatpush2.xpose.msra.mxu0 0.0
        %2019 = vmatprep.subr.mxu0 0.0
        %2020 = vmatpush2.xpose.msra.mxu0 0.0
        %2021 = vmatprep.subr.mxu0 0.0
        %2022 = vmatpush2.xpose.msra.mxu0 0.0
        %2023 = vmatprep.subr.mxu0 0.0
        %2024 = vmatpush2.xpose.msra.mxu0 0.0
        %2025 = vmatprep.subr.mxu0 0.0
        %2026 = vmatpush2.xpose.msra.mxu0 0.0
        %2027 = vmatprep.subr.mxu0 0.0
        %2028 = vmatpush2.xpose.msra.mxu0 0.0
        %2029 = vmatprep.subr.mxu0 0.0
        %2030 = vmatpush2.xpose.msra.mxu0 0.0
        %2031 = vmatprep.subr.mxu0 0.0
        %2032 = vmatpush2.xpose.msra.mxu0 0.0
        %2033 = vmatprep.subr.mxu0 0.0
        %2034 = vmatpush2.xpose.msra.mxu0 0.0
        %2035 = vmatprep.subr.mxu0 0.0
        %2036 = vmatpush2.xpose.msra.mxu0 0.0
        %2037 = vmatprep.mubr.f32.mxu0 0.0
        %2038 = vmatmul.mubr.f32.gmra.mxu0 %v1969
        %v2039 = vpop.f32.mrf.mxu0
        %v2040 = vadd.f32 0.0, %v2039
        %v2041 = vpop.f32.mrf.mxu0
        %2042 = vdwg.mxu0
        %v2043 = vmul.f32 %v2040, 0.17677669
        %v2044 = vsel %vm1567, %v2043, -inf
        %2045 = vmax.xlane.f32.xlu0 %v2044
        %v2046 = vpop.xlane.xlu0 %2045
        %v2047 = vsub.f32 %v2043, %v2046
        %v2048 = vmul.f32 %v2047, 1.442695
        %v2049 = vpow.pop %v2048
        %v2050 = vsel %vm1567, %v2049, 0.0
        %2051 = vadd.xlane.f32.xlu0 %v2050
        %v2052 = vpop.xlane.xlu0 %2051
        %v2053 = vrcp.pop %v2052
        %v2054 = vmul.f32 %v2049, %v2053
        %2055 = vrot.lane.b32.xlu0 %v1486, 64
        %v2056 = vpop.permute.xlu0 %2055
        %v2059 = vsel %vm1567, %v2054, 0
        %2061 = vmatprep.subr.mxu0 0.0
        %2062 = vmatpush1.msra.mxu0 0.0
        %2063 = vmatprep.subr.mxu0 0.0
        %2064 = vmatpush1.msra.mxu0 0.0
        %2065 = vmatprep.subr.mxu0 0.0
        %2066 = vmatpush1.msra.mxu0 0.0
        %2067 = vmatprep.subr.mxu0 0.0
        %2068 = vmatpush1.msra.mxu0 0.0
        %2069 = vmatprep.subr.mxu0 0.0
        %2070 = vmatpush1.msra.mxu0 0.0
        %2071 = vmatprep.subr.mxu0 0.0
        %2072 = vmatpush1.msra.mxu0 0.0
        %2073 = vmatprep.subr.mxu0 0.0
        %2074 = vmatpush1.msra.mxu0 0.0
        %2075 = vmatprep.subr.mxu0 0.0
        %2076 = vmatpush1.msra.mxu0 0.0
        %2077 = vmatprep.subr.mxu0 0.0
        %2078 = vmatpush1.msra.mxu0 0.0
        %2079 = vmatprep.subr.mxu0 0.0
        %2080 = vmatpush1.msra.mxu0 0.0
        %2081 = vmatprep.subr.mxu0 0.0
        %2082 = vmatpush1.msra.mxu0 0.0
        %2083 = vmatprep.subr.mxu0 0.0
        %2084 = vmatpush1.msra.mxu0 0.0
        %2085 = vmatprep.subr.mxu0 0.0
        %2086 = vmatpush1.msra.mxu0 0.0
        %2087 = vmatprep.subr.mxu0 0.0
        %2088 = vmatpush1.msra.mxu0 0.0
        %2089 = vmatprep.subr.mxu0 0.0
        %2090 = vmatpush1.msra.mxu0 0.0
        %2091 = vmatprep.subr.mxu0 0.0
        %2092 = vmatpush1.msra.mxu0 %v2056
        %2093 = vmatprep.subr.mxu0 0.0
        %2094 = vmatpush2.msra.mxu0 0.0
        %2095 = vmatprep.subr.mxu0 0.0
        %2096 = vmatpush2.msra.mxu0 0.0
        %2097 = vmatprep.subr.mxu0 0.0
        %2098 = vmatpush2.msra.mxu0 0.0
        %2099 = vmatprep.subr.mxu0 0.0
        %2100 = vmatpush2.msra.mxu0 0.0
        %2101 = vmatprep.subr.mxu0 0.0
        %2102 = vmatpush2.msra.mxu0 0.0
        %2103 = vmatprep.subr.mxu0 0.0
        %2104 = vmatpush2.msra.mxu0 0.0
        %2105 = vmatprep.subr.mxu0 0.0
        %2106 = vmatpush2.msra.mxu0 0.0
        %2107 = vmatprep.subr.mxu0 0.0
        %2108 = vmatpush2.msra.mxu0 0.0
        %2109 = vmatprep.subr.mxu0 0.0
        %2110 = vmatpush2.msra.mxu0 0.0
        %2111 = vmatprep.subr.mxu0 0.0
        %2112 = vmatpush2.msra.mxu0 0.0
        %2113 = vmatprep.subr.mxu0 0.0
        %2114 = vmatpush2.msra.mxu0 0.0
        %2115 = vmatprep.subr.mxu0 0.0
        %2116 = vmatpush2.msra.mxu0 0.0
        %2117 = vmatprep.subr.mxu0 0.0
        %2118 = vmatpush2.msra.mxu0 0.0
        %2119 = vmatprep.subr.mxu0 0.0
        %2120 = vmatpush2.msra.mxu0 0.0
        %2121 = vmatprep.subr.mxu0 0.0
        %2122 = vmatpush2.msra.mxu0 0.0
        %2123 = vmatprep.subr.mxu0 0.0
        %2124 = vmatpush2.msra.mxu0 0.0
        %2125 = vmatprep.mubr.f32.mxu0 0.0
        %2126 = vmatmul.mubr.f32.gmra.mxu0 %v2059
        %v2127 = vpop.f32.mrf.mxu0
        %v2128 = vadd.f32 0.0, %v2127
        %v2129 = vpop.f32.mrf.mxu0
        %2130 = vdwg.mxu0
        %v2132 = vsel %vm1489, %v2128, 0
        %2134 = vmatprep.subr.mxu0 0.0
        %2135 = vmatpush1.msra.mxu0 0.0
        %2136 = vmatprep.subr.mxu0 0.0
        %2137 = vmatpush1.msra.mxu0 0.0
        %2138 = vmatprep.subr.mxu0 0.0
        %2139 = vmatpush1.msra.mxu0 0.0
        %2140 = vmatprep.subr.mxu0 0.0
        %2141 = vmatpush1.msra.mxu0 0.0
        %2142 = vmatprep.subr.mxu0 0.0
        %2143 = vmatpush1.msra.mxu0 0.0
        %2144 = vmatprep.subr.mxu0 0.0
        %2145 = vmatpush1.msra.mxu0 0.0
        %2146 = vmatprep.subr.mxu0 0.0
        %2147 = vmatpush1.msra.mxu0 0.0
        %2148 = vmatprep.subr.mxu0 0.0
        %2149 = vmatpush1.msra.mxu0 0.0
        %2150 = vmatprep.subr.mxu0 0.0
        %2151 = vmatpush1.msra.mxu0 0.0
        %2152 = vmatprep.subr.mxu0 0.0
        %2153 = vmatpush1.msra.mxu0 0.0
        %2154 = vmatprep.subr.mxu0 0.0
        %2155 = vmatpush1.msra.mxu0 0.0
        %2156 = vmatprep.subr.mxu0 0.0
        %2157 = vmatpush1.msra.mxu0 0.0
        %2158 = vmatprep.subr.mxu0 0.0
        %2159 = vmatpush1.msra.mxu0 %v1255
        %2160 = vmatprep.subr.mxu0 0.0
        %2161 = vmatpush1.msra.mxu0 %v1254
        %2162 = vmatprep.subr.mxu0 0.0
        %2163 = vmatpush1.msra.mxu0 %v1253
        %2164 = vmatprep.subr.mxu0 0.0
        %2165 = vmatpush1.msra.mxu0 %v1252
        %2166 = vmatprep.subr.mxu0 0.0
        %2167 = vmatpush2.msra.mxu0 0.0
        %2168 = vmatprep.subr.mxu0 0.0
        %2169 = vmatpush2.msra.mxu0 0.0
        %2170 = vmatprep.subr.mxu0 0.0
        %2171 = vmatpush2.msra.mxu0 0.0
        %2172 = vmatprep.subr.mxu0 0.0
        %2173 = vmatpush2.msra.mxu0 0.0
        %2174 = vmatprep.subr.mxu0 0.0
        %2175 = vmatpush2.msra.mxu0 0.0
        %2176 = vmatprep.subr.mxu0 0.0
        %2177 = vmatpush2.msra.mxu0 0.0
        %2178 = vmatprep.subr.mxu0 0.0
        %2179 = vmatpush2.msra.mxu0 0.0
        %2180 = vmatprep.subr.mxu0 0.0
        %2181 = vmatpush2.msra.mxu0 0.0
        %2182 = vmatprep.subr.mxu0 0.0
        %2183 = vmatpush2.msra.mxu0 0.0
        %2184 = vmatprep.subr.mxu0 0.0
        %2185 = vmatpush2.msra.mxu0 0.0
        %2186 = vmatprep.subr.mxu0 0.0
        %2187 = vmatpush2.msra.mxu0 0.0
        %2188 = vmatprep.subr.mxu0 0.0
        %2189 = vmatpush2.msra.mxu0 0.0
        %2190 = vmatprep.subr.mxu0 0.0
        %2191 = vmatpush2.msra.mxu0 0.0
        %2192 = vmatprep.subr.mxu0 0.0
        %2193 = vmatpush2.msra.mxu0 0.0
        %2194 = vmatprep.subr.mxu0 0.0
        %2195 = vmatpush2.msra.mxu0 0.0
        %2196 = vmatprep.subr.mxu0 0.0
        %2197 = vmatpush2.msra.mxu0 0.0
        %2198 = vmatprep.mubr.f32.mxu0 0.0
        %2199 = vmatmul.mubr.f32.gmra.mxu0 %v2132
        %v2200 = vpop.f32.mrf.mxu0
        %v2201 = vadd.f32 0.0, %v2200
        %v2202 = vpop.f32.mrf.mxu0
        %2203 = vdwg.mxu0
        %v2204 = vadd.f32 %v1962, %v2201
        %2205 = vrot.lane.b32.xlu0 %v1334, 32
        %v2206 = vpop.permute.xlu0 %2205
        %2207 = vrot.lane.b32.xlu0 %v1410, 32
        %v2208 = vpop.permute.xlu0 %2207
        %v2209 = vsel %vm1489, %v2206, 0
        %v2211 = vsel %vm1489, %v2208, 0
        %2213 = vmatprep.subr.mxu0 0.0
        %2214 = vmatpush1.xpose.msra.mxu0 0.0
        %2215 = vmatprep.subr.mxu0 0.0
        %2216 = vmatpush1.xpose.msra.mxu0 0.0
        %2217 = vmatprep.subr.mxu0 0.0
        %2218 = vmatpush1.xpose.msra.mxu0 0.0
        %2219 = vmatprep.subr.mxu0 0.0
        %2220 = vmatpush1.xpose.msra.mxu0 0.0
        %2221 = vmatprep.subr.mxu0 0.0
        %2222 = vmatpush1.xpose.msra.mxu0 0.0
        %2223 = vmatprep.subr.mxu0 0.0
        %2224 = vmatpush1.xpose.msra.mxu0 0.0
        %2225 = vmatprep.subr.mxu0 0.0
        %2226 = vmatpush1.xpose.msra.mxu0 0.0
        %2227 = vmatprep.subr.mxu0 0.0
        %2228 = vmatpush1.xpose.msra.mxu0 0.0
        %2229 = vmatprep.subr.mxu0 0.0
        %2230 = vmatpush1.xpose.msra.mxu0 0.0
        %2231 = vmatprep.subr.mxu0 0.0
        %2232 = vmatpush1.xpose.msra.mxu0 0.0
        %2233 = vmatprep.subr.mxu0 0.0
        %2234 = vmatpush1.xpose.msra.mxu0 0.0
        %2235 = vmatprep.subr.mxu0 0.0
        %2236 = vmatpush1.xpose.msra.mxu0 0.0
        %2237 = vmatprep.subr.mxu0 0.0
        %2238 = vmatpush1.xpose.msra.mxu0 0.0
        %2239 = vmatprep.subr.mxu0 0.0
        %2240 = vmatpush1.xpose.msra.mxu0 0.0
        %2241 = vmatprep.subr.mxu0 0.0
        %2242 = vmatpush1.xpose.msra.mxu0 0.0
        %2243 = vmatprep.subr.mxu0 0.0
        %2244 = vmatpush1.xpose.msra.mxu0 %v2211
        %2245 = vmatprep.subr.mxu0 0.0
        %2246 = vmatpush2.xpose.msra.mxu0 0.0
        %2247 = vmatprep.subr.mxu0 0.0
        %2248 = vmatpush2.xpose.msra.mxu0 0.0
        %2249 = vmatprep.subr.mxu0 0.0
        %2250 = vmatpush2.xpose.msra.mxu0 0.0
        %2251 = vmatprep.subr.mxu0 0.0
        %2252 = vmatpush2.xpose.msra.mxu0 0.0
        %2253 = vmatprep.subr.mxu0 0.0
        %2254 = vmatpush2.xpose.msra.mxu0 0.0
        %2255 = vmatprep.subr.mxu0 0.0
        %2256 = vmatpush2.xpose.msra.mxu0 0.0
        %2257 = vmatprep.subr.mxu0 0.0
        %2258 = vmatpush2.xpose.msra.mxu0 0.0
        %2259 = vmatprep.subr.mxu0 0.0
        %2260 = vmatpush2.xpose.msra.mxu0 0.0
        %2261 = vmatprep.subr.mxu0 0.0
        %2262 = vmatpush2.xpose.msra.mxu0 0.0
        %2263 = vmatprep.subr.mxu0 0.0
        %2264 = vmatpush2.xpose.msra.mxu0 0.0
        %2265 = vmatprep.subr.mxu0 0.0
        %2266 = vmatpush2.xpose.msra.mxu0 0.0
        %2267 = vmatprep.subr.mxu0 0.0
        %2268 = vmatpush2.xpose.msra.mxu0 0.0
        %2269 = vmatprep.subr.mxu0 0.0
        %2270 = vmatpush2.xpose.msra.mxu0 0.0
        %2271 = vmatprep.subr.mxu0 0.0
        %2272 = vmatpush2.xpose.msra.mxu0 0.0
        %2273 = vmatprep.subr.mxu0 0.0
        %2274 = vmatpush2.xpose.msra.mxu0 0.0
        %2275 = vmatprep.subr.mxu0 0.0
        %2276 = vmatpush2.xpose.msra.mxu0 0.0
        %2277 = vmatprep.mubr.f32.mxu0 0.0
        %2278 = vmatmul.mubr.f32.gmra.mxu0 %v2209
        %v2279 = vpop.f32.mrf.mxu0
        %v2280 = vadd.f32 0.0, %v2279
        %v2281 = vpop.f32.mrf.mxu0
        %2282 = vdwg.mxu0
        %v2283 = vmul.f32 %v2280, 0.17677669
        %v2284 = vsel %vm1567, %v2283, -inf
        %2285 = vmax.xlane.f32.xlu0 %v2284
        %v2286 = vpop.xlane.xlu0 %2285
        %v2287 = vsub.f32 %v2283, %v2286
        %v2288 = vmul.f32 %v2287, 1.442695
        %v2289 = vpow.pop %v2288
        %v2290 = vsel %vm1567, %v2289, 0.0
        %2291 = vadd.xlane.f32.xlu0 %v2290
        %v2292 = vpop.xlane.xlu0 %2291
        %v2293 = vrcp.pop %v2292
        %v2294 = vmul.f32 %v2289, %v2293
        %2295 = vrot.lane.b32.xlu0 %v1486, 32
        %v2296 = vpop.permute.xlu0 %2295
        %v2299 = vsel %vm1567, %v2294, 0
        %2301 = vmatprep.subr.mxu0 0.0
        %2302 = vmatpush1.msra.mxu0 0.0
        %2303 = vmatprep.subr.mxu0 0.0
        %2304 = vmatpush1.msra.mxu0 0.0
        %2305 = vmatprep.subr.mxu0 0.0
        %2306 = vmatpush1.msra.mxu0 0.0
        %2307 = vmatprep.subr.mxu0 0.0
        %2308 = vmatpush1.msra.mxu0 0.0
        %2309 = vmatprep.subr.mxu0 0.0
        %2310 = vmatpush1.msra.mxu0 0.0
        %2311 = vmatprep.subr.mxu0 0.0
        %2312 = vmatpush1.msra.mxu0 0.0
        %2313 = vmatprep.subr.mxu0 0.0
        %2314 = vmatpush1.msra.mxu0 0.0
        %2315 = vmatprep.subr.mxu0 0.0
        %2316 = vmatpush1.msra.mxu0 0.0
        %2317 = vmatprep.subr.mxu0 0.0
        %2318 = vmatpush1.msra.mxu0 0.0
        %2319 = vmatprep.subr.mxu0 0.0
        %2320 = vmatpush1.msra.mxu0 0.0
        %2321 = vmatprep.subr.mxu0 0.0
        %2322 = vmatpush1.msra.mxu0 0.0
        %2323 = vmatprep.subr.mxu0 0.0
        %2324 = vmatpush1.msra.mxu0 0.0
        %2325 = vmatprep.subr.mxu0 0.0
        %2326 = vmatpush1.msra.mxu0 0.0
        %2327 = vmatprep.subr.mxu0 0.0
        %2328 = vmatpush1.msra.mxu0 0.0
        %2329 = vmatprep.subr.mxu0 0.0
        %2330 = vmatpush1.msra.mxu0 0.0
        %2331 = vmatprep.subr.mxu0 0.0
        %2332 = vmatpush1.msra.mxu0 %v2296
        %2333 = vmatprep.subr.mxu0 0.0
        %2334 = vmatpush2.msra.mxu0 0.0
        %2335 = vmatprep.subr.mxu0 0.0
        %2336 = vmatpush2.msra.mxu0 0.0
        %2337 = vmatprep.subr.mxu0 0.0
        %2338 = vmatpush2.msra.mxu0 0.0
        %2339 = vmatprep.subr.mxu0 0.0
        %2340 = vmatpush2.msra.mxu0 0.0
        %2341 = vmatprep.subr.mxu0 0.0
        %2342 = vmatpush2.msra.mxu0 0.0
        %2343 = vmatprep.subr.mxu0 0.0
        %2344 = vmatpush2.msra.mxu0 0.0
        %2345 = vmatprep.subr.mxu0 0.0
        %2346 = vmatpush2.msra.mxu0 0.0
        %2347 = vmatprep.subr.mxu0 0.0
        %2348 = vmatpush2.msra.mxu0 0.0
        %2349 = vmatprep.subr.mxu0 0.0
        %2350 = vmatpush2.msra.mxu0 0.0
        %2351 = vmatprep.subr.mxu0 0.0
        %2352 = vmatpush2.msra.mxu0 0.0
        %2353 = vmatprep.subr.mxu0 0.0
        %2354 = vmatpush2.msra.mxu0 0.0
        %2355 = vmatprep.subr.mxu0 0.0
        %2356 = vmatpush2.msra.mxu0 0.0
        %2357 = vmatprep.subr.mxu0 0.0
        %2358 = vmatpush2.msra.mxu0 0.0
        %2359 = vmatprep.subr.mxu0 0.0
        %2360 = vmatpush2.msra.mxu0 0.0
        %2361 = vmatprep.subr.mxu0 0.0
        %2362 = vmatpush2.msra.mxu0 0.0
        %2363 = vmatprep.subr.mxu0 0.0
        %2364 = vmatpush2.msra.mxu0 0.0
        %2365 = vmatprep.mubr.f32.mxu0 0.0
        %2366 = vmatmul.mubr.f32.gmra.mxu0 %v2299
        %v2367 = vpop.f32.mrf.mxu0
        %v2368 = vadd.f32 0.0, %v2367
        %v2369 = vpop.f32.mrf.mxu0
        %2370 = vdwg.mxu0
        %v2372 = vsel %vm1489, %v2368, 0
        %2374 = vmatprep.subr.mxu0 0.0
        %2375 = vmatpush1.msra.mxu0 0.0
        %2376 = vmatprep.subr.mxu0 0.0
        %2377 = vmatpush1.msra.mxu0 0.0
        %2378 = vmatprep.subr.mxu0 0.0
        %2379 = vmatpush1.msra.mxu0 0.0
        %2380 = vmatprep.subr.mxu0 0.0
        %2381 = vmatpush1.msra.mxu0 0.0
        %2382 = vmatprep.subr.mxu0 0.0
        %2383 = vmatpush1.msra.mxu0 0.0
        %2384 = vmatprep.subr.mxu0 0.0
        %2385 = vmatpush1.msra.mxu0 0.0
        %2386 = vmatprep.subr.mxu0 0.0
        %2387 = vmatpush1.msra.mxu0 0.0
        %2388 = vmatprep.subr.mxu0 0.0
        %2389 = vmatpush1.msra.mxu0 0.0
        %2390 = vmatprep.subr.mxu0 0.0
        %2391 = vmatpush1.msra.mxu0 0.0
        %2392 = vmatprep.subr.mxu0 0.0
        %2393 = vmatpush1.msra.mxu0 0.0
        %2394 = vmatprep.subr.mxu0 0.0
        %2395 = vmatpush1.msra.mxu0 0.0
        %2396 = vmatprep.subr.mxu0 0.0
        %2397 = vmatpush1.msra.mxu0 0.0
        %2398 = vmatprep.subr.mxu0 0.0
        %2399 = vmatpush1.msra.mxu0 %v1259
        %2400 = vmatprep.subr.mxu0 0.0
        %2401 = vmatpush1.msra.mxu0 %v1258
        %2402 = vmatprep.subr.mxu0 0.0
        %2403 = vmatpush1.msra.mxu0 %v1257
        %2404 = vmatprep.subr.mxu0 0.0
        %2405 = vmatpush1.msra.mxu0 %v1256
        %2406 = vmatprep.subr.mxu0 0.0
        %2407 = vmatpush2.msra.mxu0 0.0
        %2408 = vmatprep.subr.mxu0 0.0
        %2409 = vmatpush2.msra.mxu0 0.0
        %2410 = vmatprep.subr.mxu0 0.0
        %2411 = vmatpush2.msra.mxu0 0.0
        %2412 = vmatprep.subr.mxu0 0.0
        %2413 = vmatpush2.msra.mxu0 0.0
        %2414 = vmatprep.subr.mxu0 0.0
        %2415 = vmatpush2.msra.mxu0 0.0
        %2416 = vmatprep.subr.mxu0 0.0
        %2417 = vmatpush2.msra.mxu0 0.0
        %2418 = vmatprep.subr.mxu0 0.0
        %2419 = vmatpush2.msra.mxu0 0.0
        %2420 = vmatprep.subr.mxu0 0.0
        %2421 = vmatpush2.msra.mxu0 0.0
        %2422 = vmatprep.subr.mxu0 0.0
        %2423 = vmatpush2.msra.mxu0 0.0
        %2424 = vmatprep.subr.mxu0 0.0
        %2425 = vmatpush2.msra.mxu0 0.0
        %2426 = vmatprep.subr.mxu0 0.0
        %2427 = vmatpush2.msra.mxu0 0.0
        %2428 = vmatprep.subr.mxu0 0.0
        %2429 = vmatpush2.msra.mxu0 0.0
        %2430 = vmatprep.subr.mxu0 0.0
        %2431 = vmatpush2.msra.mxu0 0.0
        %2432 = vmatprep.subr.mxu0 0.0
        %2433 = vmatpush2.msra.mxu0 0.0
        %2434 = vmatprep.subr.mxu0 0.0
        %2435 = vmatpush2.msra.mxu0 0.0
        %2436 = vmatprep.subr.mxu0 0.0
        %2437 = vmatpush2.msra.mxu0 0.0
        %2438 = vmatprep.mubr.f32.mxu0 0.0
        %2439 = vmatmul.mubr.f32.gmra.mxu0 %v2372
        %v2440 = vpop.f32.mrf.mxu0
        %v2441 = vadd.f32 0.0, %v2440
        %v2442 = vpop.f32.mrf.mxu0
        %2443 = vdwg.mxu0
        %v2444 = vadd.f32 %v2204, %v2441
        %v2446 = vlaneseq
        %v2447 = vshrl.u32 %v2446, 7
        %v2448 = vsub.s32 0, %v2447
        %v2449 = vrot.slane %v1260, %v2448
        %v2451 = vadd.f32 %v2444, %v2449
        %v2452 = vadd.f32 %v1154, %v2451
        %v2453 = vld [vmem:[%s51] sm:$0x1]
        %v2454 = vld [vmem:[%s53] sm:$0x1]
        %2455 = vadd.xlane.f32.xlu0 %v2452
        %v2456 = vpop.xlane.xlu0 %2455
        %v2457 = vmul.f32 %v2456, %v1161
        %v2458 = vsub.f32 %v2452, %v2457
        %v2459 = vmul.f32 %v2458, %v2458
        %2460 = vadd.xlane.f32.xlu0 %v2459
        %v2461 = vpop.xlane.xlu0 %2460
        %v2462 = vmul.f32 %v2461, %v1167
        %v2463 = vrsqrt.pop %v2462
        %v2464 = vmul.f32 %v2462, %v2463
        %vm2465 = vcmp.eq.f32.partialorder %v2462, inf
        %v2466 = vsel %vm2465, %v2462, %v2464
        %vm2467 = vcmp.eq.f32.partialorder %v2462, 0.0
        %v2468 = vand.u32 %v2462, 2147483648
        %v2469 = vsel %vm2467, %v2468, %v2466
        %v2471 = vlaneseq
        %v2472 = vshrl.u32 %v2471, 7
        %v2473 = vsub.s32 0, %v2472
        %v2474 = vrot.slane %v2453, %v2473
        %v2476 = vmul.f32 %v2474, %v2458
        %v2477 = vadd.f32 %v2469, 1e-06
        %v2478 = vrcp.pop %v2477
        %v2479 = vmul.f32 %v2476, %v2478
        %v2481 = vlaneseq
        %v2482 = vshrl.u32 %v2481, 7
        %v2483 = vsub.s32 0, %v2482
        %v2484 = vrot.slane %v2454, %v2483
        %v2486 = vadd.f32 %v2479, %v2484
        %v2487 = vld [vmem:[#allocation14] sm:$0xff]
        %v2488 = vld [vmem:[#allocation14 + $0x8] sm:$0xff]
        %v2489 = vld [vmem:[#allocation14 + $0x10] sm:$0xff]
        %v2490 = vld [vmem:[#allocation14 + $0x18] sm:$0xff]
        %v2491 = vld [vmem:[#allocation14 + $0x20] sm:$0xff]
        %v2492 = vld [vmem:[#allocation14 + $0x28] sm:$0xff]
        %v2493 = vld [vmem:[#allocation14 + $0x30] sm:$0xff]
        %v2494 = vld [vmem:[#allocation14 + $0x38] sm:$0xff]
        %v2495 = vld [vmem:[#allocation14 + $0x40] sm:$0xff]
        %v2496 = vld [vmem:[#allocation14 + $0x48] sm:$0xff]
        %v2497 = vld [vmem:[#allocation14 + $0x50] sm:$0xff]
        %v2498 = vld [vmem:[#allocation14 + $0x58] sm:$0xff]
        %v2499 = vld [vmem:[#allocation14 + $0x60] sm:$0xff]
        %v2500 = vld [vmem:[#allocation14 + $0x68] sm:$0xff]
        %v2501 = vld [vmem:[#allocation14 + $0x70] sm:$0xff]
        %v2502 = vld [vmem:[#allocation14 + $0x78] sm:$0xff]
        %v2503 = vld [vmem:[%s25] sm:$0x1]
        %v2504 = vld [vmem:[#allocation16] sm:$0xff]
        %v2505 = vld [vmem:[#allocation16 + $0x8] sm:$0xff]
        %v2506 = vld [vmem:[#allocation16 + $0x10] sm:$0xff]
        %v2507 = vld [vmem:[#allocation16 + $0x18] sm:$0xff]
        %v2508 = vld [vmem:[#allocation16 + $0x20] sm:$0xff]
        %v2509 = vld [vmem:[#allocation16 + $0x28] sm:$0xff]
        %v2510 = vld [vmem:[#allocation16 + $0x30] sm:$0xff]
        %v2511 = vld [vmem:[#allocation16 + $0x38] sm:$0xff]
        %v2512 = vld [vmem:[#allocation16 + $0x40] sm:$0xff]
        %v2513 = vld [vmem:[#allocation16 + $0x48] sm:$0xff]
        %v2514 = vld [vmem:[#allocation16 + $0x50] sm:$0xff]
        %v2515 = vld [vmem:[#allocation16 + $0x58] sm:$0xff]
        %v2516 = vld [vmem:[#allocation16 + $0x60] sm:$0xff]
        %v2517 = vld [vmem:[#allocation16 + $0x68] sm:$0xff]
        %v2518 = vld [vmem:[#allocation16 + $0x70] sm:$0xff]
        %v2519 = vld [vmem:[#allocation16 + $0x78] sm:$0xff]
        %v2520 = vld [vmem:[%s29] sm:$0x1]
        %v2521 = vld [vmem:[#allocation17] sm:$0xff]
        %v2522 = vld [vmem:[#allocation17 + $0x8] sm:$0xff]
        %v2523 = vld [vmem:[#allocation17 + $0x10] sm:$0xff]
        %v2524 = vld [vmem:[#allocation17 + $0x18] sm:$0xff]
        %v2525 = vld [vmem:[#allocation17 + $0x20] sm:$0xff]
        %v2526 = vld [vmem:[#allocation17 + $0x28] sm:$0xff]
        %v2527 = vld [vmem:[#allocation17 + $0x30] sm:$0xff]
        %v2528 = vld [vmem:[#allocation17 + $0x38] sm:$0xff]
        %v2529 = vld [vmem:[#allocation17 + $0x40] sm:$0xff]
        %v2530 = vld [vmem:[#allocation17 + $0x48] sm:$0xff]
        %v2531 = vld [vmem:[#allocation17 + $0x50] sm:$0xff]
        %v2532 = vld [vmem:[#allocation17 + $0x58] sm:$0xff]
        %v2533 = vld [vmem:[#allocation17 + $0x60] sm:$0xff]
        %v2534 = vld [vmem:[#allocation17 + $0x68] sm:$0xff]
        %v2535 = vld [vmem:[#allocation17 + $0x70] sm:$0xff]
        %v2536 = vld [vmem:[#allocation17 + $0x78] sm:$0xff]
        %v2537 = vld [vmem:[%s33] sm:$0x1]
        %v2538 = vld [vmem:[#allocation19] sm:$0xff]
        %v2539 = vld [vmem:[#allocation19 + $0x8] sm:$0xff]
        %v2540 = vld [vmem:[#allocation19 + $0x10] sm:$0xff]
        %v2541 = vld [vmem:[#allocation19 + $0x18] sm:$0xff]
        %v2542 = vld [vmem:[#allocation19 + $0x20] sm:$0xff]
        %v2543 = vld [vmem:[#allocation19 + $0x28] sm:$0xff]
        %v2544 = vld [vmem:[#allocation19 + $0x30] sm:$0xff]
        %v2545 = vld [vmem:[#allocation19 + $0x38] sm:$0xff]
        %v2546 = vld [vmem:[#allocation19 + $0x40] sm:$0xff]
        %v2547 = vld [vmem:[#allocation19 + $0x48] sm:$0xff]
        %v2548 = vld [vmem:[#allocation19 + $0x50] sm:$0xff]
        %v2549 = vld [vmem:[#allocation19 + $0x58] sm:$0xff]
        %v2550 = vld [vmem:[#allocation19 + $0x60] sm:$0xff]
        %v2551 = vld [vmem:[#allocation19 + $0x68] sm:$0xff]
        %v2552 = vld [vmem:[#allocation19 + $0x70] sm:$0xff]
        %v2553 = vld [vmem:[#allocation19 + $0x78] sm:$0xff]
        %v2554 = vld [vmem:[%s37] sm:$0x1]
        %v2556 = vlaneseq
        %v2557 = vshrl.u32 %v2556, 7
        %v2558 = vsub.s32 0, %v2557
        %v2559 = vrot.slane %v2503, %v2558
        %2561 = vmatprep.subr.mxu0 0.0
        %2562 = vmatpush1.msra.mxu0 %v2502
        %2563 = vmatprep.subr.mxu0 0.0
        %2564 = vmatpush1.msra.mxu0 %v2501
        %2565 = vmatprep.subr.mxu0 0.0
        %2566 = vmatpush1.msra.mxu0 %v2500
        %2567 = vmatprep.subr.mxu0 0.0
        %2568 = vmatpush1.msra.mxu0 %v2499
        %2569 = vmatprep.subr.mxu0 0.0
        %2570 = vmatpush1.msra.mxu0 %v2498
        %2571 = vmatprep.subr.mxu0 0.0
        %2572 = vmatpush1.msra.mxu0 %v2497
        %2573 = vmatprep.subr.mxu0 0.0
        %2574 = vmatpush1.msra.mxu0 %v2496
        %2575 = vmatprep.subr.mxu0 0.0
        %2576 = vmatpush1.msra.mxu0 %v2495
        %2577 = vmatprep.subr.mxu0 0.0
        %2578 = vmatpush1.msra.mxu0 %v2494
        %2579 = vmatprep.subr.mxu0 0.0
        %2580 = vmatpush1.msra.mxu0 %v2493
        %2581 = vmatprep.subr.mxu0 0.0
        %2582 = vmatpush1.msra.mxu0 %v2492
        %2583 = vmatprep.subr.mxu0 0.0
        %2584 = vmatpush1.msra.mxu0 %v2491
        %2585 = vmatprep.subr.mxu0 0.0
        %2586 = vmatpush1.msra.mxu0 %v2490
        %2587 = vmatprep.subr.mxu0 0.0
        %2588 = vmatpush1.msra.mxu0 %v2489
        %2589 = vmatprep.subr.mxu0 0.0
        %2590 = vmatpush1.msra.mxu0 %v2488
        %2591 = vmatprep.subr.mxu0 0.0
        %2592 = vmatpush1.msra.mxu0 %v2487
        %2593 = vmatprep.subr.mxu0 0.0
        %2594 = vmatpush2.msra.mxu0 0.0
        %2595 = vmatprep.subr.mxu0 0.0
        %2596 = vmatpush2.msra.mxu0 0.0
        %2597 = vmatprep.subr.mxu0 0.0
        %2598 = vmatpush2.msra.mxu0 0.0
        %2599 = vmatprep.subr.mxu0 0.0
        %2600 = vmatpush2.msra.mxu0 0.0
        %2601 = vmatprep.subr.mxu0 0.0
        %2602 = vmatpush2.msra.mxu0 0.0
        %2603 = vmatprep.subr.mxu0 0.0
        %2604 = vmatpush2.msra.mxu0 0.0
        %2605 = vmatprep.subr.mxu0 0.0
        %2606 = vmatpush2.msra.mxu0 0.0
        %2607 = vmatprep.subr.mxu0 0.0
        %2608 = vmatpush2.msra.mxu0 0.0
        %2609 = vmatprep.subr.mxu0 0.0
        %2610 = vmatpush2.msra.mxu0 0.0
        %2611 = vmatprep.subr.mxu0 0.0
        %2612 = vmatpush2.msra.mxu0 0.0
        %2613 = vmatprep.subr.mxu0 0.0
        %2614 = vmatpush2.msra.mxu0 0.0
        %2615 = vmatprep.subr.mxu0 0.0
        %2616 = vmatpush2.msra.mxu0 0.0
        %2617 = vmatprep.subr.mxu0 0.0
        %2618 = vmatpush2.msra.mxu0 0.0
        %2619 = vmatprep.subr.mxu0 0.0
        %2620 = vmatpush2.msra.mxu0 0.0
        %2621 = vmatprep.subr.mxu0 0.0
        %2622 = vmatpush2.msra.mxu0 0.0
        %2623 = vmatprep.subr.mxu0 0.0
        %2624 = vmatpush2.msra.mxu0 0.0
        %2625 = vmatprep.mubr.f32.mxu0 0.0
        %2626 = vmatmul.mubr.f32.gmra.mxu0 %v2486
        %v2627 = vpop.f32.mrf.mxu0
        %v2628 = vadd.f32 %v2559, %v2627
        %v2629 = vpop.f32.mrf.mxu0
        %2630 = vdwg.mxu0
        %v2632 = vlaneseq
        %v2633 = vshrl.u32 %v2632, 7
        %v2634 = vsub.s32 0, %v2633
        %v2635 = vrot.slane %v2520, %v2634
        %2637 = vmatprep.subr.mxu0 0.0
        %2638 = vmatpush1.msra.mxu0 %v2519
        %2639 = vmatprep.subr.mxu0 0.0
        %2640 = vmatpush1.msra.mxu0 %v2518
        %2641 = vmatprep.subr.mxu0 0.0
        %2642 = vmatpush1.msra.mxu0 %v2517
        %2643 = vmatprep.subr.mxu0 0.0
        %2644 = vmatpush1.msra.mxu0 %v2516
        %2645 = vmatprep.subr.mxu0 0.0
        %2646 = vmatpush1.msra.mxu0 %v2515
        %2647 = vmatprep.subr.mxu0 0.0
        %2648 = vmatpush1.msra.mxu0 %v2514
        %2649 = vmatprep.subr.mxu0 0.0
        %2650 = vmatpush1.msra.mxu0 %v2513
        %2651 = vmatprep.subr.mxu0 0.0
        %2652 = vmatpush1.msra.mxu0 %v2512
        %2653 = vmatprep.subr.mxu0 0.0
        %2654 = vmatpush1.msra.mxu0 %v2511
        %2655 = vmatprep.subr.mxu0 0.0
        %2656 = vmatpush1.msra.mxu0 %v2510
        %2657 = vmatprep.subr.mxu0 0.0
        %2658 = vmatpush1.msra.mxu0 %v2509
        %2659 = vmatprep.subr.mxu0 0.0
        %2660 = vmatpush1.msra.mxu0 %v2508
        %2661 = vmatprep.subr.mxu0 0.0
        %2662 = vmatpush1.msra.mxu0 %v2507
        %2663 = vmatprep.subr.mxu0 0.0
        %2664 = vmatpush1.msra.mxu0 %v2506
        %2665 = vmatprep.subr.mxu0 0.0
        %2666 = vmatpush1.msra.mxu0 %v2505
        %2667 = vmatprep.subr.mxu0 0.0
        %2668 = vmatpush1.msra.mxu0 %v2504
        %2669 = vmatprep.subr.mxu0 0.0
        %2670 = vmatpush2.msra.mxu0 0.0
        %2671 = vmatprep.subr.mxu0 0.0
        %2672 = vmatpush2.msra.mxu0 0.0
        %2673 = vmatprep.subr.mxu0 0.0
        %2674 = vmatpush2.msra.mxu0 0.0
        %2675 = vmatprep.subr.mxu0 0.0
        %2676 = vmatpush2.msra.mxu0 0.0
        %2677 = vmatprep.subr.mxu0 0.0
        %2678 = vmatpush2.msra.mxu0 0.0
        %2679 = vmatprep.subr.mxu0 0.0
        %2680 = vmatpush2.msra.mxu0 0.0
        %2681 = vmatprep.subr.mxu0 0.0
        %2682 = vmatpush2.msra.mxu0 0.0
        %2683 = vmatprep.subr.mxu0 0.0
        %2684 = vmatpush2.msra.mxu0 0.0
        %2685 = vmatprep.subr.mxu0 0.0
        %2686 = vmatpush2.msra.mxu0 0.0
        %2687 = vmatprep.subr.mxu0 0.0
        %2688 = vmatpush2.msra.mxu0 0.0
        %2689 = vmatprep.subr.mxu0 0.0
        %2690 = vmatpush2.msra.mxu0 0.0
        %2691 = vmatprep.subr.mxu0 0.0
        %2692 = vmatpush2.msra.mxu0 0.0
        %2693 = vmatprep.subr.mxu0 0.0
        %2694 = vmatpush2.msra.mxu0 0.0
        %2695 = vmatprep.subr.mxu0 0.0
        %2696 = vmatpush2.msra.mxu0 0.0
        %2697 = vmatprep.subr.mxu0 0.0
        %2698 = vmatpush2.msra.mxu0 0.0
        %2699 = vmatprep.subr.mxu0 0.0
        %2700 = vmatpush2.msra.mxu0 0.0
        %2701 = vmatprep.mubr.f32.mxu0 0.0
        %2702 = vmatmul.mubr.f32.gmra.mxu0 %v1155
        %v2703 = vpop.f32.mrf.mxu0
        %v2704 = vadd.f32 %v2635, %v2703
        %v2705 = vpop.f32.mrf.mxu0
        %2706 = vmatprep.mubr.f32.mxu0 0.0
        %2707 = vmatmul.mubr.f32.gmra.mxu0 %v1156
        %v2708 = vpop.f32.mrf.mxu0
        %v2709 = vadd.f32 %v2635, %v2708
        %v2710 = vpop.f32.mrf.mxu0
        %2711 = vdwg.mxu0
        %v2713 = vlaneseq
        %v2714 = vshrl.u32 %v2713, 7
        %v2715 = vsub.s32 0, %v2714
        %v2716 = vrot.slane %v2537, %v2715
        %2718 = vmatprep.subr.mxu0 0.0
        %2719 = vmatpush1.msra.mxu0 %v2536
        %2720 = vmatprep.subr.mxu0 0.0
        %2721 = vmatpush1.msra.mxu0 %v2535
        %2722 = vmatprep.subr.mxu0 0.0
        %2723 = vmatpush1.msra.mxu0 %v2534
        %2724 = vmatprep.subr.mxu0 0.0
        %2725 = vmatpush1.msra.mxu0 %v2533
        %2726 = vmatprep.subr.mxu0 0.0
        %2727 = vmatpush1.msra.mxu0 %v2532
        %2728 = vmatprep.subr.mxu0 0.0
        %2729 = vmatpush1.msra.mxu0 %v2531
        %2730 = vmatprep.subr.mxu0 0.0
        %2731 = vmatpush1.msra.mxu0 %v2530
        %2732 = vmatprep.subr.mxu0 0.0
        %2733 = vmatpush1.msra.mxu0 %v2529
        %2734 = vmatprep.subr.mxu0 0.0
        %2735 = vmatpush1.msra.mxu0 %v2528
        %2736 = vmatprep.subr.mxu0 0.0
        %2737 = vmatpush1.msra.mxu0 %v2527
        %2738 = vmatprep.subr.mxu0 0.0
        %2739 = vmatpush1.msra.mxu0 %v2526
        %2740 = vmatprep.subr.mxu0 0.0
        %2741 = vmatpush1.msra.mxu0 %v2525
        %2742 = vmatprep.subr.mxu0 0.0
        %2743 = vmatpush1.msra.mxu0 %v2524
        %2744 = vmatprep.subr.mxu0 0.0
        %2745 = vmatpush1.msra.mxu0 %v2523
        %2746 = vmatprep.subr.mxu0 0.0
        %2747 = vmatpush1.msra.mxu0 %v2522
        %2748 = vmatprep.subr.mxu0 0.0
        %2749 = vmatpush1.msra.mxu0 %v2521
        %2750 = vmatprep.subr.mxu0 0.0
        %2751 = vmatpush2.msra.mxu0 0.0
        %2752 = vmatprep.subr.mxu0 0.0
        %2753 = vmatpush2.msra.mxu0 0.0
        %2754 = vmatprep.subr.mxu0 0.0
        %2755 = vmatpush2.msra.mxu0 0.0
        %2756 = vmatprep.subr.mxu0 0.0
        %2757 = vmatpush2.msra.mxu0 0.0
        %2758 = vmatprep.subr.mxu0 0.0
        %2759 = vmatpush2.msra.mxu0 0.0
        %2760 = vmatprep.subr.mxu0 0.0
        %2761 = vmatpush2.msra.mxu0 0.0
        %2762 = vmatprep.subr.mxu0 0.0
        %2763 = vmatpush2.msra.mxu0 0.0
        %2764 = vmatprep.subr.mxu0 0.0
        %2765 = vmatpush2.msra.mxu0 0.0
        %2766 = vmatprep.subr.mxu0 0.0
        %2767 = vmatpush2.msra.mxu0 0.0
        %2768 = vmatprep.subr.mxu0 0.0
        %2769 = vmatpush2.msra.mxu0 0.0
        %2770 = vmatprep.subr.mxu0 0.0
        %2771 = vmatpush2.msra.mxu0 0.0
        %2772 = vmatprep.subr.mxu0 0.0
        %2773 = vmatpush2.msra.mxu0 0.0
        %2774 = vmatprep.subr.mxu0 0.0
        %2775 = vmatpush2.msra.mxu0 0.0
        %2776 = vmatprep.subr.mxu0 0.0
        %2777 = vmatpush2.msra.mxu0 0.0
        %2778 = vmatprep.subr.mxu0 0.0
        %2779 = vmatpush2.msra.mxu0 0.0
        %2780 = vmatprep.subr.mxu0 0.0
        %2781 = vmatpush2.msra.mxu0 0.0
        %2782 = vmatprep.mubr.f32.mxu0 0.0
        %2783 = vmatmul.mubr.f32.gmra.mxu0 %v1155
        %v2784 = vpop.f32.mrf.mxu0
        %v2785 = vadd.f32 %v2716, %v2784
        %v2786 = vpop.f32.mrf.mxu0
        %2787 = vmatprep.mubr.f32.mxu0 0.0
        %2788 = vmatmul.mubr.f32.gmra.mxu0 %v1156
        %v2789 = vpop.f32.mrf.mxu0
        %v2790 = vadd.f32 %v2716, %v2789
        %v2791 = vpop.f32.mrf.mxu0
        %2792 = vdwg.mxu0
        %v2794 = vsel %vm1489, %v2628, 0
        %v2797 = vsel %vm1489, %v2704, 0
        %v2800 = vsel %vm1489, %v2709, 0
        %2802 = vmatprep.subr.mxu0 0.0
        %2803 = vmatpush1.xpose.msra.mxu0 0.0
        %2804 = vmatprep.subr.mxu0 0.0
        %2805 = vmatpush1.xpose.msra.mxu0 0.0
        %2806 = vmatprep.subr.mxu0 0.0
        %2807 = vmatpush1.xpose.msra.mxu0 0.0
        %2808 = vmatprep.subr.mxu0 0.0
        %2809 = vmatpush1.xpose.msra.mxu0 0.0
        %2810 = vmatprep.subr.mxu0 0.0
        %2811 = vmatpush1.xpose.msra.mxu0 0.0
        %2812 = vmatprep.subr.mxu0 0.0
        %2813 = vmatpush1.xpose.msra.mxu0 0.0
        %2814 = vmatprep.subr.mxu0 0.0
        %2815 = vmatpush1.xpose.msra.mxu0 0.0
        %2816 = vmatprep.subr.mxu0 0.0
        %2817 = vmatpush1.xpose.msra.mxu0 0.0
        %2818 = vmatprep.subr.mxu0 0.0
        %2819 = vmatpush1.xpose.msra.mxu0 0.0
        %2820 = vmatprep.subr.mxu0 0.0
        %2821 = vmatpush1.xpose.msra.mxu0 0.0
        %2822 = vmatprep.subr.mxu0 0.0
        %2823 = vmatpush1.xpose.msra.mxu0 0.0
        %2824 = vmatprep.subr.mxu0 0.0
        %2825 = vmatpush1.xpose.msra.mxu0 0.0
        %2826 = vmatprep.subr.mxu0 0.0
        %2827 = vmatpush1.xpose.msra.mxu0 0.0
        %2828 = vmatprep.subr.mxu0 0.0
        %2829 = vmatpush1.xpose.msra.mxu0 0.0
        %2830 = vmatprep.subr.mxu0 0.0
        %2831 = vmatpush1.xpose.msra.mxu0 %v2800
        %2832 = vmatprep.subr.mxu0 0.0
        %2833 = vmatpush1.xpose.msra.mxu0 %v2797
        %2834 = vmatprep.subr.mxu0 0.0
        %2835 = vmatpush2.xpose.msra.mxu0 0.0
        %2836 = vmatprep.subr.mxu0 0.0
        %2837 = vmatpush2.xpose.msra.mxu0 0.0
        %2838 = vmatprep.subr.mxu0 0.0
        %2839 = vmatpush2.xpose.msra.mxu0 0.0
        %2840 = vmatprep.subr.mxu0 0.0
        %2841 = vmatpush2.xpose.msra.mxu0 0.0
        %2842 = vmatprep.subr.mxu0 0.0
        %2843 = vmatpush2.xpose.msra.mxu0 0.0
        %2844 = vmatprep.subr.mxu0 0.0
        %2845 = vmatpush2.xpose.msra.mxu0 0.0
        %2846 = vmatprep.subr.mxu0 0.0
        %2847 = vmatpush2.xpose.msra.mxu0 0.0
        %2848 = vmatprep.subr.mxu0 0.0
        %2849 = vmatpush2.xpose.msra.mxu0 0.0
        %2850 = vmatprep.subr.mxu0 0.0
        %2851 = vmatpush2.xpose.msra.mxu0 0.0
        %2852 = vmatprep.subr.mxu0 0.0
        %2853 = vmatpush2.xpose.msra.mxu0 0.0
        %2854 = vmatprep.subr.mxu0 0.0
        %2855 = vmatpush2.xpose.msra.mxu0 0.0
        %2856 = vmatprep.subr.mxu0 0.0
        %2857 = vmatpush2.xpose.msra.mxu0 0.0
        %2858 = vmatprep.subr.mxu0 0.0
        %2859 = vmatpush2.xpose.msra.mxu0 0.0
        %2860 = vmatprep.subr.mxu0 0.0
        %2861 = vmatpush2.xpose.msra.mxu0 0.0
        %2862 = vmatprep.subr.mxu0 0.0
        %2863 = vmatpush2.xpose.msra.mxu0 0.0
        %2864 = vmatprep.subr.mxu0 0.0
        %2865 = vmatpush2.xpose.msra.mxu0 0.0
        %2866 = vmatprep.mubr.f32.mxu0 0.0
        %2867 = vmatmul.mubr.f32.gmra.mxu0 %v2794
        %v2868 = vpop.f32.mrf.mxu0
        %v2869 = vadd.f32 0.0, %v2868
        %v2870 = vpop.f32.mrf.mxu0
        %2871 = vdwg.mxu0
        %v2872 = vmul.f32 %v2869, 0.17677669
        %vm2873 = vcmask 130048
        %v2874 = vsel %vm2873, %v2872, -inf
        %2875 = vmax.xlane.f32.xlu0 %v2874
        %v2876 = vpop.xlane.xlu0 %2875
        %v2877 = vsub.f32 %v2872, %v2876
        %v2878 = vmul.f32 %v2877, 1.442695
        %v2879 = vpow.pop %v2878
        %v2880 = vsel %vm2873, %v2879, 0.0
        %2881 = vadd.xlane.f32.xlu0 %v2880
        %v2882 = vpop.xlane.xlu0 %2881
        %v2883 = vrcp.pop %v2882
        %v2884 = vmul.f32 %v2879, %v2883
        %v2886 = vsel %vm2873, %v2884, 0
        %2888 = vmatprep.subr.mxu0 0.0
        %2889 = vmatpush1.msra.mxu0 0.0
        %2890 = vmatprep.subr.mxu0 0.0
        %2891 = vmatpush1.msra.mxu0 0.0
        %2892 = vmatprep.subr.mxu0 0.0
        %2893 = vmatpush1.msra.mxu0 0.0
        %2894 = vmatprep.subr.mxu0 0.0
        %2895 = vmatpush1.msra.mxu0 0.0
        %2896 = vmatprep.subr.mxu0 0.0
        %2897 = vmatpush1.msra.mxu0 0.0
        %2898 = vmatprep.subr.mxu0 0.0
        %2899 = vmatpush1.msra.mxu0 0.0
        %2900 = vmatprep.subr.mxu0 0.0
        %2901 = vmatpush1.msra.mxu0 0.0
        %2902 = vmatprep.subr.mxu0 0.0
        %2903 = vmatpush1.msra.mxu0 0.0
        %2904 = vmatprep.subr.mxu0 0.0
        %2905 = vmatpush1.msra.mxu0 0.0
        %2906 = vmatprep.subr.mxu0 0.0
        %2907 = vmatpush1.msra.mxu0 0.0
        %2908 = vmatprep.subr.mxu0 0.0
        %2909 = vmatpush1.msra.mxu0 0.0
        %2910 = vmatprep.subr.mxu0 0.0
        %2911 = vmatpush1.msra.mxu0 0.0
        %2912 = vmatprep.subr.mxu0 0.0
        %2913 = vmatpush1.msra.mxu0 0.0
        %2914 = vmatprep.subr.mxu0 0.0
        %2915 = vmatpush1.msra.mxu0 0.0
        %2916 = vmatprep.subr.mxu0 0.0
        %2917 = vmatpush1.msra.mxu0 %v2790
        %2918 = vmatprep.subr.mxu0 0.0
        %2919 = vmatpush1.msra.mxu0 %v2785
        %2920 = vmatprep.subr.mxu0 0.0
        %2921 = vmatpush2.msra.mxu0 0.0
        %2922 = vmatprep.subr.mxu0 0.0
        %2923 = vmatpush2.msra.mxu0 0.0
        %2924 = vmatprep.subr.mxu0 0.0
        %2925 = vmatpush2.msra.mxu0 0.0
        %2926 = vmatprep.subr.mxu0 0.0
        %2927 = vmatpush2.msra.mxu0 0.0
        %2928 = vmatprep.subr.mxu0 0.0
        %2929 = vmatpush2.msra.mxu0 0.0
        %2930 = vmatprep.subr.mxu0 0.0
        %2931 = vmatpush2.msra.mxu0 0.0
        %2932 = vmatprep.subr.mxu0 0.0
        %2933 = vmatpush2.msra.mxu0 0.0
        %2934 = vmatprep.subr.mxu0 0.0
        %2935 = vmatpush2.msra.mxu0 0.0
        %2936 = vmatprep.subr.mxu0 0.0
        %2937 = vmatpush2.msra.mxu0 0.0
        %2938 = vmatprep.subr.mxu0 0.0
        %2939 = vmatpush2.msra.mxu0 0.0
        %2940 = vmatprep.subr.mxu0 0.0
        %2941 = vmatpush2.msra.mxu0 0.0
        %2942 = vmatprep.subr.mxu0 0.0
        %2943 = vmatpush2.msra.mxu0 0.0
        %2944 = vmatprep.subr.mxu0 0.0
        %2945 = vmatpush2.msra.mxu0 0.0
        %2946 = vmatprep.subr.mxu0 0.0
        %2947 = vmatpush2.msra.mxu0 0.0
        %2948 = vmatprep.subr.mxu0 0.0
        %2949 = vmatpush2.msra.mxu0 0.0
        %2950 = vmatprep.subr.mxu0 0.0
        %2951 = vmatpush2.msra.mxu0 0.0
        %2952 = vmatprep.mubr.f32.mxu0 0.0
        %2953 = vmatmul.mubr.f32.gmra.mxu0 %v2886
        %v2954 = vpop.f32.mrf.mxu0
        %v2955 = vadd.f32 0.0, %v2954
        %v2956 = vpop.f32.mrf.mxu0
        %2957 = vdwg.mxu0
        %2958 = vrot.lane.b32.xlu0 %v2628, 96
        %v2959 = vpop.permute.xlu0 %2958
        %2960 = vrot.lane.b32.xlu0 %v2704, 96
        %v2961 = vpop.permute.xlu0 %2960
        %2962 = vrot.lane.b32.xlu0 %v2709, 96
        %v2963 = vpop.permute.xlu0 %2962
        %v2964 = vsel %vm1489, %v2959, 0
        %v2966 = vsel %vm1489, %v2961, 0
        %v2968 = vsel %vm1489, %v2963, 0
        %2970 = vmatprep.subr.mxu0 0.0
        %2971 = vmatpush1.xpose.msra.mxu0 0.0
        %2972 = vmatprep.subr.mxu0 0.0
        %2973 = vmatpush1.xpose.msra.mxu0 0.0
        %2974 = vmatprep.subr.mxu0 0.0
        %2975 = vmatpush1.xpose.msra.mxu0 0.0
        %2976 = vmatprep.subr.mxu0 0.0
        %2977 = vmatpush1.xpose.msra.mxu0 0.0
        %2978 = vmatprep.subr.mxu0 0.0
        %2979 = vmatpush1.xpose.msra.mxu0 0.0
        %2980 = vmatprep.subr.mxu0 0.0
        %2981 = vmatpush1.xpose.msra.mxu0 0.0
        %2982 = vmatprep.subr.mxu0 0.0
        %2983 = vmatpush1.xpose.msra.mxu0 0.0
        %2984 = vmatprep.subr.mxu0 0.0
        %2985 = vmatpush1.xpose.msra.mxu0 0.0
        %2986 = vmatprep.subr.mxu0 0.0
        %2987 = vmatpush1.xpose.msra.mxu0 0.0
        %2988 = vmatprep.subr.mxu0 0.0
        %2989 = vmatpush1.xpose.msra.mxu0 0.0
        %2990 = vmatprep.subr.mxu0 0.0
        %2991 = vmatpush1.xpose.msra.mxu0 0.0
        %2992 = vmatprep.subr.mxu0 0.0
        %2993 = vmatpush1.xpose.msra.mxu0 0.0
        %2994 = vmatprep.subr.mxu0 0.0
        %2995 = vmatpush1.xpose.msra.mxu0 0.0
        %2996 = vmatprep.subr.mxu0 0.0
        %2997 = vmatpush1.xpose.msra.mxu0 0.0
        %2998 = vmatprep.subr.mxu0 0.0
        %2999 = vmatpush1.xpose.msra.mxu0 %v2968
        %3000 = vmatprep.subr.mxu0 0.0
        %3001 = vmatpush1.xpose.msra.mxu0 %v2966
        %3002 = vmatprep.subr.mxu0 0.0
        %3003 = vmatpush2.xpose.msra.mxu0 0.0
        %3004 = vmatprep.subr.mxu0 0.0
        %3005 = vmatpush2.xpose.msra.mxu0 0.0
        %3006 = vmatprep.subr.mxu0 0.0
        %3007 = vmatpush2.xpose.msra.mxu0 0.0
        %3008 = vmatprep.subr.mxu0 0.0
        %3009 = vmatpush2.xpose.msra.mxu0 0.0
        %3010 = vmatprep.subr.mxu0 0.0
        %3011 = vmatpush2.xpose.msra.mxu0 0.0
        %3012 = vmatprep.subr.mxu0 0.0
        %3013 = vmatpush2.xpose.msra.mxu0 0.0
        %3014 = vmatprep.subr.mxu0 0.0
        %3015 = vmatpush2.xpose.msra.mxu0 0.0
        %3016 = vmatprep.subr.mxu0 0.0
        %3017 = vmatpush2.xpose.msra.mxu0 0.0
        %3018 = vmatprep.subr.mxu0 0.0
        %3019 = vmatpush2.xpose.msra.mxu0 0.0
        %3020 = vmatprep.subr.mxu0 0.0
        %3021 = vmatpush2.xpose.msra.mxu0 0.0
        %3022 = vmatprep.subr.mxu0 0.0
        %3023 = vmatpush2.xpose.msra.mxu0 0.0
        %3024 = vmatprep.subr.mxu0 0.0
        %3025 = vmatpush2.xpose.msra.mxu0 0.0
        %3026 = vmatprep.subr.mxu0 0.0
        %3027 = vmatpush2.xpose.msra.mxu0 0.0
        %3028 = vmatprep.subr.mxu0 0.0
        %3029 = vmatpush2.xpose.msra.mxu0 0.0
        %3030 = vmatprep.subr.mxu0 0.0
        %3031 = vmatpush2.xpose.msra.mxu0 0.0
        %3032 = vmatprep.subr.mxu0 0.0
        %3033 = vmatpush2.xpose.msra.mxu0 0.0
        %3034 = vmatprep.mubr.f32.mxu0 0.0
        %3035 = vmatmul.mubr.f32.gmra.mxu0 %v2964
        %v3036 = vpop.f32.mrf.mxu0
        %v3037 = vadd.f32 0.0, %v3036
        %v3038 = vpop.f32.mrf.mxu0
        %3039 = vdwg.mxu0
        %v3040 = vmul.f32 %v3037, 0.17677669
        %v3041 = vsel %vm2873, %v3040, -inf
        %3042 = vmax.xlane.f32.xlu0 %v3041
        %v3043 = vpop.xlane.xlu0 %3042
        %v3044 = vsub.f32 %v3040, %v3043
        %v3045 = vmul.f32 %v3044, 1.442695
        %v3046 = vpow.pop %v3045
        %v3047 = vsel %vm2873, %v3046, 0.0
        %3048 = vadd.xlane.f32.xlu0 %v3047
        %v3049 = vpop.xlane.xlu0 %3048
        %v3050 = vrcp.pop %v3049
        %v3051 = vmul.f32 %v3046, %v3050
        %3054 = vrot.lane.b32.xlu0 %v2785, 96
        %v3055 = vpop.permute.xlu0 %3054
        %3056 = vrot.lane.b32.xlu0 %v2790, 96
        %v3057 = vpop.permute.xlu0 %3056
        %v3061 = vsel %vm2873, %v3051, 0
        %3063 = vmatprep.subr.mxu0 0.0
        %3064 = vmatpush1.msra.mxu0 0.0
        %3065 = vmatprep.subr.mxu0 0.0
        %3066 = vmatpush1.msra.mxu0 0.0
        %3067 = vmatprep.subr.mxu0 0.0
        %3068 = vmatpush1.msra.mxu0 0.0
        %3069 = vmatprep.subr.mxu0 0.0
        %3070 = vmatpush1.msra.mxu0 0.0
        %3071 = vmatprep.subr.mxu0 0.0
        %3072 = vmatpush1.msra.mxu0 0.0
        %3073 = vmatprep.subr.mxu0 0.0
        %3074 = vmatpush1.msra.mxu0 0.0
        %3075 = vmatprep.subr.mxu0 0.0
        %3076 = vmatpush1.msra.mxu0 0.0
        %3077 = vmatprep.subr.mxu0 0.0
        %3078 = vmatpush1.msra.mxu0 0.0
        %3079 = vmatprep.subr.mxu0 0.0
        %3080 = vmatpush1.msra.mxu0 0.0
        %3081 = vmatprep.subr.mxu0 0.0
        %3082 = vmatpush1.msra.mxu0 0.0
        %3083 = vmatprep.subr.mxu0 0.0
        %3084 = vmatpush1.msra.mxu0 0.0
        %3085 = vmatprep.subr.mxu0 0.0
        %3086 = vmatpush1.msra.mxu0 0.0
        %3087 = vmatprep.subr.mxu0 0.0
        %3088 = vmatpush1.msra.mxu0 0.0
        %3089 = vmatprep.subr.mxu0 0.0
        %3090 = vmatpush1.msra.mxu0 0.0
        %3091 = vmatprep.subr.mxu0 0.0
        %3092 = vmatpush1.msra.mxu0 %v3057
        %3093 = vmatprep.subr.mxu0 0.0
        %3094 = vmatpush1.msra.mxu0 %v3055
        %3095 = vmatprep.subr.mxu0 0.0
        %3096 = vmatpush2.msra.mxu0 0.0
        %3097 = vmatprep.subr.mxu0 0.0
        %3098 = vmatpush2.msra.mxu0 0.0
        %3099 = vmatprep.subr.mxu0 0.0
        %3100 = vmatpush2.msra.mxu0 0.0
        %3101 = vmatprep.subr.mxu0 0.0
        %3102 = vmatpush2.msra.mxu0 0.0
        %3103 = vmatprep.subr.mxu0 0.0
        %3104 = vmatpush2.msra.mxu0 0.0
        %3105 = vmatprep.subr.mxu0 0.0
        %3106 = vmatpush2.msra.mxu0 0.0
        %3107 = vmatprep.subr.mxu0 0.0
        %3108 = vmatpush2.msra.mxu0 0.0
        %3109 = vmatprep.subr.mxu0 0.0
        %3110 = vmatpush2.msra.mxu0 0.0
        %3111 = vmatprep.subr.mxu0 0.0
        %3112 = vmatpush2.msra.mxu0 0.0
        %3113 = vmatprep.subr.mxu0 0.0
        %3114 = vmatpush2.msra.mxu0 0.0
        %3115 = vmatprep.subr.mxu0 0.0
        %3116 = vmatpush2.msra.mxu0 0.0
        %3117 = vmatprep.subr.mxu0 0.0
        %3118 = vmatpush2.msra.mxu0 0.0
        %3119 = vmatprep.subr.mxu0 0.0
        %3120 = vmatpush2.msra.mxu0 0.0
        %3121 = vmatprep.subr.mxu0 0.0
        %3122 = vmatpush2.msra.mxu0 0.0
        %3123 = vmatprep.subr.mxu0 0.0
        %3124 = vmatpush2.msra.mxu0 0.0
        %3125 = vmatprep.subr.mxu0 0.0
        %3126 = vmatpush2.msra.mxu0 0.0
        %3127 = vmatprep.mubr.f32.mxu0 0.0
        %3128 = vmatmul.mubr.f32.gmra.mxu0 %v3061
        %v3129 = vpop.f32.mrf.mxu0
        %v3130 = vadd.f32 0.0, %v3129
        %v3131 = vpop.f32.mrf.mxu0
        %3132 = vdwg.mxu0
        %v3134 = vsel %vm1489, %v3130, 0
        %3136 = vmatprep.subr.mxu0 0.0
        %3137 = vmatpush1.msra.mxu0 0.0
        %3138 = vmatprep.subr.mxu0 0.0
        %3139 = vmatpush1.msra.mxu0 0.0
        %3140 = vmatprep.subr.mxu0 0.0
        %3141 = vmatpush1.msra.mxu0 0.0
        %3142 = vmatprep.subr.mxu0 0.0
        %3143 = vmatpush1.msra.mxu0 0.0
        %3144 = vmatprep.subr.mxu0 0.0
        %3145 = vmatpush1.msra.mxu0 0.0
        %3146 = vmatprep.subr.mxu0 0.0
        %3147 = vmatpush1.msra.mxu0 0.0
        %3148 = vmatprep.subr.mxu0 0.0
        %3149 = vmatpush1.msra.mxu0 0.0
        %3150 = vmatprep.subr.mxu0 0.0
        %3151 = vmatpush1.msra.mxu0 0.0
        %3152 = vmatprep.subr.mxu0 0.0
        %3153 = vmatpush1.msra.mxu0 0.0
        %3154 = vmatprep.subr.mxu0 0.0
        %3155 = vmatpush1.msra.mxu0 0.0
        %3156 = vmatprep.subr.mxu0 0.0
        %3157 = vmatpush1.msra.mxu0 0.0
        %3158 = vmatprep.subr.mxu0 0.0
        %3159 = vmatpush1.msra.mxu0 0.0
        %3160 = vmatprep.subr.mxu0 0.0
        %3161 = vmatpush1.msra.mxu0 %v2545
        %3162 = vmatprep.subr.mxu0 0.0
        %3163 = vmatpush1.msra.mxu0 %v2544
        %3164 = vmatprep.subr.mxu0 0.0
        %3165 = vmatpush1.msra.mxu0 %v2543
        %3166 = vmatprep.subr.mxu0 0.0
        %3167 = vmatpush1.msra.mxu0 %v2542
        %3168 = vmatprep.subr.mxu0 0.0
        %3169 = vmatpush2.msra.mxu0 0.0
        %3170 = vmatprep.subr.mxu0 0.0
        %3171 = vmatpush2.msra.mxu0 0.0
        %3172 = vmatprep.subr.mxu0 0.0
        %3173 = vmatpush2.msra.mxu0 0.0
        %3174 = vmatprep.subr.mxu0 0.0
        %3175 = vmatpush2.msra.mxu0 0.0
        %3176 = vmatprep.subr.mxu0 0.0
        %3177 = vmatpush2.msra.mxu0 0.0
        %3178 = vmatprep.subr.mxu0 0.0
        %3179 = vmatpush2.msra.mxu0 0.0
        %3180 = vmatprep.subr.mxu0 0.0
        %3181 = vmatpush2.msra.mxu0 0.0
        %3182 = vmatprep.subr.mxu0 0.0
        %3183 = vmatpush2.msra.mxu0 0.0
        %3184 = vmatprep.subr.mxu0 0.0
        %3185 = vmatpush2.msra.mxu0 0.0
        %3186 = vmatprep.subr.mxu0 0.0
        %3187 = vmatpush2.msra.mxu0 0.0
        %3188 = vmatprep.subr.mxu0 0.0
        %3189 = vmatpush2.msra.mxu0 0.0
        %3190 = vmatprep.subr.mxu0 0.0
        %3191 = vmatpush2.msra.mxu0 0.0
        %3192 = vmatprep.subr.mxu0 0.0
        %3193 = vmatpush2.msra.mxu0 0.0
        %3194 = vmatprep.subr.mxu0 0.0
        %3195 = vmatpush2.msra.mxu0 0.0
        %3196 = vmatprep.subr.mxu0 0.0
        %3197 = vmatpush2.msra.mxu0 0.0
        %3198 = vmatprep.subr.mxu0 0.0
        %3199 = vmatpush2.msra.mxu0 0.0
        %3200 = vmatprep.mubr.f32.mxu0 0.0
        %3201 = vmatmul.mubr.f32.gmra.mxu0 %v3134
        %v3202 = vpop.f32.mrf.mxu0
        %v3203 = vadd.f32 0.0, %v3202
        %v3204 = vpop.f32.mrf.mxu0
        %3205 = vdwg.mxu0
        %v3207 = vsel %vm1489, %v2955, 0
        %3209 = vmatprep.subr.mxu0 0.0
        %3210 = vmatpush1.msra.mxu0 0.0
        %3211 = vmatprep.subr.mxu0 0.0
        %3212 = vmatpush1.msra.mxu0 0.0
        %3213 = vmatprep.subr.mxu0 0.0
        %3214 = vmatpush1.msra.mxu0 0.0
        %3215 = vmatprep.subr.mxu0 0.0
        %3216 = vmatpush1.msra.mxu0 0.0
        %3217 = vmatprep.subr.mxu0 0.0
        %3218 = vmatpush1.msra.mxu0 0.0
        %3219 = vmatprep.subr.mxu0 0.0
        %3220 = vmatpush1.msra.mxu0 0.0
        %3221 = vmatprep.subr.mxu0 0.0
        %3222 = vmatpush1.msra.mxu0 0.0
        %3223 = vmatprep.subr.mxu0 0.0
        %3224 = vmatpush1.msra.mxu0 0.0
        %3225 = vmatprep.subr.mxu0 0.0
        %3226 = vmatpush1.msra.mxu0 0.0
        %3227 = vmatprep.subr.mxu0 0.0
        %3228 = vmatpush1.msra.mxu0 0.0
        %3229 = vmatprep.subr.mxu0 0.0
        %3230 = vmatpush1.msra.mxu0 0.0
        %3231 = vmatprep.subr.mxu0 0.0
        %3232 = vmatpush1.msra.mxu0 0.0
        %3233 = vmatprep.subr.mxu0 0.0
        %3234 = vmatpush1.msra.mxu0 %v2541
        %3235 = vmatprep.subr.mxu0 0.0
        %3236 = vmatpush1.msra.mxu0 %v2540
        %3237 = vmatprep.subr.mxu0 0.0
        %3238 = vmatpush1.msra.mxu0 %v2539
        %3239 = vmatprep.subr.mxu0 0.0
        %3240 = vmatpush1.msra.mxu0 %v2538
        %3241 = vmatprep.subr.mxu0 0.0
        %3242 = vmatpush2.msra.mxu0 0.0
        %3243 = vmatprep.subr.mxu0 0.0
        %3244 = vmatpush2.msra.mxu0 0.0
        %3245 = vmatprep.subr.mxu0 0.0
        %3246 = vmatpush2.msra.mxu0 0.0
        %3247 = vmatprep.subr.mxu0 0.0
        %3248 = vmatpush2.msra.mxu0 0.0
        %3249 = vmatprep.subr.mxu0 0.0
        %3250 = vmatpush2.msra.mxu0 0.0
        %3251 = vmatprep.subr.mxu0 0.0
        %3252 = vmatpush2.msra.mxu0 0.0
        %3253 = vmatprep.subr.mxu0 0.0
        %3254 = vmatpush2.msra.mxu0 0.0
        %3255 = vmatprep.subr.mxu0 0.0
        %3256 = vmatpush2.msra.mxu0 0.0
        %3257 = vmatprep.subr.mxu0 0.0
        %3258 = vmatpush2.msra.mxu0 0.0
        %3259 = vmatprep.subr.mxu0 0.0
        %3260 = vmatpush2.msra.mxu0 0.0
        %3261 = vmatprep.subr.mxu0 0.0
        %3262 = vmatpush2.msra.mxu0 0.0
        %3263 = vmatprep.subr.mxu0 0.0
        %3264 = vmatpush2.msra.mxu0 0.0
        %3265 = vmatprep.subr.mxu0 0.0
        %3266 = vmatpush2.msra.mxu0 0.0
        %3267 = vmatprep.subr.mxu0 0.0
        %3268 = vmatpush2.msra.mxu0 0.0
        %3269 = vmatprep.subr.mxu0 0.0
        %3270 = vmatpush2.msra.mxu0 0.0
        %3271 = vmatprep.subr.mxu0 0.0
        %3272 = vmatpush2.msra.mxu0 0.0
        %3273 = vmatprep.mubr.f32.mxu0 0.0
        %3274 = vmatmul.mubr.f32.gmra.mxu0 %v3207
        %v3275 = vpop.f32.mrf.mxu0
        %v3276 = vadd.f32 %v3203, %v3275
        %v3277 = vpop.f32.mrf.mxu0
        %3278 = vdwg.mxu0
        %3279 = vrot.lane.b32.xlu0 %v2628, 64
        %v3280 = vpop.permute.xlu0 %3279
        %3281 = vrot.lane.b32.xlu0 %v2704, 64
        %v3282 = vpop.permute.xlu0 %3281
        %3283 = vrot.lane.b32.xlu0 %v2709, 64
        %v3284 = vpop.permute.xlu0 %3283
        %v3285 = vsel %vm1489, %v3280, 0
        %v3287 = vsel %vm1489, %v3282, 0
        %v3289 = vsel %vm1489, %v3284, 0
        %3291 = vmatprep.subr.mxu0 0.0
        %3292 = vmatpush1.xpose.msra.mxu0 0.0
        %3293 = vmatprep.subr.mxu0 0.0
        %3294 = vmatpush1.xpose.msra.mxu0 0.0
        %3295 = vmatprep.subr.mxu0 0.0
        %3296 = vmatpush1.xpose.msra.mxu0 0.0
        %3297 = vmatprep.subr.mxu0 0.0
        %3298 = vmatpush1.xpose.msra.mxu0 0.0
        %3299 = vmatprep.subr.mxu0 0.0
        %3300 = vmatpush1.xpose.msra.mxu0 0.0
        %3301 = vmatprep.subr.mxu0 0.0
        %3302 = vmatpush1.xpose.msra.mxu0 0.0
        %3303 = vmatprep.subr.mxu0 0.0
        %3304 = vmatpush1.xpose.msra.mxu0 0.0
        %3305 = vmatprep.subr.mxu0 0.0
        %3306 = vmatpush1.xpose.msra.mxu0 0.0
        %3307 = vmatprep.subr.mxu0 0.0
        %3308 = vmatpush1.xpose.msra.mxu0 0.0
        %3309 = vmatprep.subr.mxu0 0.0
        %3310 = vmatpush1.xpose.msra.mxu0 0.0
        %3311 = vmatprep.subr.mxu0 0.0
        %3312 = vmatpush1.xpose.msra.mxu0 0.0
        %3313 = vmatprep.subr.mxu0 0.0
        %3314 = vmatpush1.xpose.msra.mxu0 0.0
        %3315 = vmatprep.subr.mxu0 0.0
        %3316 = vmatpush1.xpose.msra.mxu0 0.0
        %3317 = vmatprep.subr.mxu0 0.0
        %3318 = vmatpush1.xpose.msra.mxu0 0.0
        %3319 = vmatprep.subr.mxu0 0.0
        %3320 = vmatpush1.xpose.msra.mxu0 %v3289
        %3321 = vmatprep.subr.mxu0 0.0
        %3322 = vmatpush1.xpose.msra.mxu0 %v3287
        %3323 = vmatprep.subr.mxu0 0.0
        %3324 = vmatpush2.xpose.msra.mxu0 0.0
        %3325 = vmatprep.subr.mxu0 0.0
        %3326 = vmatpush2.xpose.msra.mxu0 0.0
        %3327 = vmatprep.subr.mxu0 0.0
        %3328 = vmatpush2.xpose.msra.mxu0 0.0
        %3329 = vmatprep.subr.mxu0 0.0
        %3330 = vmatpush2.xpose.msra.mxu0 0.0
        %3331 = vmatprep.subr.mxu0 0.0
        %3332 = vmatpush2.xpose.msra.mxu0 0.0
        %3333 = vmatprep.subr.mxu0 0.0
        %3334 = vmatpush2.xpose.msra.mxu0 0.0
        %3335 = vmatprep.subr.mxu0 0.0
        %3336 = vmatpush2.xpose.msra.mxu0 0.0
        %3337 = vmatprep.subr.mxu0 0.0
        %3338 = vmatpush2.xpose.msra.mxu0 0.0
        %3339 = vmatprep.subr.mxu0 0.0
        %3340 = vmatpush2.xpose.msra.mxu0 0.0
        %3341 = vmatprep.subr.mxu0 0.0
        %3342 = vmatpush2.xpose.msra.mxu0 0.0
        %3343 = vmatprep.subr.mxu0 0.0
        %3344 = vmatpush2.xpose.msra.mxu0 0.0
        %3345 = vmatprep.subr.mxu0 0.0
        %3346 = vmatpush2.xpose.msra.mxu0 0.0
        %3347 = vmatprep.subr.mxu0 0.0
        %3348 = vmatpush2.xpose.msra.mxu0 0.0
        %3349 = vmatprep.subr.mxu0 0.0
        %3350 = vmatpush2.xpose.msra.mxu0 0.0
        %3351 = vmatprep.subr.mxu0 0.0
        %3352 = vmatpush2.xpose.msra.mxu0 0.0
        %3353 = vmatprep.subr.mxu0 0.0
        %3354 = vmatpush2.xpose.msra.mxu0 0.0
        %3355 = vmatprep.mubr.f32.mxu0 0.0
        %3356 = vmatmul.mubr.f32.gmra.mxu0 %v3285
        %v3357 = vpop.f32.mrf.mxu0
        %v3358 = vadd.f32 0.0, %v3357
        %v3359 = vpop.f32.mrf.mxu0
        %3360 = vdwg.mxu0
        %v3361 = vmul.f32 %v3358, 0.17677669
        %v3362 = vsel %vm2873, %v3361, -inf
        %3363 = vmax.xlane.f32.xlu0 %v3362
        %v3364 = vpop.xlane.xlu0 %3363
        %v3365 = vsub.f32 %v3361, %v3364
        %v3366 = vmul.f32 %v3365, 1.442695
        %v3367 = vpow.pop %v3366
        %v3368 = vsel %vm2873, %v3367, 0.0
        %3369 = vadd.xlane.f32.xlu0 %v3368
        %v3370 = vpop.xlane.xlu0 %3369
        %v3371 = vrcp.pop %v3370
        %v3372 = vmul.f32 %v3367, %v3371
        %3373 = vrot.lane.b32.xlu0 %v2785, 64
        %v3374 = vpop.permute.xlu0 %3373
        %3375 = vrot.lane.b32.xlu0 %v2790, 64
        %v3376 = vpop.permute.xlu0 %3375
        %v3380 = vsel %vm2873, %v3372, 0
        %3382 = vmatprep.subr.mxu0 0.0
        %3383 = vmatpush1.msra.mxu0 0.0
        %3384 = vmatprep.subr.mxu0 0.0
        %3385 = vmatpush1.msra.mxu0 0.0
        %3386 = vmatprep.subr.mxu0 0.0
        %3387 = vmatpush1.msra.mxu0 0.0
        %3388 = vmatprep.subr.mxu0 0.0
        %3389 = vmatpush1.msra.mxu0 0.0
        %3390 = vmatprep.subr.mxu0 0.0
        %3391 = vmatpush1.msra.mxu0 0.0
        %3392 = vmatprep.subr.mxu0 0.0
        %3393 = vmatpush1.msra.mxu0 0.0
        %3394 = vmatprep.subr.mxu0 0.0
        %3395 = vmatpush1.msra.mxu0 0.0
        %3396 = vmatprep.subr.mxu0 0.0
        %3397 = vmatpush1.msra.mxu0 0.0
        %3398 = vmatprep.subr.mxu0 0.0
        %3399 = vmatpush1.msra.mxu0 0.0
        %3400 = vmatprep.subr.mxu0 0.0
        %3401 = vmatpush1.msra.mxu0 0.0
        %3402 = vmatprep.subr.mxu0 0.0
        %3403 = vmatpush1.msra.mxu0 0.0
        %3404 = vmatprep.subr.mxu0 0.0
        %3405 = vmatpush1.msra.mxu0 0.0
        %3406 = vmatprep.subr.mxu0 0.0
        %3407 = vmatpush1.msra.mxu0 0.0
        %3408 = vmatprep.subr.mxu0 0.0
        %3409 = vmatpush1.msra.mxu0 0.0
        %3410 = vmatprep.subr.mxu0 0.0
        %3411 = vmatpush1.msra.mxu0 %v3376
        %3412 = vmatprep.subr.mxu0 0.0
        %3413 = vmatpush1.msra.mxu0 %v3374
        %3414 = vmatprep.subr.mxu0 0.0
        %3415 = vmatpush2.msra.mxu0 0.0
        %3416 = vmatprep.subr.mxu0 0.0
        %3417 = vmatpush2.msra.mxu0 0.0
        %3418 = vmatprep.subr.mxu0 0.0
        %3419 = vmatpush2.msra.mxu0 0.0
        %3420 = vmatprep.subr.mxu0 0.0
        %3421 = vmatpush2.msra.mxu0 0.0
        %3422 = vmatprep.subr.mxu0 0.0
        %3423 = vmatpush2.msra.mxu0 0.0
        %3424 = vmatprep.subr.mxu0 0.0
        %3425 = vmatpush2.msra.mxu0 0.0
        %3426 = vmatprep.subr.mxu0 0.0
        %3427 = vmatpush2.msra.mxu0 0.0
        %3428 = vmatprep.subr.mxu0 0.0
        %3429 = vmatpush2.msra.mxu0 0.0
        %3430 = vmatprep.subr.mxu0 0.0
        %3431 = vmatpush2.msra.mxu0 0.0
        %3432 = vmatprep.subr.mxu0 0.0
        %3433 = vmatpush2.msra.mxu0 0.0
        %3434 = vmatprep.subr.mxu0 0.0
        %3435 = vmatpush2.msra.mxu0 0.0
        %3436 = vmatprep.subr.mxu0 0.0
        %3437 = vmatpush2.msra.mxu0 0.0
        %3438 = vmatprep.subr.mxu0 0.0
        %3439 = vmatpush2.msra.mxu0 0.0
        %3440 = vmatprep.subr.mxu0 0.0
        %3441 = vmatpush2.msra.mxu0 0.0
        %3442 = vmatprep.subr.mxu0 0.0
        %3443 = vmatpush2.msra.mxu0 0.0
        %3444 = vmatprep.subr.mxu0 0.0
        %3445 = vmatpush2.msra.mxu0 0.0
        %3446 = vmatprep.mubr.f32.mxu0 0.0
        %3447 = vmatmul.mubr.f32.gmra.mxu0 %v3380
        %v3448 = vpop.f32.mrf.mxu0
        %v3449 = vadd.f32 0.0, %v3448
        %v3450 = vpop.f32.mrf.mxu0
        %3451 = vdwg.mxu0
        %v3453 = vsel %vm1489, %v3449, 0
        %3455 = vmatprep.subr.mxu0 0.0
        %3456 = vmatpush1.msra.mxu0 0.0
        %3457 = vmatprep.subr.mxu0 0.0
        %3458 = vmatpush1.msra.mxu0 0.0
        %3459 = vmatprep.subr.mxu0 0.0
        %3460 = vmatpush1.msra.mxu0 0.0
        %3461 = vmatprep.subr.mxu0 0.0
        %3462 = vmatpush1.msra.mxu0 0.0
        %3463 = vmatprep.subr.mxu0 0.0
        %3464 = vmatpush1.msra.mxu0 0.0
        %3465 = vmatprep.subr.mxu0 0.0
        %3466 = vmatpush1.msra.mxu0 0.0
        %3467 = vmatprep.subr.mxu0 0.0
        %3468 = vmatpush1.msra.mxu0 0.0
        %3469 = vmatprep.subr.mxu0 0.0
        %3470 = vmatpush1.msra.mxu0 0.0
        %3471 = vmatprep.subr.mxu0 0.0
        %3472 = vmatpush1.msra.mxu0 0.0
        %3473 = vmatprep.subr.mxu0 0.0
        %3474 = vmatpush1.msra.mxu0 0.0
        %3475 = vmatprep.subr.mxu0 0.0
        %3476 = vmatpush1.msra.mxu0 0.0
        %3477 = vmatprep.subr.mxu0 0.0
        %3478 = vmatpush1.msra.mxu0 0.0
        %3479 = vmatprep.subr.mxu0 0.0
        %3480 = vmatpush1.msra.mxu0 %v2549
        %3481 = vmatprep.subr.mxu0 0.0
        %3482 = vmatpush1.msra.mxu0 %v2548
        %3483 = vmatprep.subr.mxu0 0.0
        %3484 = vmatpush1.msra.mxu0 %v2547
        %3485 = vmatprep.subr.mxu0 0.0
        %3486 = vmatpush1.msra.mxu0 %v2546
        %3487 = vmatprep.subr.mxu0 0.0
        %3488 = vmatpush2.msra.mxu0 0.0
        %3489 = vmatprep.subr.mxu0 0.0
        %3490 = vmatpush2.msra.mxu0 0.0
        %3491 = vmatprep.subr.mxu0 0.0
        %3492 = vmatpush2.msra.mxu0 0.0
        %3493 = vmatprep.subr.mxu0 0.0
        %3494 = vmatpush2.msra.mxu0 0.0
        %3495 = vmatprep.subr.mxu0 0.0
        %3496 = vmatpush2.msra.mxu0 0.0
        %3497 = vmatprep.subr.mxu0 0.0
        %3498 = vmatpush2.msra.mxu0 0.0
        %3499 = vmatprep.subr.mxu0 0.0
        %3500 = vmatpush2.msra.mxu0 0.0
        %3501 = vmatprep.subr.mxu0 0.0
        %3502 = vmatpush2.msra.mxu0 0.0
        %3503 = vmatprep.subr.mxu0 0.0
        %3504 = vmatpush2.msra.mxu0 0.0
        %3505 = vmatprep.subr.mxu0 0.0
        %3506 = vmatpush2.msra.mxu0 0.0
        %3507 = vmatprep.subr.mxu0 0.0
        %3508 = vmatpush2.msra.mxu0 0.0
        %3509 = vmatprep.subr.mxu0 0.0
        %3510 = vmatpush2.msra.mxu0 0.0
        %3511 = vmatprep.subr.mxu0 0.0
        %3512 = vmatpush2.msra.mxu0 0.0
        %3513 = vmatprep.subr.mxu0 0.0
        %3514 = vmatpush2.msra.mxu0 0.0
        %3515 = vmatprep.subr.mxu0 0.0
        %3516 = vmatpush2.msra.mxu0 0.0
        %3517 = vmatprep.subr.mxu0 0.0
        %3518 = vmatpush2.msra.mxu0 0.0
        %3519 = vmatprep.mubr.f32.mxu0 0.0
        %3520 = vmatmul.mubr.f32.gmra.mxu0 %v3453
        %v3521 = vpop.f32.mrf.mxu0
        %v3522 = vadd.f32 0.0, %v3521
        %v3523 = vpop.f32.mrf.mxu0
        %3524 = vdwg.mxu0
        %v3525 = vadd.f32 %v3276, %v3522
        %3526 = vrot.lane.b32.xlu0 %v2628, 32
        %v3527 = vpop.permute.xlu0 %3526
        %3528 = vrot.lane.b32.xlu0 %v2704, 32
        %v3529 = vpop.permute.xlu0 %3528
        %3530 = vrot.lane.b32.xlu0 %v2709, 32
        %v3531 = vpop.permute.xlu0 %3530
        %v3532 = vsel %vm1489, %v3527, 0
        %v3534 = vsel %vm1489, %v3529, 0
        %v3536 = vsel %vm1489, %v3531, 0
        %3538 = vmatprep.subr.mxu0 0.0
        %3539 = vmatpush1.xpose.msra.mxu0 0.0
        %3540 = vmatprep.subr.mxu0 0.0
        %3541 = vmatpush1.xpose.msra.mxu0 0.0
        %3542 = vmatprep.subr.mxu0 0.0
        %3543 = vmatpush1.xpose.msra.mxu0 0.0
        %3544 = vmatprep.subr.mxu0 0.0
        %3545 = vmatpush1.xpose.msra.mxu0 0.0
        %3546 = vmatprep.subr.mxu0 0.0
        %3547 = vmatpush1.xpose.msra.mxu0 0.0
        %3548 = vmatprep.subr.mxu0 0.0
        %3549 = vmatpush1.xpose.msra.mxu0 0.0
        %3550 = vmatprep.subr.mxu0 0.0
        %3551 = vmatpush1.xpose.msra.mxu0 0.0
        %3552 = vmatprep.subr.mxu0 0.0
        %3553 = vmatpush1.xpose.msra.mxu0 0.0
        %3554 = vmatprep.subr.mxu0 0.0
        %3555 = vmatpush1.xpose.msra.mxu0 0.0
        %3556 = vmatprep.subr.mxu0 0.0
        %3557 = vmatpush1.xpose.msra.mxu0 0.0
        %3558 = vmatprep.subr.mxu0 0.0
        %3559 = vmatpush1.xpose.msra.mxu0 0.0
        %3560 = vmatprep.subr.mxu0 0.0
        %3561 = vmatpush1.xpose.msra.mxu0 0.0
        %3562 = vmatprep.subr.mxu0 0.0
        %3563 = vmatpush1.xpose.msra.mxu0 0.0
        %3564 = vmatprep.subr.mxu0 0.0
        %3565 = vmatpush1.xpose.msra.mxu0 0.0
        %3566 = vmatprep.subr.mxu0 0.0
        %3567 = vmatpush1.xpose.msra.mxu0 %v3536
        %3568 = vmatprep.subr.mxu0 0.0
        %3569 = vmatpush1.xpose.msra.mxu0 %v3534
        %3570 = vmatprep.subr.mxu0 0.0
        %3571 = vmatpush2.xpose.msra.mxu0 0.0
        %3572 = vmatprep.subr.mxu0 0.0
        %3573 = vmatpush2.xpose.msra.mxu0 0.0
        %3574 = vmatprep.subr.mxu0 0.0
        %3575 = vmatpush2.xpose.msra.mxu0 0.0
        %3576 = vmatprep.subr.mxu0 0.0
        %3577 = vmatpush2.xpose.msra.mxu0 0.0
        %3578 = vmatprep.subr.mxu0 0.0
        %3579 = vmatpush2.xpose.msra.mxu0 0.0
        %3580 = vmatprep.subr.mxu0 0.0
        %3581 = vmatpush2.xpose.msra.mxu0 0.0
        %3582 = vmatprep.subr.mxu0 0.0
        %3583 = vmatpush2.xpose.msra.mxu0 0.0
        %3584 = vmatprep.subr.mxu0 0.0
        %3585 = vmatpush2.xpose.msra.mxu0 0.0
        %3586 = vmatprep.subr.mxu0 0.0
        %3587 = vmatpush2.xpose.msra.mxu0 0.0
        %3588 = vmatprep.subr.mxu0 0.0
        %3589 = vmatpush2.xpose.msra.mxu0 0.0
        %3590 = vmatprep.subr.mxu0 0.0
        %3591 = vmatpush2.xpose.msra.mxu0 0.0
        %3592 = vmatprep.subr.mxu0 0.0
        %3593 = vmatpush2.xpose.msra.mxu0 0.0
        %3594 = vmatprep.subr.mxu0 0.0
        %3595 = vmatpush2.xpose.msra.mxu0 0.0
        %3596 = vmatprep.subr.mxu0 0.0
        %3597 = vmatpush2.xpose.msra.mxu0 0.0
        %3598 = vmatprep.subr.mxu0 0.0
        %3599 = vmatpush2.xpose.msra.mxu0 0.0
        %3600 = vmatprep.subr.mxu0 0.0
        %3601 = vmatpush2.xpose.msra.mxu0 0.0
        %3602 = vmatprep.mubr.f32.mxu0 0.0
        %3603 = vmatmul.mubr.f32.gmra.mxu0 %v3532
        %v3604 = vpop.f32.mrf.mxu0
        %v3605 = vadd.f32 0.0, %v3604
        %v3606 = vpop.f32.mrf.mxu0
        %3607 = vdwg.mxu0
        %v3608 = vmul.f32 %v3605, 0.17677669
        %v3609 = vsel %vm2873, %v3608, -inf
        %3610 = vmax.xlane.f32.xlu0 %v3609
        %v3611 = vpop.xlane.xlu0 %3610
        %v3612 = vsub.f32 %v3608, %v3611
        %v3613 = vmul.f32 %v3612, 1.442695
        %v3614 = vpow.pop %v3613
        %v3615 = vsel %vm2873, %v3614, 0.0
        %3616 = vadd.xlane.f32.xlu0 %v3615
        %v3617 = vpop.xlane.xlu0 %3616
        %v3618 = vrcp.pop %v3617
        %v3619 = vmul.f32 %v3614, %v3618
        %3620 = vrot.lane.b32.xlu0 %v2785, 32
        %v3621 = vpop.permute.xlu0 %3620
        %3622 = vrot.lane.b32.xlu0 %v2790, 32
        %v3623 = vpop.permute.xlu0 %3622
        %v3627 = vsel %vm2873, %v3619, 0
        %3629 = vmatprep.subr.mxu0 0.0
        %3630 = vmatpush1.msra.mxu0 0.0
        %3631 = vmatprep.subr.mxu0 0.0
        %3632 = vmatpush1.msra.mxu0 0.0
        %3633 = vmatprep.subr.mxu0 0.0
        %3634 = vmatpush1.msra.mxu0 0.0
        %3635 = vmatprep.subr.mxu0 0.0
        %3636 = vmatpush1.msra.mxu0 0.0
        %3637 = vmatprep.subr.mxu0 0.0
        %3638 = vmatpush1.msra.mxu0 0.0
        %3639 = vmatprep.subr.mxu0 0.0
        %3640 = vmatpush1.msra.mxu0 0.0
        %3641 = vmatprep.subr.mxu0 0.0
        %3642 = vmatpush1.msra.mxu0 0.0
        %3643 = vmatprep.subr.mxu0 0.0
        %3644 = vmatpush1.msra.mxu0 0.0
        %3645 = vmatprep.subr.mxu0 0.0
        %3646 = vmatpush1.msra.mxu0 0.0
        %3647 = vmatprep.subr.mxu0 0.0
        %3648 = vmatpush1.msra.mxu0 0.0
        %3649 = vmatprep.subr.mxu0 0.0
        %3650 = vmatpush1.msra.mxu0 0.0
        %3651 = vmatprep.subr.mxu0 0.0
        %3652 = vmatpush1.msra.mxu0 0.0
        %3653 = vmatprep.subr.mxu0 0.0
        %3654 = vmatpush1.msra.mxu0 0.0
        %3655 = vmatprep.subr.mxu0 0.0
        %3656 = vmatpush1.msra.mxu0 0.0
        %3657 = vmatprep.subr.mxu0 0.0
        %3658 = vmatpush1.msra.mxu0 %v3623
        %3659 = vmatprep.subr.mxu0 0.0
        %3660 = vmatpush1.msra.mxu0 %v3621
        %3661 = vmatprep.subr.mxu0 0.0
        %3662 = vmatpush2.msra.mxu0 0.0
        %3663 = vmatprep.subr.mxu0 0.0
        %3664 = vmatpush2.msra.mxu0 0.0
        %3665 = vmatprep.subr.mxu0 0.0
        %3666 = vmatpush2.msra.mxu0 0.0
        %3667 = vmatprep.subr.mxu0 0.0
        %3668 = vmatpush2.msra.mxu0 0.0
        %3669 = vmatprep.subr.mxu0 0.0
        %3670 = vmatpush2.msra.mxu0 0.0
        %3671 = vmatprep.subr.mxu0 0.0
        %3672 = vmatpush2.msra.mxu0 0.0
        %3673 = vmatprep.subr.mxu0 0.0
        %3674 = vmatpush2.msra.mxu0 0.0
        %3675 = vmatprep.subr.mxu0 0.0
        %3676 = vmatpush2.msra.mxu0 0.0
        %3677 = vmatprep.subr.mxu0 0.0
        %3678 = vmatpush2.msra.mxu0 0.0
        %3679 = vmatprep.subr.mxu0 0.0
        %3680 = vmatpush2.msra.mxu0 0.0
        %3681 = vmatprep.subr.mxu0 0.0
        %3682 = vmatpush2.msra.mxu0 0.0
        %3683 = vmatprep.subr.mxu0 0.0
        %3684 = vmatpush2.msra.mxu0 0.0
        %3685 = vmatprep.subr.mxu0 0.0
        %3686 = vmatpush2.msra.mxu0 0.0
        %3687 = vmatprep.subr.mxu0 0.0
        %3688 = vmatpush2.msra.mxu0 0.0
        %3689 = vmatprep.subr.mxu0 0.0
        %3690 = vmatpush2.msra.mxu0 0.0
        %3691 = vmatprep.subr.mxu0 0.0
        %3692 = vmatpush2.msra.mxu0 0.0
        %3693 = vmatprep.mubr.f32.mxu0 0.0
        %3694 = vmatmul.mubr.f32.gmra.mxu0 %v3627
        %v3695 = vpop.f32.mrf.mxu0
        %v3696 = vadd.f32 0.0, %v3695
        %v3697 = vpop.f32.mrf.mxu0
        %3698 = vdwg.mxu0
        %v3700 = vsel %vm1489, %v3696, 0
        %3702 = vmatprep.subr.mxu0 0.0
        %3703 = vmatpush1.msra.mxu0 0.0
        %3704 = vmatprep.subr.mxu0 0.0
        %3705 = vmatpush1.msra.mxu0 0.0
        %3706 = vmatprep.subr.mxu0 0.0
        %3707 = vmatpush1.msra.mxu0 0.0
        %3708 = vmatprep.subr.mxu0 0.0
        %3709 = vmatpush1.msra.mxu0 0.0
        %3710 = vmatprep.subr.mxu0 0.0
        %3711 = vmatpush1.msra.mxu0 0.0
        %3712 = vmatprep.subr.mxu0 0.0
        %3713 = vmatpush1.msra.mxu0 0.0
        %3714 = vmatprep.subr.mxu0 0.0
        %3715 = vmatpush1.msra.mxu0 0.0
        %3716 = vmatprep.subr.mxu0 0.0
        %3717 = vmatpush1.msra.mxu0 0.0
        %3718 = vmatprep.subr.mxu0 0.0
        %3719 = vmatpush1.msra.mxu0 0.0
        %3720 = vmatprep.subr.mxu0 0.0
        %3721 = vmatpush1.msra.mxu0 0.0
        %3722 = vmatprep.subr.mxu0 0.0
        %3723 = vmatpush1.msra.mxu0 0.0
        %3724 = vmatprep.subr.mxu0 0.0
        %3725 = vmatpush1.msra.mxu0 0.0
        %3726 = vmatprep.subr.mxu0 0.0
        %3727 = vmatpush1.msra.mxu0 %v2553
        %3728 = vmatprep.subr.mxu0 0.0
        %3729 = vmatpush1.msra.mxu0 %v2552
        %3730 = vmatprep.subr.mxu0 0.0
        %3731 = vmatpush1.msra.mxu0 %v2551
        %3732 = vmatprep.subr.mxu0 0.0
        %3733 = vmatpush1.msra.mxu0 %v2550
        %3734 = vmatprep.subr.mxu0 0.0
        %3735 = vmatpush2.msra.mxu0 0.0
        %3736 = vmatprep.subr.mxu0 0.0
        %3737 = vmatpush2.msra.mxu0 0.0
        %3738 = vmatprep.subr.mxu0 0.0
        %3739 = vmatpush2.msra.mxu0 0.0
        %3740 = vmatprep.subr.mxu0 0.0
        %3741 = vmatpush2.msra.mxu0 0.0
        %3742 = vmatprep.subr.mxu0 0.0
        %3743 = vmatpush2.msra.mxu0 0.0
        %3744 = vmatprep.subr.mxu0 0.0
        %3745 = vmatpush2.msra.mxu0 0.0
        %3746 = vmatprep.subr.mxu0 0.0
        %3747 = vmatpush2.msra.mxu0 0.0
        %3748 = vmatprep.subr.mxu0 0.0
        %3749 = vmatpush2.msra.mxu0 0.0
        %3750 = vmatprep.subr.mxu0 0.0
        %3751 = vmatpush2.msra.mxu0 0.0
        %3752 = vmatprep.subr.mxu0 0.0
        %3753 = vmatpush2.msra.mxu0 0.0
        %3754 = vmatprep.subr.mxu0 0.0
        %3755 = vmatpush2.msra.mxu0 0.0
        %3756 = vmatprep.subr.mxu0 0.0
        %3757 = vmatpush2.msra.mxu0 0.0
        %3758 = vmatprep.subr.mxu0 0.0
        %3759 = vmatpush2.msra.mxu0 0.0
        %3760 = vmatprep.subr.mxu0 0.0
        %3761 = vmatpush2.msra.mxu0 0.0
        %3762 = vmatprep.subr.mxu0 0.0
        %3763 = vmatpush2.msra.mxu0 0.0
        %3764 = vmatprep.subr.mxu0 0.0
        %3765 = vmatpush2.msra.mxu0 0.0
        %3766 = vmatprep.mubr.f32.mxu0 0.0
        %3767 = vmatmul.mubr.f32.gmra.mxu0 %v3700
        %v3768 = vpop.f32.mrf.mxu0
        %v3769 = vadd.f32 0.0, %v3768
        %v3770 = vpop.f32.mrf.mxu0
        %3771 = vdwg.mxu0
        %v3772 = vadd.f32 %v3525, %v3769
        %v3774 = vlaneseq
        %v3775 = vshrl.u32 %v3774, 7
        %v3776 = vsub.s32 0, %v3775
        %v3777 = vrot.slane %v2554, %v3776
        %v3779 = vadd.f32 %v3772, %v3777
        %v3780 = vadd.f32 %v2452, %v3779
        %v3781 = vld [vmem:[%s55] sm:$0x1]
        %v3782 = vld [vmem:[%s57] sm:$0x1]
        %3783 = vadd.xlane.f32.xlu0 %v3780
        %v3784 = vpop.xlane.xlu0 %3783
        %v3785 = vmul.f32 %v3784, %v1161
        %v3786 = vsub.f32 %v3780, %v3785
        %v3787 = vmul.f32 %v3786, %v3786
        %3788 = vadd.xlane.f32.xlu0 %v3787
        %v3789 = vpop.xlane.xlu0 %3788
        %v3790 = vmul.f32 %v3789, %v1167
        %v3791 = vrsqrt.pop %v3790
        %v3792 = vmul.f32 %v3790, %v3791
        %vm3793 = vcmp.eq.f32.partialorder %v3790, inf
        %v3794 = vsel %vm3793, %v3790, %v3792
        %vm3795 = vcmp.eq.f32.partialorder %v3790, 0.0
        %v3796 = vand.u32 %v3790, 2147483648
        %v3797 = vsel %vm3795, %v3796, %v3794
        %v3799 = vlaneseq
        %v3800 = vshrl.u32 %v3799, 7
        %v3801 = vsub.s32 0, %v3800
        %v3802 = vrot.slane %v3781, %v3801
        %v3804 = vmul.f32 %v3802, %v3786
        %v3805 = vadd.f32 %v3797, 1e-06
        %v3806 = vrcp.pop %v3805
        %v3807 = vmul.f32 %v3804, %v3806
        %v3809 = vlaneseq
        %v3810 = vshrl.u32 %v3809, 7
        %v3811 = vsub.s32 0, %v3810
        %v3812 = vrot.slane %v3782, %v3811
        %v3814 = vadd.f32 %v3807, %v3812
        %v3815 = vld [vmem:[#allocation20] sm:$0xff]
        %v3816 = vld [vmem:[#allocation20 + $0x8] sm:$0xff]
        %v3817 = vld [vmem:[#allocation20 + $0x10] sm:$0xff]
        %v3818 = vld [vmem:[#allocation20 + $0x18] sm:$0xff]
        %v3819 = vld [vmem:[#allocation20 + $0x20] sm:$0xff]
        %v3820 = vld [vmem:[#allocation20 + $0x28] sm:$0xff]
        %v3821 = vld [vmem:[#allocation20 + $0x30] sm:$0xff]
        %v3822 = vld [vmem:[#allocation20 + $0x38] sm:$0xff]
        %v3823 = vld [vmem:[#allocation20 + $0x40] sm:$0xff]
        %v3824 = vld [vmem:[#allocation20 + $0x48] sm:$0xff]
        %v3825 = vld [vmem:[#allocation20 + $0x50] sm:$0xff]
        %v3826 = vld [vmem:[#allocation20 + $0x58] sm:$0xff]
        %v3827 = vld [vmem:[#allocation20 + $0x60] sm:$0xff]
        %v3828 = vld [vmem:[#allocation20 + $0x68] sm:$0xff]
        %v3829 = vld [vmem:[#allocation20 + $0x70] sm:$0xff]
        %v3830 = vld [vmem:[#allocation20 + $0x78] sm:$0xff]
        %v3831 = vld [vmem:[#allocation20 + $0x80] sm:$0xff]
        %v3832 = vld [vmem:[#allocation20 + $0x88] sm:$0xff]
        %v3833 = vld [vmem:[#allocation20 + $0x90] sm:$0xff]
        %v3834 = vld [vmem:[#allocation20 + $0x98] sm:$0xff]
        %v3835 = vld [vmem:[#allocation20 + $0xa0] sm:$0xff]
        %v3836 = vld [vmem:[#allocation20 + $0xa8] sm:$0xff]
        %v3837 = vld [vmem:[#allocation20 + $0xb0] sm:$0xff]
        %v3838 = vld [vmem:[#allocation20 + $0xb8] sm:$0xff]
        %v3839 = vld [vmem:[#allocation20 + $0xc0] sm:$0xff]
        %v3840 = vld [vmem:[#allocation20 + $0xc8] sm:$0xff]
        %v3841 = vld [vmem:[#allocation20 + $0xd0] sm:$0xff]
        %v3842 = vld [vmem:[#allocation20 + $0xd8] sm:$0xff]
        %v3843 = vld [vmem:[#allocation20 + $0xe0] sm:$0xff]
        %v3844 = vld [vmem:[#allocation20 + $0xe8] sm:$0xff]
        %v3845 = vld [vmem:[#allocation20 + $0xf0] sm:$0xff]
        %v3846 = vld [vmem:[#allocation20 + $0xf8] sm:$0xff]
        %v3847 = vld [vmem:[#allocation20 + $0x100] sm:$0xff]
        %v3848 = vld [vmem:[#allocation20 + $0x108] sm:$0xff]
        %v3849 = vld [vmem:[#allocation20 + $0x110] sm:$0xff]
        %v3850 = vld [vmem:[#allocation20 + $0x118] sm:$0xff]
        %v3851 = vld [vmem:[#allocation20 + $0x120] sm:$0xff]
        %v3852 = vld [vmem:[#allocation20 + $0x128] sm:$0xff]
        %v3853 = vld [vmem:[#allocation20 + $0x130] sm:$0xff]
        %v3854 = vld [vmem:[#allocation20 + $0x138] sm:$0xff]
        %v3855 = vld [vmem:[#allocation20 + $0x140] sm:$0xff]
        %v3856 = vld [vmem:[#allocation20 + $0x148] sm:$0xff]
        %v3857 = vld [vmem:[#allocation20 + $0x150] sm:$0xff]
        %v3858 = vld [vmem:[#allocation20 + $0x158] sm:$0xff]
        %v3859 = vld [vmem:[#allocation20 + $0x160] sm:$0xff]
        %v3860 = vld [vmem:[#allocation20 + $0x168] sm:$0xff]
        %v3861 = vld [vmem:[#allocation20 + $0x170] sm:$0xff]
        %v3862 = vld [vmem:[#allocation20 + $0x178] sm:$0xff]
        %v3863 = vld [vmem:[#allocation20 + $0x180] sm:$0xff]
        %v3864 = vld [vmem:[#allocation20 + $0x188] sm:$0xff]
        %v3865 = vld [vmem:[#allocation20 + $0x190] sm:$0xff]
        %v3866 = vld [vmem:[#allocation20 + $0x198] sm:$0xff]
        %v3867 = vld [vmem:[#allocation20 + $0x1a0] sm:$0xff]
        %v3868 = vld [vmem:[#allocation20 + $0x1a8] sm:$0xff]
        %v3869 = vld [vmem:[#allocation20 + $0x1b0] sm:$0xff]
        %v3870 = vld [vmem:[#allocation20 + $0x1b8] sm:$0xff]
        %v3871 = vld [vmem:[#allocation20 + $0x1c0] sm:$0xff]
        %v3872 = vld [vmem:[#allocation20 + $0x1c8] sm:$0xff]
        %v3873 = vld [vmem:[#allocation20 + $0x1d0] sm:$0xff]
        %v3874 = vld [vmem:[#allocation20 + $0x1d8] sm:$0xff]
        %v3875 = vld [vmem:[#allocation20 + $0x1e0] sm:$0xff]
        %v3876 = vld [vmem:[#allocation20 + $0x1e8] sm:$0xff]
        %v3877 = vld [vmem:[#allocation20 + $0x1f0] sm:$0xff]
        %v3878 = vld [vmem:[#allocation20 + $0x1f8] sm:$0xff]
        %v3879 = vld [vmem:[#allocation22] sm:$0xff]
        %v3880 = vld [vmem:[#allocation22 + $0x8] sm:$0xff]
        %v3881 = vld [vmem:[#allocation22 + $0x10] sm:$0xff]
        %v3882 = vld [vmem:[#allocation22 + $0x18] sm:$0xff]
        %v3883 = vld [vmem:[#allocation22 + $0x20] sm:$0xff]
        %v3884 = vld [vmem:[#allocation22 + $0x28] sm:$0xff]
        %v3885 = vld [vmem:[#allocation22 + $0x30] sm:$0xff]
        %v3886 = vld [vmem:[#allocation22 + $0x38] sm:$0xff]
        %v3887 = vld [vmem:[#allocation22 + $0x40] sm:$0xff]
        %v3888 = vld [vmem:[#allocation22 + $0x48] sm:$0xff]
        %v3889 = vld [vmem:[#allocation22 + $0x50] sm:$0xff]
        %v3890 = vld [vmem:[#allocation22 + $0x58] sm:$0xff]
        %v3891 = vld [vmem:[#allocation22 + $0x60] sm:$0xff]
        %v3892 = vld [vmem:[#allocation22 + $0x68] sm:$0xff]
        %v3893 = vld [vmem:[#allocation22 + $0x70] sm:$0xff]
        %v3894 = vld [vmem:[#allocation22 + $0x78] sm:$0xff]
        %v3895 = vld [vmem:[#allocation22 + $0x80] sm:$0xff]
        %v3896 = vld [vmem:[#allocation22 + $0x88] sm:$0xff]
        %v3897 = vld [vmem:[#allocation22 + $0x90] sm:$0xff]
        %v3898 = vld [vmem:[#allocation22 + $0x98] sm:$0xff]
        %v3899 = vld [vmem:[#allocation22 + $0xa0] sm:$0xff]
        %v3900 = vld [vmem:[#allocation22 + $0xa8] sm:$0xff]
        %v3901 = vld [vmem:[#allocation22 + $0xb0] sm:$0xff]
        %v3902 = vld [vmem:[#allocation22 + $0xb8] sm:$0xff]
        %v3903 = vld [vmem:[#allocation22 + $0xc0] sm:$0xff]
        %v3904 = vld [vmem:[#allocation22 + $0xc8] sm:$0xff]
        %v3905 = vld [vmem:[#allocation22 + $0xd0] sm:$0xff]
        %v3906 = vld [vmem:[#allocation22 + $0xd8] sm:$0xff]
        %v3907 = vld [vmem:[#allocation22 + $0xe0] sm:$0xff]
        %v3908 = vld [vmem:[#allocation22 + $0xe8] sm:$0xff]
        %v3909 = vld [vmem:[#allocation22 + $0xf0] sm:$0xff]
        %v3910 = vld [vmem:[#allocation22 + $0xf8] sm:$0xff]
        %v3911 = vld [vmem:[#allocation22 + $0x100] sm:$0xff]
        %v3912 = vld [vmem:[#allocation22 + $0x108] sm:$0xff]
        %v3913 = vld [vmem:[#allocation22 + $0x110] sm:$0xff]
        %v3914 = vld [vmem:[#allocation22 + $0x118] sm:$0xff]
        %v3915 = vld [vmem:[#allocation22 + $0x120] sm:$0xff]
        %v3916 = vld [vmem:[#allocation22 + $0x128] sm:$0xff]
        %v3917 = vld [vmem:[#allocation22 + $0x130] sm:$0xff]
        %v3918 = vld [vmem:[#allocation22 + $0x138] sm:$0xff]
        %v3919 = vld [vmem:[#allocation22 + $0x140] sm:$0xff]
        %v3920 = vld [vmem:[#allocation22 + $0x148] sm:$0xff]
        %v3921 = vld [vmem:[#allocation22 + $0x150] sm:$0xff]
        %v3922 = vld [vmem:[#allocation22 + $0x158] sm:$0xff]
        %v3923 = vld [vmem:[#allocation22 + $0x160] sm:$0xff]
        %v3924 = vld [vmem:[#allocation22 + $0x168] sm:$0xff]
        %v3925 = vld [vmem:[#allocation22 + $0x170] sm:$0xff]
        %v3926 = vld [vmem:[#allocation22 + $0x178] sm:$0xff]
        %v3927 = vld [vmem:[#allocation22 + $0x180] sm:$0xff]
        %v3928 = vld [vmem:[#allocation22 + $0x188] sm:$0xff]
        %v3929 = vld [vmem:[#allocation22 + $0x190] sm:$0xff]
        %v3930 = vld [vmem:[#allocation22 + $0x198] sm:$0xff]
        %v3931 = vld [vmem:[#allocation22 + $0x1a0] sm:$0xff]
        %v3932 = vld [vmem:[#allocation22 + $0x1a8] sm:$0xff]
        %v3933 = vld [vmem:[#allocation22 + $0x1b0] sm:$0xff]
        %v3934 = vld [vmem:[#allocation22 + $0x1b8] sm:$0xff]
        %v3935 = vld [vmem:[#allocation22 + $0x1c0] sm:$0xff]
        %v3936 = vld [vmem:[#allocation22 + $0x1c8] sm:$0xff]
        %v3937 = vld [vmem:[#allocation22 + $0x1d0] sm:$0xff]
        %v3938 = vld [vmem:[#allocation22 + $0x1d8] sm:$0xff]
        %v3939 = vld [vmem:[#allocation22 + $0x1e0] sm:$0xff]
        %v3940 = vld [vmem:[#allocation22 + $0x1e8] sm:$0xff]
        %v3941 = vld [vmem:[#allocation22 + $0x1f0] sm:$0xff]
        %v3942 = vld [vmem:[#allocation22 + $0x1f8] sm:$0xff]
        %v3943 = vld [vmem:[%s41] sm:$0xf]
        %v3945 = vlaneseq
        %v3946 = vshrl.u32 %v3945, 7
        %v3947 = vsub.s32 0, %v3946
        %v3948 = vrot.slane %v3943, %v3947
        %v3949 = vlaneseq
        %v3950 = vshrl.u32 %v3949, 7
        %v3951 = vsub.s32 1, %v3950
        %v3952 = vrot.slane %v3943, %v3951
        %v3953 = vlaneseq
        %v3954 = vshrl.u32 %v3953, 7
        %v3955 = vsub.s32 2, %v3954
        %v3956 = vrot.slane %v3943, %v3955
        %v3957 = vlaneseq
        %v3958 = vshrl.u32 %v3957, 7
        %v3959 = vsub.s32 3, %v3958
        %v3960 = vrot.slane %v3943, %v3959
        %3965 = vmatprep.subr.mxu0 %v3876
        %3966 = vmatpush1.msra.mxu0 %v3875
        %3967 = vmatprep.subr.mxu0 %v3872
        %3968 = vmatpush1.msra.mxu0 %v3871
        %3969 = vmatprep.subr.mxu0 %v3868
        %3970 = vmatpush1.msra.mxu0 %v3867
        %3971 = vmatprep.subr.mxu0 %v3864
        %3972 = vmatpush1.msra.mxu0 %v3863
        %3973 = vmatprep.subr.mxu0 %v3860
        %3974 = vmatpush1.msra.mxu0 %v3859
        %3975 = vmatprep.subr.mxu0 %v3856
        %3976 = vmatpush1.msra.mxu0 %v3855
        %3977 = vmatprep.subr.mxu0 %v3852
        %3978 = vmatpush1.msra.mxu0 %v3851
        %3979 = vmatprep.subr.mxu0 %v3848
        %3980 = vmatpush1.msra.mxu0 %v3847
        %3981 = vmatprep.subr.mxu0 %v3844
        %3982 = vmatpush1.msra.mxu0 %v3843
        %3983 = vmatprep.subr.mxu0 %v3840
        %3984 = vmatpush1.msra.mxu0 %v3839
        %3985 = vmatprep.subr.mxu0 %v3836
        %3986 = vmatpush1.msra.mxu0 %v3835
        %3987 = vmatprep.subr.mxu0 %v3832
        %3988 = vmatpush1.msra.mxu0 %v3831
        %3989 = vmatprep.subr.mxu0 %v3828
        %3990 = vmatpush1.msra.mxu0 %v3827
        %3991 = vmatprep.subr.mxu0 %v3824
        %3992 = vmatpush1.msra.mxu0 %v3823
        %3993 = vmatprep.subr.mxu0 %v3820
        %3994 = vmatpush1.msra.mxu0 %v3819
        %3995 = vmatprep.subr.mxu0 %v3816
        %3996 = vmatpush1.msra.mxu0 %v3815
        %3997 = vmatprep.subr.mxu0 0.0
        %3998 = vmatpush2.msra.mxu0 0.0
        %3999 = vmatprep.subr.mxu0 0.0
        %4000 = vmatpush2.msra.mxu0 0.0
        %4001 = vmatprep.subr.mxu0 0.0
        %4002 = vmatpush2.msra.mxu0 0.0
        %4003 = vmatprep.subr.mxu0 0.0
        %4004 = vmatpush2.msra.mxu0 0.0
        %4005 = vmatprep.subr.mxu0 0.0
        %4006 = vmatpush2.msra.mxu0 0.0
        %4007 = vmatprep.subr.mxu0 0.0
        %4008 = vmatpush2.msra.mxu0 0.0
        %4009 = vmatprep.subr.mxu0 0.0
        %4010 = vmatpush2.msra.mxu0 0.0
        %4011 = vmatprep.subr.mxu0 0.0
        %4012 = vmatpush2.msra.mxu0 0.0
        %4013 = vmatprep.subr.mxu0 0.0
        %4014 = vmatpush2.msra.mxu0 0.0
        %4015 = vmatprep.subr.mxu0 0.0
        %4016 = vmatpush2.msra.mxu0 0.0
        %4017 = vmatprep.subr.mxu0 0.0
        %4018 = vmatpush2.msra.mxu0 0.0
        %4019 = vmatprep.subr.mxu0 0.0
        %4020 = vmatpush2.msra.mxu0 0.0
        %4021 = vmatprep.subr.mxu0 0.0
        %4022 = vmatpush2.msra.mxu0 0.0
        %4023 = vmatprep.subr.mxu0 0.0
        %4024 = vmatpush2.msra.mxu0 0.0
        %4025 = vmatprep.subr.mxu0 0.0
        %4026 = vmatpush2.msra.mxu0 0.0
        %4027 = vmatprep.subr.mxu0 0.0
        %4028 = vmatpush2.msra.mxu0 0.0
        %4029 = vmatprep.mubr.f32.mxu0 0.0
        %4030 = vmatmul.mubr.f32.gmra.mxu0 %v3814
        %v4031 = vpop.f32.mrf.mxu0
        %v4032 = vadd.f32 %v3948, %v4031
        %v4033 = vpop.f32.mrf.mxu0
        %v4034 = vadd.f32 %v3952, %v4033
        %4035 = vdwg.mxu0
        %4036 = vmatprep.subr.mxu0 %v3878
        %4037 = vmatpush1.msra.mxu0 %v3877
        %4038 = vmatprep.subr.mxu0 %v3874
        %4039 = vmatpush1.msra.mxu0 %v3873
        %4040 = vmatprep.subr.mxu0 %v3870
        %4041 = vmatpush1.msra.mxu0 %v3869
        %4042 = vmatprep.subr.mxu0 %v3866
        %4043 = vmatpush1.msra.mxu0 %v3865
        %4044 = vmatprep.subr.mxu0 %v3862
        %4045 = vmatpush1.msra.mxu0 %v3861
        %4046 = vmatprep.subr.mxu0 %v3858
        %4047 = vmatpush1.msra.mxu0 %v3857
        %4048 = vmatprep.subr.mxu0 %v3854
        %4049 = vmatpush1.msra.mxu0 %v3853
        %4050 = vmatprep.subr.mxu0 %v3850
        %4051 = vmatpush1.msra.mxu0 %v3849
        %4052 = vmatprep.subr.mxu0 %v3846
        %4053 = vmatpush1.msra.mxu0 %v3845
        %4054 = vmatprep.subr.mxu0 %v3842
        %4055 = vmatpush1.msra.mxu0 %v3841
        %4056 = vmatprep.subr.mxu0 %v3838
        %4057 = vmatpush1.msra.mxu0 %v3837
        %4058 = vmatprep.subr.mxu0 %v3834
        %4059 = vmatpush1.msra.mxu0 %v3833
        %4060 = vmatprep.subr.mxu0 %v3830
        %4061 = vmatpush1.msra.mxu0 %v3829
        %4062 = vmatprep.subr.mxu0 %v3826
        %4063 = vmatpush1.msra.mxu0 %v3825
        %4064 = vmatprep.subr.mxu0 %v3822
        %4065 = vmatpush1.msra.mxu0 %v3821
        %4066 = vmatprep.subr.mxu0 %v3818
        %4067 = vmatpush1.msra.mxu0 %v3817
        %4068 = vmatprep.subr.mxu0 0.0
        %4069 = vmatpush2.msra.mxu0 0.0
        %4070 = vmatprep.subr.mxu0 0.0
        %4071 = vmatpush2.msra.mxu0 0.0
        %4072 = vmatprep.subr.mxu0 0.0
        %4073 = vmatpush2.msra.mxu0 0.0
        %4074 = vmatprep.subr.mxu0 0.0
        %4075 = vmatpush2.msra.mxu0 0.0
        %4076 = vmatprep.subr.mxu0 0.0
        %4077 = vmatpush2.msra.mxu0 0.0
        %4078 = vmatprep.subr.mxu0 0.0
        %4079 = vmatpush2.msra.mxu0 0.0
        %4080 = vmatprep.subr.mxu0 0.0
        %4081 = vmatpush2.msra.mxu0 0.0
        %4082 = vmatprep.subr.mxu0 0.0
        %4083 = vmatpush2.msra.mxu0 0.0
        %4084 = vmatprep.subr.mxu0 0.0
        %4085 = vmatpush2.msra.mxu0 0.0
        %4086 = vmatprep.subr.mxu0 0.0
        %4087 = vmatpush2.msra.mxu0 0.0
        %4088 = vmatprep.subr.mxu0 0.0
        %4089 = vmatpush2.msra.mxu0 0.0
        %4090 = vmatprep.subr.mxu0 0.0
        %4091 = vmatpush2.msra.mxu0 0.0
        %4092 = vmatprep.subr.mxu0 0.0
        %4093 = vmatpush2.msra.mxu0 0.0
        %4094 = vmatprep.subr.mxu0 0.0
        %4095 = vmatpush2.msra.mxu0 0.0
        %4096 = vmatprep.subr.mxu0 0.0
        %4097 = vmatpush2.msra.mxu0 0.0
        %4098 = vmatprep.subr.mxu0 0.0
        %4099 = vmatpush2.msra.mxu0 0.0
        %4100 = vmatprep.mubr.f32.mxu0 0.0
        %4101 = vmatmul.mubr.f32.gmra.mxu0 %v3814
        %v4102 = vpop.f32.mrf.mxu0
        %v4103 = vadd.f32 %v3956, %v4102
        %v4104 = vpop.f32.mrf.mxu0
        %v4105 = vadd.f32 %v3960, %v4104
        %4106 = vdwg.mxu0
        %v4107 = vmax.f32 %v4032, 0.0
        %v4108 = vmax.f32 %v4034, 0.0
        %v4109 = vmax.f32 %v4103, 0.0
        %v4110 = vmax.f32 %v4105, 0.0
        %4111 = vmatprep.subr.mxu0 0.0
        %4112 = vmatpush1.msra.mxu0 %v3894
        %4113 = vmatprep.subr.mxu0 0.0
        %4114 = vmatpush1.msra.mxu0 %v3893
        %4115 = vmatprep.subr.mxu0 0.0
        %4116 = vmatpush1.msra.mxu0 %v3892
        %4117 = vmatprep.subr.mxu0 0.0
        %4118 = vmatpush1.msra.mxu0 %v3891
        %4119 = vmatprep.subr.mxu0 0.0
        %4120 = vmatpush1.msra.mxu0 %v3890
        %4121 = vmatprep.subr.mxu0 0.0
        %4122 = vmatpush1.msra.mxu0 %v3889
        %4123 = vmatprep.subr.mxu0 0.0
        %4124 = vmatpush1.msra.mxu0 %v3888
        %4125 = vmatprep.subr.mxu0 0.0
        %4126 = vmatpush1.msra.mxu0 %v3887
        %4127 = vmatprep.subr.mxu0 0.0
        %4128 = vmatpush1.msra.mxu0 %v3886
        %4129 = vmatprep.subr.mxu0 0.0
        %4130 = vmatpush1.msra.mxu0 %v3885
        %4131 = vmatprep.subr.mxu0 0.0
        %4132 = vmatpush1.msra.mxu0 %v3884
        %4133 = vmatprep.subr.mxu0 0.0
        %4134 = vmatpush1.msra.mxu0 %v3883
        %4135 = vmatprep.subr.mxu0 0.0
        %4136 = vmatpush1.msra.mxu0 %v3882
        %4137 = vmatprep.subr.mxu0 0.0
        %4138 = vmatpush1.msra.mxu0 %v3881
        %4139 = vmatprep.subr.mxu0 0.0
        %4140 = vmatpush1.msra.mxu0 %v3880
        %4141 = vmatprep.subr.mxu0 0.0
        %4142 = vmatpush1.msra.mxu0 %v3879
        %4143 = vmatprep.subr.mxu0 0.0
        %4144 = vmatpush2.msra.mxu0 %v3910
        %4145 = vmatprep.subr.mxu0 0.0
        %4146 = vmatpush2.msra.mxu0 %v3909
        %4147 = vmatprep.subr.mxu0 0.0
        %4148 = vmatpush2.msra.mxu0 %v3908
        %4149 = vmatprep.subr.mxu0 0.0
        %4150 = vmatpush2.msra.mxu0 %v3907
        %4151 = vmatprep.subr.mxu0 0.0
        %4152 = vmatpush2.msra.mxu0 %v3906
        %4153 = vmatprep.subr.mxu0 0.0
        %4154 = vmatpush2.msra.mxu0 %v3905
        %4155 = vmatprep.subr.mxu0 0.0
        %4156 = vmatpush2.msra.mxu0 %v3904
        %4157 = vmatprep.subr.mxu0 0.0
        %4158 = vmatpush2.msra.mxu0 %v3903
        %4159 = vmatprep.subr.mxu0 0.0
        %4160 = vmatpush2.msra.mxu0 %v3902
        %4161 = vmatprep.subr.mxu0 0.0
        %4162 = vmatpush2.msra.mxu0 %v3901
        %4163 = vmatprep.subr.mxu0 0.0
        %4164 = vmatpush2.msra.mxu0 %v3900
        %4165 = vmatprep.subr.mxu0 0.0
        %4166 = vmatpush2.msra.mxu0 %v3899
        %4167 = vmatprep.subr.mxu0 0.0
        %4168 = vmatpush2.msra.mxu0 %v3898
        %4169 = vmatprep.subr.mxu0 0.0
        %4170 = vmatpush2.msra.mxu0 %v3897
        %4171 = vmatprep.subr.mxu0 0.0
        %4172 = vmatpush2.msra.mxu0 %v3896
        %4173 = vmatprep.subr.mxu0 0.0
        %4174 = vmatpush2.msra.mxu0 %v3895
        %4175 = vmatprep.mubr.f32.mxu0 %v4108
        %4176 = vmatmul.mubr.f32.gmra.mxu0 %v4107
        %v4177 = vpop.f32.mrf.mxu0
        %v4178 = vadd.f32 0.0, %v4177
        %v4179 = vpop.f32.mrf.mxu0
        %4180 = vdwg.mxu0
        %4181 = vmatprep.subr.mxu0 0.0
        %4182 = vmatpush1.msra.mxu0 %v3926
        %4183 = vmatprep.subr.mxu0 0.0
        %4184 = vmatpush1.msra.mxu0 %v3925
        %4185 = vmatprep.subr.mxu0 0.0
        %4186 = vmatpush1.msra.mxu0 %v3924
        %4187 = vmatprep.subr.mxu0 0.0
        %4188 = vmatpush1.msra.mxu0 %v3923
        %4189 = vmatprep.subr.mxu0 0.0
        %4190 = vmatpush1.msra.mxu0 %v3922
        %4191 = vmatprep.subr.mxu0 0.0
        %4192 = vmatpush1.msra.mxu0 %v3921
        %4193 = vmatprep.subr.mxu0 0.0
        %4194 = vmatpush1.msra.mxu0 %v3920
        %4195 = vmatprep.subr.mxu0 0.0
        %4196 = vmatpush1.msra.mxu0 %v3919
        %4197 = vmatprep.subr.mxu0 0.0
        %4198 = vmatpush1.msra.mxu0 %v3918
        %4199 = vmatprep.subr.mxu0 0.0
        %4200 = vmatpush1.msra.mxu0 %v3917
        %4201 = vmatprep.subr.mxu0 0.0
        %4202 = vmatpush1.msra.mxu0 %v3916
        %4203 = vmatprep.subr.mxu0 0.0
        %4204 = vmatpush1.msra.mxu0 %v3915
        %4205 = vmatprep.subr.mxu0 0.0
        %4206 = vmatpush1.msra.mxu0 %v3914
        %4207 = vmatprep.subr.mxu0 0.0
        %4208 = vmatpush1.msra.mxu0 %v3913
        %4209 = vmatprep.subr.mxu0 0.0
        %4210 = vmatpush1.msra.mxu0 %v3912
        %4211 = vmatprep.subr.mxu0 0.0
        %4212 = vmatpush1.msra.mxu0 %v3911
        %4213 = vmatprep.subr.mxu0 0.0
        %4214 = vmatpush2.msra.mxu0 %v3942
        %4215 = vmatprep.subr.mxu0 0.0
        %4216 = vmatpush2.msra.mxu0 %v3941
        %4217 = vmatprep.subr.mxu0 0.0
        %4218 = vmatpush2.msra.mxu0 %v3940
        %4219 = vmatprep.subr.mxu0 0.0
        %4220 = vmatpush2.msra.mxu0 %v3939
        %4221 = vmatprep.subr.mxu0 0.0
        %4222 = vmatpush2.msra.mxu0 %v3938
        %4223 = vmatprep.subr.mxu0 0.0
        %4224 = vmatpush2.msra.mxu0 %v3937
        %4225 = vmatprep.subr.mxu0 0.0
        %4226 = vmatpush2.msra.mxu0 %v3936
        %4227 = vmatprep.subr.mxu0 0.0
        %4228 = vmatpush2.msra.mxu0 %v3935
        %4229 = vmatprep.subr.mxu0 0.0
        %4230 = vmatpush2.msra.mxu0 %v3934
        %4231 = vmatprep.subr.mxu0 0.0
        %4232 = vmatpush2.msra.mxu0 %v3933
        %4233 = vmatprep.subr.mxu0 0.0
        %4234 = vmatpush2.msra.mxu0 %v3932
        %4235 = vmatprep.subr.mxu0 0.0
        %4236 = vmatpush2.msra.mxu0 %v3931
        %4237 = vmatprep.subr.mxu0 0.0
        %4238 = vmatpush2.msra.mxu0 %v3930
        %4239 = vmatprep.subr.mxu0 0.0
        %4240 = vmatpush2.msra.mxu0 %v3929
        %4241 = vmatprep.subr.mxu0 0.0
        %4242 = vmatpush2.msra.mxu0 %v3928
        %4243 = vmatprep.subr.mxu0 0.0
        %4244 = vmatpush2.msra.mxu0 %v3927
        %4245 = vmatprep.mubr.f32.mxu0 %v4110
        %4246 = vmatmul.mubr.f32.gmra.mxu0 %v4109
        %v4247 = vpop.f32.mrf.mxu0
        %v4248 = vadd.f32 %v4178, %v4247
        %v4249 = vpop.f32.mrf.mxu0
        %4250 = vdwg.mxu0
        %v4251 = vadd.f32 %v3780, %v4248
        %v4252 = vld [vmem:[%s45] sm:$0x1]
        %v4254 = vlaneseq
        %v4255 = vshrl.u32 %v4254, 7
        %v4256 = vsub.s32 0, %v4255
        %v4257 = vrot.slane %v4252, %v4256
        %v4259 = vadd.f32 %v4251, %v4257
        %4260 = vst [vmem:[%s1153] sm:$0xff] %v4259
        %s4261 = sand.u32 %s732, 1
        %s4262 = scalar_lea.sflag [#allocation4], %s4261
        %s4263 = sand.u32 %s732, 1
        %s4264 = smul.addr %s4263, 8
        %s4265 = scalar_lea.vmem [#allocation23], %s4264
        // Predicated region
        $region189: #{tpu_custom_call.1} parent=135 // pred_check
          %p4266 = pneg %p742
        $region190: #{tpu_custom_call.1} parent=135 // pred_check_branch
          %4268 = sbr.rel (%p4266) target = $region192
        $region191: #{tpu_custom_call.1} parent=135 // pred_region
          %s4270 = ssub.s32 128, 128
          %4271 = vsyncadd %s4262, %s4270
          %s4272 = sadd.s32 %s89, %s88
          %s4273 = smul.addr %s4272, 128
          %s4274 = scalar_lea.hbm %s59, %s4273
          %s4276 = sshll.u32 %s4265, 4
          %s4277 = int_to_ptr.vmem [resolvable:$true] %s4276
          %4279 = dma.vmem_to_hbm [thread:$0]  %s4277, 128, %s4274, %s4262
        $region192: #{tpu_custom_call.1} parent=135 // pred_fallthru
          _
      $region136: #{tpu_custom_call.1} parent=5 // pred_fallthru
        _
      %p4280 = scmp.le.s32.totalorder 2, %s79
      // Predicated region
      $region193: #{tpu_custom_call.1} parent=5 // pred_check
        %p4281 = pneg %p4280
      $region194: #{tpu_custom_call.1} parent=5 // pred_check_branch
        %4283 = sbr.rel (%p4281) target = $region196
      $region195: #{tpu_custom_call.1} parent=5 // pred_region
        %s4284 = ssub.s32 %s79, 2
        // Predicated region
        $region197: #{tpu_custom_call.1} parent=195 // pred_check
          %p4285 = pneg %p748
        $region198: #{tpu_custom_call.1} parent=195 // pred_check_branch
          %4287 = sbr.rel (%p4285) target = $region200
        $region199: #{tpu_custom_call.1} parent=195 // pred_region
          %s4288 = sand.u32 %s733, 1
          %s4289 = scalar_lea.sflag [#allocation4], %s4288
          %s4290 = sand.u32 %s733, 1
          %s4291 = smul.addr %s4290, 8
          %s4292 = scalar_lea.vmem [#allocation23], %s4291
          %4293 = dma.done %s4289, 128
        $region200: #{tpu_custom_call.1} parent=195 // pred_fallthru
          _
      $region196: #{tpu_custom_call.1} parent=5 // pred_fallthru
        _
    $region6: #{tpu_custom_call.1} parent=1 // loop_footer
      %s83 = sadd.s32 1, %s79
    $region7: #{tpu_custom_call.1} parent=1 // loop_footer_branch
      %78 = sbr.rel target = $region3
    $region8: #{tpu_custom_call.1} parent=1 // loop_exit
      _
    %4294 = vsyncpa [#allocation3], 1
    %s4295 = scalar_lea.sflag [#allocation3], 1
    %4296 = vsyncpa %s4295, 1
    %4297 = vsyncpa [#allocation6], 1
    %s4298 = scalar_lea.sflag [#allocation6], 1
    %4299 = vsyncpa %s4298, 1
    %4300 = vsyncpa [#allocation9], 1
    %4301 = vsyncpa [#allocation12], 1
    %4302 = vsyncpa [#allocation15], 1
    %4303 = vsyncpa [#allocation18], 1
    %4304 = vsyncpa [#allocation21], 1
    %4305 = vsyncpa [#allocation4], 1
    %s4306 = scalar_lea.sflag [#allocation4], 1
    %4307 = vsyncpa %s4306, 1

</llo_original>
